<compile_context>
chip_gen: v7x
topology: tpu7x:2x2x1
jax: 0.10.0
libtpu: 0.0.40
codegen_flags: <defaults>
</compile_context>

<pallas_src>
import functools

import numpy as np
import jax
import jax.numpy as jnp
from jax.experimental import pallas as pl
from jax.experimental.pallas import tpu as pltpu

LN_EPS = 1e-5


# ----------------------------- in-kernel helpers -----------------------------
def _layernorm(x, g, b):
    mu = jnp.mean(x, axis=-1, keepdims=True)
    var = jnp.mean(jnp.square(x - mu), axis=-1, keepdims=True)
    return (x - mu) * jax.lax.rsqrt(var + LN_EPS) * g + b


def _softmax_lastdim(x):
    m = jnp.max(x, axis=-1, keepdims=True)
    e = jnp.exp(x - m)
    # divide -> EUP approximate reciprocal (VALU divide removed; EUP slot is idle here).
    return e * pl.reciprocal(jnp.sum(e, axis=-1, keepdims=True), approx=True)


def _gelu_tanh(x):
    # tanh-approximate GELU (max |err| vs exact erf-GELU ~3e-4, well inside tolerance).
    c = 0.7978845608028654  # sqrt(2/pi)
    return 0.5 * x * (1.0 + jnp.tanh(c * (x + 0.044715 * x * x * x)))


# --------------------------------- kernel ------------------------------------
def flsvir_kernel(
    x_ref,                                           # (Bp, N, C)
    lnf_g_ref, lnf_b_ref, lng_g_ref, lng_b_ref,      # per-layer LayerNorms (L, C)
    wqkv_ref,                                        # fused qkv (C, 3C); scale in q cols
    fcw_ref, fcb_ref, nw_ref, nb_ref,                # shared attn fc + its LayerNorm
    fc2w_ref, fc2b_ref,                              # shared attn fc2
    w1_ref, b1_ref, w2_ref, b2_ref,                  # shared Mlp
    out_ref,                                         # (Bp, N, C)
    *, num_layers, num_heads, head_dim, tokens,
):
    N, Dh, H = tokens, head_dim, num_heads
    Bp = x_ref.shape[0]
    C = x_ref.shape[2]
    BN = Bp * N
    G = H * Bp                                       # heads folded into einsum batch dim
    S = fcw_ref.shape[1]

    # ---- shared weights / biases: one VMEM read each, reused by all layers ----
    wqkv = wqkv_ref[...]
    fcw = fcw_ref[...]
    fc2w = fc2w_ref[...]
    w1 = w1_ref[...]
    w2 = w2_ref[...]
    fcb = fcb_ref[0, :]
    nw = nw_ref[0, :]
    nb = nb_ref[0, :]
    fc2b = fc2b_ref[0, :]
    b1 = b1_ref[0, :]
    b2 = b2_ref[0, :]

    def to_heads(t2d, off):
        # (BN, 3C) lane-slice per head -> (G, N, Dh), g = h*Bp + b (all static slices).
        parts = [t2d[:, off + h * Dh: off + (h + 1) * Dh].reshape(Bp, N, Dh)
                 for h in range(H)]
        return jnp.concatenate(parts, axis=0)

    def from_heads(t3d):
        # (G, N, Dh), g = h*Bp + b -> (BN, C) with channel layout c = h*Dh + d.
        parts = [t3d[h * Bp:(h + 1) * Bp].reshape(BN, Dh) for h in range(H)]
        return jnp.concatenate(parts, axis=-1)

    x0 = x_ref[...].reshape(BN, C)
    x1 = x0
    x2 = x0

    for layer in range(num_layers):                  # static, fully unrolled
        # ------------- f branch: y1 = x1 + Attention(LayerNorm_f(x2)) -------------
        x2n = _layernorm(x2, lnf_g_ref[layer, :], lnf_b_ref[layer, :])        # (BN, C)
        qkv = jnp.dot(x2n, wqkv, preferred_element_type=jnp.float32)          # (BN, 3C)
        q = to_heads(qkv, 0)                                                  # (G, N, Dh)
        k = to_heads(qkv, C)
        v = to_heads(qkv, 2 * C)

        # attention scores (scale pre-folded into q weights): (G, N, N)
        s = jnp.einsum('gnd,gmd->gnm', q, k, preferred_element_type=jnp.float32)
        # fc: Linear(N -> S) as a single sublane-filling 2-D dot over (G*N) rows
        a = jnp.dot(s.reshape(G * N, N), fcw, preferred_element_type=jnp.float32) + fcb
        a = _layernorm(a, nw, nb)
        a = _softmax_lastdim(a).reshape(G, N, S)
        # (A^T @ v): (G, S, Dh)
        y = jnp.einsum('gns,gnd->gsd', a, v, preferred_element_type=jnp.float32)
        # fc2: Linear(S -> N), bias indexed by output token n: (G, N, Dh)
        z = jnp.einsum('gsd,sn->gnd', y, fc2w, preferred_element_type=jnp.float32)
        z = z + fc2b[None, :, None]
        y1 = x1 + from_heads(z)                                               # (BN, C)

        # ------------- g branch: y2 = x2 + Mlp(LayerNorm_g(y1)) -------------------
        y1n = _layernorm(y1, lng_g_ref[layer, :], lng_b_ref[layer, :])
        h1 = _gelu_tanh(jnp.dot(y1n, w1, preferred_element_type=jnp.float32) + b1)
        y2 = x2 + jnp.dot(h1, w2, preferred_element_type=jnp.float32) + b2

        x1, x2 = y1, y2

    # final result = mean of the two reversible streams (written exactly once per program)
    out_ref[...] = ((x1 + x2) * 0.5).reshape(Bp, N, C)


# --------------------------------- wrapper -----------------------------------
def _tc_parallel_programs(batch):
    """2 programs (one per TensorCore) on v7x-class chips, 1 elsewhere."""
    try:
        kind = jax.devices()[0].device_kind.lower()
    except Exception:
        return 1
    if ("v7" in kind or "7x" in kind) and batch % 2 == 0 and batch >= 2:
        return 2
    return 1


def flsvir_forward(x, params, *, num_layers, num_heads, num_programs=None):
    B, N, C = x.shape
    Dh = C // num_heads
    S = params['fcb'].shape[-1]
    HID = params['b1'].shape[-1]
    scale = Dh ** -0.5

    if num_programs is None:
        num_programs = _tc_parallel_programs(B)
    Bp = B // num_programs

    # fuse qkv into one (C, 3C) weight; fold the 1/sqrt(Dh) scale into the q columns.
    wqkv = jnp.concatenate([params['wq'] * scale, params['wk'], params['wv']], axis=1)

    def const_spec(shape):
        nd = len(shape)
        return pl.BlockSpec(shape, lambda i, _nd=nd: (0,) * _nd)

    grid_spec = pltpu.PrefetchScalarGridSpec(
        num_scalar_prefetch=0,
        grid=(num_programs,),                         # 1 program (v5e/v6e) or per-TC batch split (v7x)
        in_specs=[
            pl.BlockSpec((Bp, N, C), lambda i: (i, 0, 0)),               # x
            const_spec((num_layers, C)), const_spec((num_layers, C)),    # lnf g/b
            const_spec((num_layers, C)), const_spec((num_layers, C)),    # lng g/b
            const_spec((C, 3 * C)),                                      # fused qkv
            const_spec((N, S)), const_spec((1, S)),                      # attn fc
            const_spec((1, S)), const_spec((1, S)),                      # attn LayerNorm
            const_spec((S, N)), const_spec((1, N)),                      # attn fc2
            const_spec((C, HID)), const_spec((1, HID)),                  # mlp fc1
            const_spec((HID, C)), const_spec((1, C)),                    # mlp fc2
        ],
        out_specs=pl.BlockSpec((Bp, N, C), lambda i: (i, 0, 0)),
    )

    kernel = functools.partial(
        flsvir_kernel, num_layers=num_layers, num_heads=num_heads,
        head_dim=Dh, tokens=N)

    out = pl.pallas_call(
        kernel,
        out_shape=jax.ShapeDtypeStruct((B, N, C), jnp.float32),
        grid_spec=grid_spec,
        compiler_params=pltpu.CompilerParams(
            dimension_semantics=(("parallel",) if num_programs > 1 else ("arbitrary",))),
    )(x,
      params['lnf_g'].reshape(num_layers, C), params['lnf_b'].reshape(num_layers, C),
      params['lng_g'].reshape(num_layers, C), params['lng_b'].reshape(num_layers, C),
      wqkv,
      params['fcw'], params['fcb'], params['nw'], params['nb'],
      params['fc2w'], params['fc2b'],
      params['w1'], params['b1'], params['w2'], params['b2'])
    return out


# ------------------------------ pure-JAX reference ----------------------------
def flsvir_ref(x, p, *, num_layers, num_heads):
    B, N, C = x.shape
    Dh = C // num_heads
    scale = Dh ** -0.5

    def ln(t, g, b):
        mu = t.mean(-1, keepdims=True)
        var = ((t - mu) ** 2).mean(-1, keepdims=True)
        return (t - mu) / jnp.sqrt(var + LN_EPS) * g + b

    def attn(xn):
        q = xn @ p['wq']
        k = xn @ p['wk']
        v = xn @ p['wv']
        q = q.reshape(B, N, num_heads, Dh).transpose(0, 2, 1, 3)
        k = k.reshape(B, N, num_heads, Dh).transpose(0, 2, 1, 3)
        v = v.reshape(B, N, num_heads, Dh).transpose(0, 2, 1, 3)
        a = jnp.einsum('bhnd,bhmd->bhnm', q, k) * scale
        a = a @ p['fcw'] + p['fcb'][0]
        a = ln(a, p['nw'][0], p['nb'][0])
        a = jax.nn.softmax(a, axis=-1)
        a = a.transpose(0, 1, 3, 2)                           # (B,H,S,N)
        o = jnp.einsum('bhsn,bhnd->bhsd', a, v)               # (B,H,S,Dh)
        o = o.transpose(0, 1, 3, 2)                           # (B,H,Dh,S)
        o = o @ p['fc2w'] + p['fc2b'][0]                      # (B,H,Dh,N)
        o = o.transpose(0, 1, 3, 2)                           # (B,H,N,Dh)
        return o.transpose(0, 2, 1, 3).reshape(B, N, C)

    def mlp(xn):
        h = xn @ p['w1'] + p['b1'][0]
        h = jax.nn.gelu(h, approximate=False)
        return h @ p['w2'] + p['b2'][0]

    x1, x2 = x, x
    for l in range(num_layers):
        y1 = x1 + attn(ln(x2, p['lnf_g'][l, 0], p['lnf_b'][l, 0]))
        y2 = x2 + mlp(ln(y1, p['lng_g'][l, 0], p['lng_b'][l, 0]))
        x1, x2 = y1, y2
    return (x1 + x2) * 0.5


# ------------------------------- parameter init --------------------------------
def init_params(key, *, emb, n_tokens, seq_len, hidden, layers):
    ks = jax.random.split(key, 24)

    def w(k, shape, s=0.05):
        return (s * jax.random.normal(k, shape)).astype(jnp.float32)

    return dict(
        # per-layer PreNorm LayerNorms
        lnf_g=(1.0 + 0.1 * jax.random.normal(ks[0], (layers, 1, emb))).astype(jnp.float32),
        lnf_b=w(ks[1], (layers, 1, emb)),
        lng_g=(1.0 + 0.1 * jax.random.normal(ks[2], (layers, 1, emb))).astype(jnp.float32),
        lng_b=w(ks[3], (layers, 1, emb)),
        # shared Attention (qkv_bias=False)
        wq=w(ks[4], (emb, emb)), wk=w(ks[5], (emb, emb)), wv=w(ks[6], (emb, emb)),
        fcw=w(ks[7], (n_tokens, seq_len)), fcb=w(ks[8], (1, seq_len)),
        nw=(1.0 + 0.1 * jax.random.normal(ks[9], (1, seq_len))).astype(jnp.float32),
        nb=w(ks[10], (1, seq_len)),
        fc2w=w(ks[11], (seq_len, n_tokens)), fc2b=w(ks[12], (1, n_tokens)),
        # shared Mlp
        w1=w(ks[13], (emb, hidden)), b1=w(ks[14], (1, hidden)),
        w2=w(ks[15], (hidden, emb)), b2=w(ks[16], (1, emb)),
    )


# ----------------------------------- main --------------------------------------
if __name__ == "__main__":
    # FLSVIR(emb_dim=32, seq_len=8, num_layers=2, num_patches=15, num_heads=4, mlp_ratio=2.0)
    B = 2
    EMB = 32
    HEADS = 4
    NUM_PATCHES = 15
    N_TOKENS = NUM_PATCHES + 1            # patch_dim = num_patches + 1
    SEQ_LEN = 8
    MLP_RATIO = 2.0
    HIDDEN = int(EMB * MLP_RATIO)
    LAYERS = 2

    key = jax.random.PRNGKey(0)
    kx, kp = jax.random.split(key)
    x = jax.random.normal(kx, (B, N_TOKENS, EMB), jnp.float32)
    params = init_params(kp, emb=EMB, n_tokens=N_TOKENS, seq_len=SEQ_LEN,
                         hidden=HIDDEN, layers=LAYERS)

    out = flsvir_forward(x, params, num_layers=LAYERS, num_heads=HEADS)
    out = jax.block_until_ready(out)

    ref = jax.block_until_ready(flsvir_ref(x, params, num_layers=LAYERS, num_heads=HEADS))
    if not np.allclose(np.asarray(out), np.asarray(ref), rtol=5e-3, atol=5e-3):
        raise AssertionError("Pallas kernel output does not match JAX reference")

    print("KERNEL_OK")
</pallas_src>

<mosaic_0001>
module attributes {stable_mosaic.version = 11 : i64} {
  func.func @flsvir_kernel(%arg0: i32, %arg1: memref<2x16x32xf32, #tpu.memory_space<vmem>>, %arg2: memref<2x32xf32, #tpu.memory_space<vmem>>, %arg3: memref<2x32xf32, #tpu.memory_space<vmem>>, %arg4: memref<2x32xf32, #tpu.memory_space<vmem>>, %arg5: memref<2x32xf32, #tpu.memory_space<vmem>>, %arg6: memref<32x96xf32, #tpu.memory_space<vmem>>, %arg7: memref<16x8xf32, #tpu.memory_space<vmem>>, %arg8: memref<1x8xf32, #tpu.memory_space<vmem>>, %arg9: memref<1x8xf32, #tpu.memory_space<vmem>>, %arg10: memref<1x8xf32, #tpu.memory_space<vmem>>, %arg11: memref<8x16xf32, #tpu.memory_space<vmem>>, %arg12: memref<1x16xf32, #tpu.memory_space<vmem>>, %arg13: memref<32x64xf32, #tpu.memory_space<vmem>>, %arg14: memref<1x64xf32, #tpu.memory_space<vmem>>, %arg15: memref<64x32xf32, #tpu.memory_space<vmem>>, %arg16: memref<1x32xf32, #tpu.memory_space<vmem>>, %arg17: memref<2x16x32xf32, #tpu.memory_space<vmem>>) attributes {dimension_semantics = [#tpu.dimension_semantics<arbitrary>], iteration_bounds = array<i64: 1>, scalar_prefetch = 0 : i64, scratch_operands = 0 : i64, tpu.core_type = #tpu.core_type<tc>, window_params = [{transform_indices = @transform_0, window_bounds = array<i64: 2, 16, 32>}, {pipeline_mode = #tpu.pipeline_mode<synchronous>, transform_indices = @transform_1, window_bounds = array<i64: 2, 32>}, {pipeline_mode = #tpu.pipeline_mode<synchronous>, transform_indices = @transform_2, window_bounds = array<i64: 2, 32>}, {pipeline_mode = #tpu.pipeline_mode<synchronous>, transform_indices = @transform_3, window_bounds = array<i64: 2, 32>}, {pipeline_mode = #tpu.pipeline_mode<synchronous>, transform_indices = @transform_4, window_bounds = array<i64: 2, 32>}, {pipeline_mode = #tpu.pipeline_mode<synchronous>, transform_indices = @transform_5, window_bounds = array<i64: 32, 96>}, {pipeline_mode = #tpu.pipeline_mode<synchronous>, transform_indices = @transform_6, window_bounds = array<i64: 16, 8>}, {pipeline_mode = #tpu.pipeline_mode<synchronous>, transform_indices = @transform_7, window_bounds = array<i64: 1, 8>}, {pipeline_mode = #tpu.pipeline_mode<synchronous>, transform_indices = @transform_8, window_bounds = array<i64: 1, 8>}, {pipeline_mode = #tpu.pipeline_mode<synchronous>, transform_indices = @transform_9, window_bounds = array<i64: 1, 8>}, {pipeline_mode = #tpu.pipeline_mode<synchronous>, transform_indices = @transform_10, window_bounds = array<i64: 8, 16>}, {pipeline_mode = #tpu.pipeline_mode<synchronous>, transform_indices = @transform_11, window_bounds = array<i64: 1, 16>}, {pipeline_mode = #tpu.pipeline_mode<synchronous>, transform_indices = @transform_12, window_bounds = array<i64: 32, 64>}, {pipeline_mode = #tpu.pipeline_mode<synchronous>, transform_indices = @transform_13, window_bounds = array<i64: 1, 64>}, {pipeline_mode = #tpu.pipeline_mode<synchronous>, transform_indices = @transform_14, window_bounds = array<i64: 64, 32>}, {pipeline_mode = #tpu.pipeline_mode<synchronous>, transform_indices = @transform_15, window_bounds = array<i64: 1, 32>}, {transform_indices = @transform_16, window_bounds = array<i64: 2, 16, 32>}]} {
    %c0 = arith.constant 0 : index
    %c0_0 = arith.constant 0 : index
    %0 = vector.load %arg6[%c0, %c0_0] : memref<32x96xf32, #tpu.memory_space<vmem>>, vector<32x96xf32>
    %c0_1 = arith.constant 0 : index
    %c0_2 = arith.constant 0 : index
    %1 = vector.load %arg7[%c0_1, %c0_2] : memref<16x8xf32, #tpu.memory_space<vmem>>, vector<16x8xf32>
    %c0_3 = arith.constant 0 : index
    %c0_4 = arith.constant 0 : index
    %2 = vector.load %arg11[%c0_3, %c0_4] : memref<8x16xf32, #tpu.memory_space<vmem>>, vector<8x16xf32>
    %c0_5 = arith.constant 0 : index
    %c0_6 = arith.constant 0 : index
    %3 = vector.load %arg13[%c0_5, %c0_6] : memref<32x64xf32, #tpu.memory_space<vmem>>, vector<32x64xf32>
    %c0_7 = arith.constant 0 : index
    %c0_8 = arith.constant 0 : index
    %4 = vector.load %arg15[%c0_7, %c0_8] : memref<64x32xf32, #tpu.memory_space<vmem>>, vector<64x32xf32>
    %c0_9 = arith.constant 0 : index
    %c0_10 = arith.constant 0 : index
    %5 = vector.load %arg8[%c0_9, %c0_10] : memref<1x8xf32, #tpu.memory_space<vmem>>, vector<1x8xf32>
    %6 = vector.shape_cast %5 : vector<1x8xf32> to vector<8xf32>
    %c0_11 = arith.constant 0 : index
    %c0_12 = arith.constant 0 : index
    %7 = vector.load %arg9[%c0_11, %c0_12] : memref<1x8xf32, #tpu.memory_space<vmem>>, vector<1x8xf32>
    %8 = vector.shape_cast %7 : vector<1x8xf32> to vector<8xf32>
    %c0_13 = arith.constant 0 : index
    %c0_14 = arith.constant 0 : index
    %9 = vector.load %arg10[%c0_13, %c0_14] : memref<1x8xf32, #tpu.memory_space<vmem>>, vector<1x8xf32>
    %10 = vector.shape_cast %9 : vector<1x8xf32> to vector<8xf32>
    %c0_15 = arith.constant 0 : index
    %c0_16 = arith.constant 0 : index
    %11 = vector.load %arg12[%c0_15, %c0_16] : memref<1x16xf32, #tpu.memory_space<vmem>>, vector<1x16xf32>
    %12 = vector.shape_cast %11 : vector<1x16xf32> to vector<16xf32>
    %c0_17 = arith.constant 0 : index
    %c0_18 = arith.constant 0 : index
    %13 = vector.load %arg14[%c0_17, %c0_18] : memref<1x64xf32, #tpu.memory_space<vmem>>, vector<1x64xf32>
    %14 = vector.shape_cast %13 : vector<1x64xf32> to vector<64xf32>
    %c0_19 = arith.constant 0 : index
    %c0_20 = arith.constant 0 : index
    %15 = vector.load %arg16[%c0_19, %c0_20] : memref<1x32xf32, #tpu.memory_space<vmem>>, vector<1x32xf32>
    %16 = vector.shape_cast %15 : vector<1x32xf32> to vector<32xf32>
    %c0_21 = arith.constant 0 : index
    %c0_22 = arith.constant 0 : index
    %c0_23 = arith.constant 0 : index
    %17 = vector.load %arg1[%c0_21, %c0_22, %c0_23] : memref<2x16x32xf32, #tpu.memory_space<vmem>>, vector<2x16x32xf32>
    %18 = vector.shape_cast %17 : vector<2x16x32xf32> to vector<32x32xf32>
    %c0_24 = arith.constant 0 : index
    %c0_25 = arith.constant 0 : index
    %19 = vector.load %arg2[%c0_24, %c0_25] : memref<2x32xf32, #tpu.memory_space<vmem>>, vector<1x32xf32>
    %20 = vector.shape_cast %19 : vector<1x32xf32> to vector<32xf32>
    %c0_26 = arith.constant 0 : index
    %c0_27 = arith.constant 0 : index
    %21 = vector.load %arg3[%c0_26, %c0_27] : memref<2x32xf32, #tpu.memory_space<vmem>>, vector<1x32xf32>
    %22 = vector.shape_cast %21 : vector<1x32xf32> to vector<32xf32>
    %cst = arith.constant dense<0.000000e+00> : vector<32xf32>
    %23 = vector.multi_reduction <add>, %18, %cst [1] : vector<32x32xf32> to vector<32xf32>
    %24 = vector.shape_cast %23 : vector<32xf32> to vector<32x1xf32>
    %cst_28 = arith.constant 3.200000e+01 : f32
    %25 = vector.broadcast %cst_28 : f32 to vector<32x1xf32>
    %26 = arith.divf %24, %25 : vector<32x1xf32>
    %27 = vector.broadcast %26 : vector<32x1xf32> to vector<32x32xf32>
    %28 = arith.subf %18, %27 : vector<32x32xf32>
    %29 = arith.mulf %28, %28 : vector<32x32xf32>
    %cst_29 = arith.constant dense<0.000000e+00> : vector<32xf32>
    %30 = vector.multi_reduction <add>, %29, %cst_29 [1] : vector<32x32xf32> to vector<32xf32>
    %31 = vector.shape_cast %30 : vector<32xf32> to vector<32x1xf32>
    %cst_30 = arith.constant 3.200000e+01 : f32
    %32 = vector.broadcast %cst_30 : f32 to vector<32x1xf32>
    %33 = arith.divf %31, %32 : vector<32x1xf32>
    %34 = vector.broadcast %26 : vector<32x1xf32> to vector<32x32xf32>
    %35 = arith.subf %18, %34 : vector<32x32xf32>
    %cst_31 = arith.constant 9.99999974E-6 : f32
    %36 = vector.broadcast %cst_31 : f32 to vector<32x1xf32>
    %37 = arith.addf %33, %36 : vector<32x1xf32>
    %38 = math.rsqrt %37 : vector<32x1xf32>
    %39 = vector.broadcast %38 : vector<32x1xf32> to vector<32x32xf32>
    %40 = arith.mulf %35, %39 : vector<32x32xf32>
    %41 = vector.shape_cast %20 : vector<32xf32> to vector<1x32xf32>
    %42 = vector.broadcast %41 : vector<1x32xf32> to vector<32x32xf32>
    %43 = arith.mulf %40, %42 : vector<32x32xf32>
    %44 = vector.shape_cast %22 : vector<32xf32> to vector<1x32xf32>
    %45 = vector.broadcast %44 : vector<1x32xf32> to vector<32x32xf32>
    %46 = arith.addf %43, %45 : vector<32x32xf32>
    %cst_32 = arith.constant dense<0.000000e+00> : vector<32x96xf32>
    %47 = tpu.matmul %46, %0, %cst_32 {dimension_numbers = #tpu.dot_dimension_numbers<[1], [0], [0], [1], [0, 0, 1, 1], [], []>} : vector<32x32xf32>, vector<32x96xf32>, vector<32x96xf32> -> vector<32x96xf32>
    %48 = vector.extract_strided_slice %47 {offsets = [0, 0], sizes = [32, 8], strides = [1, 1]} : vector<32x96xf32> to vector<32x8xf32>
    %49 = vector.shape_cast %48 : vector<32x8xf32> to vector<2x16x8xf32>
    %50 = vector.extract_strided_slice %47 {offsets = [0, 8], sizes = [32, 8], strides = [1, 1]} : vector<32x96xf32> to vector<32x8xf32>
    %51 = vector.shape_cast %50 : vector<32x8xf32> to vector<2x16x8xf32>
    %52 = vector.extract_strided_slice %47 {offsets = [0, 16], sizes = [32, 8], strides = [1, 1]} : vector<32x96xf32> to vector<32x8xf32>
    %53 = vector.shape_cast %52 : vector<32x8xf32> to vector<2x16x8xf32>
    %54 = vector.extract_strided_slice %47 {offsets = [0, 24], sizes = [32, 8], strides = [1, 1]} : vector<32x96xf32> to vector<32x8xf32>
    %55 = vector.shape_cast %54 : vector<32x8xf32> to vector<2x16x8xf32>
    %56 = tpu.concatenate %49, %51, %53, %55 in 0 : vector<2x16x8xf32>, vector<2x16x8xf32>, vector<2x16x8xf32>, vector<2x16x8xf32> -> vector<8x16x8xf32>
    %57 = vector.extract_strided_slice %47 {offsets = [0, 32], sizes = [32, 8], strides = [1, 1]} : vector<32x96xf32> to vector<32x8xf32>
    %58 = vector.shape_cast %57 : vector<32x8xf32> to vector<2x16x8xf32>
    %59 = vector.extract_strided_slice %47 {offsets = [0, 40], sizes = [32, 8], strides = [1, 1]} : vector<32x96xf32> to vector<32x8xf32>
    %60 = vector.shape_cast %59 : vector<32x8xf32> to vector<2x16x8xf32>
    %61 = vector.extract_strided_slice %47 {offsets = [0, 48], sizes = [32, 8], strides = [1, 1]} : vector<32x96xf32> to vector<32x8xf32>
    %62 = vector.shape_cast %61 : vector<32x8xf32> to vector<2x16x8xf32>
    %63 = vector.extract_strided_slice %47 {offsets = [0, 56], sizes = [32, 8], strides = [1, 1]} : vector<32x96xf32> to vector<32x8xf32>
    %64 = vector.shape_cast %63 : vector<32x8xf32> to vector<2x16x8xf32>
    %65 = tpu.concatenate %58, %60, %62, %64 in 0 : vector<2x16x8xf32>, vector<2x16x8xf32>, vector<2x16x8xf32>, vector<2x16x8xf32> -> vector<8x16x8xf32>
    %66 = vector.extract_strided_slice %47 {offsets = [0, 64], sizes = [32, 8], strides = [1, 1]} : vector<32x96xf32> to vector<32x8xf32>
    %67 = vector.shape_cast %66 : vector<32x8xf32> to vector<2x16x8xf32>
    %68 = vector.extract_strided_slice %47 {offsets = [0, 72], sizes = [32, 8], strides = [1, 1]} : vector<32x96xf32> to vector<32x8xf32>
    %69 = vector.shape_cast %68 : vector<32x8xf32> to vector<2x16x8xf32>
    %70 = vector.extract_strided_slice %47 {offsets = [0, 80], sizes = [32, 8], strides = [1, 1]} : vector<32x96xf32> to vector<32x8xf32>
    %71 = vector.shape_cast %70 : vector<32x8xf32> to vector<2x16x8xf32>
    %72 = vector.extract_strided_slice %47 {offsets = [0, 88], sizes = [32, 8], strides = [1, 1]} : vector<32x96xf32> to vector<32x8xf32>
    %73 = vector.shape_cast %72 : vector<32x8xf32> to vector<2x16x8xf32>
    %74 = tpu.concatenate %67, %69, %71, %73 in 0 : vector<2x16x8xf32>, vector<2x16x8xf32>, vector<2x16x8xf32>, vector<2x16x8xf32> -> vector<8x16x8xf32>
    "tpu.trace_start"() <{level = 10 : i32, message = "gnd,gmd->gnm"}> : () -> ()
    %cst_33 = arith.constant dense<0.000000e+00> : vector<8x16x16xf32>
    %75 = tpu.matmul %56, %65, %cst_33 {dimension_numbers = #tpu.dot_dimension_numbers<[2], [2], [1], [1], [0, 0, 0, 1, 1, 1], [0], [0]>} : vector<8x16x8xf32>, vector<8x16x8xf32>, vector<8x16x16xf32> -> vector<8x16x16xf32>
    "tpu.trace_stop"() : () -> ()
    %76 = vector.shape_cast %75 : vector<8x16x16xf32> to vector<128x16xf32>
    %cst_34 = arith.constant dense<0.000000e+00> : vector<128x8xf32>
    %77 = tpu.matmul %76, %1, %cst_34 {dimension_numbers = #tpu.dot_dimension_numbers<[1], [0], [0], [1], [0, 0, 1, 1], [], []>} : vector<128x16xf32>, vector<16x8xf32>, vector<128x8xf32> -> vector<128x8xf32>
    %78 = vector.shape_cast %6 : vector<8xf32> to vector<1x8xf32>
    %79 = vector.broadcast %78 : vector<1x8xf32> to vector<128x8xf32>
    %80 = arith.addf %77, %79 : vector<128x8xf32>
    %cst_35 = arith.constant dense<0.000000e+00> : vector<128xf32>
    %81 = vector.multi_reduction <add>, %80, %cst_35 [1] : vector<128x8xf32> to vector<128xf32>
    %82 = vector.shape_cast %81 : vector<128xf32> to vector<128x1xf32>
    %cst_36 = arith.constant 8.000000e+00 : f32
    %83 = vector.broadcast %cst_36 : f32 to vector<128x1xf32>
    %84 = arith.divf %82, %83 : vector<128x1xf32>
    %85 = vector.broadcast %84 : vector<128x1xf32> to vector<128x8xf32>
    %86 = arith.subf %80, %85 : vector<128x8xf32>
    %87 = arith.mulf %86, %86 : vector<128x8xf32>
    %cst_37 = arith.constant dense<0.000000e+00> : vector<128xf32>
    %88 = vector.multi_reduction <add>, %87, %cst_37 [1] : vector<128x8xf32> to vector<128xf32>
    %89 = vector.shape_cast %88 : vector<128xf32> to vector<128x1xf32>
    %cst_38 = arith.constant 8.000000e+00 : f32
    %90 = vector.broadcast %cst_38 : f32 to vector<128x1xf32>
    %91 = arith.divf %89, %90 : vector<128x1xf32>
    %92 = vector.broadcast %84 : vector<128x1xf32> to vector<128x8xf32>
    %93 = arith.subf %80, %92 : vector<128x8xf32>
    %cst_39 = arith.constant 9.99999974E-6 : f32
    %94 = vector.broadcast %cst_39 : f32 to vector<128x1xf32>
    %95 = arith.addf %91, %94 : vector<128x1xf32>
    %96 = math.rsqrt %95 : vector<128x1xf32>
    %97 = vector.broadcast %96 : vector<128x1xf32> to vector<128x8xf32>
    %98 = arith.mulf %93, %97 : vector<128x8xf32>
    %99 = vector.shape_cast %8 : vector<8xf32> to vector<1x8xf32>
    %100 = vector.broadcast %99 : vector<1x8xf32> to vector<128x8xf32>
    %101 = arith.mulf %98, %100 : vector<128x8xf32>
    %102 = vector.shape_cast %10 : vector<8xf32> to vector<1x8xf32>
    %103 = vector.broadcast %102 : vector<1x8xf32> to vector<128x8xf32>
    %104 = arith.addf %101, %103 : vector<128x8xf32>
    %cst_40 = arith.constant dense<0xFF800000> : vector<128xf32>
    %105 = vector.multi_reduction <maximumf>, %104, %cst_40 [1] : vector<128x8xf32> to vector<128xf32>
    %106 = vector.shape_cast %105 : vector<128xf32> to vector<128x1xf32>
    %107 = vector.broadcast %106 : vector<128x1xf32> to vector<128x8xf32>
    %108 = arith.subf %104, %107 : vector<128x8xf32>
    %109 = math.exp %108 : vector<128x8xf32>
    %cst_41 = arith.constant dense<0.000000e+00> : vector<128xf32>
    %110 = vector.multi_reduction <add>, %109, %cst_41 [1] : vector<128x8xf32> to vector<128xf32>
    %111 = vector.shape_cast %110 : vector<128xf32> to vector<128x1xf32>
    %112 = tpu.reciprocal %111 {approx = true} : vector<128x1xf32> -> vector<128x1xf32>
    %113 = vector.broadcast %112 : vector<128x1xf32> to vector<128x8xf32>
    %114 = arith.mulf %109, %113 : vector<128x8xf32>
    %115 = vector.shape_cast %114 : vector<128x8xf32> to vector<8x16x8xf32>
    "tpu.trace_start"() <{level = 10 : i32, message = "gns,gnd->gsd"}> : () -> ()
    %cst_42 = arith.constant dense<0.000000e+00> : vector<8x8x8xf32>
    %116 = tpu.matmul %115, %74, %cst_42 {dimension_numbers = #tpu.dot_dimension_numbers<[1], [1], [2], [2], [0, 0, 0, 2, 1, 2], [0], [0]>} : vector<8x16x8xf32>, vector<8x16x8xf32>, vector<8x8x8xf32> -> vector<8x8x8xf32>
    "tpu.trace_stop"() : () -> ()
    "tpu.trace_start"() <{level = 10 : i32, message = "gsd,sn->gnd"}> : () -> ()
    %cst_43 = arith.constant dense<0.000000e+00> : vector<16x8x8xf32>
    %117 = tpu.matmul %2, %116, %cst_43 {dimension_numbers = #tpu.dot_dimension_numbers<[0], [1], [1], [0, 2], [0, 1, 1, 0, 1, 2], [], []>} : vector<8x16xf32>, vector<8x8x8xf32>, vector<16x8x8xf32> -> vector<16x8x8xf32>
    %118 = tpu.transpose %117, [1, 0, 2] : vector<16x8x8xf32> -> vector<8x16x8xf32>
    "tpu.trace_stop"() : () -> ()
    %119 = vector.shape_cast %12 : vector<16xf32> to vector<1x16x1xf32>
    %120 = vector.broadcast %119 : vector<1x16x1xf32> to vector<8x16x8xf32>
    %121 = arith.addf %118, %120 : vector<8x16x8xf32>
    %122 = vector.extract_strided_slice %121 {offsets = [0, 0, 0], sizes = [2, 16, 8], strides = [1, 1, 1]} : vector<8x16x8xf32> to vector<2x16x8xf32>
    %123 = vector.shape_cast %122 : vector<2x16x8xf32> to vector<32x8xf32>
    %124 = vector.extract_strided_slice %121 {offsets = [2, 0, 0], sizes = [2, 16, 8], strides = [1, 1, 1]} : vector<8x16x8xf32> to vector<2x16x8xf32>
    %125 = vector.shape_cast %124 : vector<2x16x8xf32> to vector<32x8xf32>
    %126 = vector.extract_strided_slice %121 {offsets = [4, 0, 0], sizes = [2, 16, 8], strides = [1, 1, 1]} : vector<8x16x8xf32> to vector<2x16x8xf32>
    %127 = vector.shape_cast %126 : vector<2x16x8xf32> to vector<32x8xf32>
    %128 = vector.extract_strided_slice %121 {offsets = [6, 0, 0], sizes = [2, 16, 8], strides = [1, 1, 1]} : vector<8x16x8xf32> to vector<2x16x8xf32>
    %129 = vector.shape_cast %128 : vector<2x16x8xf32> to vector<32x8xf32>
    %130 = tpu.concatenate %123, %125, %127, %129 in 1 : vector<32x8xf32>, vector<32x8xf32>, vector<32x8xf32>, vector<32x8xf32> -> vector<32x32xf32>
    %131 = arith.addf %18, %130 : vector<32x32xf32>
    %c0_44 = arith.constant 0 : index
    %c0_45 = arith.constant 0 : index
    %132 = vector.load %arg4[%c0_44, %c0_45] : memref<2x32xf32, #tpu.memory_space<vmem>>, vector<1x32xf32>
    %133 = vector.shape_cast %132 : vector<1x32xf32> to vector<32xf32>
    %c0_46 = arith.constant 0 : index
    %c0_47 = arith.constant 0 : index
    %134 = vector.load %arg5[%c0_46, %c0_47] : memref<2x32xf32, #tpu.memory_space<vmem>>, vector<1x32xf32>
    %135 = vector.shape_cast %134 : vector<1x32xf32> to vector<32xf32>
    %cst_48 = arith.constant dense<0.000000e+00> : vector<32xf32>
    %136 = vector.multi_reduction <add>, %131, %cst_48 [1] : vector<32x32xf32> to vector<32xf32>
    %137 = vector.shape_cast %136 : vector<32xf32> to vector<32x1xf32>
    %cst_49 = arith.constant 3.200000e+01 : f32
    %138 = vector.broadcast %cst_49 : f32 to vector<32x1xf32>
    %139 = arith.divf %137, %138 : vector<32x1xf32>
    %140 = vector.broadcast %139 : vector<32x1xf32> to vector<32x32xf32>
    %141 = arith.subf %131, %140 : vector<32x32xf32>
    %142 = arith.mulf %141, %141 : vector<32x32xf32>
    %cst_50 = arith.constant dense<0.000000e+00> : vector<32xf32>
    %143 = vector.multi_reduction <add>, %142, %cst_50 [1] : vector<32x32xf32> to vector<32xf32>
    %144 = vector.shape_cast %143 : vector<32xf32> to vector<32x1xf32>
    %cst_51 = arith.constant 3.200000e+01 : f32
    %145 = vector.broadcast %cst_51 : f32 to vector<32x1xf32>
    %146 = arith.divf %144, %145 : vector<32x1xf32>
    %147 = vector.broadcast %139 : vector<32x1xf32> to vector<32x32xf32>
    %148 = arith.subf %131, %147 : vector<32x32xf32>
    %cst_52 = arith.constant 9.99999974E-6 : f32
    %149 = vector.broadcast %cst_52 : f32 to vector<32x1xf32>
    %150 = arith.addf %146, %149 : vector<32x1xf32>
    %151 = math.rsqrt %150 : vector<32x1xf32>
    %152 = vector.broadcast %151 : vector<32x1xf32> to vector<32x32xf32>
    %153 = arith.mulf %148, %152 : vector<32x32xf32>
    %154 = vector.shape_cast %133 : vector<32xf32> to vector<1x32xf32>
    %155 = vector.broadcast %154 : vector<1x32xf32> to vector<32x32xf32>
    %156 = arith.mulf %153, %155 : vector<32x32xf32>
    %157 = vector.shape_cast %135 : vector<32xf32> to vector<1x32xf32>
    %158 = vector.broadcast %157 : vector<1x32xf32> to vector<32x32xf32>
    %159 = arith.addf %156, %158 : vector<32x32xf32>
    %cst_53 = arith.constant dense<0.000000e+00> : vector<32x64xf32>
    %160 = tpu.matmul %159, %3, %cst_53 {dimension_numbers = #tpu.dot_dimension_numbers<[1], [0], [0], [1], [0, 0, 1, 1], [], []>} : vector<32x32xf32>, vector<32x64xf32>, vector<32x64xf32> -> vector<32x64xf32>
    %161 = vector.shape_cast %14 : vector<64xf32> to vector<1x64xf32>
    %162 = vector.broadcast %161 : vector<1x64xf32> to vector<32x64xf32>
    %163 = arith.addf %160, %162 : vector<32x64xf32>
    %cst_54 = arith.constant 5.000000e-01 : f32
    %164 = vector.broadcast %cst_54 : f32 to vector<32x64xf32>
    %165 = arith.mulf %164, %163 : vector<32x64xf32>
    %cst_55 = arith.constant 4.471500e-02 : f32
    %166 = vector.broadcast %cst_55 : f32 to vector<32x64xf32>
    %167 = arith.mulf %166, %163 : vector<32x64xf32>
    %168 = arith.mulf %167, %163 : vector<32x64xf32>
    %169 = arith.mulf %168, %163 : vector<32x64xf32>
    %170 = arith.addf %163, %169 : vector<32x64xf32>
    %cst_56 = arith.constant 0.797884583 : f32
    %171 = vector.broadcast %cst_56 : f32 to vector<32x64xf32>
    %172 = arith.mulf %171, %170 : vector<32x64xf32>
    %173 = math.tanh %172 : vector<32x64xf32>
    %cst_57 = arith.constant 1.000000e+00 : f32
    %174 = vector.broadcast %cst_57 : f32 to vector<32x64xf32>
    %175 = arith.addf %174, %173 : vector<32x64xf32>
    %176 = arith.mulf %165, %175 : vector<32x64xf32>
    %cst_58 = arith.constant dense<0.000000e+00> : vector<32x32xf32>
    %177 = tpu.matmul %176, %4, %cst_58 {dimension_numbers = #tpu.dot_dimension_numbers<[1], [0], [0], [1], [0, 0, 1, 1], [], []>} : vector<32x64xf32>, vector<64x32xf32>, vector<32x32xf32> -> vector<32x32xf32>
    %178 = arith.addf %18, %177 : vector<32x32xf32>
    %179 = vector.shape_cast %16 : vector<32xf32> to vector<1x32xf32>
    %180 = vector.broadcast %179 : vector<1x32xf32> to vector<32x32xf32>
    %181 = arith.addf %178, %180 : vector<32x32xf32>
    %c1 = arith.constant 1 : index
    %c0_59 = arith.constant 0 : index
    %182 = vector.load %arg2[%c1, %c0_59] : memref<2x32xf32, #tpu.memory_space<vmem>>, vector<1x32xf32>
    %183 = vector.shape_cast %182 : vector<1x32xf32> to vector<32xf32>
    %c1_60 = arith.constant 1 : index
    %c0_61 = arith.constant 0 : index
    %184 = vector.load %arg3[%c1_60, %c0_61] : memref<2x32xf32, #tpu.memory_space<vmem>>, vector<1x32xf32>
    %185 = vector.shape_cast %184 : vector<1x32xf32> to vector<32xf32>
    %cst_62 = arith.constant dense<0.000000e+00> : vector<32xf32>
    %186 = vector.multi_reduction <add>, %181, %cst_62 [1] : vector<32x32xf32> to vector<32xf32>
    %187 = vector.shape_cast %186 : vector<32xf32> to vector<32x1xf32>
    %cst_63 = arith.constant 3.200000e+01 : f32
    %188 = vector.broadcast %cst_63 : f32 to vector<32x1xf32>
    %189 = arith.divf %187, %188 : vector<32x1xf32>
    %190 = vector.broadcast %189 : vector<32x1xf32> to vector<32x32xf32>
    %191 = arith.subf %181, %190 : vector<32x32xf32>
    %192 = arith.mulf %191, %191 : vector<32x32xf32>
    %cst_64 = arith.constant dense<0.000000e+00> : vector<32xf32>
    %193 = vector.multi_reduction <add>, %192, %cst_64 [1] : vector<32x32xf32> to vector<32xf32>
    %194 = vector.shape_cast %193 : vector<32xf32> to vector<32x1xf32>
    %cst_65 = arith.constant 3.200000e+01 : f32
    %195 = vector.broadcast %cst_65 : f32 to vector<32x1xf32>
    %196 = arith.divf %194, %195 : vector<32x1xf32>
    %197 = vector.broadcast %189 : vector<32x1xf32> to vector<32x32xf32>
    %198 = arith.subf %181, %197 : vector<32x32xf32>
    %cst_66 = arith.constant 9.99999974E-6 : f32
    %199 = vector.broadcast %cst_66 : f32 to vector<32x1xf32>
    %200 = arith.addf %196, %199 : vector<32x1xf32>
    %201 = math.rsqrt %200 : vector<32x1xf32>
    %202 = vector.broadcast %201 : vector<32x1xf32> to vector<32x32xf32>
    %203 = arith.mulf %198, %202 : vector<32x32xf32>
    %204 = vector.shape_cast %183 : vector<32xf32> to vector<1x32xf32>
    %205 = vector.broadcast %204 : vector<1x32xf32> to vector<32x32xf32>
    %206 = arith.mulf %203, %205 : vector<32x32xf32>
    %207 = vector.shape_cast %185 : vector<32xf32> to vector<1x32xf32>
    %208 = vector.broadcast %207 : vector<1x32xf32> to vector<32x32xf32>
    %209 = arith.addf %206, %208 : vector<32x32xf32>
    %cst_67 = arith.constant dense<0.000000e+00> : vector<32x96xf32>
    %210 = tpu.matmul %209, %0, %cst_67 {dimension_numbers = #tpu.dot_dimension_numbers<[1], [0], [0], [1], [0, 0, 1, 1], [], []>} : vector<32x32xf32>, vector<32x96xf32>, vector<32x96xf32> -> vector<32x96xf32>
    %211 = vector.extract_strided_slice %210 {offsets = [0, 0], sizes = [32, 8], strides = [1, 1]} : vector<32x96xf32> to vector<32x8xf32>
    %212 = vector.shape_cast %211 : vector<32x8xf32> to vector<2x16x8xf32>
    %213 = vector.extract_strided_slice %210 {offsets = [0, 8], sizes = [32, 8], strides = [1, 1]} : vector<32x96xf32> to vector<32x8xf32>
    %214 = vector.shape_cast %213 : vector<32x8xf32> to vector<2x16x8xf32>
    %215 = vector.extract_strided_slice %210 {offsets = [0, 16], sizes = [32, 8], strides = [1, 1]} : vector<32x96xf32> to vector<32x8xf32>
    %216 = vector.shape_cast %215 : vector<32x8xf32> to vector<2x16x8xf32>
    %217 = vector.extract_strided_slice %210 {offsets = [0, 24], sizes = [32, 8], strides = [1, 1]} : vector<32x96xf32> to vector<32x8xf32>
    %218 = vector.shape_cast %217 : vector<32x8xf32> to vector<2x16x8xf32>
    %219 = tpu.concatenate %212, %214, %216, %218 in 0 : vector<2x16x8xf32>, vector<2x16x8xf32>, vector<2x16x8xf32>, vector<2x16x8xf32> -> vector<8x16x8xf32>
    %220 = vector.extract_strided_slice %210 {offsets = [0, 32], sizes = [32, 8], strides = [1, 1]} : vector<32x96xf32> to vector<32x8xf32>
    %221 = vector.shape_cast %220 : vector<32x8xf32> to vector<2x16x8xf32>
    %222 = vector.extract_strided_slice %210 {offsets = [0, 40], sizes = [32, 8], strides = [1, 1]} : vector<32x96xf32> to vector<32x8xf32>
    %223 = vector.shape_cast %222 : vector<32x8xf32> to vector<2x16x8xf32>
    %224 = vector.extract_strided_slice %210 {offsets = [0, 48], sizes = [32, 8], strides = [1, 1]} : vector<32x96xf32> to vector<32x8xf32>
    %225 = vector.shape_cast %224 : vector<32x8xf32> to vector<2x16x8xf32>
    %226 = vector.extract_strided_slice %210 {offsets = [0, 56], sizes = [32, 8], strides = [1, 1]} : vector<32x96xf32> to vector<32x8xf32>
    %227 = vector.shape_cast %226 : vector<32x8xf32> to vector<2x16x8xf32>
    %228 = tpu.concatenate %221, %223, %225, %227 in 0 : vector<2x16x8xf32>, vector<2x16x8xf32>, vector<2x16x8xf32>, vector<2x16x8xf32> -> vector<8x16x8xf32>
    %229 = vector.extract_strided_slice %210 {offsets = [0, 64], sizes = [32, 8], strides = [1, 1]} : vector<32x96xf32> to vector<32x8xf32>
    %230 = vector.shape_cast %229 : vector<32x8xf32> to vector<2x16x8xf32>
    %231 = vector.extract_strided_slice %210 {offsets = [0, 72], sizes = [32, 8], strides = [1, 1]} : vector<32x96xf32> to vector<32x8xf32>
    %232 = vector.shape_cast %231 : vector<32x8xf32> to vector<2x16x8xf32>
    %233 = vector.extract_strided_slice %210 {offsets = [0, 80], sizes = [32, 8], strides = [1, 1]} : vector<32x96xf32> to vector<32x8xf32>
    %234 = vector.shape_cast %233 : vector<32x8xf32> to vector<2x16x8xf32>
    %235 = vector.extract_strided_slice %210 {offsets = [0, 88], sizes = [32, 8], strides = [1, 1]} : vector<32x96xf32> to vector<32x8xf32>
    %236 = vector.shape_cast %235 : vector<32x8xf32> to vector<2x16x8xf32>
    %237 = tpu.concatenate %230, %232, %234, %236 in 0 : vector<2x16x8xf32>, vector<2x16x8xf32>, vector<2x16x8xf32>, vector<2x16x8xf32> -> vector<8x16x8xf32>
    "tpu.trace_start"() <{level = 10 : i32, message = "gnd,gmd->gnm"}> : () -> ()
    %cst_68 = arith.constant dense<0.000000e+00> : vector<8x16x16xf32>
    %238 = tpu.matmul %219, %228, %cst_68 {dimension_numbers = #tpu.dot_dimension_numbers<[2], [2], [1], [1], [0, 0, 0, 1, 1, 1], [0], [0]>} : vector<8x16x8xf32>, vector<8x16x8xf32>, vector<8x16x16xf32> -> vector<8x16x16xf32>
    "tpu.trace_stop"() : () -> ()
    %239 = vector.shape_cast %238 : vector<8x16x16xf32> to vector<128x16xf32>
    %cst_69 = arith.constant dense<0.000000e+00> : vector<128x8xf32>
    %240 = tpu.matmul %239, %1, %cst_69 {dimension_numbers = #tpu.dot_dimension_numbers<[1], [0], [0], [1], [0, 0, 1, 1], [], []>} : vector<128x16xf32>, vector<16x8xf32>, vector<128x8xf32> -> vector<128x8xf32>
    %241 = vector.shape_cast %6 : vector<8xf32> to vector<1x8xf32>
    %242 = vector.broadcast %241 : vector<1x8xf32> to vector<128x8xf32>
    %243 = arith.addf %240, %242 : vector<128x8xf32>
    %cst_70 = arith.constant dense<0.000000e+00> : vector<128xf32>
    %244 = vector.multi_reduction <add>, %243, %cst_70 [1] : vector<128x8xf32> to vector<128xf32>
    %245 = vector.shape_cast %244 : vector<128xf32> to vector<128x1xf32>
    %cst_71 = arith.constant 8.000000e+00 : f32
    %246 = vector.broadcast %cst_71 : f32 to vector<128x1xf32>
    %247 = arith.divf %245, %246 : vector<128x1xf32>
    %248 = vector.broadcast %247 : vector<128x1xf32> to vector<128x8xf32>
    %249 = arith.subf %243, %248 : vector<128x8xf32>
    %250 = arith.mulf %249, %249 : vector<128x8xf32>
    %cst_72 = arith.constant dense<0.000000e+00> : vector<128xf32>
    %251 = vector.multi_reduction <add>, %250, %cst_72 [1] : vector<128x8xf32> to vector<128xf32>
    %252 = vector.shape_cast %251 : vector<128xf32> to vector<128x1xf32>
    %cst_73 = arith.constant 8.000000e+00 : f32
    %253 = vector.broadcast %cst_73 : f32 to vector<128x1xf32>
    %254 = arith.divf %252, %253 : vector<128x1xf32>
    %255 = vector.broadcast %247 : vector<128x1xf32> to vector<128x8xf32>
    %256 = arith.subf %243, %255 : vector<128x8xf32>
    %cst_74 = arith.constant 9.99999974E-6 : f32
    %257 = vector.broadcast %cst_74 : f32 to vector<128x1xf32>
    %258 = arith.addf %254, %257 : vector<128x1xf32>
    %259 = math.rsqrt %258 : vector<128x1xf32>
    %260 = vector.broadcast %259 : vector<128x1xf32> to vector<128x8xf32>
    %261 = arith.mulf %256, %260 : vector<128x8xf32>
    %262 = vector.shape_cast %8 : vector<8xf32> to vector<1x8xf32>
    %263 = vector.broadcast %262 : vector<1x8xf32> to vector<128x8xf32>
    %264 = arith.mulf %261, %263 : vector<128x8xf32>
    %265 = vector.shape_cast %10 : vector<8xf32> to vector<1x8xf32>
    %266 = vector.broadcast %265 : vector<1x8xf32> to vector<128x8xf32>
    %267 = arith.addf %264, %266 : vector<128x8xf32>
    %cst_75 = arith.constant dense<0xFF800000> : vector<128xf32>
    %268 = vector.multi_reduction <maximumf>, %267, %cst_75 [1] : vector<128x8xf32> to vector<128xf32>
    %269 = vector.shape_cast %268 : vector<128xf32> to vector<128x1xf32>
    %270 = vector.broadcast %269 : vector<128x1xf32> to vector<128x8xf32>
    %271 = arith.subf %267, %270 : vector<128x8xf32>
    %272 = math.exp %271 : vector<128x8xf32>
    %cst_76 = arith.constant dense<0.000000e+00> : vector<128xf32>
    %273 = vector.multi_reduction <add>, %272, %cst_76 [1] : vector<128x8xf32> to vector<128xf32>
    %274 = vector.shape_cast %273 : vector<128xf32> to vector<128x1xf32>
    %275 = tpu.reciprocal %274 {approx = true} : vector<128x1xf32> -> vector<128x1xf32>
    %276 = vector.broadcast %275 : vector<128x1xf32> to vector<128x8xf32>
    %277 = arith.mulf %272, %276 : vector<128x8xf32>
    %278 = vector.shape_cast %277 : vector<128x8xf32> to vector<8x16x8xf32>
    "tpu.trace_start"() <{level = 10 : i32, message = "gns,gnd->gsd"}> : () -> ()
    %cst_77 = arith.constant dense<0.000000e+00> : vector<8x8x8xf32>
    %279 = tpu.matmul %278, %237, %cst_77 {dimension_numbers = #tpu.dot_dimension_numbers<[1], [1], [2], [2], [0, 0, 0, 2, 1, 2], [0], [0]>} : vector<8x16x8xf32>, vector<8x16x8xf32>, vector<8x8x8xf32> -> vector<8x8x8xf32>
    "tpu.trace_stop"() : () -> ()
    "tpu.trace_start"() <{level = 10 : i32, message = "gsd,sn->gnd"}> : () -> ()
    %cst_78 = arith.constant dense<0.000000e+00> : vector<16x8x8xf32>
    %280 = tpu.matmul %2, %279, %cst_78 {dimension_numbers = #tpu.dot_dimension_numbers<[0], [1], [1], [0, 2], [0, 1, 1, 0, 1, 2], [], []>} : vector<8x16xf32>, vector<8x8x8xf32>, vector<16x8x8xf32> -> vector<16x8x8xf32>
    %281 = tpu.transpose %280, [1, 0, 2] : vector<16x8x8xf32> -> vector<8x16x8xf32>
    "tpu.trace_stop"() : () -> ()
    %282 = vector.shape_cast %12 : vector<16xf32> to vector<1x16x1xf32>
    %283 = vector.broadcast %282 : vector<1x16x1xf32> to vector<8x16x8xf32>
    %284 = arith.addf %281, %283 : vector<8x16x8xf32>
    %285 = vector.extract_strided_slice %284 {offsets = [0, 0, 0], sizes = [2, 16, 8], strides = [1, 1, 1]} : vector<8x16x8xf32> to vector<2x16x8xf32>
    %286 = vector.shape_cast %285 : vector<2x16x8xf32> to vector<32x8xf32>
    %287 = vector.extract_strided_slice %284 {offsets = [2, 0, 0], sizes = [2, 16, 8], strides = [1, 1, 1]} : vector<8x16x8xf32> to vector<2x16x8xf32>
    %288 = vector.shape_cast %287 : vector<2x16x8xf32> to vector<32x8xf32>
    %289 = vector.extract_strided_slice %284 {offsets = [4, 0, 0], sizes = [2, 16, 8], strides = [1, 1, 1]} : vector<8x16x8xf32> to vector<2x16x8xf32>
    %290 = vector.shape_cast %289 : vector<2x16x8xf32> to vector<32x8xf32>
    %291 = vector.extract_strided_slice %284 {offsets = [6, 0, 0], sizes = [2, 16, 8], strides = [1, 1, 1]} : vector<8x16x8xf32> to vector<2x16x8xf32>
    %292 = vector.shape_cast %291 : vector<2x16x8xf32> to vector<32x8xf32>
    %293 = tpu.concatenate %286, %288, %290, %292 in 1 : vector<32x8xf32>, vector<32x8xf32>, vector<32x8xf32>, vector<32x8xf32> -> vector<32x32xf32>
    %294 = arith.addf %131, %293 : vector<32x32xf32>
    %c1_79 = arith.constant 1 : index
    %c0_80 = arith.constant 0 : index
    %295 = vector.load %arg4[%c1_79, %c0_80] : memref<2x32xf32, #tpu.memory_space<vmem>>, vector<1x32xf32>
    %296 = vector.shape_cast %295 : vector<1x32xf32> to vector<32xf32>
    %c1_81 = arith.constant 1 : index
    %c0_82 = arith.constant 0 : index
    %297 = vector.load %arg5[%c1_81, %c0_82] : memref<2x32xf32, #tpu.memory_space<vmem>>, vector<1x32xf32>
    %298 = vector.shape_cast %297 : vector<1x32xf32> to vector<32xf32>
    %cst_83 = arith.constant dense<0.000000e+00> : vector<32xf32>
    %299 = vector.multi_reduction <add>, %294, %cst_83 [1] : vector<32x32xf32> to vector<32xf32>
    %300 = vector.shape_cast %299 : vector<32xf32> to vector<32x1xf32>
    %cst_84 = arith.constant 3.200000e+01 : f32
    %301 = vector.broadcast %cst_84 : f32 to vector<32x1xf32>
    %302 = arith.divf %300, %301 : vector<32x1xf32>
    %303 = vector.broadcast %302 : vector<32x1xf32> to vector<32x32xf32>
    %304 = arith.subf %294, %303 : vector<32x32xf32>
    %305 = arith.mulf %304, %304 : vector<32x32xf32>
    %cst_85 = arith.constant dense<0.000000e+00> : vector<32xf32>
    %306 = vector.multi_reduction <add>, %305, %cst_85 [1] : vector<32x32xf32> to vector<32xf32>
    %307 = vector.shape_cast %306 : vector<32xf32> to vector<32x1xf32>
    %cst_86 = arith.constant 3.200000e+01 : f32
    %308 = vector.broadcast %cst_86 : f32 to vector<32x1xf32>
    %309 = arith.divf %307, %308 : vector<32x1xf32>
    %310 = vector.broadcast %302 : vector<32x1xf32> to vector<32x32xf32>
    %311 = arith.subf %294, %310 : vector<32x32xf32>
    %cst_87 = arith.constant 9.99999974E-6 : f32
    %312 = vector.broadcast %cst_87 : f32 to vector<32x1xf32>
    %313 = arith.addf %309, %312 : vector<32x1xf32>
    %314 = math.rsqrt %313 : vector<32x1xf32>
    %315 = vector.broadcast %314 : vector<32x1xf32> to vector<32x32xf32>
    %316 = arith.mulf %311, %315 : vector<32x32xf32>
    %317 = vector.shape_cast %296 : vector<32xf32> to vector<1x32xf32>
    %318 = vector.broadcast %317 : vector<1x32xf32> to vector<32x32xf32>
    %319 = arith.mulf %316, %318 : vector<32x32xf32>
    %320 = vector.shape_cast %298 : vector<32xf32> to vector<1x32xf32>
    %321 = vector.broadcast %320 : vector<1x32xf32> to vector<32x32xf32>
    %322 = arith.addf %319, %321 : vector<32x32xf32>
    %cst_88 = arith.constant dense<0.000000e+00> : vector<32x64xf32>
    %323 = tpu.matmul %322, %3, %cst_88 {dimension_numbers = #tpu.dot_dimension_numbers<[1], [0], [0], [1], [0, 0, 1, 1], [], []>} : vector<32x32xf32>, vector<32x64xf32>, vector<32x64xf32> -> vector<32x64xf32>
    %324 = vector.shape_cast %14 : vector<64xf32> to vector<1x64xf32>
    %325 = vector.broadcast %324 : vector<1x64xf32> to vector<32x64xf32>
    %326 = arith.addf %323, %325 : vector<32x64xf32>
    %cst_89 = arith.constant 5.000000e-01 : f32
    %327 = vector.broadcast %cst_89 : f32 to vector<32x64xf32>
    %328 = arith.mulf %327, %326 : vector<32x64xf32>
    %cst_90 = arith.constant 4.471500e-02 : f32
    %329 = vector.broadcast %cst_90 : f32 to vector<32x64xf32>
    %330 = arith.mulf %329, %326 : vector<32x64xf32>
    %331 = arith.mulf %330, %326 : vector<32x64xf32>
    %332 = arith.mulf %331, %326 : vector<32x64xf32>
    %333 = arith.addf %326, %332 : vector<32x64xf32>
    %cst_91 = arith.constant 0.797884583 : f32
    %334 = vector.broadcast %cst_91 : f32 to vector<32x64xf32>
    %335 = arith.mulf %334, %333 : vector<32x64xf32>
    %336 = math.tanh %335 : vector<32x64xf32>
    %cst_92 = arith.constant 1.000000e+00 : f32
    %337 = vector.broadcast %cst_92 : f32 to vector<32x64xf32>
    %338 = arith.addf %337, %336 : vector<32x64xf32>
    %339 = arith.mulf %328, %338 : vector<32x64xf32>
    %cst_93 = arith.constant dense<0.000000e+00> : vector<32x32xf32>
    %340 = tpu.matmul %339, %4, %cst_93 {dimension_numbers = #tpu.dot_dimension_numbers<[1], [0], [0], [1], [0, 0, 1, 1], [], []>} : vector<32x64xf32>, vector<64x32xf32>, vector<32x32xf32> -> vector<32x32xf32>
    %341 = arith.addf %181, %340 : vector<32x32xf32>
    %342 = vector.shape_cast %16 : vector<32xf32> to vector<1x32xf32>
    %343 = vector.broadcast %342 : vector<1x32xf32> to vector<32x32xf32>
    %344 = arith.addf %341, %343 : vector<32x32xf32>
    %345 = arith.addf %294, %344 : vector<32x32xf32>
    %cst_94 = arith.constant 5.000000e-01 : f32
    %346 = vector.broadcast %cst_94 : f32 to vector<32x32xf32>
    %347 = arith.mulf %345, %346 : vector<32x32xf32>
    %348 = vector.shape_cast %347 : vector<32x32xf32> to vector<2x16x32xf32>
    %c0_95 = arith.constant 0 : index
    %c0_96 = arith.constant 0 : index
    %c0_97 = arith.constant 0 : index
    %349 = vector.load %arg17[%c0_95, %c0_96, %c0_97] : memref<2x16x32xf32, #tpu.memory_space<vmem>>, vector<2x16x32xf32>
    tpu.vector_store %arg17[%c0_95, %c0_96, %c0_97], %348 {strides = array<i32>} : memref<2x16x32xf32, #tpu.memory_space<vmem>>, vector<2x16x32xf32>,
    return
  }
  func.func @transform_0(%arg0: i32) -> (i32, i32, i32) {
    %c0_i32 = arith.constant 0 : i32
    %c0_i32_0 = arith.constant 0 : i32
    %c0_i32_1 = arith.constant 0 : i32
    return %arg0, %c0_i32, %c0_i32_0 : i32, i32, i32
  }
  func.func @transform_1(%arg0: i32) -> (i32, i32) {
    %c0_i32 = arith.constant 0 : i32
    %c0_i32_0 = arith.constant 0 : i32
    %c0_i32_1 = arith.constant 0 : i32
    return %c0_i32, %c0_i32_0 : i32, i32
  }
  func.func @transform_2(%arg0: i32) -> (i32, i32) {
    %c0_i32 = arith.constant 0 : i32
    %c0_i32_0 = arith.constant 0 : i32
    %c0_i32_1 = arith.constant 0 : i32
    return %c0_i32, %c0_i32_0 : i32, i32
  }
  func.func @transform_3(%arg0: i32) -> (i32, i32) {
    %c0_i32 = arith.constant 0 : i32
    %c0_i32_0 = arith.constant 0 : i32
    %c0_i32_1 = arith.constant 0 : i32
    return %c0_i32, %c0_i32_0 : i32, i32
  }
  func.func @transform_4(%arg0: i32) -> (i32, i32) {
    %c0_i32 = arith.constant 0 : i32
    %c0_i32_0 = arith.constant 0 : i32
    %c0_i32_1 = arith.constant 0 : i32
    return %c0_i32, %c0_i32_0 : i32, i32
  }
  func.func @transform_5(%arg0: i32) -> (i32, i32) {
    %c0_i32 = arith.constant 0 : i32
    %c0_i32_0 = arith.constant 0 : i32
    %c0_i32_1 = arith.constant 0 : i32
    return %c0_i32, %c0_i32_0 : i32, i32
  }
  func.func @transform_6(%arg0: i32) -> (i32, i32) {
    %c0_i32 = arith.constant 0 : i32
    %c0_i32_0 = arith.constant 0 : i32
    %c0_i32_1 = arith.constant 0 : i32
    return %c0_i32, %c0_i32_0 : i32, i32
  }
  func.func @transform_7(%arg0: i32) -> (i32, i32) {
    %c0_i32 = arith.constant 0 : i32
    %c0_i32_0 = arith.constant 0 : i32
    %c0_i32_1 = arith.constant 0 : i32
    return %c0_i32, %c0_i32_0 : i32, i32
  }
  func.func @transform_8(%arg0: i32) -> (i32, i32) {
    %c0_i32 = arith.constant 0 : i32
    %c0_i32_0 = arith.constant 0 : i32
    %c0_i32_1 = arith.constant 0 : i32
    return %c0_i32, %c0_i32_0 : i32, i32
  }
  func.func @transform_9(%arg0: i32) -> (i32, i32) {
    %c0_i32 = arith.constant 0 : i32
    %c0_i32_0 = arith.constant 0 : i32
    %c0_i32_1 = arith.constant 0 : i32
    return %c0_i32, %c0_i32_0 : i32, i32
  }
  func.func @transform_10(%arg0: i32) -> (i32, i32) {
    %c0_i32 = arith.constant 0 : i32
    %c0_i32_0 = arith.constant 0 : i32
    %c0_i32_1 = arith.constant 0 : i32
    return %c0_i32, %c0_i32_0 : i32, i32
  }
  func.func @transform_11(%arg0: i32) -> (i32, i32) {
    %c0_i32 = arith.constant 0 : i32
    %c0_i32_0 = arith.constant 0 : i32
    %c0_i32_1 = arith.constant 0 : i32
    return %c0_i32, %c0_i32_0 : i32, i32
  }
  func.func @transform_12(%arg0: i32) -> (i32, i32) {
    %c0_i32 = arith.constant 0 : i32
    %c0_i32_0 = arith.constant 0 : i32
    %c0_i32_1 = arith.constant 0 : i32
    return %c0_i32, %c0_i32_0 : i32, i32
  }
  func.func @transform_13(%arg0: i32) -> (i32, i32) {
    %c0_i32 = arith.constant 0 : i32
    %c0_i32_0 = arith.constant 0 : i32
    %c0_i32_1 = arith.constant 0 : i32
    return %c0_i32, %c0_i32_0 : i32, i32
  }
  func.func @transform_14(%arg0: i32) -> (i32, i32) {
    %c0_i32 = arith.constant 0 : i32
    %c0_i32_0 = arith.constant 0 : i32
    %c0_i32_1 = arith.constant 0 : i32
    return %c0_i32, %c0_i32_0 : i32, i32
  }
  func.func @transform_15(%arg0: i32) -> (i32, i32) {
    %c0_i32 = arith.constant 0 : i32
    %c0_i32_0 = arith.constant 0 : i32
    %c0_i32_1 = arith.constant 0 : i32
    return %c0_i32, %c0_i32_0 : i32, i32
  }
  func.func @transform_16(%arg0: i32) -> (i32, i32, i32) {
    %c0_i32 = arith.constant 0 : i32
    %c0_i32_0 = arith.constant 0 : i32
    %c0_i32_1 = arith.constant 0 : i32
    return %arg0, %c0_i32, %c0_i32_0 : i32, i32, i32
  }
}

</mosaic_0001>

<llo_original>
// kernel: tpu_custom_call.1
$region0: #{tpu_custom_call.1}
  #allocation0 [shape = 'u32[]', space=smem, size = 0x4, offset = 0x4, fixed_abs, tag = 'smem constant byte address 0x4 - core index']
  #allocation1 [shape = 'u32[144,128]{1,0:T(1,128)}', space=vmem, size = 0x12000, scoped, tag = 'internal scratch']
  %s0 = inlined_call_operand.vmem [shape: f32[2,16,32], index: 0, kind: input, shape index: {}]
  %s1 = inlined_call_operand.vmem [shape: f32[2,32], index: 1, kind: input, shape index: {}]
  %s2 = inlined_call_operand.vmem [shape: f32[2,32], index: 2, kind: input, shape index: {}]
  %s3 = inlined_call_operand.vmem [shape: f32[2,32], index: 3, kind: input, shape index: {}]
  %s4 = inlined_call_operand.vmem [shape: f32[2,32], index: 4, kind: input, shape index: {}]
  %s5 = inlined_call_operand.vmem [shape: f32[32,96], index: 5, kind: input, shape index: {}]
  %s6 = inlined_call_operand.vmem [shape: f32[16,8], index: 6, kind: input, shape index: {}]
  %s7 = inlined_call_operand.vmem [shape: f32[1,8], index: 7, kind: input, shape index: {}]
  %s8 = inlined_call_operand.vmem [shape: f32[1,8], index: 8, kind: input, shape index: {}]
  %s9 = inlined_call_operand.vmem [shape: f32[1,8], index: 9, kind: input, shape index: {}]
  %s10 = inlined_call_operand.vmem [shape: f32[8,16], index: 10, kind: input, shape index: {}]
  %s11 = inlined_call_operand.vmem [shape: f32[1,16], index: 11, kind: input, shape index: {}]
  %s12 = inlined_call_operand.vmem [shape: f32[32,64], index: 12, kind: input, shape index: {}]
  %s13 = inlined_call_operand.vmem [shape: f32[1,64], index: 13, kind: input, shape index: {}]
  %s14 = inlined_call_operand.vmem [shape: f32[64,32], index: 14, kind: input, shape index: {}]
  %s15 = inlined_call_operand.vmem [shape: f32[1,32], index: 15, kind: input, shape index: {}]
  %s16 = inlined_call_operand.hbm [shape: f32[2,16,32], index: 16, kind: output, shape index: {}]
  %s17 = sld [smem:[#allocation0]]
  $region74: #{tpu_custom_call.1} parent=0
    _
  %s19 = ssub.s32 1, %s17
  %s20 = scalar_select 0, %s19, %s17
  $region1: #{tpu_custom_call.1} parent=0
    #allocation2 [shape = 'u8[16384]{0}', space=vmem, size = 0x4000, scoped, tag = 'output window, operand 0, single buffered']
    #allocation3 [shape = 's32[1]{0}', space=sflag, size = 0x4, scoped, tag = 'scoped memory for tpu_custom_call.1']
    %21 = vsyncpa [#allocation3], 0
    // Predicated region
    $region2: #{tpu_custom_call.1} parent=1 // pred_check
      _
    $region3: #{tpu_custom_call.1} parent=1 // pred_check_branch
      %23 = sbr.rel (0) target = $region5
    $region4: #{tpu_custom_call.1} parent=1 // pred_region
      _
    $region5: #{tpu_custom_call.1} parent=1 // pred_fallthru
      _
    // Predicated region
    $region6: #{tpu_custom_call.1} parent=1 // pred_check
      _
    $region7: #{tpu_custom_call.1} parent=1 // pred_check_branch
      %25 = sbr.rel (0) target = $region9
    $region8: #{tpu_custom_call.1} parent=1 // pred_region
      _
    $region9: #{tpu_custom_call.1} parent=1 // pred_fallthru
      _
    // Predicated region
    $region10: #{tpu_custom_call.1} parent=1 // pred_check
      _
    $region11: #{tpu_custom_call.1} parent=1 // pred_check_branch
      %27 = sbr.rel (0) target = $region13
    $region12: #{tpu_custom_call.1} parent=1 // pred_region
      _
    $region13: #{tpu_custom_call.1} parent=1 // pred_fallthru
      _
    // Predicated region
    $region14: #{tpu_custom_call.1} parent=1 // pred_check
      _
    $region15: #{tpu_custom_call.1} parent=1 // pred_check_branch
      %29 = sbr.rel (0) target = $region17
    $region16: #{tpu_custom_call.1} parent=1 // pred_region
      _
    $region17: #{tpu_custom_call.1} parent=1 // pred_fallthru
      _
    // Predicated region
    $region18: #{tpu_custom_call.1} parent=1 // pred_check
      _
    $region19: #{tpu_custom_call.1} parent=1 // pred_check_branch
      %31 = sbr.rel (0) target = $region21
    $region20: #{tpu_custom_call.1} parent=1 // pred_region
      _
    $region21: #{tpu_custom_call.1} parent=1 // pred_fallthru
      _
    // Predicated region
    $region22: #{tpu_custom_call.1} parent=1 // pred_check
      _
    $region23: #{tpu_custom_call.1} parent=1 // pred_check_branch
      %33 = sbr.rel (0) target = $region25
    $region24: #{tpu_custom_call.1} parent=1 // pred_region
      _
    $region25: #{tpu_custom_call.1} parent=1 // pred_fallthru
      _
    // Predicated region
    $region26: #{tpu_custom_call.1} parent=1 // pred_check
      _
    $region27: #{tpu_custom_call.1} parent=1 // pred_check_branch
      %35 = sbr.rel (0) target = $region29
    $region28: #{tpu_custom_call.1} parent=1 // pred_region
      _
    $region29: #{tpu_custom_call.1} parent=1 // pred_fallthru
      _
    // Predicated region
    $region30: #{tpu_custom_call.1} parent=1 // pred_check
      _
    $region31: #{tpu_custom_call.1} parent=1 // pred_check_branch
      %37 = sbr.rel (0) target = $region33
    $region32: #{tpu_custom_call.1} parent=1 // pred_region
      _
    $region33: #{tpu_custom_call.1} parent=1 // pred_fallthru
      _
    // Predicated region
    $region34: #{tpu_custom_call.1} parent=1 // pred_check
      _
    $region35: #{tpu_custom_call.1} parent=1 // pred_check_branch
      %39 = sbr.rel (0) target = $region37
    $region36: #{tpu_custom_call.1} parent=1 // pred_region
      _
    $region37: #{tpu_custom_call.1} parent=1 // pred_fallthru
      _
    // Predicated region
    $region38: #{tpu_custom_call.1} parent=1 // pred_check
      _
    $region39: #{tpu_custom_call.1} parent=1 // pred_check_branch
      %41 = sbr.rel (0) target = $region41
    $region40: #{tpu_custom_call.1} parent=1 // pred_region
      _
    $region41: #{tpu_custom_call.1} parent=1 // pred_fallthru
      _
    // Predicated region
    $region42: #{tpu_custom_call.1} parent=1 // pred_check
      _
    $region43: #{tpu_custom_call.1} parent=1 // pred_check_branch
      %43 = sbr.rel (0) target = $region45
    $region44: #{tpu_custom_call.1} parent=1 // pred_region
      _
    $region45: #{tpu_custom_call.1} parent=1 // pred_fallthru
      _
    // Predicated region
    $region46: #{tpu_custom_call.1} parent=1 // pred_check
      _
    $region47: #{tpu_custom_call.1} parent=1 // pred_check_branch
      %45 = sbr.rel (0) target = $region49
    $region48: #{tpu_custom_call.1} parent=1 // pred_region
      _
    $region49: #{tpu_custom_call.1} parent=1 // pred_fallthru
      _
    // Predicated region
    $region50: #{tpu_custom_call.1} parent=1 // pred_check
      _
    $region51: #{tpu_custom_call.1} parent=1 // pred_check_branch
      %47 = sbr.rel (0) target = $region53
    $region52: #{tpu_custom_call.1} parent=1 // pred_region
      _
    $region53: #{tpu_custom_call.1} parent=1 // pred_fallthru
      _
    // Predicated region
    $region54: #{tpu_custom_call.1} parent=1 // pred_check
      _
    $region55: #{tpu_custom_call.1} parent=1 // pred_check_branch
      %49 = sbr.rel (0) target = $region57
    $region56: #{tpu_custom_call.1} parent=1 // pred_region
      _
    $region57: #{tpu_custom_call.1} parent=1 // pred_fallthru
      _
    // Predicated region
    $region58: #{tpu_custom_call.1} parent=1 // pred_check
      _
    $region59: #{tpu_custom_call.1} parent=1 // pred_check_branch
      %51 = sbr.rel (0) target = $region61
    $region60: #{tpu_custom_call.1} parent=1 // pred_region
      _
    $region61: #{tpu_custom_call.1} parent=1 // pred_fallthru
      _
    // Predicated region
    $region62: #{tpu_custom_call.1} parent=1 // pred_check
      _
    $region63: #{tpu_custom_call.1} parent=1 // pred_check_branch
      %53 = sbr.rel (0) target = $region65
    $region64: #{tpu_custom_call.1} parent=1 // pred_region
      _
    $region65: #{tpu_custom_call.1} parent=1 // pred_fallthru
      _
    %v54 = vld [vmem:[%s5] sm:$0xff]
    %v55 = vld [vmem:[%s5 + $0x8] sm:$0xff]
    %v56 = vld [vmem:[%s5 + $0x10] sm:$0xff]
    %v57 = vld [vmem:[%s5 + $0x18] sm:$0xff]
    %v58 = vld [vmem:[%s6] sm:$0xff]
    %v59 = vld [vmem:[%s6 + $0x8] sm:$0xff]
    %v60 = vld [vmem:[%s10] sm:$0xff]
    %v61 = vld [vmem:[%s12] sm:$0xff]
    %v62 = vld [vmem:[%s12 + $0x8] sm:$0xff]
    %v63 = vld [vmem:[%s12 + $0x10] sm:$0xff]
    %v64 = vld [vmem:[%s12 + $0x18] sm:$0xff]
    %v65 = vld [vmem:[%s14] sm:$0xff]
    %v66 = vld [vmem:[%s14 + $0x8] sm:$0xff]
    %v67 = vld [vmem:[%s14 + $0x10] sm:$0xff]
    %v68 = vld [vmem:[%s14 + $0x18] sm:$0xff]
    %v69 = vld [vmem:[%s14 + $0x20] sm:$0xff]
    %v70 = vld [vmem:[%s14 + $0x28] sm:$0xff]
    %v71 = vld [vmem:[%s14 + $0x30] sm:$0xff]
    %v72 = vld [vmem:[%s14 + $0x38] sm:$0xff]
    %v73 = vld [vmem:[%s7] sm:$0x1]
    %v74 = vld [vmem:[%s8] sm:$0x1]
    %v75 = vld [vmem:[%s9] sm:$0x1]
    %v76 = vld [vmem:[%s11] sm:$0x1]
    %v77 = vld [vmem:[%s13] sm:$0x1]
    %v78 = vld [vmem:[%s15] sm:$0x1]
    %v79 = vld [vmem:[%s0] sm:$0xff]
    %v80 = vld [vmem:[%s0 + $0x8] sm:$0xff]
    %v81 = vld [vmem:[%s0 + $0x10] sm:$0xff]
    %v82 = vld [vmem:[%s0 + $0x18] sm:$0xff]
    %v83 = vld [vmem:[%s1] sm:$0x1]
    %v84 = vld [vmem:[%s2] sm:$0x1]
    %vm85 = vcmask 261120
    %v86 = vsel %vm85, %v79, 0.0
    %87 = vadd.xlane.f32.xlu0 %v86
    %v88 = vpop.xlane.xlu0 %87
    %v89 = vsel %vm85, %v80, 0.0
    %90 = vadd.xlane.f32.xlu0 %v89
    %v91 = vpop.xlane.xlu0 %90
    %v92 = vsel %vm85, %v81, 0.0
    %93 = vadd.xlane.f32.xlu0 %v92
    %v94 = vpop.xlane.xlu0 %93
    %v95 = vsel %vm85, %v82, 0.0
    %96 = vadd.xlane.f32.xlu0 %v95
    %v97 = vpop.xlane.xlu0 %96
    %v98 = vrcp.pop 32.0
    %v99 = vmul.f32 %v88, %v98
    %v100 = vmul.f32 %v91, %v98
    %v101 = vmul.f32 %v94, %v98
    %v102 = vmul.f32 %v97, %v98
    %v103 = vsub.f32 %v79, %v99
    %v104 = vsub.f32 %v80, %v100
    %v105 = vsub.f32 %v81, %v101
    %v106 = vsub.f32 %v82, %v102
    %v107 = vmul.f32 %v103, %v103
    %v108 = vmul.f32 %v104, %v104
    %v109 = vmul.f32 %v105, %v105
    %v110 = vmul.f32 %v106, %v106
    %v111 = vsel %vm85, %v107, 0.0
    %112 = vadd.xlane.f32.xlu0 %v111
    %v113 = vpop.xlane.xlu0 %112
    %v114 = vsel %vm85, %v108, 0.0
    %115 = vadd.xlane.f32.xlu0 %v114
    %v116 = vpop.xlane.xlu0 %115
    %v117 = vsel %vm85, %v109, 0.0
    %118 = vadd.xlane.f32.xlu0 %v117
    %v119 = vpop.xlane.xlu0 %118
    %v120 = vsel %vm85, %v110, 0.0
    %121 = vadd.xlane.f32.xlu0 %v120
    %v122 = vpop.xlane.xlu0 %121
    %v123 = vmul.f32 %v113, %v98
    %v124 = vmul.f32 %v116, %v98
    %v125 = vmul.f32 %v119, %v98
    %v126 = vmul.f32 %v122, %v98
    %v127 = vadd.f32 %v123, 1e-05
    %v128 = vadd.f32 %v124, 1e-05
    %v129 = vadd.f32 %v125, 1e-05
    %v130 = vadd.f32 %v126, 1e-05
    %v131 = vrsqrt.pop %v127
    %v132 = vrsqrt.pop %v128
    %v133 = vrsqrt.pop %v129
    %v134 = vrsqrt.pop %v130
    %v135 = vmul.f32 %v103, %v131
    %v136 = vmul.f32 %v104, %v132
    %v137 = vmul.f32 %v105, %v133
    %v138 = vmul.f32 %v106, %v134
    %v139 = vlaneseq
    %v140 = vshrl.u32 %v139, 7
    %v141 = vsub.s32 0, %v140
    %v142 = vrot.slane %v83, %v141
    %v143 = vmul.f32 %v135, %v142
    %v144 = vmul.f32 %v136, %v142
    %v145 = vmul.f32 %v137, %v142
    %v146 = vmul.f32 %v138, %v142
    %v147 = vlaneseq
    %v148 = vshrl.u32 %v147, 7
    %v149 = vsub.s32 0, %v148
    %v150 = vrot.slane %v84, %v149
    %v151 = vadd.f32 %v143, %v150
    %v152 = vadd.f32 %v144, %v150
    %v153 = vadd.f32 %v145, %v150
    %v154 = vadd.f32 %v146, %v150
    %v156 = vsel %vm85, %v151, 0
    %v159 = vsel %vm85, %v152, 0
    %v162 = vsel %vm85, %v153, 0
    %v165 = vsel %vm85, %v154, 0
    %167 = vmatprep.subr.mxu0 0.0
    %168 = vmatpush1.msra.mxu0 %v54
    %169 = vmatprep.subr.mxu0 0.0
    %170 = vmatpush1.msra.mxu0 %v55
    %171 = vmatprep.subr.mxu0 0.0
    %172 = vmatpush1.msra.mxu0 %v56
    %173 = vmatprep.subr.mxu0 0.0
    %174 = vmatpush1.msra.mxu0 %v57
    %175 = vmatprep.subr.mxu0 0.0
    %176 = vmatpush1.msra.mxu0 0.0
    %177 = vmatprep.subr.mxu0 0.0
    %178 = vmatpush1.msra.mxu0 0.0
    %179 = vmatprep.subr.mxu0 0.0
    %180 = vmatpush1.msra.mxu0 0.0
    %181 = vmatprep.subr.mxu0 0.0
    %182 = vmatpush1.msra.mxu0 0.0
    %183 = vmatprep.subr.mxu0 0.0
    %184 = vmatpush1.msra.mxu0 0.0
    %185 = vmatprep.subr.mxu0 0.0
    %186 = vmatpush1.msra.mxu0 0.0
    %187 = vmatprep.subr.mxu0 0.0
    %188 = vmatpush1.msra.mxu0 0.0
    %189 = vmatprep.subr.mxu0 0.0
    %190 = vmatpush1.msra.mxu0 0.0
    %191 = vmatprep.subr.mxu0 0.0
    %192 = vmatpush1.msra.mxu0 0.0
    %193 = vmatprep.subr.mxu0 0.0
    %194 = vmatpush1.msra.mxu0 0.0
    %195 = vmatprep.subr.mxu0 0.0
    %196 = vmatpush1.msra.mxu0 0.0
    %197 = vmatprep.subr.mxu0 0.0
    %198 = vmatpush1.msra.mxu0 0.0
    %199 = vmatprep.subr.mxu0 0.0
    %200 = vmatpush1.msra.mxu0 0.0
    %201 = vmatprep.subr.mxu0 0.0
    %202 = vmatpush1.msra.mxu0 0.0
    %203 = vmatprep.subr.mxu0 0.0
    %204 = vmatpush1.msra.mxu0 0.0
    %205 = vmatprep.subr.mxu0 0.0
    %206 = vmatpush1.msra.mxu0 0.0
    %207 = vmatprep.subr.mxu0 0.0
    %208 = vmatpush1.msra.mxu0 0.0
    %209 = vmatprep.subr.mxu0 0.0
    %210 = vmatpush1.msra.mxu0 0.0
    %211 = vmatprep.subr.mxu0 0.0
    %212 = vmatpush1.msra.mxu0 0.0
    %213 = vmatprep.subr.mxu0 0.0
    %214 = vmatpush1.msra.mxu0 0.0
    %215 = vmatprep.subr.mxu0 0.0
    %216 = vmatpush1.msra.mxu0 0.0
    %217 = vmatprep.subr.mxu0 0.0
    %218 = vmatpush1.msra.mxu0 0.0
    %219 = vmatprep.subr.mxu0 0.0
    %220 = vmatpush1.msra.mxu0 0.0
    %221 = vmatprep.subr.mxu0 0.0
    %222 = vmatpush1.msra.mxu0 0.0
    %223 = vmatprep.subr.mxu0 0.0
    %224 = vmatpush1.msra.mxu0 0.0
    %225 = vmatprep.subr.mxu0 0.0
    %226 = vmatpush1.msra.mxu0 0.0
    %227 = vmatprep.subr.mxu0 0.0
    %228 = vmatpush1.msra.mxu0 0.0
    %229 = vmatprep.subr.mxu0 0.0
    %230 = vmatpush1.msra.mxu0 0.0
    %231 = vmatprep.mubr.f32.mxu0 0.0
    %232 = vmatmul.mubr.f32.gmra.mrb[0].mxu0 %v156
    %v233 = vpop.f32.mrb[0].mxu0
    %v234 = vadd.f32 0.0, %v233
    %v235 = vpop.f32.mrb[0].mxu0
    %236 = vmatprep.mubr.f32.mxu0 0.0
    %237 = vmatmul.mubr.f32.gmra.mrb[0].mxu0 %v159
    %v238 = vpop.f32.mrb[0].mxu0
    %v239 = vadd.f32 0.0, %v238
    %v240 = vpop.f32.mrb[0].mxu0
    %241 = vmatprep.mubr.f32.mxu0 0.0
    %242 = vmatmul.mubr.f32.gmra.mrb[0].mxu0 %v162
    %v243 = vpop.f32.mrb[0].mxu0
    %v244 = vadd.f32 0.0, %v243
    %v245 = vpop.f32.mrb[0].mxu0
    %246 = vmatprep.mubr.f32.mxu0 0.0
    %247 = vmatmul.mubr.f32.gmra.mrb[0].mxu0 %v165
    %v248 = vpop.f32.mrb[0].mxu0
    %v249 = vadd.f32 0.0, %v248
    %v250 = vpop.f32.mrb[0].mxu0
    %251 = vdwg.mxu0
    %256 = vrot.lane.b32.xlu0 %v234, 120
    %v257 = vpop.permute.xlu0 %256
    %258 = vrot.lane.b32.xlu0 %v239, 120
    %v259 = vpop.permute.xlu0 %258
    %260 = vrot.lane.b32.xlu0 %v244, 120
    %v261 = vpop.permute.xlu0 %260
    %262 = vrot.lane.b32.xlu0 %v249, 120
    %v263 = vpop.permute.xlu0 %262
    %264 = vrot.lane.b32.xlu0 %v234, 112
    %v265 = vpop.permute.xlu0 %264
    %266 = vrot.lane.b32.xlu0 %v239, 112
    %v267 = vpop.permute.xlu0 %266
    %268 = vrot.lane.b32.xlu0 %v244, 112
    %v269 = vpop.permute.xlu0 %268
    %270 = vrot.lane.b32.xlu0 %v249, 112
    %v271 = vpop.permute.xlu0 %270
    %272 = vrot.lane.b32.xlu0 %v234, 104
    %v273 = vpop.permute.xlu0 %272
    %274 = vrot.lane.b32.xlu0 %v239, 104
    %v275 = vpop.permute.xlu0 %274
    %276 = vrot.lane.b32.xlu0 %v244, 104
    %v277 = vpop.permute.xlu0 %276
    %278 = vrot.lane.b32.xlu0 %v249, 104
    %v279 = vpop.permute.xlu0 %278
    %280 = vrot.lane.b32.xlu0 %v234, 96
    %v281 = vpop.permute.xlu0 %280
    %282 = vrot.lane.b32.xlu0 %v239, 96
    %v283 = vpop.permute.xlu0 %282
    %vm284 = vcmask 64512
    %v285 = vsel %vm284, %v234, 0
    %v287 = vsel %vm284, %v239, 0
    %v289 = vsel %vm284, %v281, 0
    %v291 = vsel %vm284, %v283, 0
    %293 = vmatprep.subr.mxu0 0.0
    %294 = vmatpush1.xpose.msra.mxu0 %v289
    %295 = vmatprep.subr.mxu0 0.0
    %296 = vmatpush1.xpose.msra.mxu0 %v291
    %297 = vmatprep.subr.mxu0 0.0
    %298 = vmatpush1.xpose.msra.mxu0 0.0
    %299 = vmatprep.subr.mxu0 0.0
    %300 = vmatpush1.xpose.msra.mxu0 0.0
    %301 = vmatprep.subr.mxu0 0.0
    %302 = vmatpush1.xpose.msra.mxu0 0.0
    %303 = vmatprep.subr.mxu0 0.0
    %304 = vmatpush1.xpose.msra.mxu0 0.0
    %305 = vmatprep.subr.mxu0 0.0
    %306 = vmatpush1.xpose.msra.mxu0 0.0
    %307 = vmatprep.subr.mxu0 0.0
    %308 = vmatpush1.xpose.msra.mxu0 0.0
    %309 = vmatprep.subr.mxu0 0.0
    %310 = vmatpush1.xpose.msra.mxu0 0.0
    %311 = vmatprep.subr.mxu0 0.0
    %312 = vmatpush1.xpose.msra.mxu0 0.0
    %313 = vmatprep.subr.mxu0 0.0
    %314 = vmatpush1.xpose.msra.mxu0 0.0
    %315 = vmatprep.subr.mxu0 0.0
    %316 = vmatpush1.xpose.msra.mxu0 0.0
    %317 = vmatprep.subr.mxu0 0.0
    %318 = vmatpush1.xpose.msra.mxu0 0.0
    %319 = vmatprep.subr.mxu0 0.0
    %320 = vmatpush1.xpose.msra.mxu0 0.0
    %321 = vmatprep.subr.mxu0 0.0
    %322 = vmatpush1.xpose.msra.mxu0 0.0
    %323 = vmatprep.subr.mxu0 0.0
    %324 = vmatpush1.xpose.msra.mxu0 0.0
    %325 = vmatprep.subr.mxu0 0.0
    %326 = vmatpush1.xpose.msra.mxu0 0.0
    %327 = vmatprep.subr.mxu0 0.0
    %328 = vmatpush1.xpose.msra.mxu0 0.0
    %329 = vmatprep.subr.mxu0 0.0
    %330 = vmatpush1.xpose.msra.mxu0 0.0
    %331 = vmatprep.subr.mxu0 0.0
    %332 = vmatpush1.xpose.msra.mxu0 0.0
    %333 = vmatprep.subr.mxu0 0.0
    %334 = vmatpush1.xpose.msra.mxu0 0.0
    %335 = vmatprep.subr.mxu0 0.0
    %336 = vmatpush1.xpose.msra.mxu0 0.0
    %337 = vmatprep.subr.mxu0 0.0
    %338 = vmatpush1.xpose.msra.mxu0 0.0
    %339 = vmatprep.subr.mxu0 0.0
    %340 = vmatpush1.xpose.msra.mxu0 0.0
    %341 = vmatprep.subr.mxu0 0.0
    %342 = vmatpush1.xpose.msra.mxu0 0.0
    %343 = vmatprep.subr.mxu0 0.0
    %344 = vmatpush1.xpose.msra.mxu0 0.0
    %345 = vmatprep.subr.mxu0 0.0
    %346 = vmatpush1.xpose.msra.mxu0 0.0
    %347 = vmatprep.subr.mxu0 0.0
    %348 = vmatpush1.xpose.msra.mxu0 0.0
    %349 = vmatprep.subr.mxu0 0.0
    %350 = vmatpush1.xpose.msra.mxu0 0.0
    %351 = vmatprep.subr.mxu0 0.0
    %352 = vmatpush1.xpose.msra.mxu0 0.0
    %353 = vmatprep.subr.mxu0 0.0
    %354 = vmatpush1.xpose.msra.mxu0 0.0
    %355 = vmatprep.subr.mxu0 0.0
    %356 = vmatpush1.xpose.msra.mxu0 0.0
    %357 = vmatprep.mubr.f32.mxu0 0.0
    %358 = vmatmul.mubr.f32.gmra.mrb[0].mxu0 %v285
    %v359 = vpop.f32.mrb[0].mxu0
    %v360 = vadd.f32 0.0, %v359
    %v361 = vpop.f32.mrb[0].mxu0
    %362 = vmatprep.mubr.f32.mxu0 0.0
    %363 = vmatmul.mubr.f32.gmra.mrb[0].mxu0 %v287
    %v364 = vpop.f32.mrb[0].mxu0
    %v365 = vadd.f32 0.0, %v364
    %v366 = vpop.f32.mrb[0].mxu0
    %367 = vdwg.mxu0
    %368 = vrot.lane.b32.xlu0 %v244, 96
    %v369 = vpop.permute.xlu0 %368
    %370 = vrot.lane.b32.xlu0 %v249, 96
    %v371 = vpop.permute.xlu0 %370
    %v372 = vsel %vm284, %v244, 0
    %v374 = vsel %vm284, %v249, 0
    %v376 = vsel %vm284, %v369, 0
    %v378 = vsel %vm284, %v371, 0
    %380 = vmatprep.subr.mxu0 0.0
    %381 = vmatpush1.xpose.msra.mxu0 %v376
    %382 = vmatprep.subr.mxu0 0.0
    %383 = vmatpush1.xpose.msra.mxu0 %v378
    %384 = vmatprep.subr.mxu0 0.0
    %385 = vmatpush1.xpose.msra.mxu0 0.0
    %386 = vmatprep.subr.mxu0 0.0
    %387 = vmatpush1.xpose.msra.mxu0 0.0
    %388 = vmatprep.subr.mxu0 0.0
    %389 = vmatpush1.xpose.msra.mxu0 0.0
    %390 = vmatprep.subr.mxu0 0.0
    %391 = vmatpush1.xpose.msra.mxu0 0.0
    %392 = vmatprep.subr.mxu0 0.0
    %393 = vmatpush1.xpose.msra.mxu0 0.0
    %394 = vmatprep.subr.mxu0 0.0
    %395 = vmatpush1.xpose.msra.mxu0 0.0
    %396 = vmatprep.subr.mxu0 0.0
    %397 = vmatpush1.xpose.msra.mxu0 0.0
    %398 = vmatprep.subr.mxu0 0.0
    %399 = vmatpush1.xpose.msra.mxu0 0.0
    %400 = vmatprep.subr.mxu0 0.0
    %401 = vmatpush1.xpose.msra.mxu0 0.0
    %402 = vmatprep.subr.mxu0 0.0
    %403 = vmatpush1.xpose.msra.mxu0 0.0
    %404 = vmatprep.subr.mxu0 0.0
    %405 = vmatpush1.xpose.msra.mxu0 0.0
    %406 = vmatprep.subr.mxu0 0.0
    %407 = vmatpush1.xpose.msra.mxu0 0.0
    %408 = vmatprep.subr.mxu0 0.0
    %409 = vmatpush1.xpose.msra.mxu0 0.0
    %410 = vmatprep.subr.mxu0 0.0
    %411 = vmatpush1.xpose.msra.mxu0 0.0
    %412 = vmatprep.subr.mxu0 0.0
    %413 = vmatpush1.xpose.msra.mxu0 0.0
    %414 = vmatprep.subr.mxu0 0.0
    %415 = vmatpush1.xpose.msra.mxu0 0.0
    %416 = vmatprep.subr.mxu0 0.0
    %417 = vmatpush1.xpose.msra.mxu0 0.0
    %418 = vmatprep.subr.mxu0 0.0
    %419 = vmatpush1.xpose.msra.mxu0 0.0
    %420 = vmatprep.subr.mxu0 0.0
    %421 = vmatpush1.xpose.msra.mxu0 0.0
    %422 = vmatprep.subr.mxu0 0.0
    %423 = vmatpush1.xpose.msra.mxu0 0.0
    %424 = vmatprep.subr.mxu0 0.0
    %425 = vmatpush1.xpose.msra.mxu0 0.0
    %426 = vmatprep.subr.mxu0 0.0
    %427 = vmatpush1.xpose.msra.mxu0 0.0
    %428 = vmatprep.subr.mxu0 0.0
    %429 = vmatpush1.xpose.msra.mxu0 0.0
    %430 = vmatprep.subr.mxu0 0.0
    %431 = vmatpush1.xpose.msra.mxu0 0.0
    %432 = vmatprep.subr.mxu0 0.0
    %433 = vmatpush1.xpose.msra.mxu0 0.0
    %434 = vmatprep.subr.mxu0 0.0
    %435 = vmatpush1.xpose.msra.mxu0 0.0
    %436 = vmatprep.subr.mxu0 0.0
    %437 = vmatpush1.xpose.msra.mxu0 0.0
    %438 = vmatprep.subr.mxu0 0.0
    %439 = vmatpush1.xpose.msra.mxu0 0.0
    %440 = vmatprep.subr.mxu0 0.0
    %441 = vmatpush1.xpose.msra.mxu0 0.0
    %442 = vmatprep.subr.mxu0 0.0
    %443 = vmatpush1.xpose.msra.mxu0 0.0
    %444 = vmatprep.mubr.f32.mxu0 0.0
    %445 = vmatmul.mubr.f32.gmra.mrb[0].mxu0 %v372
    %v446 = vpop.f32.mrb[0].mxu0
    %v447 = vadd.f32 0.0, %v446
    %v448 = vpop.f32.mrb[0].mxu0
    %449 = vmatprep.mubr.f32.mxu0 0.0
    %450 = vmatmul.mubr.f32.gmra.mrb[0].mxu0 %v374
    %v451 = vpop.f32.mrb[0].mxu0
    %v452 = vadd.f32 0.0, %v451
    %v453 = vpop.f32.mrb[0].mxu0
    %454 = vdwg.mxu0
    %455 = vrot.lane.b32.xlu0 %v257, 96
    %v456 = vpop.permute.xlu0 %455
    %457 = vrot.lane.b32.xlu0 %v259, 96
    %v458 = vpop.permute.xlu0 %457
    %v459 = vsel %vm284, %v257, 0
    %v461 = vsel %vm284, %v259, 0
    %v463 = vsel %vm284, %v456, 0
    %v465 = vsel %vm284, %v458, 0
    %467 = vmatprep.subr.mxu0 0.0
    %468 = vmatpush1.xpose.msra.mxu0 %v463
    %469 = vmatprep.subr.mxu0 0.0
    %470 = vmatpush1.xpose.msra.mxu0 %v465
    %471 = vmatprep.subr.mxu0 0.0
    %472 = vmatpush1.xpose.msra.mxu0 0.0
    %473 = vmatprep.subr.mxu0 0.0
    %474 = vmatpush1.xpose.msra.mxu0 0.0
    %475 = vmatprep.subr.mxu0 0.0
    %476 = vmatpush1.xpose.msra.mxu0 0.0
    %477 = vmatprep.subr.mxu0 0.0
    %478 = vmatpush1.xpose.msra.mxu0 0.0
    %479 = vmatprep.subr.mxu0 0.0
    %480 = vmatpush1.xpose.msra.mxu0 0.0
    %481 = vmatprep.subr.mxu0 0.0
    %482 = vmatpush1.xpose.msra.mxu0 0.0
    %483 = vmatprep.subr.mxu0 0.0
    %484 = vmatpush1.xpose.msra.mxu0 0.0
    %485 = vmatprep.subr.mxu0 0.0
    %486 = vmatpush1.xpose.msra.mxu0 0.0
    %487 = vmatprep.subr.mxu0 0.0
    %488 = vmatpush1.xpose.msra.mxu0 0.0
    %489 = vmatprep.subr.mxu0 0.0
    %490 = vmatpush1.xpose.msra.mxu0 0.0
    %491 = vmatprep.subr.mxu0 0.0
    %492 = vmatpush1.xpose.msra.mxu0 0.0
    %493 = vmatprep.subr.mxu0 0.0
    %494 = vmatpush1.xpose.msra.mxu0 0.0
    %495 = vmatprep.subr.mxu0 0.0
    %496 = vmatpush1.xpose.msra.mxu0 0.0
    %497 = vmatprep.subr.mxu0 0.0
    %498 = vmatpush1.xpose.msra.mxu0 0.0
    %499 = vmatprep.subr.mxu0 0.0
    %500 = vmatpush1.xpose.msra.mxu0 0.0
    %501 = vmatprep.subr.mxu0 0.0
    %502 = vmatpush1.xpose.msra.mxu0 0.0
    %503 = vmatprep.subr.mxu0 0.0
    %504 = vmatpush1.xpose.msra.mxu0 0.0
    %505 = vmatprep.subr.mxu0 0.0
    %506 = vmatpush1.xpose.msra.mxu0 0.0
    %507 = vmatprep.subr.mxu0 0.0
    %508 = vmatpush1.xpose.msra.mxu0 0.0
    %509 = vmatprep.subr.mxu0 0.0
    %510 = vmatpush1.xpose.msra.mxu0 0.0
    %511 = vmatprep.subr.mxu0 0.0
    %512 = vmatpush1.xpose.msra.mxu0 0.0
    %513 = vmatprep.subr.mxu0 0.0
    %514 = vmatpush1.xpose.msra.mxu0 0.0
    %515 = vmatprep.subr.mxu0 0.0
    %516 = vmatpush1.xpose.msra.mxu0 0.0
    %517 = vmatprep.subr.mxu0 0.0
    %518 = vmatpush1.xpose.msra.mxu0 0.0
    %519 = vmatprep.subr.mxu0 0.0
    %520 = vmatpush1.xpose.msra.mxu0 0.0
    %521 = vmatprep.subr.mxu0 0.0
    %522 = vmatpush1.xpose.msra.mxu0 0.0
    %523 = vmatprep.subr.mxu0 0.0
    %524 = vmatpush1.xpose.msra.mxu0 0.0
    %525 = vmatprep.subr.mxu0 0.0
    %526 = vmatpush1.xpose.msra.mxu0 0.0
    %527 = vmatprep.subr.mxu0 0.0
    %528 = vmatpush1.xpose.msra.mxu0 0.0
    %529 = vmatprep.subr.mxu0 0.0
    %530 = vmatpush1.xpose.msra.mxu0 0.0
    %531 = vmatprep.mubr.f32.mxu0 0.0
    %532 = vmatmul.mubr.f32.gmra.mrb[0].mxu0 %v459
    %v533 = vpop.f32.mrb[0].mxu0
    %v534 = vadd.f32 0.0, %v533
    %v535 = vpop.f32.mrb[0].mxu0
    %536 = vmatprep.mubr.f32.mxu0 0.0
    %537 = vmatmul.mubr.f32.gmra.mrb[0].mxu0 %v461
    %v538 = vpop.f32.mrb[0].mxu0
    %v539 = vadd.f32 0.0, %v538
    %v540 = vpop.f32.mrb[0].mxu0
    %541 = vdwg.mxu0
    %542 = vrot.lane.b32.xlu0 %v261, 96
    %v543 = vpop.permute.xlu0 %542
    %544 = vrot.lane.b32.xlu0 %v263, 96
    %v545 = vpop.permute.xlu0 %544
    %v546 = vsel %vm284, %v261, 0
    %v548 = vsel %vm284, %v263, 0
    %v550 = vsel %vm284, %v543, 0
    %v552 = vsel %vm284, %v545, 0
    %554 = vmatprep.subr.mxu0 0.0
    %555 = vmatpush1.xpose.msra.mxu0 %v550
    %556 = vmatprep.subr.mxu0 0.0
    %557 = vmatpush1.xpose.msra.mxu0 %v552
    %558 = vmatprep.subr.mxu0 0.0
    %559 = vmatpush1.xpose.msra.mxu0 0.0
    %560 = vmatprep.subr.mxu0 0.0
    %561 = vmatpush1.xpose.msra.mxu0 0.0
    %562 = vmatprep.subr.mxu0 0.0
    %563 = vmatpush1.xpose.msra.mxu0 0.0
    %564 = vmatprep.subr.mxu0 0.0
    %565 = vmatpush1.xpose.msra.mxu0 0.0
    %566 = vmatprep.subr.mxu0 0.0
    %567 = vmatpush1.xpose.msra.mxu0 0.0
    %568 = vmatprep.subr.mxu0 0.0
    %569 = vmatpush1.xpose.msra.mxu0 0.0
    %570 = vmatprep.subr.mxu0 0.0
    %571 = vmatpush1.xpose.msra.mxu0 0.0
    %572 = vmatprep.subr.mxu0 0.0
    %573 = vmatpush1.xpose.msra.mxu0 0.0
    %574 = vmatprep.subr.mxu0 0.0
    %575 = vmatpush1.xpose.msra.mxu0 0.0
    %576 = vmatprep.subr.mxu0 0.0
    %577 = vmatpush1.xpose.msra.mxu0 0.0
    %578 = vmatprep.subr.mxu0 0.0
    %579 = vmatpush1.xpose.msra.mxu0 0.0
    %580 = vmatprep.subr.mxu0 0.0
    %581 = vmatpush1.xpose.msra.mxu0 0.0
    %582 = vmatprep.subr.mxu0 0.0
    %583 = vmatpush1.xpose.msra.mxu0 0.0
    %584 = vmatprep.subr.mxu0 0.0
    %585 = vmatpush1.xpose.msra.mxu0 0.0
    %586 = vmatprep.subr.mxu0 0.0
    %587 = vmatpush1.xpose.msra.mxu0 0.0
    %588 = vmatprep.subr.mxu0 0.0
    %589 = vmatpush1.xpose.msra.mxu0 0.0
    %590 = vmatprep.subr.mxu0 0.0
    %591 = vmatpush1.xpose.msra.mxu0 0.0
    %592 = vmatprep.subr.mxu0 0.0
    %593 = vmatpush1.xpose.msra.mxu0 0.0
    %594 = vmatprep.subr.mxu0 0.0
    %595 = vmatpush1.xpose.msra.mxu0 0.0
    %596 = vmatprep.subr.mxu0 0.0
    %597 = vmatpush1.xpose.msra.mxu0 0.0
    %598 = vmatprep.subr.mxu0 0.0
    %599 = vmatpush1.xpose.msra.mxu0 0.0
    %600 = vmatprep.subr.mxu0 0.0
    %601 = vmatpush1.xpose.msra.mxu0 0.0
    %602 = vmatprep.subr.mxu0 0.0
    %603 = vmatpush1.xpose.msra.mxu0 0.0
    %604 = vmatprep.subr.mxu0 0.0
    %605 = vmatpush1.xpose.msra.mxu0 0.0
    %606 = vmatprep.subr.mxu0 0.0
    %607 = vmatpush1.xpose.msra.mxu0 0.0
    %608 = vmatprep.subr.mxu0 0.0
    %609 = vmatpush1.xpose.msra.mxu0 0.0
    %610 = vmatprep.subr.mxu0 0.0
    %611 = vmatpush1.xpose.msra.mxu0 0.0
    %612 = vmatprep.subr.mxu0 0.0
    %613 = vmatpush1.xpose.msra.mxu0 0.0
    %614 = vmatprep.subr.mxu0 0.0
    %615 = vmatpush1.xpose.msra.mxu0 0.0
    %616 = vmatprep.subr.mxu0 0.0
    %617 = vmatpush1.xpose.msra.mxu0 0.0
    %618 = vmatprep.mubr.f32.mxu0 0.0
    %619 = vmatmul.mubr.f32.gmra.mrb[0].mxu0 %v546
    %v620 = vpop.f32.mrb[0].mxu0
    %v621 = vadd.f32 0.0, %v620
    %v622 = vpop.f32.mrb[0].mxu0
    %623 = vmatprep.mubr.f32.mxu0 0.0
    %624 = vmatmul.mubr.f32.gmra.mrb[0].mxu0 %v548
    %v625 = vpop.f32.mrb[0].mxu0
    %v626 = vadd.f32 0.0, %v625
    %v627 = vpop.f32.mrb[0].mxu0
    %628 = vdwg.mxu0
    %629 = vrot.lane.b32.xlu0 %v265, 96
    %v630 = vpop.permute.xlu0 %629
    %631 = vrot.lane.b32.xlu0 %v267, 96
    %v632 = vpop.permute.xlu0 %631
    %v633 = vsel %vm284, %v265, 0
    %v635 = vsel %vm284, %v267, 0
    %v637 = vsel %vm284, %v630, 0
    %v639 = vsel %vm284, %v632, 0
    %641 = vmatprep.subr.mxu0 0.0
    %642 = vmatpush1.xpose.msra.mxu0 %v637
    %643 = vmatprep.subr.mxu0 0.0
    %644 = vmatpush1.xpose.msra.mxu0 %v639
    %645 = vmatprep.subr.mxu0 0.0
    %646 = vmatpush1.xpose.msra.mxu0 0.0
    %647 = vmatprep.subr.mxu0 0.0
    %648 = vmatpush1.xpose.msra.mxu0 0.0
    %649 = vmatprep.subr.mxu0 0.0
    %650 = vmatpush1.xpose.msra.mxu0 0.0
    %651 = vmatprep.subr.mxu0 0.0
    %652 = vmatpush1.xpose.msra.mxu0 0.0
    %653 = vmatprep.subr.mxu0 0.0
    %654 = vmatpush1.xpose.msra.mxu0 0.0
    %655 = vmatprep.subr.mxu0 0.0
    %656 = vmatpush1.xpose.msra.mxu0 0.0
    %657 = vmatprep.subr.mxu0 0.0
    %658 = vmatpush1.xpose.msra.mxu0 0.0
    %659 = vmatprep.subr.mxu0 0.0
    %660 = vmatpush1.xpose.msra.mxu0 0.0
    %661 = vmatprep.subr.mxu0 0.0
    %662 = vmatpush1.xpose.msra.mxu0 0.0
    %663 = vmatprep.subr.mxu0 0.0
    %664 = vmatpush1.xpose.msra.mxu0 0.0
    %665 = vmatprep.subr.mxu0 0.0
    %666 = vmatpush1.xpose.msra.mxu0 0.0
    %667 = vmatprep.subr.mxu0 0.0
    %668 = vmatpush1.xpose.msra.mxu0 0.0
    %669 = vmatprep.subr.mxu0 0.0
    %670 = vmatpush1.xpose.msra.mxu0 0.0
    %671 = vmatprep.subr.mxu0 0.0
    %672 = vmatpush1.xpose.msra.mxu0 0.0
    %673 = vmatprep.subr.mxu0 0.0
    %674 = vmatpush1.xpose.msra.mxu0 0.0
    %675 = vmatprep.subr.mxu0 0.0
    %676 = vmatpush1.xpose.msra.mxu0 0.0
    %677 = vmatprep.subr.mxu0 0.0
    %678 = vmatpush1.xpose.msra.mxu0 0.0
    %679 = vmatprep.subr.mxu0 0.0
    %680 = vmatpush1.xpose.msra.mxu0 0.0
    %681 = vmatprep.subr.mxu0 0.0
    %682 = vmatpush1.xpose.msra.mxu0 0.0
    %683 = vmatprep.subr.mxu0 0.0
    %684 = vmatpush1.xpose.msra.mxu0 0.0
    %685 = vmatprep.subr.mxu0 0.0
    %686 = vmatpush1.xpose.msra.mxu0 0.0
    %687 = vmatprep.subr.mxu0 0.0
    %688 = vmatpush1.xpose.msra.mxu0 0.0
    %689 = vmatprep.subr.mxu0 0.0
    %690 = vmatpush1.xpose.msra.mxu0 0.0
    %691 = vmatprep.subr.mxu0 0.0
    %692 = vmatpush1.xpose.msra.mxu0 0.0
    %693 = vmatprep.subr.mxu0 0.0
    %694 = vmatpush1.xpose.msra.mxu0 0.0
    %695 = vmatprep.subr.mxu0 0.0
    %696 = vmatpush1.xpose.msra.mxu0 0.0
    %697 = vmatprep.subr.mxu0 0.0
    %698 = vmatpush1.xpose.msra.mxu0 0.0
    %699 = vmatprep.subr.mxu0 0.0
    %700 = vmatpush1.xpose.msra.mxu0 0.0
    %701 = vmatprep.subr.mxu0 0.0
    %702 = vmatpush1.xpose.msra.mxu0 0.0
    %703 = vmatprep.subr.mxu0 0.0
    %704 = vmatpush1.xpose.msra.mxu0 0.0
    %705 = vmatprep.mubr.f32.mxu0 0.0
    %706 = vmatmul.mubr.f32.gmra.mrb[0].mxu0 %v633
    %v707 = vpop.f32.mrb[0].mxu0
    %v708 = vadd.f32 0.0, %v707
    %v709 = vpop.f32.mrb[0].mxu0
    %710 = vmatprep.mubr.f32.mxu0 0.0
    %711 = vmatmul.mubr.f32.gmra.mrb[0].mxu0 %v635
    %v712 = vpop.f32.mrb[0].mxu0
    %v713 = vadd.f32 0.0, %v712
    %v714 = vpop.f32.mrb[0].mxu0
    %715 = vdwg.mxu0
    %716 = vrot.lane.b32.xlu0 %v269, 96
    %v717 = vpop.permute.xlu0 %716
    %718 = vrot.lane.b32.xlu0 %v271, 96
    %v719 = vpop.permute.xlu0 %718
    %v720 = vsel %vm284, %v269, 0
    %v722 = vsel %vm284, %v271, 0
    %v724 = vsel %vm284, %v717, 0
    %v726 = vsel %vm284, %v719, 0
    %728 = vmatprep.subr.mxu0 0.0
    %729 = vmatpush1.xpose.msra.mxu0 %v724
    %730 = vmatprep.subr.mxu0 0.0
    %731 = vmatpush1.xpose.msra.mxu0 %v726
    %732 = vmatprep.subr.mxu0 0.0
    %733 = vmatpush1.xpose.msra.mxu0 0.0
    %734 = vmatprep.subr.mxu0 0.0
    %735 = vmatpush1.xpose.msra.mxu0 0.0
    %736 = vmatprep.subr.mxu0 0.0
    %737 = vmatpush1.xpose.msra.mxu0 0.0
    %738 = vmatprep.subr.mxu0 0.0
    %739 = vmatpush1.xpose.msra.mxu0 0.0
    %740 = vmatprep.subr.mxu0 0.0
    %741 = vmatpush1.xpose.msra.mxu0 0.0
    %742 = vmatprep.subr.mxu0 0.0
    %743 = vmatpush1.xpose.msra.mxu0 0.0
    %744 = vmatprep.subr.mxu0 0.0
    %745 = vmatpush1.xpose.msra.mxu0 0.0
    %746 = vmatprep.subr.mxu0 0.0
    %747 = vmatpush1.xpose.msra.mxu0 0.0
    %748 = vmatprep.subr.mxu0 0.0
    %749 = vmatpush1.xpose.msra.mxu0 0.0
    %750 = vmatprep.subr.mxu0 0.0
    %751 = vmatpush1.xpose.msra.mxu0 0.0
    %752 = vmatprep.subr.mxu0 0.0
    %753 = vmatpush1.xpose.msra.mxu0 0.0
    %754 = vmatprep.subr.mxu0 0.0
    %755 = vmatpush1.xpose.msra.mxu0 0.0
    %756 = vmatprep.subr.mxu0 0.0
    %757 = vmatpush1.xpose.msra.mxu0 0.0
    %758 = vmatprep.subr.mxu0 0.0
    %759 = vmatpush1.xpose.msra.mxu0 0.0
    %760 = vmatprep.subr.mxu0 0.0
    %761 = vmatpush1.xpose.msra.mxu0 0.0
    %762 = vmatprep.subr.mxu0 0.0
    %763 = vmatpush1.xpose.msra.mxu0 0.0
    %764 = vmatprep.subr.mxu0 0.0
    %765 = vmatpush1.xpose.msra.mxu0 0.0
    %766 = vmatprep.subr.mxu0 0.0
    %767 = vmatpush1.xpose.msra.mxu0 0.0
    %768 = vmatprep.subr.mxu0 0.0
    %769 = vmatpush1.xpose.msra.mxu0 0.0
    %770 = vmatprep.subr.mxu0 0.0
    %771 = vmatpush1.xpose.msra.mxu0 0.0
    %772 = vmatprep.subr.mxu0 0.0
    %773 = vmatpush1.xpose.msra.mxu0 0.0
    %774 = vmatprep.subr.mxu0 0.0
    %775 = vmatpush1.xpose.msra.mxu0 0.0
    %776 = vmatprep.subr.mxu0 0.0
    %777 = vmatpush1.xpose.msra.mxu0 0.0
    %778 = vmatprep.subr.mxu0 0.0
    %779 = vmatpush1.xpose.msra.mxu0 0.0
    %780 = vmatprep.subr.mxu0 0.0
    %781 = vmatpush1.xpose.msra.mxu0 0.0
    %782 = vmatprep.subr.mxu0 0.0
    %783 = vmatpush1.xpose.msra.mxu0 0.0
    %784 = vmatprep.subr.mxu0 0.0
    %785 = vmatpush1.xpose.msra.mxu0 0.0
    %786 = vmatprep.subr.mxu0 0.0
    %787 = vmatpush1.xpose.msra.mxu0 0.0
    %788 = vmatprep.subr.mxu0 0.0
    %789 = vmatpush1.xpose.msra.mxu0 0.0
    %790 = vmatprep.subr.mxu0 0.0
    %791 = vmatpush1.xpose.msra.mxu0 0.0
    %792 = vmatprep.mubr.f32.mxu0 0.0
    %793 = vmatmul.mubr.f32.gmra.mrb[0].mxu0 %v720
    %v794 = vpop.f32.mrb[0].mxu0
    %v795 = vadd.f32 0.0, %v794
    %v796 = vpop.f32.mrb[0].mxu0
    %797 = vmatprep.mubr.f32.mxu0 0.0
    %798 = vmatmul.mubr.f32.gmra.mrb[0].mxu0 %v722
    %v799 = vpop.f32.mrb[0].mxu0
    %v800 = vadd.f32 0.0, %v799
    %v801 = vpop.f32.mrb[0].mxu0
    %802 = vdwg.mxu0
    %803 = vrot.lane.b32.xlu0 %v273, 96
    %v804 = vpop.permute.xlu0 %803
    %805 = vrot.lane.b32.xlu0 %v275, 96
    %v806 = vpop.permute.xlu0 %805
    %v807 = vsel %vm284, %v273, 0
    %v809 = vsel %vm284, %v275, 0
    %v811 = vsel %vm284, %v804, 0
    %v813 = vsel %vm284, %v806, 0
    %815 = vmatprep.subr.mxu0 0.0
    %816 = vmatpush1.xpose.msra.mxu0 %v811
    %817 = vmatprep.subr.mxu0 0.0
    %818 = vmatpush1.xpose.msra.mxu0 %v813
    %819 = vmatprep.subr.mxu0 0.0
    %820 = vmatpush1.xpose.msra.mxu0 0.0
    %821 = vmatprep.subr.mxu0 0.0
    %822 = vmatpush1.xpose.msra.mxu0 0.0
    %823 = vmatprep.subr.mxu0 0.0
    %824 = vmatpush1.xpose.msra.mxu0 0.0
    %825 = vmatprep.subr.mxu0 0.0
    %826 = vmatpush1.xpose.msra.mxu0 0.0
    %827 = vmatprep.subr.mxu0 0.0
    %828 = vmatpush1.xpose.msra.mxu0 0.0
    %829 = vmatprep.subr.mxu0 0.0
    %830 = vmatpush1.xpose.msra.mxu0 0.0
    %831 = vmatprep.subr.mxu0 0.0
    %832 = vmatpush1.xpose.msra.mxu0 0.0
    %833 = vmatprep.subr.mxu0 0.0
    %834 = vmatpush1.xpose.msra.mxu0 0.0
    %835 = vmatprep.subr.mxu0 0.0
    %836 = vmatpush1.xpose.msra.mxu0 0.0
    %837 = vmatprep.subr.mxu0 0.0
    %838 = vmatpush1.xpose.msra.mxu0 0.0
    %839 = vmatprep.subr.mxu0 0.0
    %840 = vmatpush1.xpose.msra.mxu0 0.0
    %841 = vmatprep.subr.mxu0 0.0
    %842 = vmatpush1.xpose.msra.mxu0 0.0
    %843 = vmatprep.subr.mxu0 0.0
    %844 = vmatpush1.xpose.msra.mxu0 0.0
    %845 = vmatprep.subr.mxu0 0.0
    %846 = vmatpush1.xpose.msra.mxu0 0.0
    %847 = vmatprep.subr.mxu0 0.0
    %848 = vmatpush1.xpose.msra.mxu0 0.0
    %849 = vmatprep.subr.mxu0 0.0
    %850 = vmatpush1.xpose.msra.mxu0 0.0
    %851 = vmatprep.subr.mxu0 0.0
    %852 = vmatpush1.xpose.msra.mxu0 0.0
    %853 = vmatprep.subr.mxu0 0.0
    %854 = vmatpush1.xpose.msra.mxu0 0.0
    %855 = vmatprep.subr.mxu0 0.0
    %856 = vmatpush1.xpose.msra.mxu0 0.0
    %857 = vmatprep.subr.mxu0 0.0
    %858 = vmatpush1.xpose.msra.mxu0 0.0
    %859 = vmatprep.subr.mxu0 0.0
    %860 = vmatpush1.xpose.msra.mxu0 0.0
    %861 = vmatprep.subr.mxu0 0.0
    %862 = vmatpush1.xpose.msra.mxu0 0.0
    %863 = vmatprep.subr.mxu0 0.0
    %864 = vmatpush1.xpose.msra.mxu0 0.0
    %865 = vmatprep.subr.mxu0 0.0
    %866 = vmatpush1.xpose.msra.mxu0 0.0
    %867 = vmatprep.subr.mxu0 0.0
    %868 = vmatpush1.xpose.msra.mxu0 0.0
    %869 = vmatprep.subr.mxu0 0.0
    %870 = vmatpush1.xpose.msra.mxu0 0.0
    %871 = vmatprep.subr.mxu0 0.0
    %872 = vmatpush1.xpose.msra.mxu0 0.0
    %873 = vmatprep.subr.mxu0 0.0
    %874 = vmatpush1.xpose.msra.mxu0 0.0
    %875 = vmatprep.subr.mxu0 0.0
    %876 = vmatpush1.xpose.msra.mxu0 0.0
    %877 = vmatprep.subr.mxu0 0.0
    %878 = vmatpush1.xpose.msra.mxu0 0.0
    %879 = vmatprep.mubr.f32.mxu0 0.0
    %880 = vmatmul.mubr.f32.gmra.mrb[0].mxu0 %v807
    %v881 = vpop.f32.mrb[0].mxu0
    %v882 = vadd.f32 0.0, %v881
    %v883 = vpop.f32.mrb[0].mxu0
    %884 = vmatprep.mubr.f32.mxu0 0.0
    %885 = vmatmul.mubr.f32.gmra.mrb[0].mxu0 %v809
    %v886 = vpop.f32.mrb[0].mxu0
    %v887 = vadd.f32 0.0, %v886
    %v888 = vpop.f32.mrb[0].mxu0
    %889 = vdwg.mxu0
    %890 = vrot.lane.b32.xlu0 %v277, 96
    %v891 = vpop.permute.xlu0 %890
    %892 = vrot.lane.b32.xlu0 %v279, 96
    %v893 = vpop.permute.xlu0 %892
    %v894 = vsel %vm284, %v277, 0
    %v896 = vsel %vm284, %v279, 0
    %v898 = vsel %vm284, %v891, 0
    %v900 = vsel %vm284, %v893, 0
    %902 = vmatprep.subr.mxu0 0.0
    %903 = vmatpush1.xpose.msra.mxu0 %v898
    %904 = vmatprep.subr.mxu0 0.0
    %905 = vmatpush1.xpose.msra.mxu0 %v900
    %906 = vmatprep.subr.mxu0 0.0
    %907 = vmatpush1.xpose.msra.mxu0 0.0
    %908 = vmatprep.subr.mxu0 0.0
    %909 = vmatpush1.xpose.msra.mxu0 0.0
    %910 = vmatprep.subr.mxu0 0.0
    %911 = vmatpush1.xpose.msra.mxu0 0.0
    %912 = vmatprep.subr.mxu0 0.0
    %913 = vmatpush1.xpose.msra.mxu0 0.0
    %914 = vmatprep.subr.mxu0 0.0
    %915 = vmatpush1.xpose.msra.mxu0 0.0
    %916 = vmatprep.subr.mxu0 0.0
    %917 = vmatpush1.xpose.msra.mxu0 0.0
    %918 = vmatprep.subr.mxu0 0.0
    %919 = vmatpush1.xpose.msra.mxu0 0.0
    %920 = vmatprep.subr.mxu0 0.0
    %921 = vmatpush1.xpose.msra.mxu0 0.0
    %922 = vmatprep.subr.mxu0 0.0
    %923 = vmatpush1.xpose.msra.mxu0 0.0
    %924 = vmatprep.subr.mxu0 0.0
    %925 = vmatpush1.xpose.msra.mxu0 0.0
    %926 = vmatprep.subr.mxu0 0.0
    %927 = vmatpush1.xpose.msra.mxu0 0.0
    %928 = vmatprep.subr.mxu0 0.0
    %929 = vmatpush1.xpose.msra.mxu0 0.0
    %930 = vmatprep.subr.mxu0 0.0
    %931 = vmatpush1.xpose.msra.mxu0 0.0
    %932 = vmatprep.subr.mxu0 0.0
    %933 = vmatpush1.xpose.msra.mxu0 0.0
    %934 = vmatprep.subr.mxu0 0.0
    %935 = vmatpush1.xpose.msra.mxu0 0.0
    %936 = vmatprep.subr.mxu0 0.0
    %937 = vmatpush1.xpose.msra.mxu0 0.0
    %938 = vmatprep.subr.mxu0 0.0
    %939 = vmatpush1.xpose.msra.mxu0 0.0
    %940 = vmatprep.subr.mxu0 0.0
    %941 = vmatpush1.xpose.msra.mxu0 0.0
    %942 = vmatprep.subr.mxu0 0.0
    %943 = vmatpush1.xpose.msra.mxu0 0.0
    %944 = vmatprep.subr.mxu0 0.0
    %945 = vmatpush1.xpose.msra.mxu0 0.0
    %946 = vmatprep.subr.mxu0 0.0
    %947 = vmatpush1.xpose.msra.mxu0 0.0
    %948 = vmatprep.subr.mxu0 0.0
    %949 = vmatpush1.xpose.msra.mxu0 0.0
    %950 = vmatprep.subr.mxu0 0.0
    %951 = vmatpush1.xpose.msra.mxu0 0.0
    %952 = vmatprep.subr.mxu0 0.0
    %953 = vmatpush1.xpose.msra.mxu0 0.0
    %954 = vmatprep.subr.mxu0 0.0
    %955 = vmatpush1.xpose.msra.mxu0 0.0
    %956 = vmatprep.subr.mxu0 0.0
    %957 = vmatpush1.xpose.msra.mxu0 0.0
    %958 = vmatprep.subr.mxu0 0.0
    %959 = vmatpush1.xpose.msra.mxu0 0.0
    %960 = vmatprep.subr.mxu0 0.0
    %961 = vmatpush1.xpose.msra.mxu0 0.0
    %962 = vmatprep.subr.mxu0 0.0
    %963 = vmatpush1.xpose.msra.mxu0 0.0
    %964 = vmatprep.subr.mxu0 0.0
    %965 = vmatpush1.xpose.msra.mxu0 0.0
    %966 = vmatprep.mubr.f32.mxu0 0.0
    %967 = vmatmul.mubr.f32.gmra.mrb[0].mxu0 %v894
    %v968 = vpop.f32.mrb[0].mxu0
    %v969 = vadd.f32 0.0, %v968
    %v970 = vpop.f32.mrb[0].mxu0
    %971 = vmatprep.mubr.f32.mxu0 0.0
    %972 = vmatmul.mubr.f32.gmra.mrb[0].mxu0 %v896
    %v973 = vpop.f32.mrb[0].mxu0
    %v974 = vadd.f32 0.0, %v973
    %v975 = vpop.f32.mrb[0].mxu0
    %976 = vdwg.mxu0
    %v978 = vlaneseq
    %v979 = vshrl.u32 %v978, 7
    %v980 = vsub.s32 0, %v979
    %v981 = vrot.slane %v73, %v980
    %vm983 = vcmask 130048
    %v985 = vsel %vm983, %v360, 0
    %v988 = vsel %vm983, %v365, 0
    %v991 = vsel %vm983, %v447, 0
    %v994 = vsel %vm983, %v452, 0
    %v997 = vsel %vm983, %v534, 0
    %v1000 = vsel %vm983, %v539, 0
    %v1003 = vsel %vm983, %v621, 0
    %v1006 = vsel %vm983, %v626, 0
    %v1009 = vsel %vm983, %v708, 0
    %v1012 = vsel %vm983, %v713, 0
    %v1015 = vsel %vm983, %v795, 0
    %v1018 = vsel %vm983, %v800, 0
    %v1021 = vsel %vm983, %v882, 0
    %v1024 = vsel %vm983, %v887, 0
    %v1027 = vsel %vm983, %v969, 0
    %v1030 = vsel %vm983, %v974, 0
    %1032 = vmatprep.subr.mxu0 0.0
    %1033 = vmatpush1.msra.mxu0 %v58
    %1034 = vmatprep.subr.mxu0 0.0
    %1035 = vmatpush1.msra.mxu0 %v59
    %1036 = vmatprep.subr.mxu0 0.0
    %1037 = vmatpush1.msra.mxu0 0.0
    %1038 = vmatprep.subr.mxu0 0.0
    %1039 = vmatpush1.msra.mxu0 0.0
    %1040 = vmatprep.subr.mxu0 0.0
    %1041 = vmatpush1.msra.mxu0 0.0
    %1042 = vmatprep.subr.mxu0 0.0
    %1043 = vmatpush1.msra.mxu0 0.0
    %1044 = vmatprep.subr.mxu0 0.0
    %1045 = vmatpush1.msra.mxu0 0.0
    %1046 = vmatprep.subr.mxu0 0.0
    %1047 = vmatpush1.msra.mxu0 0.0
    %1048 = vmatprep.subr.mxu0 0.0
    %1049 = vmatpush1.msra.mxu0 0.0
    %1050 = vmatprep.subr.mxu0 0.0
    %1051 = vmatpush1.msra.mxu0 0.0
    %1052 = vmatprep.subr.mxu0 0.0
    %1053 = vmatpush1.msra.mxu0 0.0
    %1054 = vmatprep.subr.mxu0 0.0
    %1055 = vmatpush1.msra.mxu0 0.0
    %1056 = vmatprep.subr.mxu0 0.0
    %1057 = vmatpush1.msra.mxu0 0.0
    %1058 = vmatprep.subr.mxu0 0.0
    %1059 = vmatpush1.msra.mxu0 0.0
    %1060 = vmatprep.subr.mxu0 0.0
    %1061 = vmatpush1.msra.mxu0 0.0
    %1062 = vmatprep.subr.mxu0 0.0
    %1063 = vmatpush1.msra.mxu0 0.0
    %1064 = vmatprep.subr.mxu0 0.0
    %1065 = vmatpush1.msra.mxu0 0.0
    %1066 = vmatprep.subr.mxu0 0.0
    %1067 = vmatpush1.msra.mxu0 0.0
    %1068 = vmatprep.subr.mxu0 0.0
    %1069 = vmatpush1.msra.mxu0 0.0
    %1070 = vmatprep.subr.mxu0 0.0
    %1071 = vmatpush1.msra.mxu0 0.0
    %1072 = vmatprep.subr.mxu0 0.0
    %1073 = vmatpush1.msra.mxu0 0.0
    %1074 = vmatprep.subr.mxu0 0.0
    %1075 = vmatpush1.msra.mxu0 0.0
    %1076 = vmatprep.subr.mxu0 0.0
    %1077 = vmatpush1.msra.mxu0 0.0
    %1078 = vmatprep.subr.mxu0 0.0
    %1079 = vmatpush1.msra.mxu0 0.0
    %1080 = vmatprep.subr.mxu0 0.0
    %1081 = vmatpush1.msra.mxu0 0.0
    %1082 = vmatprep.subr.mxu0 0.0
    %1083 = vmatpush1.msra.mxu0 0.0
    %1084 = vmatprep.subr.mxu0 0.0
    %1085 = vmatpush1.msra.mxu0 0.0
    %1086 = vmatprep.subr.mxu0 0.0
    %1087 = vmatpush1.msra.mxu0 0.0
    %1088 = vmatprep.subr.mxu0 0.0
    %1089 = vmatpush1.msra.mxu0 0.0
    %1090 = vmatprep.subr.mxu0 0.0
    %1091 = vmatpush1.msra.mxu0 0.0
    %1092 = vmatprep.subr.mxu0 0.0
    %1093 = vmatpush1.msra.mxu0 0.0
    %1094 = vmatprep.subr.mxu0 0.0
    %1095 = vmatpush1.msra.mxu0 0.0
    %1096 = vmatprep.mubr.f32.mxu0 0.0
    %1097 = vmatmul.mubr.f32.gmra.mrb[0].mxu0 %v985
    %v1098 = vpop.f32.mrb[0].mxu0
    %v1099 = vadd.f32 %v981, %v1098
    %v1100 = vpop.f32.mrb[0].mxu0
    %1101 = vmatprep.mubr.f32.mxu0 0.0
    %1102 = vmatmul.mubr.f32.gmra.mrb[0].mxu0 %v988
    %v1103 = vpop.f32.mrb[0].mxu0
    %v1104 = vadd.f32 %v981, %v1103
    %v1105 = vpop.f32.mrb[0].mxu0
    %1106 = vmatprep.mubr.f32.mxu0 0.0
    %1107 = vmatmul.mubr.f32.gmra.mrb[0].mxu0 %v991
    %v1108 = vpop.f32.mrb[0].mxu0
    %v1109 = vadd.f32 %v981, %v1108
    %v1110 = vpop.f32.mrb[0].mxu0
    %1111 = vmatprep.mubr.f32.mxu0 0.0
    %1112 = vmatmul.mubr.f32.gmra.mrb[0].mxu0 %v994
    %v1113 = vpop.f32.mrb[0].mxu0
    %v1114 = vadd.f32 %v981, %v1113
    %v1115 = vpop.f32.mrb[0].mxu0
    %1116 = vmatprep.mubr.f32.mxu0 0.0
    %1117 = vmatmul.mubr.f32.gmra.mrb[0].mxu0 %v997
    %v1118 = vpop.f32.mrb[0].mxu0
    %v1119 = vadd.f32 %v981, %v1118
    %v1120 = vpop.f32.mrb[0].mxu0
    %1121 = vmatprep.mubr.f32.mxu0 0.0
    %1122 = vmatmul.mubr.f32.gmra.mrb[0].mxu0 %v1000
    %v1123 = vpop.f32.mrb[0].mxu0
    %v1124 = vadd.f32 %v981, %v1123
    %v1125 = vpop.f32.mrb[0].mxu0
    %1126 = vmatprep.mubr.f32.mxu0 0.0
    %1127 = vmatmul.mubr.f32.gmra.mrb[0].mxu0 %v1003
    %v1128 = vpop.f32.mrb[0].mxu0
    %v1129 = vadd.f32 %v981, %v1128
    %v1130 = vpop.f32.mrb[0].mxu0
    %1131 = vmatprep.mubr.f32.mxu0 0.0
    %1132 = vmatmul.mubr.f32.gmra.mrb[0].mxu0 %v1006
    %v1133 = vpop.f32.mrb[0].mxu0
    %v1134 = vadd.f32 %v981, %v1133
    %v1135 = vpop.f32.mrb[0].mxu0
    %1136 = vmatprep.mubr.f32.mxu0 0.0
    %1137 = vmatmul.mubr.f32.gmra.mrb[0].mxu0 %v1009
    %v1138 = vpop.f32.mrb[0].mxu0
    %v1139 = vadd.f32 %v981, %v1138
    %v1140 = vpop.f32.mrb[0].mxu0
    %1141 = vmatprep.mubr.f32.mxu0 0.0
    %1142 = vmatmul.mubr.f32.gmra.mrb[0].mxu0 %v1012
    %v1143 = vpop.f32.mrb[0].mxu0
    %v1144 = vadd.f32 %v981, %v1143
    %v1145 = vpop.f32.mrb[0].mxu0
    %1146 = vmatprep.mubr.f32.mxu0 0.0
    %1147 = vmatmul.mubr.f32.gmra.mrb[0].mxu0 %v1015
    %v1148 = vpop.f32.mrb[0].mxu0
    %v1149 = vadd.f32 %v981, %v1148
    %v1150 = vpop.f32.mrb[0].mxu0
    %1151 = vmatprep.mubr.f32.mxu0 0.0
    %1152 = vmatmul.mubr.f32.gmra.mrb[0].mxu0 %v1018
    %v1153 = vpop.f32.mrb[0].mxu0
    %v1154 = vadd.f32 %v981, %v1153
    %v1155 = vpop.f32.mrb[0].mxu0
    %1156 = vmatprep.mubr.f32.mxu0 0.0
    %1157 = vmatmul.mubr.f32.gmra.mrb[0].mxu0 %v1021
    %v1158 = vpop.f32.mrb[0].mxu0
    %v1159 = vadd.f32 %v981, %v1158
    %v1160 = vpop.f32.mrb[0].mxu0
    %1161 = vmatprep.mubr.f32.mxu0 0.0
    %1162 = vmatmul.mubr.f32.gmra.mrb[0].mxu0 %v1024
    %v1163 = vpop.f32.mrb[0].mxu0
    %v1164 = vadd.f32 %v981, %v1163
    %v1165 = vpop.f32.mrb[0].mxu0
    %1166 = vmatprep.mubr.f32.mxu0 0.0
    %1167 = vmatmul.mubr.f32.gmra.mrb[0].mxu0 %v1027
    %v1168 = vpop.f32.mrb[0].mxu0
    %v1169 = vadd.f32 %v981, %v1168
    %v1170 = vpop.f32.mrb[0].mxu0
    %1171 = vmatprep.mubr.f32.mxu0 0.0
    %1172 = vmatmul.mubr.f32.gmra.mrb[0].mxu0 %v1030
    %v1173 = vpop.f32.mrb[0].mxu0
    %v1174 = vadd.f32 %v981, %v1173
    %v1175 = vpop.f32.mrb[0].mxu0
    %1176 = vdwg.mxu0
    %v1177 = vsel %vm284, %v1099, 0.0
    %1178 = vadd.xlane.f32.xlu0 %v1177
    %v1179 = vpop.xlane.xlu0 %1178
    %v1180 = vsel %vm284, %v1104, 0.0
    %1181 = vadd.xlane.f32.xlu0 %v1180
    %v1182 = vpop.xlane.xlu0 %1181
    %v1183 = vsel %vm284, %v1109, 0.0
    %1184 = vadd.xlane.f32.xlu0 %v1183
    %v1185 = vpop.xlane.xlu0 %1184
    %v1186 = vsel %vm284, %v1114, 0.0
    %1187 = vadd.xlane.f32.xlu0 %v1186
    %v1188 = vpop.xlane.xlu0 %1187
    %v1189 = vsel %vm284, %v1119, 0.0
    %1190 = vadd.xlane.f32.xlu0 %v1189
    %v1191 = vpop.xlane.xlu0 %1190
    %v1192 = vsel %vm284, %v1124, 0.0
    %1193 = vadd.xlane.f32.xlu0 %v1192
    %v1194 = vpop.xlane.xlu0 %1193
    %v1195 = vsel %vm284, %v1129, 0.0
    %1196 = vadd.xlane.f32.xlu0 %v1195
    %v1197 = vpop.xlane.xlu0 %1196
    %v1198 = vsel %vm284, %v1134, 0.0
    %1199 = vadd.xlane.f32.xlu0 %v1198
    %v1200 = vpop.xlane.xlu0 %1199
    %v1201 = vsel %vm284, %v1139, 0.0
    %1202 = vadd.xlane.f32.xlu0 %v1201
    %v1203 = vpop.xlane.xlu0 %1202
    %v1204 = vsel %vm284, %v1144, 0.0
    %1205 = vadd.xlane.f32.xlu0 %v1204
    %v1206 = vpop.xlane.xlu0 %1205
    %v1207 = vsel %vm284, %v1149, 0.0
    %1208 = vadd.xlane.f32.xlu0 %v1207
    %v1209 = vpop.xlane.xlu0 %1208
    %v1210 = vsel %vm284, %v1154, 0.0
    %1211 = vadd.xlane.f32.xlu0 %v1210
    %v1212 = vpop.xlane.xlu0 %1211
    %v1213 = vsel %vm284, %v1159, 0.0
    %1214 = vadd.xlane.f32.xlu0 %v1213
    %v1215 = vpop.xlane.xlu0 %1214
    %v1216 = vsel %vm284, %v1164, 0.0
    %1217 = vadd.xlane.f32.xlu0 %v1216
    %v1218 = vpop.xlane.xlu0 %1217
    %v1219 = vsel %vm284, %v1169, 0.0
    %1220 = vadd.xlane.f32.xlu0 %v1219
    %v1221 = vpop.xlane.xlu0 %1220
    %v1222 = vsel %vm284, %v1174, 0.0
    %1223 = vadd.xlane.f32.xlu0 %v1222
    %v1224 = vpop.xlane.xlu0 %1223
    %v1225 = vrcp.pop 8.0
    %v1226 = vmul.f32 %v1179, %v1225
    %v1227 = vmul.f32 %v1182, %v1225
    %v1228 = vmul.f32 %v1185, %v1225
    %v1229 = vmul.f32 %v1188, %v1225
    %v1230 = vmul.f32 %v1191, %v1225
    %v1231 = vmul.f32 %v1194, %v1225
    %v1232 = vmul.f32 %v1197, %v1225
    %v1233 = vmul.f32 %v1200, %v1225
    %v1234 = vmul.f32 %v1203, %v1225
    %v1235 = vmul.f32 %v1206, %v1225
    %v1236 = vmul.f32 %v1209, %v1225
    %v1237 = vmul.f32 %v1212, %v1225
    %v1238 = vmul.f32 %v1215, %v1225
    %v1239 = vmul.f32 %v1218, %v1225
    %v1240 = vmul.f32 %v1221, %v1225
    %v1241 = vmul.f32 %v1224, %v1225
    %v1242 = vsub.f32 %v1099, %v1226
    %v1243 = vsub.f32 %v1104, %v1227
    %v1244 = vsub.f32 %v1109, %v1228
    %v1245 = vsub.f32 %v1114, %v1229
    %v1246 = vsub.f32 %v1119, %v1230
    %v1247 = vsub.f32 %v1124, %v1231
    %v1248 = vsub.f32 %v1129, %v1232
    %v1249 = vsub.f32 %v1134, %v1233
    %v1250 = vsub.f32 %v1139, %v1234
    %v1251 = vsub.f32 %v1144, %v1235
    %v1252 = vsub.f32 %v1149, %v1236
    %v1253 = vsub.f32 %v1154, %v1237
    %v1254 = vsub.f32 %v1159, %v1238
    %v1255 = vsub.f32 %v1164, %v1239
    %v1256 = vsub.f32 %v1169, %v1240
    %v1257 = vsub.f32 %v1174, %v1241
    %v1258 = vmul.f32 %v1242, %v1242
    %v1259 = vmul.f32 %v1243, %v1243
    %v1260 = vmul.f32 %v1244, %v1244
    %v1261 = vmul.f32 %v1245, %v1245
    %v1262 = vmul.f32 %v1246, %v1246
    %v1263 = vmul.f32 %v1247, %v1247
    %v1264 = vmul.f32 %v1248, %v1248
    %v1265 = vmul.f32 %v1249, %v1249
    %v1266 = vmul.f32 %v1250, %v1250
    %v1267 = vmul.f32 %v1251, %v1251
    %v1268 = vmul.f32 %v1252, %v1252
    %v1269 = vmul.f32 %v1253, %v1253
    %v1270 = vmul.f32 %v1254, %v1254
    %v1271 = vmul.f32 %v1255, %v1255
    %v1272 = vmul.f32 %v1256, %v1256
    %v1273 = vmul.f32 %v1257, %v1257
    %v1274 = vsel %vm284, %v1258, 0.0
    %1275 = vadd.xlane.f32.xlu0 %v1274
    %v1276 = vpop.xlane.xlu0 %1275
    %v1277 = vsel %vm284, %v1259, 0.0
    %1278 = vadd.xlane.f32.xlu0 %v1277
    %v1279 = vpop.xlane.xlu0 %1278
    %v1280 = vsel %vm284, %v1260, 0.0
    %1281 = vadd.xlane.f32.xlu0 %v1280
    %v1282 = vpop.xlane.xlu0 %1281
    %v1283 = vsel %vm284, %v1261, 0.0
    %1284 = vadd.xlane.f32.xlu0 %v1283
    %v1285 = vpop.xlane.xlu0 %1284
    %v1286 = vsel %vm284, %v1262, 0.0
    %1287 = vadd.xlane.f32.xlu0 %v1286
    %v1288 = vpop.xlane.xlu0 %1287
    %v1289 = vsel %vm284, %v1263, 0.0
    %1290 = vadd.xlane.f32.xlu0 %v1289
    %v1291 = vpop.xlane.xlu0 %1290
    %v1292 = vsel %vm284, %v1264, 0.0
    %1293 = vadd.xlane.f32.xlu0 %v1292
    %v1294 = vpop.xlane.xlu0 %1293
    %v1295 = vsel %vm284, %v1265, 0.0
    %1296 = vadd.xlane.f32.xlu0 %v1295
    %v1297 = vpop.xlane.xlu0 %1296
    %v1298 = vsel %vm284, %v1266, 0.0
    %1299 = vadd.xlane.f32.xlu0 %v1298
    %v1300 = vpop.xlane.xlu0 %1299
    %v1301 = vsel %vm284, %v1267, 0.0
    %1302 = vadd.xlane.f32.xlu0 %v1301
    %v1303 = vpop.xlane.xlu0 %1302
    %v1304 = vsel %vm284, %v1268, 0.0
    %1305 = vadd.xlane.f32.xlu0 %v1304
    %v1306 = vpop.xlane.xlu0 %1305
    %v1307 = vsel %vm284, %v1269, 0.0
    %1308 = vadd.xlane.f32.xlu0 %v1307
    %v1309 = vpop.xlane.xlu0 %1308
    %v1310 = vsel %vm284, %v1270, 0.0
    %1311 = vadd.xlane.f32.xlu0 %v1310
    %v1312 = vpop.xlane.xlu0 %1311
    %v1313 = vsel %vm284, %v1271, 0.0
    %1314 = vadd.xlane.f32.xlu0 %v1313
    %v1315 = vpop.xlane.xlu0 %1314
    %v1316 = vsel %vm284, %v1272, 0.0
    %1317 = vadd.xlane.f32.xlu0 %v1316
    %v1318 = vpop.xlane.xlu0 %1317
    %v1319 = vsel %vm284, %v1273, 0.0
    %1320 = vadd.xlane.f32.xlu0 %v1319
    %v1321 = vpop.xlane.xlu0 %1320
    %v1322 = vmul.f32 %v1276, %v1225
    %v1323 = vmul.f32 %v1279, %v1225
    %v1324 = vmul.f32 %v1282, %v1225
    %v1325 = vmul.f32 %v1285, %v1225
    %v1326 = vmul.f32 %v1288, %v1225
    %v1327 = vmul.f32 %v1291, %v1225
    %v1328 = vmul.f32 %v1294, %v1225
    %v1329 = vmul.f32 %v1297, %v1225
    %v1330 = vmul.f32 %v1300, %v1225
    %v1331 = vmul.f32 %v1303, %v1225
    %v1332 = vmul.f32 %v1306, %v1225
    %v1333 = vmul.f32 %v1309, %v1225
    %v1334 = vmul.f32 %v1312, %v1225
    %v1335 = vmul.f32 %v1315, %v1225
    %v1336 = vmul.f32 %v1318, %v1225
    %v1337 = vmul.f32 %v1321, %v1225
    %v1338 = vadd.f32 %v1322, 1e-05
    %v1339 = vadd.f32 %v1323, 1e-05
    %v1340 = vadd.f32 %v1324, 1e-05
    %v1341 = vadd.f32 %v1325, 1e-05
    %v1342 = vadd.f32 %v1326, 1e-05
    %v1343 = vadd.f32 %v1327, 1e-05
    %v1344 = vadd.f32 %v1328, 1e-05
    %v1345 = vadd.f32 %v1329, 1e-05
    %v1346 = vadd.f32 %v1330, 1e-05
    %v1347 = vadd.f32 %v1331, 1e-05
    %v1348 = vadd.f32 %v1332, 1e-05
    %v1349 = vadd.f32 %v1333, 1e-05
    %v1350 = vadd.f32 %v1334, 1e-05
    %v1351 = vadd.f32 %v1335, 1e-05
    %v1352 = vadd.f32 %v1336, 1e-05
    %v1353 = vadd.f32 %v1337, 1e-05
    %v1354 = vrsqrt.pop %v1338
    %v1355 = vrsqrt.pop %v1339
    %v1356 = vrsqrt.pop %v1340
    %v1357 = vrsqrt.pop %v1341
    %v1358 = vrsqrt.pop %v1342
    %v1359 = vrsqrt.pop %v1343
    %v1360 = vrsqrt.pop %v1344
    %v1361 = vrsqrt.pop %v1345
    %v1362 = vrsqrt.pop %v1346
    %v1363 = vrsqrt.pop %v1347
    %v1364 = vrsqrt.pop %v1348
    %v1365 = vrsqrt.pop %v1349
    %v1366 = vrsqrt.pop %v1350
    %v1367 = vrsqrt.pop %v1351
    %v1368 = vrsqrt.pop %v1352
    %v1369 = vrsqrt.pop %v1353
    %v1370 = vmul.f32 %v1242, %v1354
    %v1371 = vmul.f32 %v1243, %v1355
    %v1372 = vmul.f32 %v1244, %v1356
    %v1373 = vmul.f32 %v1245, %v1357
    %v1374 = vmul.f32 %v1246, %v1358
    %v1375 = vmul.f32 %v1247, %v1359
    %v1376 = vmul.f32 %v1248, %v1360
    %v1377 = vmul.f32 %v1249, %v1361
    %v1378 = vmul.f32 %v1250, %v1362
    %v1379 = vmul.f32 %v1251, %v1363
    %v1380 = vmul.f32 %v1252, %v1364
    %v1381 = vmul.f32 %v1253, %v1365
    %v1382 = vmul.f32 %v1254, %v1366
    %v1383 = vmul.f32 %v1255, %v1367
    %v1384 = vmul.f32 %v1256, %v1368
    %v1385 = vmul.f32 %v1257, %v1369
    %v1387 = vlaneseq
    %v1388 = vshrl.u32 %v1387, 7
    %v1389 = vsub.s32 0, %v1388
    %v1390 = vrot.slane %v74, %v1389
    %v1392 = vmul.f32 %v1370, %v1390
    %v1393 = vmul.f32 %v1371, %v1390
    %v1394 = vmul.f32 %v1372, %v1390
    %v1395 = vmul.f32 %v1373, %v1390
    %v1396 = vmul.f32 %v1374, %v1390
    %v1397 = vmul.f32 %v1375, %v1390
    %v1398 = vmul.f32 %v1376, %v1390
    %v1399 = vmul.f32 %v1377, %v1390
    %v1400 = vmul.f32 %v1378, %v1390
    %v1401 = vmul.f32 %v1379, %v1390
    %v1402 = vmul.f32 %v1380, %v1390
    %v1403 = vmul.f32 %v1381, %v1390
    %v1404 = vmul.f32 %v1382, %v1390
    %v1405 = vmul.f32 %v1383, %v1390
    %v1406 = vmul.f32 %v1384, %v1390
    %v1407 = vmul.f32 %v1385, %v1390
    %v1409 = vlaneseq
    %v1410 = vshrl.u32 %v1409, 7
    %v1411 = vsub.s32 0, %v1410
    %v1412 = vrot.slane %v75, %v1411
    %v1414 = vadd.f32 %v1392, %v1412
    %v1415 = vadd.f32 %v1393, %v1412
    %v1416 = vadd.f32 %v1394, %v1412
    %v1417 = vadd.f32 %v1395, %v1412
    %v1418 = vadd.f32 %v1396, %v1412
    %v1419 = vadd.f32 %v1397, %v1412
    %v1420 = vadd.f32 %v1398, %v1412
    %v1421 = vadd.f32 %v1399, %v1412
    %v1422 = vadd.f32 %v1400, %v1412
    %v1423 = vadd.f32 %v1401, %v1412
    %v1424 = vadd.f32 %v1402, %v1412
    %v1425 = vadd.f32 %v1403, %v1412
    %v1426 = vadd.f32 %v1404, %v1412
    %v1427 = vadd.f32 %v1405, %v1412
    %v1428 = vadd.f32 %v1406, %v1412
    %v1429 = vadd.f32 %v1407, %v1412
    %v1430 = vsel %vm284, %v1414, -inf
    %1431 = vmax.xlane.f32.xlu0 %v1430
    %v1432 = vpop.xlane.xlu0 %1431
    %v1433 = vsel %vm284, %v1415, -inf
    %1434 = vmax.xlane.f32.xlu0 %v1433
    %v1435 = vpop.xlane.xlu0 %1434
    %v1436 = vsel %vm284, %v1416, -inf
    %1437 = vmax.xlane.f32.xlu0 %v1436
    %v1438 = vpop.xlane.xlu0 %1437
    %v1439 = vsel %vm284, %v1417, -inf
    %1440 = vmax.xlane.f32.xlu0 %v1439
    %v1441 = vpop.xlane.xlu0 %1440
    %v1442 = vsel %vm284, %v1418, -inf
    %1443 = vmax.xlane.f32.xlu0 %v1442
    %v1444 = vpop.xlane.xlu0 %1443
    %v1445 = vsel %vm284, %v1419, -inf
    %1446 = vmax.xlane.f32.xlu0 %v1445
    %v1447 = vpop.xlane.xlu0 %1446
    %v1448 = vsel %vm284, %v1420, -inf
    %1449 = vmax.xlane.f32.xlu0 %v1448
    %v1450 = vpop.xlane.xlu0 %1449
    %v1451 = vsel %vm284, %v1421, -inf
    %1452 = vmax.xlane.f32.xlu0 %v1451
    %v1453 = vpop.xlane.xlu0 %1452
    %v1454 = vsel %vm284, %v1422, -inf
    %1455 = vmax.xlane.f32.xlu0 %v1454
    %v1456 = vpop.xlane.xlu0 %1455
    %v1457 = vsel %vm284, %v1423, -inf
    %1458 = vmax.xlane.f32.xlu0 %v1457
    %v1459 = vpop.xlane.xlu0 %1458
    %v1460 = vsel %vm284, %v1424, -inf
    %1461 = vmax.xlane.f32.xlu0 %v1460
    %v1462 = vpop.xlane.xlu0 %1461
    %v1463 = vsel %vm284, %v1425, -inf
    %1464 = vmax.xlane.f32.xlu0 %v1463
    %v1465 = vpop.xlane.xlu0 %1464
    %v1466 = vsel %vm284, %v1426, -inf
    %1467 = vmax.xlane.f32.xlu0 %v1466
    %v1468 = vpop.xlane.xlu0 %1467
    %v1469 = vsel %vm284, %v1427, -inf
    %1470 = vmax.xlane.f32.xlu0 %v1469
    %v1471 = vpop.xlane.xlu0 %1470
    %v1472 = vsel %vm284, %v1428, -inf
    %1473 = vmax.xlane.f32.xlu0 %v1472
    %v1474 = vpop.xlane.xlu0 %1473
    %v1475 = vsel %vm284, %v1429, -inf
    %1476 = vmax.xlane.f32.xlu0 %v1475
    %v1477 = vpop.xlane.xlu0 %1476
    %v1478 = vsub.f32 %v1414, %v1432
    %v1479 = vsub.f32 %v1415, %v1435
    %v1480 = vsub.f32 %v1416, %v1438
    %v1481 = vsub.f32 %v1417, %v1441
    %v1482 = vsub.f32 %v1418, %v1444
    %v1483 = vsub.f32 %v1419, %v1447
    %v1484 = vsub.f32 %v1420, %v1450
    %v1485 = vsub.f32 %v1421, %v1453
    %v1486 = vsub.f32 %v1422, %v1456
    %v1487 = vsub.f32 %v1423, %v1459
    %v1488 = vsub.f32 %v1424, %v1462
    %v1489 = vsub.f32 %v1425, %v1465
    %v1490 = vsub.f32 %v1426, %v1468
    %v1491 = vsub.f32 %v1427, %v1471
    %v1492 = vsub.f32 %v1428, %v1474
    %v1493 = vsub.f32 %v1429, %v1477
    %v1494 = vmul.f32 %v1478, 1.442695
    %v1495 = vpow.pop %v1494
    %v1496 = vmul.f32 %v1479, 1.442695
    %v1497 = vpow.pop %v1496
    %v1498 = vmul.f32 %v1480, 1.442695
    %v1499 = vpow.pop %v1498
    %v1500 = vmul.f32 %v1481, 1.442695
    %v1501 = vpow.pop %v1500
    %v1502 = vmul.f32 %v1482, 1.442695
    %v1503 = vpow.pop %v1502
    %v1504 = vmul.f32 %v1483, 1.442695
    %v1505 = vpow.pop %v1504
    %v1506 = vmul.f32 %v1484, 1.442695
    %v1507 = vpow.pop %v1506
    %v1508 = vmul.f32 %v1485, 1.442695
    %v1509 = vpow.pop %v1508
    %v1510 = vmul.f32 %v1486, 1.442695
    %v1511 = vpow.pop %v1510
    %v1512 = vmul.f32 %v1487, 1.442695
    %v1513 = vpow.pop %v1512
    %v1514 = vmul.f32 %v1488, 1.442695
    %v1515 = vpow.pop %v1514
    %v1516 = vmul.f32 %v1489, 1.442695
    %v1517 = vpow.pop %v1516
    %v1518 = vmul.f32 %v1490, 1.442695
    %v1519 = vpow.pop %v1518
    %v1520 = vmul.f32 %v1491, 1.442695
    %v1521 = vpow.pop %v1520
    %v1522 = vmul.f32 %v1492, 1.442695
    %v1523 = vpow.pop %v1522
    %v1524 = vmul.f32 %v1493, 1.442695
    %v1525 = vpow.pop %v1524
    %v1526 = vsel %vm284, %v1495, 0.0
    %1527 = vadd.xlane.f32.xlu0 %v1526
    %v1528 = vpop.xlane.xlu0 %1527
    %v1529 = vsel %vm284, %v1497, 0.0
    %1530 = vadd.xlane.f32.xlu0 %v1529
    %v1531 = vpop.xlane.xlu0 %1530
    %v1532 = vsel %vm284, %v1499, 0.0
    %1533 = vadd.xlane.f32.xlu0 %v1532
    %v1534 = vpop.xlane.xlu0 %1533
    %v1535 = vsel %vm284, %v1501, 0.0
    %1536 = vadd.xlane.f32.xlu0 %v1535
    %v1537 = vpop.xlane.xlu0 %1536
    %v1538 = vsel %vm284, %v1503, 0.0
    %1539 = vadd.xlane.f32.xlu0 %v1538
    %v1540 = vpop.xlane.xlu0 %1539
    %v1541 = vsel %vm284, %v1505, 0.0
    %1542 = vadd.xlane.f32.xlu0 %v1541
    %v1543 = vpop.xlane.xlu0 %1542
    %v1544 = vsel %vm284, %v1507, 0.0
    %1545 = vadd.xlane.f32.xlu0 %v1544
    %v1546 = vpop.xlane.xlu0 %1545
    %v1547 = vsel %vm284, %v1509, 0.0
    %1548 = vadd.xlane.f32.xlu0 %v1547
    %v1549 = vpop.xlane.xlu0 %1548
    %v1550 = vsel %vm284, %v1511, 0.0
    %1551 = vadd.xlane.f32.xlu0 %v1550
    %v1552 = vpop.xlane.xlu0 %1551
    %v1553 = vsel %vm284, %v1513, 0.0
    %1554 = vadd.xlane.f32.xlu0 %v1553
    %v1555 = vpop.xlane.xlu0 %1554
    %v1556 = vsel %vm284, %v1515, 0.0
    %1557 = vadd.xlane.f32.xlu0 %v1556
    %v1558 = vpop.xlane.xlu0 %1557
    %v1559 = vsel %vm284, %v1517, 0.0
    %1560 = vadd.xlane.f32.xlu0 %v1559
    %v1561 = vpop.xlane.xlu0 %1560
    %v1562 = vsel %vm284, %v1519, 0.0
    %1563 = vadd.xlane.f32.xlu0 %v1562
    %v1564 = vpop.xlane.xlu0 %1563
    %v1565 = vsel %vm284, %v1521, 0.0
    %1566 = vadd.xlane.f32.xlu0 %v1565
    %v1567 = vpop.xlane.xlu0 %1566
    %v1568 = vsel %vm284, %v1523, 0.0
    %1569 = vadd.xlane.f32.xlu0 %v1568
    %v1570 = vpop.xlane.xlu0 %1569
    %v1571 = vsel %vm284, %v1525, 0.0
    %1572 = vadd.xlane.f32.xlu0 %v1571
    %v1573 = vpop.xlane.xlu0 %1572
    %v1574 = vrcp.pop %v1528
    %v1575 = vrcp.pop %v1531
    %v1576 = vrcp.pop %v1534
    %v1577 = vrcp.pop %v1537
    %v1578 = vrcp.pop %v1540
    %v1579 = vrcp.pop %v1543
    %v1580 = vrcp.pop %v1546
    %v1581 = vrcp.pop %v1549
    %v1582 = vrcp.pop %v1552
    %v1583 = vrcp.pop %v1555
    %v1584 = vrcp.pop %v1558
    %v1585 = vrcp.pop %v1561
    %v1586 = vrcp.pop %v1564
    %v1587 = vrcp.pop %v1567
    %v1588 = vrcp.pop %v1570
    %v1589 = vrcp.pop %v1573
    %v1590 = vmul.f32 %v1495, %v1574
    %v1591 = vmul.f32 %v1497, %v1575
    %v1592 = vmul.f32 %v1499, %v1576
    %v1593 = vmul.f32 %v1501, %v1577
    %v1594 = vmul.f32 %v1503, %v1578
    %v1595 = vmul.f32 %v1505, %v1579
    %v1596 = vmul.f32 %v1507, %v1580
    %v1597 = vmul.f32 %v1509, %v1581
    %v1598 = vmul.f32 %v1511, %v1582
    %v1599 = vmul.f32 %v1513, %v1583
    %v1600 = vmul.f32 %v1515, %v1584
    %v1601 = vmul.f32 %v1517, %v1585
    %v1602 = vmul.f32 %v1519, %v1586
    %v1603 = vmul.f32 %v1521, %v1587
    %v1604 = vmul.f32 %v1523, %v1588
    %v1605 = vmul.f32 %v1525, %v1589
    %1606 = vxpose.xlu0.b32.start [1/16] %v1590, 128
    %1607 = vxpose.xlu0.b32.cont [2/16] %v1591, 128
    %1608 = vxpose.xlu0.b32.cont [3/16] 0.0, 128
    %1609 = vxpose.xlu0.b32.cont [4/16] 0.0, 128
    %1610 = vxpose.xlu0.b32.cont [5/16] 0.0, 128
    %1611 = vxpose.xlu0.b32.cont [6/16] 0.0, 128
    %1612 = vxpose.xlu0.b32.cont [7/16] 0.0, 128
    %1613 = vxpose.xlu0.b32.cont [8/16] 0.0, 128
    %1614 = vxpose.xlu0.b32.cont [9/16] 0.0, 128
    %1615 = vxpose.xlu0.b32.cont [10/16] 0.0, 128
    %1616 = vxpose.xlu0.b32.cont [11/16] 0.0, 128
    %1617 = vxpose.xlu0.b32.cont [12/16] 0.0, 128
    %1618 = vxpose.xlu0.b32.cont [13/16] 0.0, 128
    %1619 = vxpose.xlu0.b32.cont [14/16] 0.0, 128
    %1620 = vxpose.xlu0.b32.cont [15/16] 0.0, 128
    %1621 = vxpose.xlu0.b32.end [16/16] 0.0, 128
    %v1622 = vpop.trf.xlu0
    %v1623 = vpop.trf.xlu0
    %v1624 = vpop.trf.xlu0
    %v1625 = vpop.trf.xlu0
    %v1626 = vpop.trf.xlu0
    %v1627 = vpop.trf.xlu0
    %v1628 = vpop.trf.xlu0
    %v1629 = vpop.trf.xlu0
    %v1630 = vpop.trf.xlu0
    %v1631 = vpop.trf.xlu0
    %v1632 = vpop.trf.xlu0
    %v1633 = vpop.trf.xlu0
    %v1634 = vpop.trf.xlu0
    %v1635 = vpop.trf.xlu0
    %v1636 = vpop.trf.xlu0
    %v1637 = vpop.trf.xlu0
    %1638 = vrot.lane.b32.xlu0 %v234, 64
    %v1639 = vpop.permute.xlu0 %1638
    %1640 = vrot.lane.b32.xlu0 %v239, 64
    %v1641 = vpop.permute.xlu0 %1640
    %v1645 = vsel %vm983, %v1622, 0
    %1647 = vmatprep.subr.mxu0 0.0
    %1648 = vmatpush1.msra.mxu0 %v1639
    %1649 = vmatprep.subr.mxu0 0.0
    %1650 = vmatpush1.msra.mxu0 %v1641
    %1651 = vmatprep.subr.mxu0 0.0
    %1652 = vmatpush1.msra.mxu0 0.0
    %1653 = vmatprep.subr.mxu0 0.0
    %1654 = vmatpush1.msra.mxu0 0.0
    %1655 = vmatprep.subr.mxu0 0.0
    %1656 = vmatpush1.msra.mxu0 0.0
    %1657 = vmatprep.subr.mxu0 0.0
    %1658 = vmatpush1.msra.mxu0 0.0
    %1659 = vmatprep.subr.mxu0 0.0
    %1660 = vmatpush1.msra.mxu0 0.0
    %1661 = vmatprep.subr.mxu0 0.0
    %1662 = vmatpush1.msra.mxu0 0.0
    %1663 = vmatprep.subr.mxu0 0.0
    %1664 = vmatpush1.msra.mxu0 0.0
    %1665 = vmatprep.subr.mxu0 0.0
    %1666 = vmatpush1.msra.mxu0 0.0
    %1667 = vmatprep.subr.mxu0 0.0
    %1668 = vmatpush1.msra.mxu0 0.0
    %1669 = vmatprep.subr.mxu0 0.0
    %1670 = vmatpush1.msra.mxu0 0.0
    %1671 = vmatprep.subr.mxu0 0.0
    %1672 = vmatpush1.msra.mxu0 0.0
    %1673 = vmatprep.subr.mxu0 0.0
    %1674 = vmatpush1.msra.mxu0 0.0
    %1675 = vmatprep.subr.mxu0 0.0
    %1676 = vmatpush1.msra.mxu0 0.0
    %1677 = vmatprep.subr.mxu0 0.0
    %1678 = vmatpush1.msra.mxu0 0.0
    %1679 = vmatprep.subr.mxu0 0.0
    %1680 = vmatpush1.msra.mxu0 0.0
    %1681 = vmatprep.subr.mxu0 0.0
    %1682 = vmatpush1.msra.mxu0 0.0
    %1683 = vmatprep.subr.mxu0 0.0
    %1684 = vmatpush1.msra.mxu0 0.0
    %1685 = vmatprep.subr.mxu0 0.0
    %1686 = vmatpush1.msra.mxu0 0.0
    %1687 = vmatprep.subr.mxu0 0.0
    %1688 = vmatpush1.msra.mxu0 0.0
    %1689 = vmatprep.subr.mxu0 0.0
    %1690 = vmatpush1.msra.mxu0 0.0
    %1691 = vmatprep.subr.mxu0 0.0
    %1692 = vmatpush1.msra.mxu0 0.0
    %1693 = vmatprep.subr.mxu0 0.0
    %1694 = vmatpush1.msra.mxu0 0.0
    %1695 = vmatprep.subr.mxu0 0.0
    %1696 = vmatpush1.msra.mxu0 0.0
    %1697 = vmatprep.subr.mxu0 0.0
    %1698 = vmatpush1.msra.mxu0 0.0
    %1699 = vmatprep.subr.mxu0 0.0
    %1700 = vmatpush1.msra.mxu0 0.0
    %1701 = vmatprep.subr.mxu0 0.0
    %1702 = vmatpush1.msra.mxu0 0.0
    %1703 = vmatprep.subr.mxu0 0.0
    %1704 = vmatpush1.msra.mxu0 0.0
    %1705 = vmatprep.subr.mxu0 0.0
    %1706 = vmatpush1.msra.mxu0 0.0
    %1707 = vmatprep.subr.mxu0 0.0
    %1708 = vmatpush1.msra.mxu0 0.0
    %1709 = vmatprep.subr.mxu0 0.0
    %1710 = vmatpush1.msra.mxu0 0.0
    %1711 = vmatprep.mubr.f32.mxu0 0.0
    %1712 = vmatmul.mubr.f32.gmra.mrb[0].mxu0 %v1645
    %v1713 = vpop.f32.mrb[0].mxu0
    %v1714 = vadd.f32 0.0, %v1713
    %v1715 = vpop.f32.mrb[0].mxu0
    %1716 = vdwg.mxu0
    %1717 = vxpose.xlu0.b32.start [1/16] %v1592, 128
    %1718 = vxpose.xlu0.b32.cont [2/16] %v1593, 128
    %1719 = vxpose.xlu0.b32.cont [3/16] 0.0, 128
    %1720 = vxpose.xlu0.b32.cont [4/16] 0.0, 128
    %1721 = vxpose.xlu0.b32.cont [5/16] 0.0, 128
    %1722 = vxpose.xlu0.b32.cont [6/16] 0.0, 128
    %1723 = vxpose.xlu0.b32.cont [7/16] 0.0, 128
    %1724 = vxpose.xlu0.b32.cont [8/16] 0.0, 128
    %1725 = vxpose.xlu0.b32.cont [9/16] 0.0, 128
    %1726 = vxpose.xlu0.b32.cont [10/16] 0.0, 128
    %1727 = vxpose.xlu0.b32.cont [11/16] 0.0, 128
    %1728 = vxpose.xlu0.b32.cont [12/16] 0.0, 128
    %1729 = vxpose.xlu0.b32.cont [13/16] 0.0, 128
    %1730 = vxpose.xlu0.b32.cont [14/16] 0.0, 128
    %1731 = vxpose.xlu0.b32.cont [15/16] 0.0, 128
    %1732 = vxpose.xlu0.b32.end [16/16] 0.0, 128
    %v1733 = vpop.trf.xlu0
    %v1734 = vpop.trf.xlu0
    %v1735 = vpop.trf.xlu0
    %v1736 = vpop.trf.xlu0
    %v1737 = vpop.trf.xlu0
    %v1738 = vpop.trf.xlu0
    %v1739 = vpop.trf.xlu0
    %v1740 = vpop.trf.xlu0
    %v1741 = vpop.trf.xlu0
    %v1742 = vpop.trf.xlu0
    %v1743 = vpop.trf.xlu0
    %v1744 = vpop.trf.xlu0
    %v1745 = vpop.trf.xlu0
    %v1746 = vpop.trf.xlu0
    %v1747 = vpop.trf.xlu0
    %v1748 = vpop.trf.xlu0
    %1749 = vrot.lane.b32.xlu0 %v244, 64
    %v1750 = vpop.permute.xlu0 %1749
    %1751 = vrot.lane.b32.xlu0 %v249, 64
    %v1752 = vpop.permute.xlu0 %1751
    %v1756 = vsel %vm983, %v1733, 0
    %1758 = vmatprep.subr.mxu0 0.0
    %1759 = vmatpush1.msra.mxu0 %v1750
    %1760 = vmatprep.subr.mxu0 0.0
    %1761 = vmatpush1.msra.mxu0 %v1752
    %1762 = vmatprep.subr.mxu0 0.0
    %1763 = vmatpush1.msra.mxu0 0.0
    %1764 = vmatprep.subr.mxu0 0.0
    %1765 = vmatpush1.msra.mxu0 0.0
    %1766 = vmatprep.subr.mxu0 0.0
    %1767 = vmatpush1.msra.mxu0 0.0
    %1768 = vmatprep.subr.mxu0 0.0
    %1769 = vmatpush1.msra.mxu0 0.0
    %1770 = vmatprep.subr.mxu0 0.0
    %1771 = vmatpush1.msra.mxu0 0.0
    %1772 = vmatprep.subr.mxu0 0.0
    %1773 = vmatpush1.msra.mxu0 0.0
    %1774 = vmatprep.subr.mxu0 0.0
    %1775 = vmatpush1.msra.mxu0 0.0
    %1776 = vmatprep.subr.mxu0 0.0
    %1777 = vmatpush1.msra.mxu0 0.0
    %1778 = vmatprep.subr.mxu0 0.0
    %1779 = vmatpush1.msra.mxu0 0.0
    %1780 = vmatprep.subr.mxu0 0.0
    %1781 = vmatpush1.msra.mxu0 0.0
    %1782 = vmatprep.subr.mxu0 0.0
    %1783 = vmatpush1.msra.mxu0 0.0
    %1784 = vmatprep.subr.mxu0 0.0
    %1785 = vmatpush1.msra.mxu0 0.0
    %1786 = vmatprep.subr.mxu0 0.0
    %1787 = vmatpush1.msra.mxu0 0.0
    %1788 = vmatprep.subr.mxu0 0.0
    %1789 = vmatpush1.msra.mxu0 0.0
    %1790 = vmatprep.subr.mxu0 0.0
    %1791 = vmatpush1.msra.mxu0 0.0
    %1792 = vmatprep.subr.mxu0 0.0
    %1793 = vmatpush1.msra.mxu0 0.0
    %1794 = vmatprep.subr.mxu0 0.0
    %1795 = vmatpush1.msra.mxu0 0.0
    %1796 = vmatprep.subr.mxu0 0.0
    %1797 = vmatpush1.msra.mxu0 0.0
    %1798 = vmatprep.subr.mxu0 0.0
    %1799 = vmatpush1.msra.mxu0 0.0
    %1800 = vmatprep.subr.mxu0 0.0
    %1801 = vmatpush1.msra.mxu0 0.0
    %1802 = vmatprep.subr.mxu0 0.0
    %1803 = vmatpush1.msra.mxu0 0.0
    %1804 = vmatprep.subr.mxu0 0.0
    %1805 = vmatpush1.msra.mxu0 0.0
    %1806 = vmatprep.subr.mxu0 0.0
    %1807 = vmatpush1.msra.mxu0 0.0
    %1808 = vmatprep.subr.mxu0 0.0
    %1809 = vmatpush1.msra.mxu0 0.0
    %1810 = vmatprep.subr.mxu0 0.0
    %1811 = vmatpush1.msra.mxu0 0.0
    %1812 = vmatprep.subr.mxu0 0.0
    %1813 = vmatpush1.msra.mxu0 0.0
    %1814 = vmatprep.subr.mxu0 0.0
    %1815 = vmatpush1.msra.mxu0 0.0
    %1816 = vmatprep.subr.mxu0 0.0
    %1817 = vmatpush1.msra.mxu0 0.0
    %1818 = vmatprep.subr.mxu0 0.0
    %1819 = vmatpush1.msra.mxu0 0.0
    %1820 = vmatprep.subr.mxu0 0.0
    %1821 = vmatpush1.msra.mxu0 0.0
    %1822 = vmatprep.mubr.f32.mxu0 0.0
    %1823 = vmatmul.mubr.f32.gmra.mrb[0].mxu0 %v1756
    %v1824 = vpop.f32.mrb[0].mxu0
    %v1825 = vadd.f32 0.0, %v1824
    %v1826 = vpop.f32.mrb[0].mxu0
    %1827 = vdwg.mxu0
    %1828 = vxpose.xlu0.b32.start [1/16] %v1594, 128
    %1829 = vxpose.xlu0.b32.cont [2/16] %v1595, 128
    %1830 = vxpose.xlu0.b32.cont [3/16] 0.0, 128
    %1831 = vxpose.xlu0.b32.cont [4/16] 0.0, 128
    %1832 = vxpose.xlu0.b32.cont [5/16] 0.0, 128
    %1833 = vxpose.xlu0.b32.cont [6/16] 0.0, 128
    %1834 = vxpose.xlu0.b32.cont [7/16] 0.0, 128
    %1835 = vxpose.xlu0.b32.cont [8/16] 0.0, 128
    %1836 = vxpose.xlu0.b32.cont [9/16] 0.0, 128
    %1837 = vxpose.xlu0.b32.cont [10/16] 0.0, 128
    %1838 = vxpose.xlu0.b32.cont [11/16] 0.0, 128
    %1839 = vxpose.xlu0.b32.cont [12/16] 0.0, 128
    %1840 = vxpose.xlu0.b32.cont [13/16] 0.0, 128
    %1841 = vxpose.xlu0.b32.cont [14/16] 0.0, 128
    %1842 = vxpose.xlu0.b32.cont [15/16] 0.0, 128
    %1843 = vxpose.xlu0.b32.end [16/16] 0.0, 128
    %v1844 = vpop.trf.xlu0
    %v1845 = vpop.trf.xlu0
    %v1846 = vpop.trf.xlu0
    %v1847 = vpop.trf.xlu0
    %v1848 = vpop.trf.xlu0
    %v1849 = vpop.trf.xlu0
    %v1850 = vpop.trf.xlu0
    %v1851 = vpop.trf.xlu0
    %v1852 = vpop.trf.xlu0
    %v1853 = vpop.trf.xlu0
    %v1854 = vpop.trf.xlu0
    %v1855 = vpop.trf.xlu0
    %v1856 = vpop.trf.xlu0
    %v1857 = vpop.trf.xlu0
    %v1858 = vpop.trf.xlu0
    %v1859 = vpop.trf.xlu0
    %1860 = vrot.lane.b32.xlu0 %v257, 64
    %v1861 = vpop.permute.xlu0 %1860
    %1862 = vrot.lane.b32.xlu0 %v259, 64
    %v1863 = vpop.permute.xlu0 %1862
    %v1867 = vsel %vm983, %v1844, 0
    %1869 = vmatprep.subr.mxu0 0.0
    %1870 = vmatpush1.msra.mxu0 %v1861
    %1871 = vmatprep.subr.mxu0 0.0
    %1872 = vmatpush1.msra.mxu0 %v1863
    %1873 = vmatprep.subr.mxu0 0.0
    %1874 = vmatpush1.msra.mxu0 0.0
    %1875 = vmatprep.subr.mxu0 0.0
    %1876 = vmatpush1.msra.mxu0 0.0
    %1877 = vmatprep.subr.mxu0 0.0
    %1878 = vmatpush1.msra.mxu0 0.0
    %1879 = vmatprep.subr.mxu0 0.0
    %1880 = vmatpush1.msra.mxu0 0.0
    %1881 = vmatprep.subr.mxu0 0.0
    %1882 = vmatpush1.msra.mxu0 0.0
    %1883 = vmatprep.subr.mxu0 0.0
    %1884 = vmatpush1.msra.mxu0 0.0
    %1885 = vmatprep.subr.mxu0 0.0
    %1886 = vmatpush1.msra.mxu0 0.0
    %1887 = vmatprep.subr.mxu0 0.0
    %1888 = vmatpush1.msra.mxu0 0.0
    %1889 = vmatprep.subr.mxu0 0.0
    %1890 = vmatpush1.msra.mxu0 0.0
    %1891 = vmatprep.subr.mxu0 0.0
    %1892 = vmatpush1.msra.mxu0 0.0
    %1893 = vmatprep.subr.mxu0 0.0
    %1894 = vmatpush1.msra.mxu0 0.0
    %1895 = vmatprep.subr.mxu0 0.0
    %1896 = vmatpush1.msra.mxu0 0.0
    %1897 = vmatprep.subr.mxu0 0.0
    %1898 = vmatpush1.msra.mxu0 0.0
    %1899 = vmatprep.subr.mxu0 0.0
    %1900 = vmatpush1.msra.mxu0 0.0
    %1901 = vmatprep.subr.mxu0 0.0
    %1902 = vmatpush1.msra.mxu0 0.0
    %1903 = vmatprep.subr.mxu0 0.0
    %1904 = vmatpush1.msra.mxu0 0.0
    %1905 = vmatprep.subr.mxu0 0.0
    %1906 = vmatpush1.msra.mxu0 0.0
    %1907 = vmatprep.subr.mxu0 0.0
    %1908 = vmatpush1.msra.mxu0 0.0
    %1909 = vmatprep.subr.mxu0 0.0
    %1910 = vmatpush1.msra.mxu0 0.0
    %1911 = vmatprep.subr.mxu0 0.0
    %1912 = vmatpush1.msra.mxu0 0.0
    %1913 = vmatprep.subr.mxu0 0.0
    %1914 = vmatpush1.msra.mxu0 0.0
    %1915 = vmatprep.subr.mxu0 0.0
    %1916 = vmatpush1.msra.mxu0 0.0
    %1917 = vmatprep.subr.mxu0 0.0
    %1918 = vmatpush1.msra.mxu0 0.0
    %1919 = vmatprep.subr.mxu0 0.0
    %1920 = vmatpush1.msra.mxu0 0.0
    %1921 = vmatprep.subr.mxu0 0.0
    %1922 = vmatpush1.msra.mxu0 0.0
    %1923 = vmatprep.subr.mxu0 0.0
    %1924 = vmatpush1.msra.mxu0 0.0
    %1925 = vmatprep.subr.mxu0 0.0
    %1926 = vmatpush1.msra.mxu0 0.0
    %1927 = vmatprep.subr.mxu0 0.0
    %1928 = vmatpush1.msra.mxu0 0.0
    %1929 = vmatprep.subr.mxu0 0.0
    %1930 = vmatpush1.msra.mxu0 0.0
    %1931 = vmatprep.subr.mxu0 0.0
    %1932 = vmatpush1.msra.mxu0 0.0
    %1933 = vmatprep.mubr.f32.mxu0 0.0
    %1934 = vmatmul.mubr.f32.gmra.mrb[0].mxu0 %v1867
    %v1935 = vpop.f32.mrb[0].mxu0
    %v1936 = vadd.f32 0.0, %v1935
    %v1937 = vpop.f32.mrb[0].mxu0
    %1938 = vdwg.mxu0
    %1939 = vxpose.xlu0.b32.start [1/16] %v1596, 128
    %1940 = vxpose.xlu0.b32.cont [2/16] %v1597, 128
    %1941 = vxpose.xlu0.b32.cont [3/16] 0.0, 128
    %1942 = vxpose.xlu0.b32.cont [4/16] 0.0, 128
    %1943 = vxpose.xlu0.b32.cont [5/16] 0.0, 128
    %1944 = vxpose.xlu0.b32.cont [6/16] 0.0, 128
    %1945 = vxpose.xlu0.b32.cont [7/16] 0.0, 128
    %1946 = vxpose.xlu0.b32.cont [8/16] 0.0, 128
    %1947 = vxpose.xlu0.b32.cont [9/16] 0.0, 128
    %1948 = vxpose.xlu0.b32.cont [10/16] 0.0, 128
    %1949 = vxpose.xlu0.b32.cont [11/16] 0.0, 128
    %1950 = vxpose.xlu0.b32.cont [12/16] 0.0, 128
    %1951 = vxpose.xlu0.b32.cont [13/16] 0.0, 128
    %1952 = vxpose.xlu0.b32.cont [14/16] 0.0, 128
    %1953 = vxpose.xlu0.b32.cont [15/16] 0.0, 128
    %1954 = vxpose.xlu0.b32.end [16/16] 0.0, 128
    %v1955 = vpop.trf.xlu0
    %v1956 = vpop.trf.xlu0
    %v1957 = vpop.trf.xlu0
    %v1958 = vpop.trf.xlu0
    %v1959 = vpop.trf.xlu0
    %v1960 = vpop.trf.xlu0
    %v1961 = vpop.trf.xlu0
    %v1962 = vpop.trf.xlu0
    %v1963 = vpop.trf.xlu0
    %v1964 = vpop.trf.xlu0
    %v1965 = vpop.trf.xlu0
    %v1966 = vpop.trf.xlu0
    %v1967 = vpop.trf.xlu0
    %v1968 = vpop.trf.xlu0
    %v1969 = vpop.trf.xlu0
    %v1970 = vpop.trf.xlu0
    %1971 = vrot.lane.b32.xlu0 %v261, 64
    %v1972 = vpop.permute.xlu0 %1971
    %1973 = vrot.lane.b32.xlu0 %v263, 64
    %v1974 = vpop.permute.xlu0 %1973
    %v1978 = vsel %vm983, %v1955, 0
    %1980 = vmatprep.subr.mxu0 0.0
    %1981 = vmatpush1.msra.mxu0 %v1972
    %1982 = vmatprep.subr.mxu0 0.0
    %1983 = vmatpush1.msra.mxu0 %v1974
    %1984 = vmatprep.subr.mxu0 0.0
    %1985 = vmatpush1.msra.mxu0 0.0
    %1986 = vmatprep.subr.mxu0 0.0
    %1987 = vmatpush1.msra.mxu0 0.0
    %1988 = vmatprep.subr.mxu0 0.0
    %1989 = vmatpush1.msra.mxu0 0.0
    %1990 = vmatprep.subr.mxu0 0.0
    %1991 = vmatpush1.msra.mxu0 0.0
    %1992 = vmatprep.subr.mxu0 0.0
    %1993 = vmatpush1.msra.mxu0 0.0
    %1994 = vmatprep.subr.mxu0 0.0
    %1995 = vmatpush1.msra.mxu0 0.0
    %1996 = vmatprep.subr.mxu0 0.0
    %1997 = vmatpush1.msra.mxu0 0.0
    %1998 = vmatprep.subr.mxu0 0.0
    %1999 = vmatpush1.msra.mxu0 0.0
    %2000 = vmatprep.subr.mxu0 0.0
    %2001 = vmatpush1.msra.mxu0 0.0
    %2002 = vmatprep.subr.mxu0 0.0
    %2003 = vmatpush1.msra.mxu0 0.0
    %2004 = vmatprep.subr.mxu0 0.0
    %2005 = vmatpush1.msra.mxu0 0.0
    %2006 = vmatprep.subr.mxu0 0.0
    %2007 = vmatpush1.msra.mxu0 0.0
    %2008 = vmatprep.subr.mxu0 0.0
    %2009 = vmatpush1.msra.mxu0 0.0
    %2010 = vmatprep.subr.mxu0 0.0
    %2011 = vmatpush1.msra.mxu0 0.0
    %2012 = vmatprep.subr.mxu0 0.0
    %2013 = vmatpush1.msra.mxu0 0.0
    %2014 = vmatprep.subr.mxu0 0.0
    %2015 = vmatpush1.msra.mxu0 0.0
    %2016 = vmatprep.subr.mxu0 0.0
    %2017 = vmatpush1.msra.mxu0 0.0
    %2018 = vmatprep.subr.mxu0 0.0
    %2019 = vmatpush1.msra.mxu0 0.0
    %2020 = vmatprep.subr.mxu0 0.0
    %2021 = vmatpush1.msra.mxu0 0.0
    %2022 = vmatprep.subr.mxu0 0.0
    %2023 = vmatpush1.msra.mxu0 0.0
    %2024 = vmatprep.subr.mxu0 0.0
    %2025 = vmatpush1.msra.mxu0 0.0
    %2026 = vmatprep.subr.mxu0 0.0
    %2027 = vmatpush1.msra.mxu0 0.0
    %2028 = vmatprep.subr.mxu0 0.0
    %2029 = vmatpush1.msra.mxu0 0.0
    %2030 = vmatprep.subr.mxu0 0.0
    %2031 = vmatpush1.msra.mxu0 0.0
    %2032 = vmatprep.subr.mxu0 0.0
    %2033 = vmatpush1.msra.mxu0 0.0
    %2034 = vmatprep.subr.mxu0 0.0
    %2035 = vmatpush1.msra.mxu0 0.0
    %2036 = vmatprep.subr.mxu0 0.0
    %2037 = vmatpush1.msra.mxu0 0.0
    %2038 = vmatprep.subr.mxu0 0.0
    %2039 = vmatpush1.msra.mxu0 0.0
    %2040 = vmatprep.subr.mxu0 0.0
    %2041 = vmatpush1.msra.mxu0 0.0
    %2042 = vmatprep.subr.mxu0 0.0
    %2043 = vmatpush1.msra.mxu0 0.0
    %2044 = vmatprep.mubr.f32.mxu0 0.0
    %2045 = vmatmul.mubr.f32.gmra.mrb[0].mxu0 %v1978
    %v2046 = vpop.f32.mrb[0].mxu0
    %v2047 = vadd.f32 0.0, %v2046
    %v2048 = vpop.f32.mrb[0].mxu0
    %2049 = vdwg.mxu0
    %2050 = vxpose.xlu0.b32.start [1/16] %v1598, 128
    %2051 = vxpose.xlu0.b32.cont [2/16] %v1599, 128
    %2052 = vxpose.xlu0.b32.cont [3/16] 0.0, 128
    %2053 = vxpose.xlu0.b32.cont [4/16] 0.0, 128
    %2054 = vxpose.xlu0.b32.cont [5/16] 0.0, 128
    %2055 = vxpose.xlu0.b32.cont [6/16] 0.0, 128
    %2056 = vxpose.xlu0.b32.cont [7/16] 0.0, 128
    %2057 = vxpose.xlu0.b32.cont [8/16] 0.0, 128
    %2058 = vxpose.xlu0.b32.cont [9/16] 0.0, 128
    %2059 = vxpose.xlu0.b32.cont [10/16] 0.0, 128
    %2060 = vxpose.xlu0.b32.cont [11/16] 0.0, 128
    %2061 = vxpose.xlu0.b32.cont [12/16] 0.0, 128
    %2062 = vxpose.xlu0.b32.cont [13/16] 0.0, 128
    %2063 = vxpose.xlu0.b32.cont [14/16] 0.0, 128
    %2064 = vxpose.xlu0.b32.cont [15/16] 0.0, 128
    %2065 = vxpose.xlu0.b32.end [16/16] 0.0, 128
    %v2066 = vpop.trf.xlu0
    %v2067 = vpop.trf.xlu0
    %v2068 = vpop.trf.xlu0
    %v2069 = vpop.trf.xlu0
    %v2070 = vpop.trf.xlu0
    %v2071 = vpop.trf.xlu0
    %v2072 = vpop.trf.xlu0
    %v2073 = vpop.trf.xlu0
    %v2074 = vpop.trf.xlu0
    %v2075 = vpop.trf.xlu0
    %v2076 = vpop.trf.xlu0
    %v2077 = vpop.trf.xlu0
    %v2078 = vpop.trf.xlu0
    %v2079 = vpop.trf.xlu0
    %v2080 = vpop.trf.xlu0
    %v2081 = vpop.trf.xlu0
    %2082 = vrot.lane.b32.xlu0 %v265, 64
    %v2083 = vpop.permute.xlu0 %2082
    %2084 = vrot.lane.b32.xlu0 %v267, 64
    %v2085 = vpop.permute.xlu0 %2084
    %v2089 = vsel %vm983, %v2066, 0
    %2091 = vmatprep.subr.mxu0 0.0
    %2092 = vmatpush1.msra.mxu0 %v2083
    %2093 = vmatprep.subr.mxu0 0.0
    %2094 = vmatpush1.msra.mxu0 %v2085
    %2095 = vmatprep.subr.mxu0 0.0
    %2096 = vmatpush1.msra.mxu0 0.0
    %2097 = vmatprep.subr.mxu0 0.0
    %2098 = vmatpush1.msra.mxu0 0.0
    %2099 = vmatprep.subr.mxu0 0.0
    %2100 = vmatpush1.msra.mxu0 0.0
    %2101 = vmatprep.subr.mxu0 0.0
    %2102 = vmatpush1.msra.mxu0 0.0
    %2103 = vmatprep.subr.mxu0 0.0
    %2104 = vmatpush1.msra.mxu0 0.0
    %2105 = vmatprep.subr.mxu0 0.0
    %2106 = vmatpush1.msra.mxu0 0.0
    %2107 = vmatprep.subr.mxu0 0.0
    %2108 = vmatpush1.msra.mxu0 0.0
    %2109 = vmatprep.subr.mxu0 0.0
    %2110 = vmatpush1.msra.mxu0 0.0
    %2111 = vmatprep.subr.mxu0 0.0
    %2112 = vmatpush1.msra.mxu0 0.0
    %2113 = vmatprep.subr.mxu0 0.0
    %2114 = vmatpush1.msra.mxu0 0.0
    %2115 = vmatprep.subr.mxu0 0.0
    %2116 = vmatpush1.msra.mxu0 0.0
    %2117 = vmatprep.subr.mxu0 0.0
    %2118 = vmatpush1.msra.mxu0 0.0
    %2119 = vmatprep.subr.mxu0 0.0
    %2120 = vmatpush1.msra.mxu0 0.0
    %2121 = vmatprep.subr.mxu0 0.0
    %2122 = vmatpush1.msra.mxu0 0.0
    %2123 = vmatprep.subr.mxu0 0.0
    %2124 = vmatpush1.msra.mxu0 0.0
    %2125 = vmatprep.subr.mxu0 0.0
    %2126 = vmatpush1.msra.mxu0 0.0
    %2127 = vmatprep.subr.mxu0 0.0
    %2128 = vmatpush1.msra.mxu0 0.0
    %2129 = vmatprep.subr.mxu0 0.0
    %2130 = vmatpush1.msra.mxu0 0.0
    %2131 = vmatprep.subr.mxu0 0.0
    %2132 = vmatpush1.msra.mxu0 0.0
    %2133 = vmatprep.subr.mxu0 0.0
    %2134 = vmatpush1.msra.mxu0 0.0
    %2135 = vmatprep.subr.mxu0 0.0
    %2136 = vmatpush1.msra.mxu0 0.0
    %2137 = vmatprep.subr.mxu0 0.0
    %2138 = vmatpush1.msra.mxu0 0.0
    %2139 = vmatprep.subr.mxu0 0.0
    %2140 = vmatpush1.msra.mxu0 0.0
    %2141 = vmatprep.subr.mxu0 0.0
    %2142 = vmatpush1.msra.mxu0 0.0
    %2143 = vmatprep.subr.mxu0 0.0
    %2144 = vmatpush1.msra.mxu0 0.0
    %2145 = vmatprep.subr.mxu0 0.0
    %2146 = vmatpush1.msra.mxu0 0.0
    %2147 = vmatprep.subr.mxu0 0.0
    %2148 = vmatpush1.msra.mxu0 0.0
    %2149 = vmatprep.subr.mxu0 0.0
    %2150 = vmatpush1.msra.mxu0 0.0
    %2151 = vmatprep.subr.mxu0 0.0
    %2152 = vmatpush1.msra.mxu0 0.0
    %2153 = vmatprep.subr.mxu0 0.0
    %2154 = vmatpush1.msra.mxu0 0.0
    %2155 = vmatprep.mubr.f32.mxu0 0.0
    %2156 = vmatmul.mubr.f32.gmra.mrb[0].mxu0 %v2089
    %v2157 = vpop.f32.mrb[0].mxu0
    %v2158 = vadd.f32 0.0, %v2157
    %v2159 = vpop.f32.mrb[0].mxu0
    %2160 = vdwg.mxu0
    %2161 = vxpose.xlu0.b32.start [1/16] %v1600, 128
    %2162 = vxpose.xlu0.b32.cont [2/16] %v1601, 128
    %2163 = vxpose.xlu0.b32.cont [3/16] 0.0, 128
    %2164 = vxpose.xlu0.b32.cont [4/16] 0.0, 128
    %2165 = vxpose.xlu0.b32.cont [5/16] 0.0, 128
    %2166 = vxpose.xlu0.b32.cont [6/16] 0.0, 128
    %2167 = vxpose.xlu0.b32.cont [7/16] 0.0, 128
    %2168 = vxpose.xlu0.b32.cont [8/16] 0.0, 128
    %2169 = vxpose.xlu0.b32.cont [9/16] 0.0, 128
    %2170 = vxpose.xlu0.b32.cont [10/16] 0.0, 128
    %2171 = vxpose.xlu0.b32.cont [11/16] 0.0, 128
    %2172 = vxpose.xlu0.b32.cont [12/16] 0.0, 128
    %2173 = vxpose.xlu0.b32.cont [13/16] 0.0, 128
    %2174 = vxpose.xlu0.b32.cont [14/16] 0.0, 128
    %2175 = vxpose.xlu0.b32.cont [15/16] 0.0, 128
    %2176 = vxpose.xlu0.b32.end [16/16] 0.0, 128
    %v2177 = vpop.trf.xlu0
    %v2178 = vpop.trf.xlu0
    %v2179 = vpop.trf.xlu0
    %v2180 = vpop.trf.xlu0
    %v2181 = vpop.trf.xlu0
    %v2182 = vpop.trf.xlu0
    %v2183 = vpop.trf.xlu0
    %v2184 = vpop.trf.xlu0
    %v2185 = vpop.trf.xlu0
    %v2186 = vpop.trf.xlu0
    %v2187 = vpop.trf.xlu0
    %v2188 = vpop.trf.xlu0
    %v2189 = vpop.trf.xlu0
    %v2190 = vpop.trf.xlu0
    %v2191 = vpop.trf.xlu0
    %v2192 = vpop.trf.xlu0
    %2193 = vrot.lane.b32.xlu0 %v269, 64
    %v2194 = vpop.permute.xlu0 %2193
    %2195 = vrot.lane.b32.xlu0 %v271, 64
    %v2196 = vpop.permute.xlu0 %2195
    %v2200 = vsel %vm983, %v2177, 0
    %2202 = vmatprep.subr.mxu0 0.0
    %2203 = vmatpush1.msra.mxu0 %v2194
    %2204 = vmatprep.subr.mxu0 0.0
    %2205 = vmatpush1.msra.mxu0 %v2196
    %2206 = vmatprep.subr.mxu0 0.0
    %2207 = vmatpush1.msra.mxu0 0.0
    %2208 = vmatprep.subr.mxu0 0.0
    %2209 = vmatpush1.msra.mxu0 0.0
    %2210 = vmatprep.subr.mxu0 0.0
    %2211 = vmatpush1.msra.mxu0 0.0
    %2212 = vmatprep.subr.mxu0 0.0
    %2213 = vmatpush1.msra.mxu0 0.0
    %2214 = vmatprep.subr.mxu0 0.0
    %2215 = vmatpush1.msra.mxu0 0.0
    %2216 = vmatprep.subr.mxu0 0.0
    %2217 = vmatpush1.msra.mxu0 0.0
    %2218 = vmatprep.subr.mxu0 0.0
    %2219 = vmatpush1.msra.mxu0 0.0
    %2220 = vmatprep.subr.mxu0 0.0
    %2221 = vmatpush1.msra.mxu0 0.0
    %2222 = vmatprep.subr.mxu0 0.0
    %2223 = vmatpush1.msra.mxu0 0.0
    %2224 = vmatprep.subr.mxu0 0.0
    %2225 = vmatpush1.msra.mxu0 0.0
    %2226 = vmatprep.subr.mxu0 0.0
    %2227 = vmatpush1.msra.mxu0 0.0
    %2228 = vmatprep.subr.mxu0 0.0
    %2229 = vmatpush1.msra.mxu0 0.0
    %2230 = vmatprep.subr.mxu0 0.0
    %2231 = vmatpush1.msra.mxu0 0.0
    %2232 = vmatprep.subr.mxu0 0.0
    %2233 = vmatpush1.msra.mxu0 0.0
    %2234 = vmatprep.subr.mxu0 0.0
    %2235 = vmatpush1.msra.mxu0 0.0
    %2236 = vmatprep.subr.mxu0 0.0
    %2237 = vmatpush1.msra.mxu0 0.0
    %2238 = vmatprep.subr.mxu0 0.0
    %2239 = vmatpush1.msra.mxu0 0.0
    %2240 = vmatprep.subr.mxu0 0.0
    %2241 = vmatpush1.msra.mxu0 0.0
    %2242 = vmatprep.subr.mxu0 0.0
    %2243 = vmatpush1.msra.mxu0 0.0
    %2244 = vmatprep.subr.mxu0 0.0
    %2245 = vmatpush1.msra.mxu0 0.0
    %2246 = vmatprep.subr.mxu0 0.0
    %2247 = vmatpush1.msra.mxu0 0.0
    %2248 = vmatprep.subr.mxu0 0.0
    %2249 = vmatpush1.msra.mxu0 0.0
    %2250 = vmatprep.subr.mxu0 0.0
    %2251 = vmatpush1.msra.mxu0 0.0
    %2252 = vmatprep.subr.mxu0 0.0
    %2253 = vmatpush1.msra.mxu0 0.0
    %2254 = vmatprep.subr.mxu0 0.0
    %2255 = vmatpush1.msra.mxu0 0.0
    %2256 = vmatprep.subr.mxu0 0.0
    %2257 = vmatpush1.msra.mxu0 0.0
    %2258 = vmatprep.subr.mxu0 0.0
    %2259 = vmatpush1.msra.mxu0 0.0
    %2260 = vmatprep.subr.mxu0 0.0
    %2261 = vmatpush1.msra.mxu0 0.0
    %2262 = vmatprep.subr.mxu0 0.0
    %2263 = vmatpush1.msra.mxu0 0.0
    %2264 = vmatprep.subr.mxu0 0.0
    %2265 = vmatpush1.msra.mxu0 0.0
    %2266 = vmatprep.mubr.f32.mxu0 0.0
    %2267 = vmatmul.mubr.f32.gmra.mrb[0].mxu0 %v2200
    %v2268 = vpop.f32.mrb[0].mxu0
    %v2269 = vadd.f32 0.0, %v2268
    %v2270 = vpop.f32.mrb[0].mxu0
    %2271 = vdwg.mxu0
    %2272 = vxpose.xlu0.b32.start [1/16] %v1602, 128
    %2273 = vxpose.xlu0.b32.cont [2/16] %v1603, 128
    %2274 = vxpose.xlu0.b32.cont [3/16] 0.0, 128
    %2275 = vxpose.xlu0.b32.cont [4/16] 0.0, 128
    %2276 = vxpose.xlu0.b32.cont [5/16] 0.0, 128
    %2277 = vxpose.xlu0.b32.cont [6/16] 0.0, 128
    %2278 = vxpose.xlu0.b32.cont [7/16] 0.0, 128
    %2279 = vxpose.xlu0.b32.cont [8/16] 0.0, 128
    %2280 = vxpose.xlu0.b32.cont [9/16] 0.0, 128
    %2281 = vxpose.xlu0.b32.cont [10/16] 0.0, 128
    %2282 = vxpose.xlu0.b32.cont [11/16] 0.0, 128
    %2283 = vxpose.xlu0.b32.cont [12/16] 0.0, 128
    %2284 = vxpose.xlu0.b32.cont [13/16] 0.0, 128
    %2285 = vxpose.xlu0.b32.cont [14/16] 0.0, 128
    %2286 = vxpose.xlu0.b32.cont [15/16] 0.0, 128
    %2287 = vxpose.xlu0.b32.end [16/16] 0.0, 128
    %v2288 = vpop.trf.xlu0
    %v2289 = vpop.trf.xlu0
    %v2290 = vpop.trf.xlu0
    %v2291 = vpop.trf.xlu0
    %v2292 = vpop.trf.xlu0
    %v2293 = vpop.trf.xlu0
    %v2294 = vpop.trf.xlu0
    %v2295 = vpop.trf.xlu0
    %v2296 = vpop.trf.xlu0
    %v2297 = vpop.trf.xlu0
    %v2298 = vpop.trf.xlu0
    %v2299 = vpop.trf.xlu0
    %v2300 = vpop.trf.xlu0
    %v2301 = vpop.trf.xlu0
    %v2302 = vpop.trf.xlu0
    %v2303 = vpop.trf.xlu0
    %2304 = vrot.lane.b32.xlu0 %v273, 64
    %v2305 = vpop.permute.xlu0 %2304
    %2306 = vrot.lane.b32.xlu0 %v275, 64
    %v2307 = vpop.permute.xlu0 %2306
    %v2311 = vsel %vm983, %v2288, 0
    %2313 = vmatprep.subr.mxu0 0.0
    %2314 = vmatpush1.msra.mxu0 %v2305
    %2315 = vmatprep.subr.mxu0 0.0
    %2316 = vmatpush1.msra.mxu0 %v2307
    %2317 = vmatprep.subr.mxu0 0.0
    %2318 = vmatpush1.msra.mxu0 0.0
    %2319 = vmatprep.subr.mxu0 0.0
    %2320 = vmatpush1.msra.mxu0 0.0
    %2321 = vmatprep.subr.mxu0 0.0
    %2322 = vmatpush1.msra.mxu0 0.0
    %2323 = vmatprep.subr.mxu0 0.0
    %2324 = vmatpush1.msra.mxu0 0.0
    %2325 = vmatprep.subr.mxu0 0.0
    %2326 = vmatpush1.msra.mxu0 0.0
    %2327 = vmatprep.subr.mxu0 0.0
    %2328 = vmatpush1.msra.mxu0 0.0
    %2329 = vmatprep.subr.mxu0 0.0
    %2330 = vmatpush1.msra.mxu0 0.0
    %2331 = vmatprep.subr.mxu0 0.0
    %2332 = vmatpush1.msra.mxu0 0.0
    %2333 = vmatprep.subr.mxu0 0.0
    %2334 = vmatpush1.msra.mxu0 0.0
    %2335 = vmatprep.subr.mxu0 0.0
    %2336 = vmatpush1.msra.mxu0 0.0
    %2337 = vmatprep.subr.mxu0 0.0
    %2338 = vmatpush1.msra.mxu0 0.0
    %2339 = vmatprep.subr.mxu0 0.0
    %2340 = vmatpush1.msra.mxu0 0.0
    %2341 = vmatprep.subr.mxu0 0.0
    %2342 = vmatpush1.msra.mxu0 0.0
    %2343 = vmatprep.subr.mxu0 0.0
    %2344 = vmatpush1.msra.mxu0 0.0
    %2345 = vmatprep.subr.mxu0 0.0
    %2346 = vmatpush1.msra.mxu0 0.0
    %2347 = vmatprep.subr.mxu0 0.0
    %2348 = vmatpush1.msra.mxu0 0.0
    %2349 = vmatprep.subr.mxu0 0.0
    %2350 = vmatpush1.msra.mxu0 0.0
    %2351 = vmatprep.subr.mxu0 0.0
    %2352 = vmatpush1.msra.mxu0 0.0
    %2353 = vmatprep.subr.mxu0 0.0
    %2354 = vmatpush1.msra.mxu0 0.0
    %2355 = vmatprep.subr.mxu0 0.0
    %2356 = vmatpush1.msra.mxu0 0.0
    %2357 = vmatprep.subr.mxu0 0.0
    %2358 = vmatpush1.msra.mxu0 0.0
    %2359 = vmatprep.subr.mxu0 0.0
    %2360 = vmatpush1.msra.mxu0 0.0
    %2361 = vmatprep.subr.mxu0 0.0
    %2362 = vmatpush1.msra.mxu0 0.0
    %2363 = vmatprep.subr.mxu0 0.0
    %2364 = vmatpush1.msra.mxu0 0.0
    %2365 = vmatprep.subr.mxu0 0.0
    %2366 = vmatpush1.msra.mxu0 0.0
    %2367 = vmatprep.subr.mxu0 0.0
    %2368 = vmatpush1.msra.mxu0 0.0
    %2369 = vmatprep.subr.mxu0 0.0
    %2370 = vmatpush1.msra.mxu0 0.0
    %2371 = vmatprep.subr.mxu0 0.0
    %2372 = vmatpush1.msra.mxu0 0.0
    %2373 = vmatprep.subr.mxu0 0.0
    %2374 = vmatpush1.msra.mxu0 0.0
    %2375 = vmatprep.subr.mxu0 0.0
    %2376 = vmatpush1.msra.mxu0 0.0
    %2377 = vmatprep.mubr.f32.mxu0 0.0
    %2378 = vmatmul.mubr.f32.gmra.mrb[0].mxu0 %v2311
    %v2379 = vpop.f32.mrb[0].mxu0
    %v2380 = vadd.f32 0.0, %v2379
    %v2381 = vpop.f32.mrb[0].mxu0
    %2382 = vdwg.mxu0
    %2383 = vxpose.xlu0.b32.start [1/16] %v1604, 128
    %2384 = vxpose.xlu0.b32.cont [2/16] %v1605, 128
    %2385 = vxpose.xlu0.b32.cont [3/16] 0.0, 128
    %2386 = vxpose.xlu0.b32.cont [4/16] 0.0, 128
    %2387 = vxpose.xlu0.b32.cont [5/16] 0.0, 128
    %2388 = vxpose.xlu0.b32.cont [6/16] 0.0, 128
    %2389 = vxpose.xlu0.b32.cont [7/16] 0.0, 128
    %2390 = vxpose.xlu0.b32.cont [8/16] 0.0, 128
    %2391 = vxpose.xlu0.b32.cont [9/16] 0.0, 128
    %2392 = vxpose.xlu0.b32.cont [10/16] 0.0, 128
    %2393 = vxpose.xlu0.b32.cont [11/16] 0.0, 128
    %2394 = vxpose.xlu0.b32.cont [12/16] 0.0, 128
    %2395 = vxpose.xlu0.b32.cont [13/16] 0.0, 128
    %2396 = vxpose.xlu0.b32.cont [14/16] 0.0, 128
    %2397 = vxpose.xlu0.b32.cont [15/16] 0.0, 128
    %2398 = vxpose.xlu0.b32.end [16/16] 0.0, 128
    %v2399 = vpop.trf.xlu0
    %v2400 = vpop.trf.xlu0
    %v2401 = vpop.trf.xlu0
    %v2402 = vpop.trf.xlu0
    %v2403 = vpop.trf.xlu0
    %v2404 = vpop.trf.xlu0
    %v2405 = vpop.trf.xlu0
    %v2406 = vpop.trf.xlu0
    %v2407 = vpop.trf.xlu0
    %v2408 = vpop.trf.xlu0
    %v2409 = vpop.trf.xlu0
    %v2410 = vpop.trf.xlu0
    %v2411 = vpop.trf.xlu0
    %v2412 = vpop.trf.xlu0
    %v2413 = vpop.trf.xlu0
    %v2414 = vpop.trf.xlu0
    %2415 = vrot.lane.b32.xlu0 %v277, 64
    %v2416 = vpop.permute.xlu0 %2415
    %2417 = vrot.lane.b32.xlu0 %v279, 64
    %v2418 = vpop.permute.xlu0 %2417
    %v2422 = vsel %vm983, %v2399, 0
    %2424 = vmatprep.subr.mxu0 0.0
    %2425 = vmatpush1.msra.mxu0 %v2416
    %2426 = vmatprep.subr.mxu0 0.0
    %2427 = vmatpush1.msra.mxu0 %v2418
    %2428 = vmatprep.subr.mxu0 0.0
    %2429 = vmatpush1.msra.mxu0 0.0
    %2430 = vmatprep.subr.mxu0 0.0
    %2431 = vmatpush1.msra.mxu0 0.0
    %2432 = vmatprep.subr.mxu0 0.0
    %2433 = vmatpush1.msra.mxu0 0.0
    %2434 = vmatprep.subr.mxu0 0.0
    %2435 = vmatpush1.msra.mxu0 0.0
    %2436 = vmatprep.subr.mxu0 0.0
    %2437 = vmatpush1.msra.mxu0 0.0
    %2438 = vmatprep.subr.mxu0 0.0
    %2439 = vmatpush1.msra.mxu0 0.0
    %2440 = vmatprep.subr.mxu0 0.0
    %2441 = vmatpush1.msra.mxu0 0.0
    %2442 = vmatprep.subr.mxu0 0.0
    %2443 = vmatpush1.msra.mxu0 0.0
    %2444 = vmatprep.subr.mxu0 0.0
    %2445 = vmatpush1.msra.mxu0 0.0
    %2446 = vmatprep.subr.mxu0 0.0
    %2447 = vmatpush1.msra.mxu0 0.0
    %2448 = vmatprep.subr.mxu0 0.0
    %2449 = vmatpush1.msra.mxu0 0.0
    %2450 = vmatprep.subr.mxu0 0.0
    %2451 = vmatpush1.msra.mxu0 0.0
    %2452 = vmatprep.subr.mxu0 0.0
    %2453 = vmatpush1.msra.mxu0 0.0
    %2454 = vmatprep.subr.mxu0 0.0
    %2455 = vmatpush1.msra.mxu0 0.0
    %2456 = vmatprep.subr.mxu0 0.0
    %2457 = vmatpush1.msra.mxu0 0.0
    %2458 = vmatprep.subr.mxu0 0.0
    %2459 = vmatpush1.msra.mxu0 0.0
    %2460 = vmatprep.subr.mxu0 0.0
    %2461 = vmatpush1.msra.mxu0 0.0
    %2462 = vmatprep.subr.mxu0 0.0
    %2463 = vmatpush1.msra.mxu0 0.0
    %2464 = vmatprep.subr.mxu0 0.0
    %2465 = vmatpush1.msra.mxu0 0.0
    %2466 = vmatprep.subr.mxu0 0.0
    %2467 = vmatpush1.msra.mxu0 0.0
    %2468 = vmatprep.subr.mxu0 0.0
    %2469 = vmatpush1.msra.mxu0 0.0
    %2470 = vmatprep.subr.mxu0 0.0
    %2471 = vmatpush1.msra.mxu0 0.0
    %2472 = vmatprep.subr.mxu0 0.0
    %2473 = vmatpush1.msra.mxu0 0.0
    %2474 = vmatprep.subr.mxu0 0.0
    %2475 = vmatpush1.msra.mxu0 0.0
    %2476 = vmatprep.subr.mxu0 0.0
    %2477 = vmatpush1.msra.mxu0 0.0
    %2478 = vmatprep.subr.mxu0 0.0
    %2479 = vmatpush1.msra.mxu0 0.0
    %2480 = vmatprep.subr.mxu0 0.0
    %2481 = vmatpush1.msra.mxu0 0.0
    %2482 = vmatprep.subr.mxu0 0.0
    %2483 = vmatpush1.msra.mxu0 0.0
    %2484 = vmatprep.subr.mxu0 0.0
    %2485 = vmatpush1.msra.mxu0 0.0
    %2486 = vmatprep.subr.mxu0 0.0
    %2487 = vmatpush1.msra.mxu0 0.0
    %2488 = vmatprep.mubr.f32.mxu0 0.0
    %2489 = vmatmul.mubr.f32.gmra.mrb[0].mxu0 %v2422
    %v2490 = vpop.f32.mrb[0].mxu0
    %v2491 = vadd.f32 0.0, %v2490
    %v2492 = vpop.f32.mrb[0].mxu0
    %2493 = vdwg.mxu0
    %v2494 = vcombine.low %v1714, %v1936
    %v2495 = vcombine.high %v1714, %v1936
    %v2497 = vunpack.c.l.s4 1983009808
    %v2498 = vunpack.c.0.s8 %v2497
    %v2499 = vlaneseq
    %v2500 = vshrl.u32 %v2499, 7
    %v2501 = vsub.s32 %v2498, %v2500
    %v2502 = vrot.slane %v2494, %v2501
    %v2504 = vunpack.c.l.s4 1983009808
    %v2505 = vunpack.c.0.s8 %v2504
    %v2506 = vlaneseq
    %v2507 = vshrl.u32 %v2506, 7
    %v2508 = vsub.s32 %v2505, %v2507
    %v2509 = vrot.slane %v2495, %v2508
    %v2510 = vcombine.low %v1825, %v2047
    %v2511 = vcombine.high %v1825, %v2047
    %v2513 = vunpack.c.l.s4 1983009808
    %v2514 = vunpack.c.0.s8 %v2513
    %v2515 = vlaneseq
    %v2516 = vshrl.u32 %v2515, 7
    %v2517 = vsub.s32 %v2514, %v2516
    %v2518 = vrot.slane %v2510, %v2517
    %v2520 = vunpack.c.l.s4 1983009808
    %v2521 = vunpack.c.0.s8 %v2520
    %v2522 = vlaneseq
    %v2523 = vshrl.u32 %v2522, 7
    %v2524 = vsub.s32 %v2521, %v2523
    %v2525 = vrot.slane %v2511, %v2524
    %v2526 = vcombine.low %v2158, %v2380
    %v2527 = vcombine.high %v2158, %v2380
    %v2529 = vunpack.c.l.s4 1983009808
    %v2530 = vunpack.c.0.s8 %v2529
    %v2531 = vlaneseq
    %v2532 = vshrl.u32 %v2531, 7
    %v2533 = vsub.s32 %v2530, %v2532
    %v2534 = vrot.slane %v2526, %v2533
    %v2536 = vunpack.c.l.s4 1983009808
    %v2537 = vunpack.c.0.s8 %v2536
    %v2538 = vlaneseq
    %v2539 = vshrl.u32 %v2538, 7
    %v2540 = vsub.s32 %v2537, %v2539
    %v2541 = vrot.slane %v2527, %v2540
    %v2542 = vcombine.low %v2269, %v2491
    %v2543 = vcombine.high %v2269, %v2491
    %v2545 = vunpack.c.l.s4 1983009808
    %v2546 = vunpack.c.0.s8 %v2545
    %v2547 = vlaneseq
    %v2548 = vshrl.u32 %v2547, 7
    %v2549 = vsub.s32 %v2546, %v2548
    %v2550 = vrot.slane %v2542, %v2549
    %v2552 = vunpack.c.l.s4 1983009808
    %v2553 = vunpack.c.0.s8 %v2552
    %v2554 = vlaneseq
    %v2555 = vshrl.u32 %v2554, 7
    %v2556 = vsub.s32 %v2553, %v2555
    %v2557 = vrot.slane %v2543, %v2556
    %v2558 = vcombine.low %v2502, %v2518
    %v2559 = vcombine.high %v2502, %v2518
    %v2561 = vunpack.c.l.s4 1934713408
    %v2562 = vunpack.c.0.s8 %v2561
    %v2563 = vlaneseq
    %v2564 = vshrl.u32 %v2563, 7
    %v2565 = vsub.s32 %v2562, %v2564
    %v2566 = vrot.slane %v2558, %v2565
    %v2568 = vunpack.c.l.s4 1934713408
    %v2569 = vunpack.c.0.s8 %v2568
    %v2570 = vlaneseq
    %v2571 = vshrl.u32 %v2570, 7
    %v2572 = vsub.s32 %v2569, %v2571
    %v2573 = vrot.slane %v2559, %v2572
    %v2574 = vcombine.low %v2509, %v2525
    %v2575 = vcombine.high %v2509, %v2525
    %v2577 = vunpack.c.l.s4 1934713408
    %v2578 = vunpack.c.0.s8 %v2577
    %v2579 = vlaneseq
    %v2580 = vshrl.u32 %v2579, 7
    %v2581 = vsub.s32 %v2578, %v2580
    %v2582 = vrot.slane %v2574, %v2581
    %v2584 = vunpack.c.l.s4 1934713408
    %v2585 = vunpack.c.0.s8 %v2584
    %v2586 = vlaneseq
    %v2587 = vshrl.u32 %v2586, 7
    %v2588 = vsub.s32 %v2585, %v2587
    %v2589 = vrot.slane %v2575, %v2588
    %v2590 = vcombine.low %v2534, %v2550
    %v2591 = vcombine.high %v2534, %v2550
    %v2593 = vunpack.c.l.s4 1934713408
    %v2594 = vunpack.c.0.s8 %v2593
    %v2595 = vlaneseq
    %v2596 = vshrl.u32 %v2595, 7
    %v2597 = vsub.s32 %v2594, %v2596
    %v2598 = vrot.slane %v2590, %v2597
    %v2600 = vunpack.c.l.s4 1934713408
    %v2601 = vunpack.c.0.s8 %v2600
    %v2602 = vlaneseq
    %v2603 = vshrl.u32 %v2602, 7
    %v2604 = vsub.s32 %v2601, %v2603
    %v2605 = vrot.slane %v2591, %v2604
    %v2606 = vcombine.low %v2541, %v2557
    %v2607 = vcombine.high %v2541, %v2557
    %v2609 = vunpack.c.l.s4 1934713408
    %v2610 = vunpack.c.0.s8 %v2609
    %v2611 = vlaneseq
    %v2612 = vshrl.u32 %v2611, 7
    %v2613 = vsub.s32 %v2610, %v2612
    %v2614 = vrot.slane %v2606, %v2613
    %v2616 = vunpack.c.l.s4 1934713408
    %v2617 = vunpack.c.0.s8 %v2616
    %v2618 = vlaneseq
    %v2619 = vshrl.u32 %v2618, 7
    %v2620 = vsub.s32 %v2617, %v2619
    %v2621 = vrot.slane %v2607, %v2620
    %v2622 = vcombine.low %v2566, %v2598
    %v2623 = vcombine.high %v2566, %v2598
    %v2624 = vcombine.low %v2573, %v2605
    %v2625 = vcombine.high %v2573, %v2605
    %v2626 = vcombine.low %v2582, %v2614
    %v2627 = vcombine.high %v2582, %v2614
    %v2628 = vcombine.low %v2589, %v2621
    %v2629 = vcombine.high %v2589, %v2621
    %v2630 = vcombine.low %v2622, %v2624
    %v2631 = vcombine.high %v2622, %v2624
    %v2633 = vunpack.c.l.s4 1983009808
    %v2634 = vunpack.c.0.s8 %v2633
    %v2635 = vlaneseq
    %v2636 = vshrl.u32 %v2635, 7
    %v2637 = vsub.s32 %v2634, %v2636
    %v2638 = vrot.slane %v2630, %v2637
    %v2640 = vunpack.c.l.s4 1983009808
    %v2641 = vunpack.c.0.s8 %v2640
    %v2642 = vlaneseq
    %v2643 = vshrl.u32 %v2642, 7
    %v2644 = vsub.s32 %v2641, %v2643
    %v2645 = vrot.slane %v2631, %v2644
    %v2646 = vcombine.low %v2623, %v2625
    %v2647 = vcombine.high %v2623, %v2625
    %v2649 = vunpack.c.l.s4 1983009808
    %v2650 = vunpack.c.0.s8 %v2649
    %v2651 = vlaneseq
    %v2652 = vshrl.u32 %v2651, 7
    %v2653 = vsub.s32 %v2650, %v2652
    %v2654 = vrot.slane %v2646, %v2653
    %v2656 = vunpack.c.l.s4 1983009808
    %v2657 = vunpack.c.0.s8 %v2656
    %v2658 = vlaneseq
    %v2659 = vshrl.u32 %v2658, 7
    %v2660 = vsub.s32 %v2657, %v2659
    %v2661 = vrot.slane %v2647, %v2660
    %v2662 = vcombine.low %v2626, %v2628
    %v2663 = vcombine.high %v2626, %v2628
    %v2665 = vunpack.c.l.s4 1983009808
    %v2666 = vunpack.c.0.s8 %v2665
    %v2667 = vlaneseq
    %v2668 = vshrl.u32 %v2667, 7
    %v2669 = vsub.s32 %v2666, %v2668
    %v2670 = vrot.slane %v2662, %v2669
    %v2672 = vunpack.c.l.s4 1983009808
    %v2673 = vunpack.c.0.s8 %v2672
    %v2674 = vlaneseq
    %v2675 = vshrl.u32 %v2674, 7
    %v2676 = vsub.s32 %v2673, %v2675
    %v2677 = vrot.slane %v2663, %v2676
    %v2678 = vcombine.low %v2627, %v2629
    %v2679 = vcombine.high %v2627, %v2629
    %v2681 = vunpack.c.l.s4 1983009808
    %v2682 = vunpack.c.0.s8 %v2681
    %v2683 = vlaneseq
    %v2684 = vshrl.u32 %v2683, 7
    %v2685 = vsub.s32 %v2682, %v2684
    %v2686 = vrot.slane %v2678, %v2685
    %v2688 = vunpack.c.l.s4 1983009808
    %v2689 = vunpack.c.0.s8 %v2688
    %v2690 = vlaneseq
    %v2691 = vshrl.u32 %v2690, 7
    %v2692 = vsub.s32 %v2689, %v2691
    %v2693 = vrot.slane %v2679, %v2692
    %v2694 = vcombine.low %v2638, %v2654
    %v2695 = vcombine.high %v2638, %v2654
    %v2697 = vunpack.c.l.s4 1934713408
    %v2698 = vunpack.c.0.s8 %v2697
    %v2699 = vlaneseq
    %v2700 = vshrl.u32 %v2699, 7
    %v2701 = vsub.s32 %v2698, %v2700
    %v2702 = vrot.slane %v2694, %v2701
    %v2704 = vunpack.c.l.s4 1934713408
    %v2705 = vunpack.c.0.s8 %v2704
    %v2706 = vlaneseq
    %v2707 = vshrl.u32 %v2706, 7
    %v2708 = vsub.s32 %v2705, %v2707
    %v2709 = vrot.slane %v2695, %v2708
    %v2710 = vcombine.low %v2645, %v2661
    %v2711 = vcombine.high %v2645, %v2661
    %v2713 = vunpack.c.l.s4 1934713408
    %v2714 = vunpack.c.0.s8 %v2713
    %v2715 = vlaneseq
    %v2716 = vshrl.u32 %v2715, 7
    %v2717 = vsub.s32 %v2714, %v2716
    %v2718 = vrot.slane %v2710, %v2717
    %v2720 = vunpack.c.l.s4 1934713408
    %v2721 = vunpack.c.0.s8 %v2720
    %v2722 = vlaneseq
    %v2723 = vshrl.u32 %v2722, 7
    %v2724 = vsub.s32 %v2721, %v2723
    %v2725 = vrot.slane %v2711, %v2724
    %v2726 = vcombine.low %v2670, %v2686
    %v2727 = vcombine.high %v2670, %v2686
    %v2729 = vunpack.c.l.s4 1934713408
    %v2730 = vunpack.c.0.s8 %v2729
    %v2731 = vlaneseq
    %v2732 = vshrl.u32 %v2731, 7
    %v2733 = vsub.s32 %v2730, %v2732
    %v2734 = vrot.slane %v2726, %v2733
    %v2736 = vunpack.c.l.s4 1934713408
    %v2737 = vunpack.c.0.s8 %v2736
    %v2738 = vlaneseq
    %v2739 = vshrl.u32 %v2738, 7
    %v2740 = vsub.s32 %v2737, %v2739
    %v2741 = vrot.slane %v2727, %v2740
    %v2742 = vcombine.low %v2677, %v2693
    %v2743 = vcombine.high %v2677, %v2693
    %v2745 = vunpack.c.l.s4 1934713408
    %v2746 = vunpack.c.0.s8 %v2745
    %v2747 = vlaneseq
    %v2748 = vshrl.u32 %v2747, 7
    %v2749 = vsub.s32 %v2746, %v2748
    %v2750 = vrot.slane %v2742, %v2749
    %v2752 = vunpack.c.l.s4 1934713408
    %v2753 = vunpack.c.0.s8 %v2752
    %v2754 = vlaneseq
    %v2755 = vshrl.u32 %v2754, 7
    %v2756 = vsub.s32 %v2753, %v2755
    %v2757 = vrot.slane %v2743, %v2756
    %v2758 = vcombine.low %v2702, %v2734
    %v2759 = vcombine.high %v2702, %v2734
    %v2760 = vcombine.low %v2709, %v2741
    %v2761 = vcombine.high %v2709, %v2741
    %v2762 = vcombine.low %v2718, %v2750
    %v2763 = vcombine.high %v2718, %v2750
    %v2764 = vcombine.low %v2725, %v2757
    %v2765 = vcombine.high %v2725, %v2757
    %2767 = vrot.lane.b32.xlu0 %v2759, 8
    %v2768 = vpop.permute.xlu0 %2767
    %2771 = vrot.lane.b32.xlu0 %v2760, 16
    %v2772 = vpop.permute.xlu0 %2771
    %2775 = vrot.lane.b32.xlu0 %v2761, 24
    %v2776 = vpop.permute.xlu0 %2775
    %2779 = vrot.lane.b32.xlu0 %v2762, 32
    %v2780 = vpop.permute.xlu0 %2779
    %2783 = vrot.lane.b32.xlu0 %v2763, 40
    %v2784 = vpop.permute.xlu0 %2783
    %2787 = vrot.lane.b32.xlu0 %v2764, 48
    %v2788 = vpop.permute.xlu0 %2787
    %2791 = vrot.lane.b32.xlu0 %v2765, 56
    %v2792 = vpop.permute.xlu0 %2791
    %v2794 = vsel %vm284, %v2758, %v2768
    %v2795 = vsel %vm983, %v2794, %v2772
    %vm2796 = vcmask 195584
    %v2797 = vsel %vm2796, %v2795, %v2776
    %v2798 = vsel %vm85, %v2797, %v2780
    %vm2799 = vcmask 326656
    %v2800 = vsel %vm2799, %v2798, %v2784
    %vm2801 = vcmask 392192
    %v2802 = vsel %vm2801, %v2800, %v2788
    %vm2803 = vcmask 457728
    %v2804 = vsel %vm2803, %v2802, %v2792
    %v2805 = vcombine.low 0.0, 0.0
    %v2806 = vcombine.high 0.0, 0.0
    %v2808 = vunpack.c.l.s4 1983009808
    %v2809 = vunpack.c.0.s8 %v2808
    %v2810 = vlaneseq
    %v2811 = vshrl.u32 %v2810, 7
    %v2812 = vsub.s32 %v2809, %v2811
    %v2813 = vrot.slane %v2805, %v2812
    %v2815 = vunpack.c.l.s4 1983009808
    %v2816 = vunpack.c.0.s8 %v2815
    %v2817 = vlaneseq
    %v2818 = vshrl.u32 %v2817, 7
    %v2819 = vsub.s32 %v2816, %v2818
    %v2820 = vrot.slane %v2806, %v2819
    %v2821 = vcombine.low %v2813, %v2813
    %v2822 = vcombine.high %v2813, %v2813
    %v2824 = vunpack.c.l.s4 1934713408
    %v2825 = vunpack.c.0.s8 %v2824
    %v2826 = vlaneseq
    %v2827 = vshrl.u32 %v2826, 7
    %v2828 = vsub.s32 %v2825, %v2827
    %v2829 = vrot.slane %v2821, %v2828
    %v2831 = vunpack.c.l.s4 1934713408
    %v2832 = vunpack.c.0.s8 %v2831
    %v2833 = vlaneseq
    %v2834 = vshrl.u32 %v2833, 7
    %v2835 = vsub.s32 %v2832, %v2834
    %v2836 = vrot.slane %v2822, %v2835
    %v2837 = vcombine.low %v2820, %v2820
    %v2838 = vcombine.high %v2820, %v2820
    %v2840 = vunpack.c.l.s4 1934713408
    %v2841 = vunpack.c.0.s8 %v2840
    %v2842 = vlaneseq
    %v2843 = vshrl.u32 %v2842, 7
    %v2844 = vsub.s32 %v2841, %v2843
    %v2845 = vrot.slane %v2837, %v2844
    %v2847 = vunpack.c.l.s4 1934713408
    %v2848 = vunpack.c.0.s8 %v2847
    %v2849 = vlaneseq
    %v2850 = vshrl.u32 %v2849, 7
    %v2851 = vsub.s32 %v2848, %v2850
    %v2852 = vrot.slane %v2838, %v2851
    %v2853 = vcombine.low %v2829, %v2829
    %v2854 = vcombine.high %v2829, %v2829
    %v2855 = vcombine.low %v2836, %v2836
    %v2856 = vcombine.high %v2836, %v2836
    %v2857 = vcombine.low %v2845, %v2845
    %v2858 = vcombine.high %v2845, %v2845
    %v2859 = vcombine.low %v2852, %v2852
    %v2860 = vcombine.high %v2852, %v2852
    %2862 = vrot.lane.b32.xlu0 %v2854, 8
    %v2863 = vpop.permute.xlu0 %2862
    %2866 = vrot.lane.b32.xlu0 %v2855, 16
    %v2867 = vpop.permute.xlu0 %2866
    %2870 = vrot.lane.b32.xlu0 %v2856, 24
    %v2871 = vpop.permute.xlu0 %2870
    %2874 = vrot.lane.b32.xlu0 %v2857, 32
    %v2875 = vpop.permute.xlu0 %2874
    %2878 = vrot.lane.b32.xlu0 %v2858, 40
    %v2879 = vpop.permute.xlu0 %2878
    %2882 = vrot.lane.b32.xlu0 %v2859, 48
    %v2883 = vpop.permute.xlu0 %2882
    %2886 = vrot.lane.b32.xlu0 %v2860, 56
    %v2887 = vpop.permute.xlu0 %2886
    %v2889 = vsel %vm284, %v2853, %v2863
    %v2890 = vsel %vm983, %v2889, %v2867
    %v2891 = vsel %vm2796, %v2890, %v2871
    %v2892 = vsel %vm85, %v2891, %v2875
    %v2893 = vsel %vm2799, %v2892, %v2879
    %v2894 = vsel %vm2801, %v2893, %v2883
    %v2895 = vsel %vm2803, %v2894, %v2887
    %2896 = vxpose.xlu0.b32.start [1/16] %v60, 128
    %2897 = vxpose.xlu0.b32.cont [2/16] 0.0, 128
    %2898 = vxpose.xlu0.b32.cont [3/16] 0.0, 128
    %2899 = vxpose.xlu0.b32.cont [4/16] 0.0, 128
    %2900 = vxpose.xlu0.b32.cont [5/16] 0.0, 128
    %2901 = vxpose.xlu0.b32.cont [6/16] 0.0, 128
    %2902 = vxpose.xlu0.b32.cont [7/16] 0.0, 128
    %2903 = vxpose.xlu0.b32.cont [8/16] 0.0, 128
    %2904 = vxpose.xlu0.b32.cont [9/16] 0.0, 128
    %2905 = vxpose.xlu0.b32.cont [10/16] 0.0, 128
    %2906 = vxpose.xlu0.b32.cont [11/16] 0.0, 128
    %2907 = vxpose.xlu0.b32.cont [12/16] 0.0, 128
    %2908 = vxpose.xlu0.b32.cont [13/16] 0.0, 128
    %2909 = vxpose.xlu0.b32.cont [14/16] 0.0, 128
    %2910 = vxpose.xlu0.b32.cont [15/16] 0.0, 128
    %2911 = vxpose.xlu0.b32.end [16/16] 0.0, 128
    %v2912 = vpop.trf.xlu0
    %v2913 = vpop.trf.xlu0
    %v2914 = vpop.trf.xlu0
    %v2915 = vpop.trf.xlu0
    %v2916 = vpop.trf.xlu0
    %v2917 = vpop.trf.xlu0
    %v2918 = vpop.trf.xlu0
    %v2919 = vpop.trf.xlu0
    %v2920 = vpop.trf.xlu0
    %v2921 = vpop.trf.xlu0
    %v2922 = vpop.trf.xlu0
    %v2923 = vpop.trf.xlu0
    %v2924 = vpop.trf.xlu0
    %v2925 = vpop.trf.xlu0
    %v2926 = vpop.trf.xlu0
    %v2927 = vpop.trf.xlu0
    %v2929 = vsel %vm284, %v2912, 0
    %v2932 = vsel %vm284, %v2913, 0
    %2934 = vmatprep.subr.mxu0 0.0
    %2935 = vmatpush1.msra.mxu0 %v2804
    %2936 = vmatprep.subr.mxu0 0.0
    %2937 = vmatpush1.msra.mxu0 0.0
    %2938 = vmatprep.subr.mxu0 0.0
    %2939 = vmatpush1.msra.mxu0 0.0
    %2940 = vmatprep.subr.mxu0 0.0
    %2941 = vmatpush1.msra.mxu0 0.0
    %2942 = vmatprep.subr.mxu0 0.0
    %2943 = vmatpush1.msra.mxu0 0.0
    %2944 = vmatprep.subr.mxu0 0.0
    %2945 = vmatpush1.msra.mxu0 0.0
    %2946 = vmatprep.subr.mxu0 0.0
    %2947 = vmatpush1.msra.mxu0 0.0
    %2948 = vmatprep.subr.mxu0 0.0
    %2949 = vmatpush1.msra.mxu0 0.0
    %2950 = vmatprep.subr.mxu0 0.0
    %2951 = vmatpush1.msra.mxu0 0.0
    %2952 = vmatprep.subr.mxu0 0.0
    %2953 = vmatpush1.msra.mxu0 0.0
    %2954 = vmatprep.subr.mxu0 0.0
    %2955 = vmatpush1.msra.mxu0 0.0
    %2956 = vmatprep.subr.mxu0 0.0
    %2957 = vmatpush1.msra.mxu0 0.0
    %2958 = vmatprep.subr.mxu0 0.0
    %2959 = vmatpush1.msra.mxu0 0.0
    %2960 = vmatprep.subr.mxu0 0.0
    %2961 = vmatpush1.msra.mxu0 0.0
    %2962 = vmatprep.subr.mxu0 0.0
    %2963 = vmatpush1.msra.mxu0 0.0
    %2964 = vmatprep.subr.mxu0 0.0
    %2965 = vmatpush1.msra.mxu0 0.0
    %2966 = vmatprep.subr.mxu0 0.0
    %2967 = vmatpush1.msra.mxu0 0.0
    %2968 = vmatprep.subr.mxu0 0.0
    %2969 = vmatpush1.msra.mxu0 0.0
    %2970 = vmatprep.subr.mxu0 0.0
    %2971 = vmatpush1.msra.mxu0 0.0
    %2972 = vmatprep.subr.mxu0 0.0
    %2973 = vmatpush1.msra.mxu0 0.0
    %2974 = vmatprep.subr.mxu0 0.0
    %2975 = vmatpush1.msra.mxu0 0.0
    %2976 = vmatprep.subr.mxu0 0.0
    %2977 = vmatpush1.msra.mxu0 0.0
    %2978 = vmatprep.subr.mxu0 0.0
    %2979 = vmatpush1.msra.mxu0 0.0
    %2980 = vmatprep.subr.mxu0 0.0
    %2981 = vmatpush1.msra.mxu0 0.0
    %2982 = vmatprep.subr.mxu0 0.0
    %2983 = vmatpush1.msra.mxu0 0.0
    %2984 = vmatprep.subr.mxu0 0.0
    %2985 = vmatpush1.msra.mxu0 0.0
    %2986 = vmatprep.subr.mxu0 0.0
    %2987 = vmatpush1.msra.mxu0 0.0
    %2988 = vmatprep.subr.mxu0 0.0
    %2989 = vmatpush1.msra.mxu0 0.0
    %2990 = vmatprep.subr.mxu0 0.0
    %2991 = vmatpush1.msra.mxu0 0.0
    %2992 = vmatprep.subr.mxu0 0.0
    %2993 = vmatpush1.msra.mxu0 0.0
    %2994 = vmatprep.subr.mxu0 0.0
    %2995 = vmatpush1.msra.mxu0 0.0
    %2996 = vmatprep.subr.mxu0 0.0
    %2997 = vmatpush1.msra.mxu0 0.0
    %2998 = vmatprep.mubr.f32.mxu0 0.0
    %2999 = vmatmul.mubr.f32.gmra.mrb[0].mxu0 %v2929
    %v3000 = vpop.f32.mrb[0].mxu0
    %v3001 = vadd.f32 %v2895, %v3000
    %v3002 = vpop.f32.mrb[0].mxu0
    %3003 = vmatprep.mubr.f32.mxu0 0.0
    %3004 = vmatmul.mubr.f32.gmra.mrb[0].mxu0 %v2932
    %v3005 = vpop.f32.mrb[0].mxu0
    %v3006 = vadd.f32 %v2895, %v3005
    %v3007 = vpop.f32.mrb[0].mxu0
    %3008 = vdwg.mxu0
    %3011 = vrot.lane.b32.xlu0 %v3001, 120
    %v3012 = vpop.permute.xlu0 %3011
    %3013 = vrot.lane.b32.xlu0 %v3006, 120
    %v3014 = vpop.permute.xlu0 %3013
    %3017 = vrot.lane.b32.xlu0 %v3001, 112
    %v3018 = vpop.permute.xlu0 %3017
    %3019 = vrot.lane.b32.xlu0 %v3006, 112
    %v3020 = vpop.permute.xlu0 %3019
    %3023 = vrot.lane.b32.xlu0 %v3001, 104
    %v3024 = vpop.permute.xlu0 %3023
    %3025 = vrot.lane.b32.xlu0 %v3006, 104
    %v3026 = vpop.permute.xlu0 %3025
    %3029 = vrot.lane.b32.xlu0 %v3001, 96
    %v3030 = vpop.permute.xlu0 %3029
    %3031 = vrot.lane.b32.xlu0 %v3006, 96
    %v3032 = vpop.permute.xlu0 %3031
    %3035 = vrot.lane.b32.xlu0 %v3001, 88
    %v3036 = vpop.permute.xlu0 %3035
    %3037 = vrot.lane.b32.xlu0 %v3006, 88
    %v3038 = vpop.permute.xlu0 %3037
    %3041 = vrot.lane.b32.xlu0 %v3001, 80
    %v3042 = vpop.permute.xlu0 %3041
    %3043 = vrot.lane.b32.xlu0 %v3006, 80
    %v3044 = vpop.permute.xlu0 %3043
    %3047 = vrot.lane.b32.xlu0 %v3001, 72
    %v3048 = vpop.permute.xlu0 %3047
    %3049 = vrot.lane.b32.xlu0 %v3006, 72
    %v3050 = vpop.permute.xlu0 %3049
    %v3053 = vcombine.low %v3001, %v3018
    %v3054 = vcombine.high %v3001, %v3018
    %v3056 = vunpack.c.l.s4 1983009808
    %v3057 = vunpack.c.0.s8 %v3056
    %v3058 = vlaneseq
    %v3059 = vshrl.u32 %v3058, 7
    %v3060 = vsub.s32 %v3057, %v3059
    %v3061 = vrot.slane %v3053, %v3060
    %v3063 = vunpack.c.l.s4 1983009808
    %v3064 = vunpack.c.0.s8 %v3063
    %v3065 = vlaneseq
    %v3066 = vshrl.u32 %v3065, 7
    %v3067 = vsub.s32 %v3064, %v3066
    %v3068 = vrot.slane %v3054, %v3067
    %v3069 = vcombine.low %v3012, %v3024
    %v3070 = vcombine.high %v3012, %v3024
    %v3072 = vunpack.c.l.s4 1983009808
    %v3073 = vunpack.c.0.s8 %v3072
    %v3074 = vlaneseq
    %v3075 = vshrl.u32 %v3074, 7
    %v3076 = vsub.s32 %v3073, %v3075
    %v3077 = vrot.slane %v3069, %v3076
    %v3079 = vunpack.c.l.s4 1983009808
    %v3080 = vunpack.c.0.s8 %v3079
    %v3081 = vlaneseq
    %v3082 = vshrl.u32 %v3081, 7
    %v3083 = vsub.s32 %v3080, %v3082
    %v3084 = vrot.slane %v3070, %v3083
    %v3085 = vcombine.low %v3030, %v3042
    %v3086 = vcombine.high %v3030, %v3042
    %v3088 = vunpack.c.l.s4 1983009808
    %v3089 = vunpack.c.0.s8 %v3088
    %v3090 = vlaneseq
    %v3091 = vshrl.u32 %v3090, 7
    %v3092 = vsub.s32 %v3089, %v3091
    %v3093 = vrot.slane %v3085, %v3092
    %v3095 = vunpack.c.l.s4 1983009808
    %v3096 = vunpack.c.0.s8 %v3095
    %v3097 = vlaneseq
    %v3098 = vshrl.u32 %v3097, 7
    %v3099 = vsub.s32 %v3096, %v3098
    %v3100 = vrot.slane %v3086, %v3099
    %v3101 = vcombine.low %v3036, %v3048
    %v3102 = vcombine.high %v3036, %v3048
    %v3104 = vunpack.c.l.s4 1983009808
    %v3105 = vunpack.c.0.s8 %v3104
    %v3106 = vlaneseq
    %v3107 = vshrl.u32 %v3106, 7
    %v3108 = vsub.s32 %v3105, %v3107
    %v3109 = vrot.slane %v3101, %v3108
    %v3111 = vunpack.c.l.s4 1983009808
    %v3112 = vunpack.c.0.s8 %v3111
    %v3113 = vlaneseq
    %v3114 = vshrl.u32 %v3113, 7
    %v3115 = vsub.s32 %v3112, %v3114
    %v3116 = vrot.slane %v3102, %v3115
    %v3117 = vcombine.low %v3061, %v3077
    %v3118 = vcombine.high %v3061, %v3077
    %v3120 = vunpack.c.l.s4 1934713408
    %v3121 = vunpack.c.0.s8 %v3120
    %v3122 = vlaneseq
    %v3123 = vshrl.u32 %v3122, 7
    %v3124 = vsub.s32 %v3121, %v3123
    %v3125 = vrot.slane %v3117, %v3124
    %v3127 = vunpack.c.l.s4 1934713408
    %v3128 = vunpack.c.0.s8 %v3127
    %v3129 = vlaneseq
    %v3130 = vshrl.u32 %v3129, 7
    %v3131 = vsub.s32 %v3128, %v3130
    %v3132 = vrot.slane %v3118, %v3131
    %v3133 = vcombine.low %v3068, %v3084
    %v3134 = vcombine.high %v3068, %v3084
    %v3136 = vunpack.c.l.s4 1934713408
    %v3137 = vunpack.c.0.s8 %v3136
    %v3138 = vlaneseq
    %v3139 = vshrl.u32 %v3138, 7
    %v3140 = vsub.s32 %v3137, %v3139
    %v3141 = vrot.slane %v3133, %v3140
    %v3143 = vunpack.c.l.s4 1934713408
    %v3144 = vunpack.c.0.s8 %v3143
    %v3145 = vlaneseq
    %v3146 = vshrl.u32 %v3145, 7
    %v3147 = vsub.s32 %v3144, %v3146
    %v3148 = vrot.slane %v3134, %v3147
    %v3149 = vcombine.low %v3093, %v3109
    %v3150 = vcombine.high %v3093, %v3109
    %v3152 = vunpack.c.l.s4 1934713408
    %v3153 = vunpack.c.0.s8 %v3152
    %v3154 = vlaneseq
    %v3155 = vshrl.u32 %v3154, 7
    %v3156 = vsub.s32 %v3153, %v3155
    %v3157 = vrot.slane %v3149, %v3156
    %v3159 = vunpack.c.l.s4 1934713408
    %v3160 = vunpack.c.0.s8 %v3159
    %v3161 = vlaneseq
    %v3162 = vshrl.u32 %v3161, 7
    %v3163 = vsub.s32 %v3160, %v3162
    %v3164 = vrot.slane %v3150, %v3163
    %v3165 = vcombine.low %v3100, %v3116
    %v3166 = vcombine.high %v3100, %v3116
    %v3168 = vunpack.c.l.s4 1934713408
    %v3169 = vunpack.c.0.s8 %v3168
    %v3170 = vlaneseq
    %v3171 = vshrl.u32 %v3170, 7
    %v3172 = vsub.s32 %v3169, %v3171
    %v3173 = vrot.slane %v3165, %v3172
    %v3175 = vunpack.c.l.s4 1934713408
    %v3176 = vunpack.c.0.s8 %v3175
    %v3177 = vlaneseq
    %v3178 = vshrl.u32 %v3177, 7
    %v3179 = vsub.s32 %v3176, %v3178
    %v3180 = vrot.slane %v3166, %v3179
    %v3181 = vcombine.low %v3125, %v3157
    %v3182 = vcombine.high %v3125, %v3157
    %v3183 = vcombine.low %v3132, %v3164
    %v3184 = vcombine.high %v3132, %v3164
    %v3185 = vcombine.low %v3141, %v3173
    %v3186 = vcombine.high %v3141, %v3173
    %v3187 = vcombine.low %v3148, %v3180
    %v3188 = vcombine.high %v3148, %v3180
    %v3189 = vcombine.low %v3006, %v3020
    %v3190 = vcombine.high %v3006, %v3020
    %v3192 = vunpack.c.l.s4 1983009808
    %v3193 = vunpack.c.0.s8 %v3192
    %v3194 = vlaneseq
    %v3195 = vshrl.u32 %v3194, 7
    %v3196 = vsub.s32 %v3193, %v3195
    %v3197 = vrot.slane %v3189, %v3196
    %v3199 = vunpack.c.l.s4 1983009808
    %v3200 = vunpack.c.0.s8 %v3199
    %v3201 = vlaneseq
    %v3202 = vshrl.u32 %v3201, 7
    %v3203 = vsub.s32 %v3200, %v3202
    %v3204 = vrot.slane %v3190, %v3203
    %v3205 = vcombine.low %v3014, %v3026
    %v3206 = vcombine.high %v3014, %v3026
    %v3208 = vunpack.c.l.s4 1983009808
    %v3209 = vunpack.c.0.s8 %v3208
    %v3210 = vlaneseq
    %v3211 = vshrl.u32 %v3210, 7
    %v3212 = vsub.s32 %v3209, %v3211
    %v3213 = vrot.slane %v3205, %v3212
    %v3215 = vunpack.c.l.s4 1983009808
    %v3216 = vunpack.c.0.s8 %v3215
    %v3217 = vlaneseq
    %v3218 = vshrl.u32 %v3217, 7
    %v3219 = vsub.s32 %v3216, %v3218
    %v3220 = vrot.slane %v3206, %v3219
    %v3221 = vcombine.low %v3032, %v3044
    %v3222 = vcombine.high %v3032, %v3044
    %v3224 = vunpack.c.l.s4 1983009808
    %v3225 = vunpack.c.0.s8 %v3224
    %v3226 = vlaneseq
    %v3227 = vshrl.u32 %v3226, 7
    %v3228 = vsub.s32 %v3225, %v3227
    %v3229 = vrot.slane %v3221, %v3228
    %v3231 = vunpack.c.l.s4 1983009808
    %v3232 = vunpack.c.0.s8 %v3231
    %v3233 = vlaneseq
    %v3234 = vshrl.u32 %v3233, 7
    %v3235 = vsub.s32 %v3232, %v3234
    %v3236 = vrot.slane %v3222, %v3235
    %v3237 = vcombine.low %v3038, %v3050
    %v3238 = vcombine.high %v3038, %v3050
    %v3240 = vunpack.c.l.s4 1983009808
    %v3241 = vunpack.c.0.s8 %v3240
    %v3242 = vlaneseq
    %v3243 = vshrl.u32 %v3242, 7
    %v3244 = vsub.s32 %v3241, %v3243
    %v3245 = vrot.slane %v3237, %v3244
    %v3247 = vunpack.c.l.s4 1983009808
    %v3248 = vunpack.c.0.s8 %v3247
    %v3249 = vlaneseq
    %v3250 = vshrl.u32 %v3249, 7
    %v3251 = vsub.s32 %v3248, %v3250
    %v3252 = vrot.slane %v3238, %v3251
    %v3253 = vcombine.low %v3197, %v3213
    %v3254 = vcombine.high %v3197, %v3213
    %v3256 = vunpack.c.l.s4 1934713408
    %v3257 = vunpack.c.0.s8 %v3256
    %v3258 = vlaneseq
    %v3259 = vshrl.u32 %v3258, 7
    %v3260 = vsub.s32 %v3257, %v3259
    %v3261 = vrot.slane %v3253, %v3260
    %v3263 = vunpack.c.l.s4 1934713408
    %v3264 = vunpack.c.0.s8 %v3263
    %v3265 = vlaneseq
    %v3266 = vshrl.u32 %v3265, 7
    %v3267 = vsub.s32 %v3264, %v3266
    %v3268 = vrot.slane %v3254, %v3267
    %v3269 = vcombine.low %v3204, %v3220
    %v3270 = vcombine.high %v3204, %v3220
    %v3272 = vunpack.c.l.s4 1934713408
    %v3273 = vunpack.c.0.s8 %v3272
    %v3274 = vlaneseq
    %v3275 = vshrl.u32 %v3274, 7
    %v3276 = vsub.s32 %v3273, %v3275
    %v3277 = vrot.slane %v3269, %v3276
    %v3279 = vunpack.c.l.s4 1934713408
    %v3280 = vunpack.c.0.s8 %v3279
    %v3281 = vlaneseq
    %v3282 = vshrl.u32 %v3281, 7
    %v3283 = vsub.s32 %v3280, %v3282
    %v3284 = vrot.slane %v3270, %v3283
    %v3285 = vcombine.low %v3229, %v3245
    %v3286 = vcombine.high %v3229, %v3245
    %v3288 = vunpack.c.l.s4 1934713408
    %v3289 = vunpack.c.0.s8 %v3288
    %v3290 = vlaneseq
    %v3291 = vshrl.u32 %v3290, 7
    %v3292 = vsub.s32 %v3289, %v3291
    %v3293 = vrot.slane %v3285, %v3292
    %v3295 = vunpack.c.l.s4 1934713408
    %v3296 = vunpack.c.0.s8 %v3295
    %v3297 = vlaneseq
    %v3298 = vshrl.u32 %v3297, 7
    %v3299 = vsub.s32 %v3296, %v3298
    %v3300 = vrot.slane %v3286, %v3299
    %v3301 = vcombine.low %v3236, %v3252
    %v3302 = vcombine.high %v3236, %v3252
    %v3304 = vunpack.c.l.s4 1934713408
    %v3305 = vunpack.c.0.s8 %v3304
    %v3306 = vlaneseq
    %v3307 = vshrl.u32 %v3306, 7
    %v3308 = vsub.s32 %v3305, %v3307
    %v3309 = vrot.slane %v3301, %v3308
    %v3311 = vunpack.c.l.s4 1934713408
    %v3312 = vunpack.c.0.s8 %v3311
    %v3313 = vlaneseq
    %v3314 = vshrl.u32 %v3313, 7
    %v3315 = vsub.s32 %v3312, %v3314
    %v3316 = vrot.slane %v3302, %v3315
    %v3317 = vcombine.low %v3261, %v3293
    %v3318 = vcombine.high %v3261, %v3293
    %v3319 = vcombine.low %v3268, %v3300
    %v3320 = vcombine.high %v3268, %v3300
    %v3321 = vcombine.low %v3277, %v3309
    %v3322 = vcombine.high %v3277, %v3309
    %v3323 = vcombine.low %v3284, %v3316
    %v3324 = vcombine.high %v3284, %v3316
    %v3325 = vcombine.low %v3181, %v3183
    %v3326 = vcombine.high %v3181, %v3183
    %v3328 = vunpack.c.l.s4 1983009808
    %v3329 = vunpack.c.0.s8 %v3328
    %v3330 = vlaneseq
    %v3331 = vshrl.u32 %v3330, 7
    %v3332 = vsub.s32 %v3329, %v3331
    %v3333 = vrot.slane %v3325, %v3332
    %v3335 = vunpack.c.l.s4 1983009808
    %v3336 = vunpack.c.0.s8 %v3335
    %v3337 = vlaneseq
    %v3338 = vshrl.u32 %v3337, 7
    %v3339 = vsub.s32 %v3336, %v3338
    %v3340 = vrot.slane %v3326, %v3339
    %v3341 = vcombine.low %v3182, %v3184
    %v3342 = vcombine.high %v3182, %v3184
    %v3344 = vunpack.c.l.s4 1983009808
    %v3345 = vunpack.c.0.s8 %v3344
    %v3346 = vlaneseq
    %v3347 = vshrl.u32 %v3346, 7
    %v3348 = vsub.s32 %v3345, %v3347
    %v3349 = vrot.slane %v3341, %v3348
    %v3351 = vunpack.c.l.s4 1983009808
    %v3352 = vunpack.c.0.s8 %v3351
    %v3353 = vlaneseq
    %v3354 = vshrl.u32 %v3353, 7
    %v3355 = vsub.s32 %v3352, %v3354
    %v3356 = vrot.slane %v3342, %v3355
    %v3357 = vcombine.low %v3185, %v3187
    %v3358 = vcombine.high %v3185, %v3187
    %v3360 = vunpack.c.l.s4 1983009808
    %v3361 = vunpack.c.0.s8 %v3360
    %v3362 = vlaneseq
    %v3363 = vshrl.u32 %v3362, 7
    %v3364 = vsub.s32 %v3361, %v3363
    %v3365 = vrot.slane %v3357, %v3364
    %v3367 = vunpack.c.l.s4 1983009808
    %v3368 = vunpack.c.0.s8 %v3367
    %v3369 = vlaneseq
    %v3370 = vshrl.u32 %v3369, 7
    %v3371 = vsub.s32 %v3368, %v3370
    %v3372 = vrot.slane %v3358, %v3371
    %v3373 = vcombine.low %v3186, %v3188
    %v3374 = vcombine.high %v3186, %v3188
    %v3376 = vunpack.c.l.s4 1983009808
    %v3377 = vunpack.c.0.s8 %v3376
    %v3378 = vlaneseq
    %v3379 = vshrl.u32 %v3378, 7
    %v3380 = vsub.s32 %v3377, %v3379
    %v3381 = vrot.slane %v3373, %v3380
    %v3383 = vunpack.c.l.s4 1983009808
    %v3384 = vunpack.c.0.s8 %v3383
    %v3385 = vlaneseq
    %v3386 = vshrl.u32 %v3385, 7
    %v3387 = vsub.s32 %v3384, %v3386
    %v3388 = vrot.slane %v3374, %v3387
    %v3389 = vcombine.low %v3333, %v3349
    %v3390 = vcombine.high %v3333, %v3349
    %v3392 = vunpack.c.l.s4 1934713408
    %v3393 = vunpack.c.0.s8 %v3392
    %v3394 = vlaneseq
    %v3395 = vshrl.u32 %v3394, 7
    %v3396 = vsub.s32 %v3393, %v3395
    %v3397 = vrot.slane %v3389, %v3396
    %v3399 = vunpack.c.l.s4 1934713408
    %v3400 = vunpack.c.0.s8 %v3399
    %v3401 = vlaneseq
    %v3402 = vshrl.u32 %v3401, 7
    %v3403 = vsub.s32 %v3400, %v3402
    %v3404 = vrot.slane %v3390, %v3403
    %v3405 = vcombine.low %v3340, %v3356
    %v3406 = vcombine.high %v3340, %v3356
    %v3408 = vunpack.c.l.s4 1934713408
    %v3409 = vunpack.c.0.s8 %v3408
    %v3410 = vlaneseq
    %v3411 = vshrl.u32 %v3410, 7
    %v3412 = vsub.s32 %v3409, %v3411
    %v3413 = vrot.slane %v3405, %v3412
    %v3415 = vunpack.c.l.s4 1934713408
    %v3416 = vunpack.c.0.s8 %v3415
    %v3417 = vlaneseq
    %v3418 = vshrl.u32 %v3417, 7
    %v3419 = vsub.s32 %v3416, %v3418
    %v3420 = vrot.slane %v3406, %v3419
    %v3421 = vcombine.low %v3365, %v3381
    %v3422 = vcombine.high %v3365, %v3381
    %v3424 = vunpack.c.l.s4 1934713408
    %v3425 = vunpack.c.0.s8 %v3424
    %v3426 = vlaneseq
    %v3427 = vshrl.u32 %v3426, 7
    %v3428 = vsub.s32 %v3425, %v3427
    %v3429 = vrot.slane %v3421, %v3428
    %v3431 = vunpack.c.l.s4 1934713408
    %v3432 = vunpack.c.0.s8 %v3431
    %v3433 = vlaneseq
    %v3434 = vshrl.u32 %v3433, 7
    %v3435 = vsub.s32 %v3432, %v3434
    %v3436 = vrot.slane %v3422, %v3435
    %v3437 = vcombine.low %v3372, %v3388
    %v3438 = vcombine.high %v3372, %v3388
    %v3440 = vunpack.c.l.s4 1934713408
    %v3441 = vunpack.c.0.s8 %v3440
    %v3442 = vlaneseq
    %v3443 = vshrl.u32 %v3442, 7
    %v3444 = vsub.s32 %v3441, %v3443
    %v3445 = vrot.slane %v3437, %v3444
    %v3447 = vunpack.c.l.s4 1934713408
    %v3448 = vunpack.c.0.s8 %v3447
    %v3449 = vlaneseq
    %v3450 = vshrl.u32 %v3449, 7
    %v3451 = vsub.s32 %v3448, %v3450
    %v3452 = vrot.slane %v3438, %v3451
    %v3453 = vcombine.low %v3397, %v3429
    %v3454 = vcombine.high %v3397, %v3429
    %v3455 = vcombine.low %v3404, %v3436
    %v3456 = vcombine.high %v3404, %v3436
    %v3457 = vcombine.low %v3413, %v3445
    %v3458 = vcombine.high %v3413, %v3445
    %v3459 = vcombine.low %v3420, %v3452
    %v3460 = vcombine.high %v3420, %v3452
    %v3461 = vcombine.low %v3317, %v3319
    %v3462 = vcombine.high %v3317, %v3319
    %v3464 = vunpack.c.l.s4 1983009808
    %v3465 = vunpack.c.0.s8 %v3464
    %v3466 = vlaneseq
    %v3467 = vshrl.u32 %v3466, 7
    %v3468 = vsub.s32 %v3465, %v3467
    %v3469 = vrot.slane %v3461, %v3468
    %v3471 = vunpack.c.l.s4 1983009808
    %v3472 = vunpack.c.0.s8 %v3471
    %v3473 = vlaneseq
    %v3474 = vshrl.u32 %v3473, 7
    %v3475 = vsub.s32 %v3472, %v3474
    %v3476 = vrot.slane %v3462, %v3475
    %v3477 = vcombine.low %v3318, %v3320
    %v3478 = vcombine.high %v3318, %v3320
    %v3480 = vunpack.c.l.s4 1983009808
    %v3481 = vunpack.c.0.s8 %v3480
    %v3482 = vlaneseq
    %v3483 = vshrl.u32 %v3482, 7
    %v3484 = vsub.s32 %v3481, %v3483
    %v3485 = vrot.slane %v3477, %v3484
    %v3487 = vunpack.c.l.s4 1983009808
    %v3488 = vunpack.c.0.s8 %v3487
    %v3489 = vlaneseq
    %v3490 = vshrl.u32 %v3489, 7
    %v3491 = vsub.s32 %v3488, %v3490
    %v3492 = vrot.slane %v3478, %v3491
    %v3493 = vcombine.low %v3321, %v3323
    %v3494 = vcombine.high %v3321, %v3323
    %v3496 = vunpack.c.l.s4 1983009808
    %v3497 = vunpack.c.0.s8 %v3496
    %v3498 = vlaneseq
    %v3499 = vshrl.u32 %v3498, 7
    %v3500 = vsub.s32 %v3497, %v3499
    %v3501 = vrot.slane %v3493, %v3500
    %v3503 = vunpack.c.l.s4 1983009808
    %v3504 = vunpack.c.0.s8 %v3503
    %v3505 = vlaneseq
    %v3506 = vshrl.u32 %v3505, 7
    %v3507 = vsub.s32 %v3504, %v3506
    %v3508 = vrot.slane %v3494, %v3507
    %v3509 = vcombine.low %v3322, %v3324
    %v3510 = vcombine.high %v3322, %v3324
    %v3512 = vunpack.c.l.s4 1983009808
    %v3513 = vunpack.c.0.s8 %v3512
    %v3514 = vlaneseq
    %v3515 = vshrl.u32 %v3514, 7
    %v3516 = vsub.s32 %v3513, %v3515
    %v3517 = vrot.slane %v3509, %v3516
    %v3519 = vunpack.c.l.s4 1983009808
    %v3520 = vunpack.c.0.s8 %v3519
    %v3521 = vlaneseq
    %v3522 = vshrl.u32 %v3521, 7
    %v3523 = vsub.s32 %v3520, %v3522
    %v3524 = vrot.slane %v3510, %v3523
    %v3525 = vcombine.low %v3469, %v3485
    %v3526 = vcombine.high %v3469, %v3485
    %v3528 = vunpack.c.l.s4 1934713408
    %v3529 = vunpack.c.0.s8 %v3528
    %v3530 = vlaneseq
    %v3531 = vshrl.u32 %v3530, 7
    %v3532 = vsub.s32 %v3529, %v3531
    %v3533 = vrot.slane %v3525, %v3532
    %v3535 = vunpack.c.l.s4 1934713408
    %v3536 = vunpack.c.0.s8 %v3535
    %v3537 = vlaneseq
    %v3538 = vshrl.u32 %v3537, 7
    %v3539 = vsub.s32 %v3536, %v3538
    %v3540 = vrot.slane %v3526, %v3539
    %v3541 = vcombine.low %v3476, %v3492
    %v3542 = vcombine.high %v3476, %v3492
    %v3544 = vunpack.c.l.s4 1934713408
    %v3545 = vunpack.c.0.s8 %v3544
    %v3546 = vlaneseq
    %v3547 = vshrl.u32 %v3546, 7
    %v3548 = vsub.s32 %v3545, %v3547
    %v3549 = vrot.slane %v3541, %v3548
    %v3551 = vunpack.c.l.s4 1934713408
    %v3552 = vunpack.c.0.s8 %v3551
    %v3553 = vlaneseq
    %v3554 = vshrl.u32 %v3553, 7
    %v3555 = vsub.s32 %v3552, %v3554
    %v3556 = vrot.slane %v3542, %v3555
    %v3557 = vcombine.low %v3501, %v3517
    %v3558 = vcombine.high %v3501, %v3517
    %v3560 = vunpack.c.l.s4 1934713408
    %v3561 = vunpack.c.0.s8 %v3560
    %v3562 = vlaneseq
    %v3563 = vshrl.u32 %v3562, 7
    %v3564 = vsub.s32 %v3561, %v3563
    %v3565 = vrot.slane %v3557, %v3564
    %v3567 = vunpack.c.l.s4 1934713408
    %v3568 = vunpack.c.0.s8 %v3567
    %v3569 = vlaneseq
    %v3570 = vshrl.u32 %v3569, 7
    %v3571 = vsub.s32 %v3568, %v3570
    %v3572 = vrot.slane %v3558, %v3571
    %v3573 = vcombine.low %v3508, %v3524
    %v3574 = vcombine.high %v3508, %v3524
    %v3576 = vunpack.c.l.s4 1934713408
    %v3577 = vunpack.c.0.s8 %v3576
    %v3578 = vlaneseq
    %v3579 = vshrl.u32 %v3578, 7
    %v3580 = vsub.s32 %v3577, %v3579
    %v3581 = vrot.slane %v3573, %v3580
    %v3583 = vunpack.c.l.s4 1934713408
    %v3584 = vunpack.c.0.s8 %v3583
    %v3585 = vlaneseq
    %v3586 = vshrl.u32 %v3585, 7
    %v3587 = vsub.s32 %v3584, %v3586
    %v3588 = vrot.slane %v3574, %v3587
    %v3589 = vcombine.low %v3533, %v3565
    %v3590 = vcombine.high %v3533, %v3565
    %v3591 = vcombine.low %v3540, %v3572
    %v3592 = vcombine.high %v3540, %v3572
    %v3593 = vcombine.low %v3549, %v3581
    %v3594 = vcombine.high %v3549, %v3581
    %v3595 = vcombine.low %v3556, %v3588
    %v3596 = vcombine.high %v3556, %v3588
    %v3597 = vlaneseq
    %v3598 = vshrl.u32 %v3597, 7
    %v3599 = vsub.s32 0, %v3598
    %v3600 = vrot.slane %v76, %v3599
    %3602 = vbcast.lane.b32.xlu0 %v3600, 256
    %v3603 = vpop.permute.xlu0 %3602
    %s3605 = sor.u32 256, 8
    %3606 = vbcast.lane.b32.xlu0 %v3600, %s3605
    %v3607 = vpop.permute.xlu0 %3606
    %v3608 = vadd.f32 %v3453, %v3603
    %v3609 = vadd.f32 %v3589, %v3607
    %v3610 = vadd.f32 %v3454, %v3603
    %v3611 = vadd.f32 %v3590, %v3607
    %v3612 = vadd.f32 %v3455, %v3603
    %v3613 = vadd.f32 %v3591, %v3607
    %v3614 = vadd.f32 %v3456, %v3603
    %v3615 = vadd.f32 %v3592, %v3607
    %v3616 = vadd.f32 %v3457, %v3603
    %v3617 = vadd.f32 %v3593, %v3607
    %v3618 = vadd.f32 %v3458, %v3603
    %v3619 = vadd.f32 %v3594, %v3607
    %v3620 = vadd.f32 %v3459, %v3603
    %v3621 = vadd.f32 %v3595, %v3607
    %v3622 = vadd.f32 %v3460, %v3603
    %v3623 = vadd.f32 %v3596, %v3607
    %3628 = vrot.lane.b32.xlu0 %v3612, 8
    %v3629 = vpop.permute.xlu0 %3628
    %3630 = vrot.lane.b32.xlu0 %v3613, 8
    %v3631 = vpop.permute.xlu0 %3630
    %3632 = vrot.lane.b32.xlu0 %v3614, 8
    %v3633 = vpop.permute.xlu0 %3632
    %3634 = vrot.lane.b32.xlu0 %v3615, 8
    %v3635 = vpop.permute.xlu0 %3634
    %3644 = vrot.lane.b32.xlu0 %v3616, 16
    %v3645 = vpop.permute.xlu0 %3644
    %3646 = vrot.lane.b32.xlu0 %v3617, 16
    %v3647 = vpop.permute.xlu0 %3646
    %3648 = vrot.lane.b32.xlu0 %v3618, 16
    %v3649 = vpop.permute.xlu0 %3648
    %3650 = vrot.lane.b32.xlu0 %v3619, 16
    %v3651 = vpop.permute.xlu0 %3650
    %3660 = vrot.lane.b32.xlu0 %v3620, 24
    %v3661 = vpop.permute.xlu0 %3660
    %3662 = vrot.lane.b32.xlu0 %v3621, 24
    %v3663 = vpop.permute.xlu0 %3662
    %3664 = vrot.lane.b32.xlu0 %v3622, 24
    %v3665 = vpop.permute.xlu0 %3664
    %3666 = vrot.lane.b32.xlu0 %v3623, 24
    %v3667 = vpop.permute.xlu0 %3666
    %v3672 = vsel %vm284, %v3608, %v3629
    %v3673 = vsel %vm284, %v3609, %v3631
    %v3674 = vsel %vm284, %v3610, %v3633
    %v3675 = vsel %vm284, %v3611, %v3635
    %v3676 = vsel %vm983, %v3672, %v3645
    %v3677 = vsel %vm983, %v3673, %v3647
    %v3678 = vsel %vm983, %v3674, %v3649
    %v3679 = vsel %vm983, %v3675, %v3651
    %v3680 = vsel %vm2796, %v3676, %v3661
    %v3681 = vsel %vm2796, %v3677, %v3663
    %v3682 = vsel %vm2796, %v3678, %v3665
    %v3683 = vsel %vm2796, %v3679, %v3667
    %v3684 = vadd.f32 %v79, %v3680
    %v3685 = vadd.f32 %v80, %v3681
    %v3686 = vadd.f32 %v81, %v3682
    %v3687 = vadd.f32 %v82, %v3683
    %v3688 = vld [vmem:[%s3] sm:$0x1]
    %v3689 = vld [vmem:[%s4] sm:$0x1]
    %v3690 = vsel %vm85, %v3684, 0.0
    %3691 = vadd.xlane.f32.xlu0 %v3690
    %v3692 = vpop.xlane.xlu0 %3691
    %v3693 = vsel %vm85, %v3685, 0.0
    %3694 = vadd.xlane.f32.xlu0 %v3693
    %v3695 = vpop.xlane.xlu0 %3694
    %v3696 = vsel %vm85, %v3686, 0.0
    %3697 = vadd.xlane.f32.xlu0 %v3696
    %v3698 = vpop.xlane.xlu0 %3697
    %v3699 = vsel %vm85, %v3687, 0.0
    %3700 = vadd.xlane.f32.xlu0 %v3699
    %v3701 = vpop.xlane.xlu0 %3700
    %v3702 = vmul.f32 %v3692, %v98
    %v3703 = vmul.f32 %v3695, %v98
    %v3704 = vmul.f32 %v3698, %v98
    %v3705 = vmul.f32 %v3701, %v98
    %v3706 = vsub.f32 %v3684, %v3702
    %v3707 = vsub.f32 %v3685, %v3703
    %v3708 = vsub.f32 %v3686, %v3704
    %v3709 = vsub.f32 %v3687, %v3705
    %v3710 = vmul.f32 %v3706, %v3706
    %v3711 = vmul.f32 %v3707, %v3707
    %v3712 = vmul.f32 %v3708, %v3708
    %v3713 = vmul.f32 %v3709, %v3709
    %v3714 = vsel %vm85, %v3710, 0.0
    %3715 = vadd.xlane.f32.xlu0 %v3714
    %v3716 = vpop.xlane.xlu0 %3715
    %v3717 = vsel %vm85, %v3711, 0.0
    %3718 = vadd.xlane.f32.xlu0 %v3717
    %v3719 = vpop.xlane.xlu0 %3718
    %v3720 = vsel %vm85, %v3712, 0.0
    %3721 = vadd.xlane.f32.xlu0 %v3720
    %v3722 = vpop.xlane.xlu0 %3721
    %v3723 = vsel %vm85, %v3713, 0.0
    %3724 = vadd.xlane.f32.xlu0 %v3723
    %v3725 = vpop.xlane.xlu0 %3724
    %v3726 = vmul.f32 %v3716, %v98
    %v3727 = vmul.f32 %v3719, %v98
    %v3728 = vmul.f32 %v3722, %v98
    %v3729 = vmul.f32 %v3725, %v98
    %v3730 = vadd.f32 %v3726, 1e-05
    %v3731 = vadd.f32 %v3727, 1e-05
    %v3732 = vadd.f32 %v3728, 1e-05
    %v3733 = vadd.f32 %v3729, 1e-05
    %v3734 = vrsqrt.pop %v3730
    %v3735 = vrsqrt.pop %v3731
    %v3736 = vrsqrt.pop %v3732
    %v3737 = vrsqrt.pop %v3733
    %v3738 = vmul.f32 %v3706, %v3734
    %v3739 = vmul.f32 %v3707, %v3735
    %v3740 = vmul.f32 %v3708, %v3736
    %v3741 = vmul.f32 %v3709, %v3737
    %v3742 = vlaneseq
    %v3743 = vshrl.u32 %v3742, 7
    %v3744 = vsub.s32 0, %v3743
    %v3745 = vrot.slane %v3688, %v3744
    %v3746 = vmul.f32 %v3738, %v3745
    %v3747 = vmul.f32 %v3739, %v3745
    %v3748 = vmul.f32 %v3740, %v3745
    %v3749 = vmul.f32 %v3741, %v3745
    %v3750 = vlaneseq
    %v3751 = vshrl.u32 %v3750, 7
    %v3752 = vsub.s32 0, %v3751
    %v3753 = vrot.slane %v3689, %v3752
    %v3754 = vadd.f32 %v3746, %v3753
    %v3755 = vadd.f32 %v3747, %v3753
    %v3756 = vadd.f32 %v3748, %v3753
    %v3757 = vadd.f32 %v3749, %v3753
    %v3759 = vlaneseq
    %v3760 = vshrl.u32 %v3759, 7
    %v3761 = vsub.s32 0, %v3760
    %v3762 = vrot.slane %v77, %v3761
    %v3765 = vsel %vm85, %v3754, 0
    %v3768 = vsel %vm85, %v3755, 0
    %v3771 = vsel %vm85, %v3756, 0
    %v3774 = vsel %vm85, %v3757, 0
    %3776 = vmatprep.subr.mxu0 0.0
    %3777 = vmatpush1.msra.mxu0 %v61
    %3778 = vmatprep.subr.mxu0 0.0
    %3779 = vmatpush1.msra.mxu0 %v62
    %3780 = vmatprep.subr.mxu0 0.0
    %3781 = vmatpush1.msra.mxu0 %v63
    %3782 = vmatprep.subr.mxu0 0.0
    %3783 = vmatpush1.msra.mxu0 %v64
    %3784 = vmatprep.subr.mxu0 0.0
    %3785 = vmatpush1.msra.mxu0 0.0
    %3786 = vmatprep.subr.mxu0 0.0
    %3787 = vmatpush1.msra.mxu0 0.0
    %3788 = vmatprep.subr.mxu0 0.0
    %3789 = vmatpush1.msra.mxu0 0.0
    %3790 = vmatprep.subr.mxu0 0.0
    %3791 = vmatpush1.msra.mxu0 0.0
    %3792 = vmatprep.subr.mxu0 0.0
    %3793 = vmatpush1.msra.mxu0 0.0
    %3794 = vmatprep.subr.mxu0 0.0
    %3795 = vmatpush1.msra.mxu0 0.0
    %3796 = vmatprep.subr.mxu0 0.0
    %3797 = vmatpush1.msra.mxu0 0.0
    %3798 = vmatprep.subr.mxu0 0.0
    %3799 = vmatpush1.msra.mxu0 0.0
    %3800 = vmatprep.subr.mxu0 0.0
    %3801 = vmatpush1.msra.mxu0 0.0
    %3802 = vmatprep.subr.mxu0 0.0
    %3803 = vmatpush1.msra.mxu0 0.0
    %3804 = vmatprep.subr.mxu0 0.0
    %3805 = vmatpush1.msra.mxu0 0.0
    %3806 = vmatprep.subr.mxu0 0.0
    %3807 = vmatpush1.msra.mxu0 0.0
    %3808 = vmatprep.subr.mxu0 0.0
    %3809 = vmatpush1.msra.mxu0 0.0
    %3810 = vmatprep.subr.mxu0 0.0
    %3811 = vmatpush1.msra.mxu0 0.0
    %3812 = vmatprep.subr.mxu0 0.0
    %3813 = vmatpush1.msra.mxu0 0.0
    %3814 = vmatprep.subr.mxu0 0.0
    %3815 = vmatpush1.msra.mxu0 0.0
    %3816 = vmatprep.subr.mxu0 0.0
    %3817 = vmatpush1.msra.mxu0 0.0
    %3818 = vmatprep.subr.mxu0 0.0
    %3819 = vmatpush1.msra.mxu0 0.0
    %3820 = vmatprep.subr.mxu0 0.0
    %3821 = vmatpush1.msra.mxu0 0.0
    %3822 = vmatprep.subr.mxu0 0.0
    %3823 = vmatpush1.msra.mxu0 0.0
    %3824 = vmatprep.subr.mxu0 0.0
    %3825 = vmatpush1.msra.mxu0 0.0
    %3826 = vmatprep.subr.mxu0 0.0
    %3827 = vmatpush1.msra.mxu0 0.0
    %3828 = vmatprep.subr.mxu0 0.0
    %3829 = vmatpush1.msra.mxu0 0.0
    %3830 = vmatprep.subr.mxu0 0.0
    %3831 = vmatpush1.msra.mxu0 0.0
    %3832 = vmatprep.subr.mxu0 0.0
    %3833 = vmatpush1.msra.mxu0 0.0
    %3834 = vmatprep.subr.mxu0 0.0
    %3835 = vmatpush1.msra.mxu0 0.0
    %3836 = vmatprep.subr.mxu0 0.0
    %3837 = vmatpush1.msra.mxu0 0.0
    %3838 = vmatprep.subr.mxu0 0.0
    %3839 = vmatpush1.msra.mxu0 0.0
    %3840 = vmatprep.mubr.f32.mxu0 0.0
    %3841 = vmatmul.mubr.f32.gmra.mrb[0].mxu0 %v3765
    %v3842 = vpop.f32.mrb[0].mxu0
    %v3843 = vadd.f32 %v3762, %v3842
    %v3844 = vpop.f32.mrb[0].mxu0
    %3845 = vmatprep.mubr.f32.mxu0 0.0
    %3846 = vmatmul.mubr.f32.gmra.mrb[0].mxu0 %v3768
    %v3847 = vpop.f32.mrb[0].mxu0
    %v3848 = vadd.f32 %v3762, %v3847
    %v3849 = vpop.f32.mrb[0].mxu0
    %3850 = vmatprep.mubr.f32.mxu0 0.0
    %3851 = vmatmul.mubr.f32.gmra.mrb[0].mxu0 %v3771
    %v3852 = vpop.f32.mrb[0].mxu0
    %v3853 = vadd.f32 %v3762, %v3852
    %v3854 = vpop.f32.mrb[0].mxu0
    %3855 = vmatprep.mubr.f32.mxu0 0.0
    %3856 = vmatmul.mubr.f32.gmra.mrb[0].mxu0 %v3774
    %v3857 = vpop.f32.mrb[0].mxu0
    %v3858 = vadd.f32 %v3762, %v3857
    %v3859 = vpop.f32.mrb[0].mxu0
    %3860 = vdwg.mxu0
    %v3861 = vmul.f32 %v3843, 0.5
    %v3862 = vmul.f32 %v3848, 0.5
    %v3863 = vmul.f32 %v3853, 0.5
    %v3864 = vmul.f32 %v3858, 0.5
    %v3865 = vmul.f32 %v3843, 0.044715
    %v3866 = vmul.f32 %v3848, 0.044715
    %v3867 = vmul.f32 %v3853, 0.044715
    %v3868 = vmul.f32 %v3858, 0.044715
    %v3869 = vmul.f32 %v3865, %v3843
    %v3870 = vmul.f32 %v3866, %v3848
    %v3871 = vmul.f32 %v3867, %v3853
    %v3872 = vmul.f32 %v3868, %v3858
    %v3873 = vmul.f32 %v3869, %v3843
    %v3874 = vmul.f32 %v3870, %v3848
    %v3875 = vmul.f32 %v3871, %v3853
    %v3876 = vmul.f32 %v3872, %v3858
    %v3877 = vadd.f32 %v3843, %v3873
    %v3878 = vadd.f32 %v3848, %v3874
    %v3879 = vadd.f32 %v3853, %v3875
    %v3880 = vadd.f32 %v3858, %v3876
    %v3881 = vmul.f32 %v3877, 0.7978846
    %v3882 = vmul.f32 %v3878, 0.7978846
    %v3883 = vmul.f32 %v3879, 0.7978846
    %v3884 = vmul.f32 %v3880, 0.7978846
    %v3885 = vtanh.pop %v3881
    %v3886 = vtanh.pop %v3882
    %v3887 = vtanh.pop %v3883
    %v3888 = vtanh.pop %v3884
    %v3889 = vadd.f32 %v3885, 1.0
    %v3890 = vadd.f32 %v3886, 1.0
    %v3891 = vadd.f32 %v3887, 1.0
    %v3892 = vadd.f32 %v3888, 1.0
    %v3893 = vmul.f32 %v3861, %v3889
    %v3894 = vmul.f32 %v3862, %v3890
    %v3895 = vmul.f32 %v3863, %v3891
    %v3896 = vmul.f32 %v3864, %v3892
    %vm3897 = vcmask 523264
    %v3899 = vsel %vm3897, %v3893, 0
    %v3902 = vsel %vm3897, %v3894, 0
    %v3905 = vsel %vm3897, %v3895, 0
    %v3908 = vsel %vm3897, %v3896, 0
    %3910 = vmatprep.subr.mxu0 0.0
    %3911 = vmatpush1.msra.mxu0 %v65
    %3912 = vmatprep.subr.mxu0 0.0
    %3913 = vmatpush1.msra.mxu0 %v66
    %3914 = vmatprep.subr.mxu0 0.0
    %3915 = vmatpush1.msra.mxu0 %v67
    %3916 = vmatprep.subr.mxu0 0.0
    %3917 = vmatpush1.msra.mxu0 %v68
    %3918 = vmatprep.subr.mxu0 0.0
    %3919 = vmatpush1.msra.mxu0 %v69
    %3920 = vmatprep.subr.mxu0 0.0
    %3921 = vmatpush1.msra.mxu0 %v70
    %3922 = vmatprep.subr.mxu0 0.0
    %3923 = vmatpush1.msra.mxu0 %v71
    %3924 = vmatprep.subr.mxu0 0.0
    %3925 = vmatpush1.msra.mxu0 %v72
    %3926 = vmatprep.subr.mxu0 0.0
    %3927 = vmatpush1.msra.mxu0 0.0
    %3928 = vmatprep.subr.mxu0 0.0
    %3929 = vmatpush1.msra.mxu0 0.0
    %3930 = vmatprep.subr.mxu0 0.0
    %3931 = vmatpush1.msra.mxu0 0.0
    %3932 = vmatprep.subr.mxu0 0.0
    %3933 = vmatpush1.msra.mxu0 0.0
    %3934 = vmatprep.subr.mxu0 0.0
    %3935 = vmatpush1.msra.mxu0 0.0
    %3936 = vmatprep.subr.mxu0 0.0
    %3937 = vmatpush1.msra.mxu0 0.0
    %3938 = vmatprep.subr.mxu0 0.0
    %3939 = vmatpush1.msra.mxu0 0.0
    %3940 = vmatprep.subr.mxu0 0.0
    %3941 = vmatpush1.msra.mxu0 0.0
    %3942 = vmatprep.subr.mxu0 0.0
    %3943 = vmatpush1.msra.mxu0 0.0
    %3944 = vmatprep.subr.mxu0 0.0
    %3945 = vmatpush1.msra.mxu0 0.0
    %3946 = vmatprep.subr.mxu0 0.0
    %3947 = vmatpush1.msra.mxu0 0.0
    %3948 = vmatprep.subr.mxu0 0.0
    %3949 = vmatpush1.msra.mxu0 0.0
    %3950 = vmatprep.subr.mxu0 0.0
    %3951 = vmatpush1.msra.mxu0 0.0
    %3952 = vmatprep.subr.mxu0 0.0
    %3953 = vmatpush1.msra.mxu0 0.0
    %3954 = vmatprep.subr.mxu0 0.0
    %3955 = vmatpush1.msra.mxu0 0.0
    %3956 = vmatprep.subr.mxu0 0.0
    %3957 = vmatpush1.msra.mxu0 0.0
    %3958 = vmatprep.subr.mxu0 0.0
    %3959 = vmatpush1.msra.mxu0 0.0
    %3960 = vmatprep.subr.mxu0 0.0
    %3961 = vmatpush1.msra.mxu0 0.0
    %3962 = vmatprep.subr.mxu0 0.0
    %3963 = vmatpush1.msra.mxu0 0.0
    %3964 = vmatprep.subr.mxu0 0.0
    %3965 = vmatpush1.msra.mxu0 0.0
    %3966 = vmatprep.subr.mxu0 0.0
    %3967 = vmatpush1.msra.mxu0 0.0
    %3968 = vmatprep.subr.mxu0 0.0
    %3969 = vmatpush1.msra.mxu0 0.0
    %3970 = vmatprep.subr.mxu0 0.0
    %3971 = vmatpush1.msra.mxu0 0.0
    %3972 = vmatprep.subr.mxu0 0.0
    %3973 = vmatpush1.msra.mxu0 0.0
    %3974 = vmatprep.mubr.f32.mxu0 0.0
    %3975 = vmatmul.mubr.f32.gmra.mrb[0].mxu0 %v3899
    %v3976 = vpop.f32.mrb[0].mxu0
    %v3977 = vadd.f32 0.0, %v3976
    %v3978 = vpop.f32.mrb[0].mxu0
    %3979 = vmatprep.mubr.f32.mxu0 0.0
    %3980 = vmatmul.mubr.f32.gmra.mrb[0].mxu0 %v3902
    %v3981 = vpop.f32.mrb[0].mxu0
    %v3982 = vadd.f32 0.0, %v3981
    %v3983 = vpop.f32.mrb[0].mxu0
    %3984 = vmatprep.mubr.f32.mxu0 0.0
    %3985 = vmatmul.mubr.f32.gmra.mrb[0].mxu0 %v3905
    %v3986 = vpop.f32.mrb[0].mxu0
    %v3987 = vadd.f32 0.0, %v3986
    %v3988 = vpop.f32.mrb[0].mxu0
    %3989 = vmatprep.mubr.f32.mxu0 0.0
    %3990 = vmatmul.mubr.f32.gmra.mrb[0].mxu0 %v3908
    %v3991 = vpop.f32.mrb[0].mxu0
    %v3992 = vadd.f32 0.0, %v3991
    %v3993 = vpop.f32.mrb[0].mxu0
    %3994 = vdwg.mxu0
    %v3995 = vadd.f32 %v79, %v3977
    %v3996 = vadd.f32 %v80, %v3982
    %v3997 = vadd.f32 %v81, %v3987
    %v3998 = vadd.f32 %v82, %v3992
    %v4000 = vlaneseq
    %v4001 = vshrl.u32 %v4000, 7
    %v4002 = vsub.s32 0, %v4001
    %v4003 = vrot.slane %v78, %v4002
    %v4005 = vadd.f32 %v3995, %v4003
    %v4006 = vadd.f32 %v3996, %v4003
    %v4007 = vadd.f32 %v3997, %v4003
    %v4008 = vadd.f32 %v3998, %v4003
    %v4009 = vld [vmem:[%s1 + $0x1] sm:$0x1]
    %v4010 = vld [vmem:[%s2 + $0x1] sm:$0x1]
    %v4011 = vsel %vm85, %v4005, 0.0
    %4012 = vadd.xlane.f32.xlu0 %v4011
    %v4013 = vpop.xlane.xlu0 %4012
    %v4014 = vsel %vm85, %v4006, 0.0
    %4015 = vadd.xlane.f32.xlu0 %v4014
    %v4016 = vpop.xlane.xlu0 %4015
    %v4017 = vsel %vm85, %v4007, 0.0
    %4018 = vadd.xlane.f32.xlu0 %v4017
    %v4019 = vpop.xlane.xlu0 %4018
    %v4020 = vsel %vm85, %v4008, 0.0
    %4021 = vadd.xlane.f32.xlu0 %v4020
    %v4022 = vpop.xlane.xlu0 %4021
    %v4023 = vmul.f32 %v4013, %v98
    %v4024 = vmul.f32 %v4016, %v98
    %v4025 = vmul.f32 %v4019, %v98
    %v4026 = vmul.f32 %v4022, %v98
    %v4027 = vsub.f32 %v4005, %v4023
    %v4028 = vsub.f32 %v4006, %v4024
    %v4029 = vsub.f32 %v4007, %v4025
    %v4030 = vsub.f32 %v4008, %v4026
    %v4031 = vmul.f32 %v4027, %v4027
    %v4032 = vmul.f32 %v4028, %v4028
    %v4033 = vmul.f32 %v4029, %v4029
    %v4034 = vmul.f32 %v4030, %v4030
    %v4035 = vsel %vm85, %v4031, 0.0
    %4036 = vadd.xlane.f32.xlu0 %v4035
    %v4037 = vpop.xlane.xlu0 %4036
    %v4038 = vsel %vm85, %v4032, 0.0
    %4039 = vadd.xlane.f32.xlu0 %v4038
    %v4040 = vpop.xlane.xlu0 %4039
    %v4041 = vsel %vm85, %v4033, 0.0
    %4042 = vadd.xlane.f32.xlu0 %v4041
    %v4043 = vpop.xlane.xlu0 %4042
    %v4044 = vsel %vm85, %v4034, 0.0
    %4045 = vadd.xlane.f32.xlu0 %v4044
    %v4046 = vpop.xlane.xlu0 %4045
    %v4047 = vmul.f32 %v4037, %v98
    %v4048 = vmul.f32 %v4040, %v98
    %v4049 = vmul.f32 %v4043, %v98
    %v4050 = vmul.f32 %v4046, %v98
    %v4051 = vadd.f32 %v4047, 1e-05
    %v4052 = vadd.f32 %v4048, 1e-05
    %v4053 = vadd.f32 %v4049, 1e-05
    %v4054 = vadd.f32 %v4050, 1e-05
    %v4055 = vrsqrt.pop %v4051
    %v4056 = vrsqrt.pop %v4052
    %v4057 = vrsqrt.pop %v4053
    %v4058 = vrsqrt.pop %v4054
    %v4059 = vmul.f32 %v4027, %v4055
    %v4060 = vmul.f32 %v4028, %v4056
    %v4061 = vmul.f32 %v4029, %v4057
    %v4062 = vmul.f32 %v4030, %v4058
    %v4063 = vlaneseq
    %v4064 = vshrl.u32 %v4063, 7
    %v4065 = vsub.s32 0, %v4064
    %v4066 = vrot.slane %v4009, %v4065
    %v4067 = vmul.f32 %v4059, %v4066
    %v4068 = vmul.f32 %v4060, %v4066
    %v4069 = vmul.f32 %v4061, %v4066
    %v4070 = vmul.f32 %v4062, %v4066
    %v4071 = vlaneseq
    %v4072 = vshrl.u32 %v4071, 7
    %v4073 = vsub.s32 0, %v4072
    %v4074 = vrot.slane %v4010, %v4073
    %v4075 = vadd.f32 %v4067, %v4074
    %v4076 = vadd.f32 %v4068, %v4074
    %v4077 = vadd.f32 %v4069, %v4074
    %v4078 = vadd.f32 %v4070, %v4074
    %v4080 = vsel %vm85, %v4075, 0
    %v4083 = vsel %vm85, %v4076, 0
    %v4086 = vsel %vm85, %v4077, 0
    %v4089 = vsel %vm85, %v4078, 0
    %4091 = vmatprep.subr.mxu0 0.0
    %4092 = vmatpush1.msra.mxu0 %v54
    %4093 = vmatprep.subr.mxu0 0.0
    %4094 = vmatpush1.msra.mxu0 %v55
    %4095 = vmatprep.subr.mxu0 0.0
    %4096 = vmatpush1.msra.mxu0 %v56
    %4097 = vmatprep.subr.mxu0 0.0
    %4098 = vmatpush1.msra.mxu0 %v57
    %4099 = vmatprep.subr.mxu0 0.0
    %4100 = vmatpush1.msra.mxu0 0.0
    %4101 = vmatprep.subr.mxu0 0.0
    %4102 = vmatpush1.msra.mxu0 0.0
    %4103 = vmatprep.subr.mxu0 0.0
    %4104 = vmatpush1.msra.mxu0 0.0
    %4105 = vmatprep.subr.mxu0 0.0
    %4106 = vmatpush1.msra.mxu0 0.0
    %4107 = vmatprep.subr.mxu0 0.0
    %4108 = vmatpush1.msra.mxu0 0.0
    %4109 = vmatprep.subr.mxu0 0.0
    %4110 = vmatpush1.msra.mxu0 0.0
    %4111 = vmatprep.subr.mxu0 0.0
    %4112 = vmatpush1.msra.mxu0 0.0
    %4113 = vmatprep.subr.mxu0 0.0
    %4114 = vmatpush1.msra.mxu0 0.0
    %4115 = vmatprep.subr.mxu0 0.0
    %4116 = vmatpush1.msra.mxu0 0.0
    %4117 = vmatprep.subr.mxu0 0.0
    %4118 = vmatpush1.msra.mxu0 0.0
    %4119 = vmatprep.subr.mxu0 0.0
    %4120 = vmatpush1.msra.mxu0 0.0
    %4121 = vmatprep.subr.mxu0 0.0
    %4122 = vmatpush1.msra.mxu0 0.0
    %4123 = vmatprep.subr.mxu0 0.0
    %4124 = vmatpush1.msra.mxu0 0.0
    %4125 = vmatprep.subr.mxu0 0.0
    %4126 = vmatpush1.msra.mxu0 0.0
    %4127 = vmatprep.subr.mxu0 0.0
    %4128 = vmatpush1.msra.mxu0 0.0
    %4129 = vmatprep.subr.mxu0 0.0
    %4130 = vmatpush1.msra.mxu0 0.0
    %4131 = vmatprep.subr.mxu0 0.0
    %4132 = vmatpush1.msra.mxu0 0.0
    %4133 = vmatprep.subr.mxu0 0.0
    %4134 = vmatpush1.msra.mxu0 0.0
    %4135 = vmatprep.subr.mxu0 0.0
    %4136 = vmatpush1.msra.mxu0 0.0
    %4137 = vmatprep.subr.mxu0 0.0
    %4138 = vmatpush1.msra.mxu0 0.0
    %4139 = vmatprep.subr.mxu0 0.0
    %4140 = vmatpush1.msra.mxu0 0.0
    %4141 = vmatprep.subr.mxu0 0.0
    %4142 = vmatpush1.msra.mxu0 0.0
    %4143 = vmatprep.subr.mxu0 0.0
    %4144 = vmatpush1.msra.mxu0 0.0
    %4145 = vmatprep.subr.mxu0 0.0
    %4146 = vmatpush1.msra.mxu0 0.0
    %4147 = vmatprep.subr.mxu0 0.0
    %4148 = vmatpush1.msra.mxu0 0.0
    %4149 = vmatprep.subr.mxu0 0.0
    %4150 = vmatpush1.msra.mxu0 0.0
    %4151 = vmatprep.subr.mxu0 0.0
    %4152 = vmatpush1.msra.mxu0 0.0
    %4153 = vmatprep.subr.mxu0 0.0
    %4154 = vmatpush1.msra.mxu0 0.0
    %4155 = vmatprep.mubr.f32.mxu0 0.0
    %4156 = vmatmul.mubr.f32.gmra.mrb[0].mxu0 %v4080
    %v4157 = vpop.f32.mrb[0].mxu0
    %v4158 = vadd.f32 0.0, %v4157
    %v4159 = vpop.f32.mrb[0].mxu0
    %4160 = vmatprep.mubr.f32.mxu0 0.0
    %4161 = vmatmul.mubr.f32.gmra.mrb[0].mxu0 %v4083
    %v4162 = vpop.f32.mrb[0].mxu0
    %v4163 = vadd.f32 0.0, %v4162
    %v4164 = vpop.f32.mrb[0].mxu0
    %4165 = vmatprep.mubr.f32.mxu0 0.0
    %4166 = vmatmul.mubr.f32.gmra.mrb[0].mxu0 %v4086
    %v4167 = vpop.f32.mrb[0].mxu0
    %v4168 = vadd.f32 0.0, %v4167
    %v4169 = vpop.f32.mrb[0].mxu0
    %4170 = vmatprep.mubr.f32.mxu0 0.0
    %4171 = vmatmul.mubr.f32.gmra.mrb[0].mxu0 %v4089
    %v4172 = vpop.f32.mrb[0].mxu0
    %v4173 = vadd.f32 0.0, %v4172
    %v4174 = vpop.f32.mrb[0].mxu0
    %4175 = vdwg.mxu0
    %4180 = vrot.lane.b32.xlu0 %v4158, 120
    %v4181 = vpop.permute.xlu0 %4180
    %4182 = vrot.lane.b32.xlu0 %v4163, 120
    %v4183 = vpop.permute.xlu0 %4182
    %4184 = vrot.lane.b32.xlu0 %v4168, 120
    %v4185 = vpop.permute.xlu0 %4184
    %4186 = vrot.lane.b32.xlu0 %v4173, 120
    %v4187 = vpop.permute.xlu0 %4186
    %4188 = vrot.lane.b32.xlu0 %v4158, 112
    %v4189 = vpop.permute.xlu0 %4188
    %4190 = vrot.lane.b32.xlu0 %v4163, 112
    %v4191 = vpop.permute.xlu0 %4190
    %4192 = vrot.lane.b32.xlu0 %v4168, 112
    %v4193 = vpop.permute.xlu0 %4192
    %4194 = vrot.lane.b32.xlu0 %v4173, 112
    %v4195 = vpop.permute.xlu0 %4194
    %4196 = vrot.lane.b32.xlu0 %v4158, 104
    %v4197 = vpop.permute.xlu0 %4196
    %4198 = vrot.lane.b32.xlu0 %v4163, 104
    %v4199 = vpop.permute.xlu0 %4198
    %4200 = vrot.lane.b32.xlu0 %v4168, 104
    %v4201 = vpop.permute.xlu0 %4200
    %4202 = vrot.lane.b32.xlu0 %v4173, 104
    %v4203 = vpop.permute.xlu0 %4202
    %4204 = vrot.lane.b32.xlu0 %v4158, 96
    %v4205 = vpop.permute.xlu0 %4204
    %4206 = vrot.lane.b32.xlu0 %v4163, 96
    %v4207 = vpop.permute.xlu0 %4206
    %v4208 = vsel %vm284, %v4158, 0
    %v4210 = vsel %vm284, %v4163, 0
    %v4212 = vsel %vm284, %v4205, 0
    %v4214 = vsel %vm284, %v4207, 0
    %4216 = vmatprep.subr.mxu0 0.0
    %4217 = vmatpush1.xpose.msra.mxu0 %v4212
    %4218 = vmatprep.subr.mxu0 0.0
    %4219 = vmatpush1.xpose.msra.mxu0 %v4214
    %4220 = vmatprep.subr.mxu0 0.0
    %4221 = vmatpush1.xpose.msra.mxu0 0.0
    %4222 = vmatprep.subr.mxu0 0.0
    %4223 = vmatpush1.xpose.msra.mxu0 0.0
    %4224 = vmatprep.subr.mxu0 0.0
    %4225 = vmatpush1.xpose.msra.mxu0 0.0
    %4226 = vmatprep.subr.mxu0 0.0
    %4227 = vmatpush1.xpose.msra.mxu0 0.0
    %4228 = vmatprep.subr.mxu0 0.0
    %4229 = vmatpush1.xpose.msra.mxu0 0.0
    %4230 = vmatprep.subr.mxu0 0.0
    %4231 = vmatpush1.xpose.msra.mxu0 0.0
    %4232 = vmatprep.subr.mxu0 0.0
    %4233 = vmatpush1.xpose.msra.mxu0 0.0
    %4234 = vmatprep.subr.mxu0 0.0
    %4235 = vmatpush1.xpose.msra.mxu0 0.0
    %4236 = vmatprep.subr.mxu0 0.0
    %4237 = vmatpush1.xpose.msra.mxu0 0.0
    %4238 = vmatprep.subr.mxu0 0.0
    %4239 = vmatpush1.xpose.msra.mxu0 0.0
    %4240 = vmatprep.subr.mxu0 0.0
    %4241 = vmatpush1.xpose.msra.mxu0 0.0
    %4242 = vmatprep.subr.mxu0 0.0
    %4243 = vmatpush1.xpose.msra.mxu0 0.0
    %4244 = vmatprep.subr.mxu0 0.0
    %4245 = vmatpush1.xpose.msra.mxu0 0.0
    %4246 = vmatprep.subr.mxu0 0.0
    %4247 = vmatpush1.xpose.msra.mxu0 0.0
    %4248 = vmatprep.subr.mxu0 0.0
    %4249 = vmatpush1.xpose.msra.mxu0 0.0
    %4250 = vmatprep.subr.mxu0 0.0
    %4251 = vmatpush1.xpose.msra.mxu0 0.0
    %4252 = vmatprep.subr.mxu0 0.0
    %4253 = vmatpush1.xpose.msra.mxu0 0.0
    %4254 = vmatprep.subr.mxu0 0.0
    %4255 = vmatpush1.xpose.msra.mxu0 0.0
    %4256 = vmatprep.subr.mxu0 0.0
    %4257 = vmatpush1.xpose.msra.mxu0 0.0
    %4258 = vmatprep.subr.mxu0 0.0
    %4259 = vmatpush1.xpose.msra.mxu0 0.0
    %4260 = vmatprep.subr.mxu0 0.0
    %4261 = vmatpush1.xpose.msra.mxu0 0.0
    %4262 = vmatprep.subr.mxu0 0.0
    %4263 = vmatpush1.xpose.msra.mxu0 0.0
    %4264 = vmatprep.subr.mxu0 0.0
    %4265 = vmatpush1.xpose.msra.mxu0 0.0
    %4266 = vmatprep.subr.mxu0 0.0
    %4267 = vmatpush1.xpose.msra.mxu0 0.0
    %4268 = vmatprep.subr.mxu0 0.0
    %4269 = vmatpush1.xpose.msra.mxu0 0.0
    %4270 = vmatprep.subr.mxu0 0.0
    %4271 = vmatpush1.xpose.msra.mxu0 0.0
    %4272 = vmatprep.subr.mxu0 0.0
    %4273 = vmatpush1.xpose.msra.mxu0 0.0
    %4274 = vmatprep.subr.mxu0 0.0
    %4275 = vmatpush1.xpose.msra.mxu0 0.0
    %4276 = vmatprep.subr.mxu0 0.0
    %4277 = vmatpush1.xpose.msra.mxu0 0.0
    %4278 = vmatprep.subr.mxu0 0.0
    %4279 = vmatpush1.xpose.msra.mxu0 0.0
    %4280 = vmatprep.mubr.f32.mxu0 0.0
    %4281 = vmatmul.mubr.f32.gmra.mrb[0].mxu0 %v4208
    %v4282 = vpop.f32.mrb[0].mxu0
    %v4283 = vadd.f32 0.0, %v4282
    %v4284 = vpop.f32.mrb[0].mxu0
    %4285 = vmatprep.mubr.f32.mxu0 0.0
    %4286 = vmatmul.mubr.f32.gmra.mrb[0].mxu0 %v4210
    %v4287 = vpop.f32.mrb[0].mxu0
    %v4288 = vadd.f32 0.0, %v4287
    %v4289 = vpop.f32.mrb[0].mxu0
    %4290 = vdwg.mxu0
    %4291 = vrot.lane.b32.xlu0 %v4168, 96
    %v4292 = vpop.permute.xlu0 %4291
    %4293 = vrot.lane.b32.xlu0 %v4173, 96
    %v4294 = vpop.permute.xlu0 %4293
    %v4295 = vsel %vm284, %v4168, 0
    %v4297 = vsel %vm284, %v4173, 0
    %v4299 = vsel %vm284, %v4292, 0
    %v4301 = vsel %vm284, %v4294, 0
    %4303 = vmatprep.subr.mxu0 0.0
    %4304 = vmatpush1.xpose.msra.mxu0 %v4299
    %4305 = vmatprep.subr.mxu0 0.0
    %4306 = vmatpush1.xpose.msra.mxu0 %v4301
    %4307 = vmatprep.subr.mxu0 0.0
    %4308 = vmatpush1.xpose.msra.mxu0 0.0
    %4309 = vmatprep.subr.mxu0 0.0
    %4310 = vmatpush1.xpose.msra.mxu0 0.0
    %4311 = vmatprep.subr.mxu0 0.0
    %4312 = vmatpush1.xpose.msra.mxu0 0.0
    %4313 = vmatprep.subr.mxu0 0.0
    %4314 = vmatpush1.xpose.msra.mxu0 0.0
    %4315 = vmatprep.subr.mxu0 0.0
    %4316 = vmatpush1.xpose.msra.mxu0 0.0
    %4317 = vmatprep.subr.mxu0 0.0
    %4318 = vmatpush1.xpose.msra.mxu0 0.0
    %4319 = vmatprep.subr.mxu0 0.0
    %4320 = vmatpush1.xpose.msra.mxu0 0.0
    %4321 = vmatprep.subr.mxu0 0.0
    %4322 = vmatpush1.xpose.msra.mxu0 0.0
    %4323 = vmatprep.subr.mxu0 0.0
    %4324 = vmatpush1.xpose.msra.mxu0 0.0
    %4325 = vmatprep.subr.mxu0 0.0
    %4326 = vmatpush1.xpose.msra.mxu0 0.0
    %4327 = vmatprep.subr.mxu0 0.0
    %4328 = vmatpush1.xpose.msra.mxu0 0.0
    %4329 = vmatprep.subr.mxu0 0.0
    %4330 = vmatpush1.xpose.msra.mxu0 0.0
    %4331 = vmatprep.subr.mxu0 0.0
    %4332 = vmatpush1.xpose.msra.mxu0 0.0
    %4333 = vmatprep.subr.mxu0 0.0
    %4334 = vmatpush1.xpose.msra.mxu0 0.0
    %4335 = vmatprep.subr.mxu0 0.0
    %4336 = vmatpush1.xpose.msra.mxu0 0.0
    %4337 = vmatprep.subr.mxu0 0.0
    %4338 = vmatpush1.xpose.msra.mxu0 0.0
    %4339 = vmatprep.subr.mxu0 0.0
    %4340 = vmatpush1.xpose.msra.mxu0 0.0
    %4341 = vmatprep.subr.mxu0 0.0
    %4342 = vmatpush1.xpose.msra.mxu0 0.0
    %4343 = vmatprep.subr.mxu0 0.0
    %4344 = vmatpush1.xpose.msra.mxu0 0.0
    %4345 = vmatprep.subr.mxu0 0.0
    %4346 = vmatpush1.xpose.msra.mxu0 0.0
    %4347 = vmatprep.subr.mxu0 0.0
    %4348 = vmatpush1.xpose.msra.mxu0 0.0
    %4349 = vmatprep.subr.mxu0 0.0
    %4350 = vmatpush1.xpose.msra.mxu0 0.0
    %4351 = vmatprep.subr.mxu0 0.0
    %4352 = vmatpush1.xpose.msra.mxu0 0.0
    %4353 = vmatprep.subr.mxu0 0.0
    %4354 = vmatpush1.xpose.msra.mxu0 0.0
    %4355 = vmatprep.subr.mxu0 0.0
    %4356 = vmatpush1.xpose.msra.mxu0 0.0
    %4357 = vmatprep.subr.mxu0 0.0
    %4358 = vmatpush1.xpose.msra.mxu0 0.0
    %4359 = vmatprep.subr.mxu0 0.0
    %4360 = vmatpush1.xpose.msra.mxu0 0.0
    %4361 = vmatprep.subr.mxu0 0.0
    %4362 = vmatpush1.xpose.msra.mxu0 0.0
    %4363 = vmatprep.subr.mxu0 0.0
    %4364 = vmatpush1.xpose.msra.mxu0 0.0
    %4365 = vmatprep.subr.mxu0 0.0
    %4366 = vmatpush1.xpose.msra.mxu0 0.0
    %4367 = vmatprep.mubr.f32.mxu0 0.0
    %4368 = vmatmul.mubr.f32.gmra.mrb[0].mxu0 %v4295
    %v4369 = vpop.f32.mrb[0].mxu0
    %v4370 = vadd.f32 0.0, %v4369
    %v4371 = vpop.f32.mrb[0].mxu0
    %4372 = vmatprep.mubr.f32.mxu0 0.0
    %4373 = vmatmul.mubr.f32.gmra.mrb[0].mxu0 %v4297
    %v4374 = vpop.f32.mrb[0].mxu0
    %v4375 = vadd.f32 0.0, %v4374
    %v4376 = vpop.f32.mrb[0].mxu0
    %4377 = vdwg.mxu0
    %4378 = vrot.lane.b32.xlu0 %v4181, 96
    %v4379 = vpop.permute.xlu0 %4378
    %4380 = vrot.lane.b32.xlu0 %v4183, 96
    %v4381 = vpop.permute.xlu0 %4380
    %v4382 = vsel %vm284, %v4181, 0
    %v4384 = vsel %vm284, %v4183, 0
    %v4386 = vsel %vm284, %v4379, 0
    %v4388 = vsel %vm284, %v4381, 0
    %4390 = vmatprep.subr.mxu0 0.0
    %4391 = vmatpush1.xpose.msra.mxu0 %v4386
    %4392 = vmatprep.subr.mxu0 0.0
    %4393 = vmatpush1.xpose.msra.mxu0 %v4388
    %4394 = vmatprep.subr.mxu0 0.0
    %4395 = vmatpush1.xpose.msra.mxu0 0.0
    %4396 = vmatprep.subr.mxu0 0.0
    %4397 = vmatpush1.xpose.msra.mxu0 0.0
    %4398 = vmatprep.subr.mxu0 0.0
    %4399 = vmatpush1.xpose.msra.mxu0 0.0
    %4400 = vmatprep.subr.mxu0 0.0
    %4401 = vmatpush1.xpose.msra.mxu0 0.0
    %4402 = vmatprep.subr.mxu0 0.0
    %4403 = vmatpush1.xpose.msra.mxu0 0.0
    %4404 = vmatprep.subr.mxu0 0.0
    %4405 = vmatpush1.xpose.msra.mxu0 0.0
    %4406 = vmatprep.subr.mxu0 0.0
    %4407 = vmatpush1.xpose.msra.mxu0 0.0
    %4408 = vmatprep.subr.mxu0 0.0
    %4409 = vmatpush1.xpose.msra.mxu0 0.0
    %4410 = vmatprep.subr.mxu0 0.0
    %4411 = vmatpush1.xpose.msra.mxu0 0.0
    %4412 = vmatprep.subr.mxu0 0.0
    %4413 = vmatpush1.xpose.msra.mxu0 0.0
    %4414 = vmatprep.subr.mxu0 0.0
    %4415 = vmatpush1.xpose.msra.mxu0 0.0
    %4416 = vmatprep.subr.mxu0 0.0
    %4417 = vmatpush1.xpose.msra.mxu0 0.0
    %4418 = vmatprep.subr.mxu0 0.0
    %4419 = vmatpush1.xpose.msra.mxu0 0.0
    %4420 = vmatprep.subr.mxu0 0.0
    %4421 = vmatpush1.xpose.msra.mxu0 0.0
    %4422 = vmatprep.subr.mxu0 0.0
    %4423 = vmatpush1.xpose.msra.mxu0 0.0
    %4424 = vmatprep.subr.mxu0 0.0
    %4425 = vmatpush1.xpose.msra.mxu0 0.0
    %4426 = vmatprep.subr.mxu0 0.0
    %4427 = vmatpush1.xpose.msra.mxu0 0.0
    %4428 = vmatprep.subr.mxu0 0.0
    %4429 = vmatpush1.xpose.msra.mxu0 0.0
    %4430 = vmatprep.subr.mxu0 0.0
    %4431 = vmatpush1.xpose.msra.mxu0 0.0
    %4432 = vmatprep.subr.mxu0 0.0
    %4433 = vmatpush1.xpose.msra.mxu0 0.0
    %4434 = vmatprep.subr.mxu0 0.0
    %4435 = vmatpush1.xpose.msra.mxu0 0.0
    %4436 = vmatprep.subr.mxu0 0.0
    %4437 = vmatpush1.xpose.msra.mxu0 0.0
    %4438 = vmatprep.subr.mxu0 0.0
    %4439 = vmatpush1.xpose.msra.mxu0 0.0
    %4440 = vmatprep.subr.mxu0 0.0
    %4441 = vmatpush1.xpose.msra.mxu0 0.0
    %4442 = vmatprep.subr.mxu0 0.0
    %4443 = vmatpush1.xpose.msra.mxu0 0.0
    %4444 = vmatprep.subr.mxu0 0.0
    %4445 = vmatpush1.xpose.msra.mxu0 0.0
    %4446 = vmatprep.subr.mxu0 0.0
    %4447 = vmatpush1.xpose.msra.mxu0 0.0
    %4448 = vmatprep.subr.mxu0 0.0
    %4449 = vmatpush1.xpose.msra.mxu0 0.0
    %4450 = vmatprep.subr.mxu0 0.0
    %4451 = vmatpush1.xpose.msra.mxu0 0.0
    %4452 = vmatprep.subr.mxu0 0.0
    %4453 = vmatpush1.xpose.msra.mxu0 0.0
    %4454 = vmatprep.mubr.f32.mxu0 0.0
    %4455 = vmatmul.mubr.f32.gmra.mrb[0].mxu0 %v4382
    %v4456 = vpop.f32.mrb[0].mxu0
    %v4457 = vadd.f32 0.0, %v4456
    %v4458 = vpop.f32.mrb[0].mxu0
    %4459 = vmatprep.mubr.f32.mxu0 0.0
    %4460 = vmatmul.mubr.f32.gmra.mrb[0].mxu0 %v4384
    %v4461 = vpop.f32.mrb[0].mxu0
    %v4462 = vadd.f32 0.0, %v4461
    %v4463 = vpop.f32.mrb[0].mxu0
    %4464 = vdwg.mxu0
    %4465 = vrot.lane.b32.xlu0 %v4185, 96
    %v4466 = vpop.permute.xlu0 %4465
    %4467 = vrot.lane.b32.xlu0 %v4187, 96
    %v4468 = vpop.permute.xlu0 %4467
    %v4469 = vsel %vm284, %v4185, 0
    %v4471 = vsel %vm284, %v4187, 0
    %v4473 = vsel %vm284, %v4466, 0
    %v4475 = vsel %vm284, %v4468, 0
    %4477 = vmatprep.subr.mxu0 0.0
    %4478 = vmatpush1.xpose.msra.mxu0 %v4473
    %4479 = vmatprep.subr.mxu0 0.0
    %4480 = vmatpush1.xpose.msra.mxu0 %v4475
    %4481 = vmatprep.subr.mxu0 0.0
    %4482 = vmatpush1.xpose.msra.mxu0 0.0
    %4483 = vmatprep.subr.mxu0 0.0
    %4484 = vmatpush1.xpose.msra.mxu0 0.0
    %4485 = vmatprep.subr.mxu0 0.0
    %4486 = vmatpush1.xpose.msra.mxu0 0.0
    %4487 = vmatprep.subr.mxu0 0.0
    %4488 = vmatpush1.xpose.msra.mxu0 0.0
    %4489 = vmatprep.subr.mxu0 0.0
    %4490 = vmatpush1.xpose.msra.mxu0 0.0
    %4491 = vmatprep.subr.mxu0 0.0
    %4492 = vmatpush1.xpose.msra.mxu0 0.0
    %4493 = vmatprep.subr.mxu0 0.0
    %4494 = vmatpush1.xpose.msra.mxu0 0.0
    %4495 = vmatprep.subr.mxu0 0.0
    %4496 = vmatpush1.xpose.msra.mxu0 0.0
    %4497 = vmatprep.subr.mxu0 0.0
    %4498 = vmatpush1.xpose.msra.mxu0 0.0
    %4499 = vmatprep.subr.mxu0 0.0
    %4500 = vmatpush1.xpose.msra.mxu0 0.0
    %4501 = vmatprep.subr.mxu0 0.0
    %4502 = vmatpush1.xpose.msra.mxu0 0.0
    %4503 = vmatprep.subr.mxu0 0.0
    %4504 = vmatpush1.xpose.msra.mxu0 0.0
    %4505 = vmatprep.subr.mxu0 0.0
    %4506 = vmatpush1.xpose.msra.mxu0 0.0
    %4507 = vmatprep.subr.mxu0 0.0
    %4508 = vmatpush1.xpose.msra.mxu0 0.0
    %4509 = vmatprep.subr.mxu0 0.0
    %4510 = vmatpush1.xpose.msra.mxu0 0.0
    %4511 = vmatprep.subr.mxu0 0.0
    %4512 = vmatpush1.xpose.msra.mxu0 0.0
    %4513 = vmatprep.subr.mxu0 0.0
    %4514 = vmatpush1.xpose.msra.mxu0 0.0
    %4515 = vmatprep.subr.mxu0 0.0
    %4516 = vmatpush1.xpose.msra.mxu0 0.0
    %4517 = vmatprep.subr.mxu0 0.0
    %4518 = vmatpush1.xpose.msra.mxu0 0.0
    %4519 = vmatprep.subr.mxu0 0.0
    %4520 = vmatpush1.xpose.msra.mxu0 0.0
    %4521 = vmatprep.subr.mxu0 0.0
    %4522 = vmatpush1.xpose.msra.mxu0 0.0
    %4523 = vmatprep.subr.mxu0 0.0
    %4524 = vmatpush1.xpose.msra.mxu0 0.0
    %4525 = vmatprep.subr.mxu0 0.0
    %4526 = vmatpush1.xpose.msra.mxu0 0.0
    %4527 = vmatprep.subr.mxu0 0.0
    %4528 = vmatpush1.xpose.msra.mxu0 0.0
    %4529 = vmatprep.subr.mxu0 0.0
    %4530 = vmatpush1.xpose.msra.mxu0 0.0
    %4531 = vmatprep.subr.mxu0 0.0
    %4532 = vmatpush1.xpose.msra.mxu0 0.0
    %4533 = vmatprep.subr.mxu0 0.0
    %4534 = vmatpush1.xpose.msra.mxu0 0.0
    %4535 = vmatprep.subr.mxu0 0.0
    %4536 = vmatpush1.xpose.msra.mxu0 0.0
    %4537 = vmatprep.subr.mxu0 0.0
    %4538 = vmatpush1.xpose.msra.mxu0 0.0
    %4539 = vmatprep.subr.mxu0 0.0
    %4540 = vmatpush1.xpose.msra.mxu0 0.0
    %4541 = vmatprep.mubr.f32.mxu0 0.0
    %4542 = vmatmul.mubr.f32.gmra.mrb[0].mxu0 %v4469
    %v4543 = vpop.f32.mrb[0].mxu0
    %v4544 = vadd.f32 0.0, %v4543
    %v4545 = vpop.f32.mrb[0].mxu0
    %4546 = vmatprep.mubr.f32.mxu0 0.0
    %4547 = vmatmul.mubr.f32.gmra.mrb[0].mxu0 %v4471
    %v4548 = vpop.f32.mrb[0].mxu0
    %v4549 = vadd.f32 0.0, %v4548
    %v4550 = vpop.f32.mrb[0].mxu0
    %4551 = vdwg.mxu0
    %4552 = vrot.lane.b32.xlu0 %v4189, 96
    %v4553 = vpop.permute.xlu0 %4552
    %4554 = vrot.lane.b32.xlu0 %v4191, 96
    %v4555 = vpop.permute.xlu0 %4554
    %v4556 = vsel %vm284, %v4189, 0
    %v4558 = vsel %vm284, %v4191, 0
    %v4560 = vsel %vm284, %v4553, 0
    %v4562 = vsel %vm284, %v4555, 0
    %4564 = vmatprep.subr.mxu0 0.0
    %4565 = vmatpush1.xpose.msra.mxu0 %v4560
    %4566 = vmatprep.subr.mxu0 0.0
    %4567 = vmatpush1.xpose.msra.mxu0 %v4562
    %4568 = vmatprep.subr.mxu0 0.0
    %4569 = vmatpush1.xpose.msra.mxu0 0.0
    %4570 = vmatprep.subr.mxu0 0.0
    %4571 = vmatpush1.xpose.msra.mxu0 0.0
    %4572 = vmatprep.subr.mxu0 0.0
    %4573 = vmatpush1.xpose.msra.mxu0 0.0
    %4574 = vmatprep.subr.mxu0 0.0
    %4575 = vmatpush1.xpose.msra.mxu0 0.0
    %4576 = vmatprep.subr.mxu0 0.0
    %4577 = vmatpush1.xpose.msra.mxu0 0.0
    %4578 = vmatprep.subr.mxu0 0.0
    %4579 = vmatpush1.xpose.msra.mxu0 0.0
    %4580 = vmatprep.subr.mxu0 0.0
    %4581 = vmatpush1.xpose.msra.mxu0 0.0
    %4582 = vmatprep.subr.mxu0 0.0
    %4583 = vmatpush1.xpose.msra.mxu0 0.0
    %4584 = vmatprep.subr.mxu0 0.0
    %4585 = vmatpush1.xpose.msra.mxu0 0.0
    %4586 = vmatprep.subr.mxu0 0.0
    %4587 = vmatpush1.xpose.msra.mxu0 0.0
    %4588 = vmatprep.subr.mxu0 0.0
    %4589 = vmatpush1.xpose.msra.mxu0 0.0
    %4590 = vmatprep.subr.mxu0 0.0
    %4591 = vmatpush1.xpose.msra.mxu0 0.0
    %4592 = vmatprep.subr.mxu0 0.0
    %4593 = vmatpush1.xpose.msra.mxu0 0.0
    %4594 = vmatprep.subr.mxu0 0.0
    %4595 = vmatpush1.xpose.msra.mxu0 0.0
    %4596 = vmatprep.subr.mxu0 0.0
    %4597 = vmatpush1.xpose.msra.mxu0 0.0
    %4598 = vmatprep.subr.mxu0 0.0
    %4599 = vmatpush1.xpose.msra.mxu0 0.0
    %4600 = vmatprep.subr.mxu0 0.0
    %4601 = vmatpush1.xpose.msra.mxu0 0.0
    %4602 = vmatprep.subr.mxu0 0.0
    %4603 = vmatpush1.xpose.msra.mxu0 0.0
    %4604 = vmatprep.subr.mxu0 0.0
    %4605 = vmatpush1.xpose.msra.mxu0 0.0
    %4606 = vmatprep.subr.mxu0 0.0
    %4607 = vmatpush1.xpose.msra.mxu0 0.0
    %4608 = vmatprep.subr.mxu0 0.0
    %4609 = vmatpush1.xpose.msra.mxu0 0.0
    %4610 = vmatprep.subr.mxu0 0.0
    %4611 = vmatpush1.xpose.msra.mxu0 0.0
    %4612 = vmatprep.subr.mxu0 0.0
    %4613 = vmatpush1.xpose.msra.mxu0 0.0
    %4614 = vmatprep.subr.mxu0 0.0
    %4615 = vmatpush1.xpose.msra.mxu0 0.0
    %4616 = vmatprep.subr.mxu0 0.0
    %4617 = vmatpush1.xpose.msra.mxu0 0.0
    %4618 = vmatprep.subr.mxu0 0.0
    %4619 = vmatpush1.xpose.msra.mxu0 0.0
    %4620 = vmatprep.subr.mxu0 0.0
    %4621 = vmatpush1.xpose.msra.mxu0 0.0
    %4622 = vmatprep.subr.mxu0 0.0
    %4623 = vmatpush1.xpose.msra.mxu0 0.0
    %4624 = vmatprep.subr.mxu0 0.0
    %4625 = vmatpush1.xpose.msra.mxu0 0.0
    %4626 = vmatprep.subr.mxu0 0.0
    %4627 = vmatpush1.xpose.msra.mxu0 0.0
    %4628 = vmatprep.mubr.f32.mxu0 0.0
    %4629 = vmatmul.mubr.f32.gmra.mrb[0].mxu0 %v4556
    %v4630 = vpop.f32.mrb[0].mxu0
    %v4631 = vadd.f32 0.0, %v4630
    %v4632 = vpop.f32.mrb[0].mxu0
    %4633 = vmatprep.mubr.f32.mxu0 0.0
    %4634 = vmatmul.mubr.f32.gmra.mrb[0].mxu0 %v4558
    %v4635 = vpop.f32.mrb[0].mxu0
    %v4636 = vadd.f32 0.0, %v4635
    %v4637 = vpop.f32.mrb[0].mxu0
    %4638 = vdwg.mxu0
    %4639 = vrot.lane.b32.xlu0 %v4193, 96
    %v4640 = vpop.permute.xlu0 %4639
    %4641 = vrot.lane.b32.xlu0 %v4195, 96
    %v4642 = vpop.permute.xlu0 %4641
    %v4643 = vsel %vm284, %v4193, 0
    %v4645 = vsel %vm284, %v4195, 0
    %v4647 = vsel %vm284, %v4640, 0
    %v4649 = vsel %vm284, %v4642, 0
    %4651 = vmatprep.subr.mxu0 0.0
    %4652 = vmatpush1.xpose.msra.mxu0 %v4647
    %4653 = vmatprep.subr.mxu0 0.0
    %4654 = vmatpush1.xpose.msra.mxu0 %v4649
    %4655 = vmatprep.subr.mxu0 0.0
    %4656 = vmatpush1.xpose.msra.mxu0 0.0
    %4657 = vmatprep.subr.mxu0 0.0
    %4658 = vmatpush1.xpose.msra.mxu0 0.0
    %4659 = vmatprep.subr.mxu0 0.0
    %4660 = vmatpush1.xpose.msra.mxu0 0.0
    %4661 = vmatprep.subr.mxu0 0.0
    %4662 = vmatpush1.xpose.msra.mxu0 0.0
    %4663 = vmatprep.subr.mxu0 0.0
    %4664 = vmatpush1.xpose.msra.mxu0 0.0
    %4665 = vmatprep.subr.mxu0 0.0
    %4666 = vmatpush1.xpose.msra.mxu0 0.0
    %4667 = vmatprep.subr.mxu0 0.0
    %4668 = vmatpush1.xpose.msra.mxu0 0.0
    %4669 = vmatprep.subr.mxu0 0.0
    %4670 = vmatpush1.xpose.msra.mxu0 0.0
    %4671 = vmatprep.subr.mxu0 0.0
    %4672 = vmatpush1.xpose.msra.mxu0 0.0
    %4673 = vmatprep.subr.mxu0 0.0
    %4674 = vmatpush1.xpose.msra.mxu0 0.0
    %4675 = vmatprep.subr.mxu0 0.0
    %4676 = vmatpush1.xpose.msra.mxu0 0.0
    %4677 = vmatprep.subr.mxu0 0.0
    %4678 = vmatpush1.xpose.msra.mxu0 0.0
    %4679 = vmatprep.subr.mxu0 0.0
    %4680 = vmatpush1.xpose.msra.mxu0 0.0
    %4681 = vmatprep.subr.mxu0 0.0
    %4682 = vmatpush1.xpose.msra.mxu0 0.0
    %4683 = vmatprep.subr.mxu0 0.0
    %4684 = vmatpush1.xpose.msra.mxu0 0.0
    %4685 = vmatprep.subr.mxu0 0.0
    %4686 = vmatpush1.xpose.msra.mxu0 0.0
    %4687 = vmatprep.subr.mxu0 0.0
    %4688 = vmatpush1.xpose.msra.mxu0 0.0
    %4689 = vmatprep.subr.mxu0 0.0
    %4690 = vmatpush1.xpose.msra.mxu0 0.0
    %4691 = vmatprep.subr.mxu0 0.0
    %4692 = vmatpush1.xpose.msra.mxu0 0.0
    %4693 = vmatprep.subr.mxu0 0.0
    %4694 = vmatpush1.xpose.msra.mxu0 0.0
    %4695 = vmatprep.subr.mxu0 0.0
    %4696 = vmatpush1.xpose.msra.mxu0 0.0
    %4697 = vmatprep.subr.mxu0 0.0
    %4698 = vmatpush1.xpose.msra.mxu0 0.0
    %4699 = vmatprep.subr.mxu0 0.0
    %4700 = vmatpush1.xpose.msra.mxu0 0.0
    %4701 = vmatprep.subr.mxu0 0.0
    %4702 = vmatpush1.xpose.msra.mxu0 0.0
    %4703 = vmatprep.subr.mxu0 0.0
    %4704 = vmatpush1.xpose.msra.mxu0 0.0
    %4705 = vmatprep.subr.mxu0 0.0
    %4706 = vmatpush1.xpose.msra.mxu0 0.0
    %4707 = vmatprep.subr.mxu0 0.0
    %4708 = vmatpush1.xpose.msra.mxu0 0.0
    %4709 = vmatprep.subr.mxu0 0.0
    %4710 = vmatpush1.xpose.msra.mxu0 0.0
    %4711 = vmatprep.subr.mxu0 0.0
    %4712 = vmatpush1.xpose.msra.mxu0 0.0
    %4713 = vmatprep.subr.mxu0 0.0
    %4714 = vmatpush1.xpose.msra.mxu0 0.0
    %4715 = vmatprep.mubr.f32.mxu0 0.0
    %4716 = vmatmul.mubr.f32.gmra.mrb[0].mxu0 %v4643
    %v4717 = vpop.f32.mrb[0].mxu0
    %v4718 = vadd.f32 0.0, %v4717
    %v4719 = vpop.f32.mrb[0].mxu0
    %4720 = vmatprep.mubr.f32.mxu0 0.0
    %4721 = vmatmul.mubr.f32.gmra.mrb[0].mxu0 %v4645
    %v4722 = vpop.f32.mrb[0].mxu0
    %v4723 = vadd.f32 0.0, %v4722
    %v4724 = vpop.f32.mrb[0].mxu0
    %4725 = vdwg.mxu0
    %4726 = vrot.lane.b32.xlu0 %v4197, 96
    %v4727 = vpop.permute.xlu0 %4726
    %4728 = vrot.lane.b32.xlu0 %v4199, 96
    %v4729 = vpop.permute.xlu0 %4728
    %v4730 = vsel %vm284, %v4197, 0
    %v4732 = vsel %vm284, %v4199, 0
    %v4734 = vsel %vm284, %v4727, 0
    %v4736 = vsel %vm284, %v4729, 0
    %4738 = vmatprep.subr.mxu0 0.0
    %4739 = vmatpush1.xpose.msra.mxu0 %v4734
    %4740 = vmatprep.subr.mxu0 0.0
    %4741 = vmatpush1.xpose.msra.mxu0 %v4736
    %4742 = vmatprep.subr.mxu0 0.0
    %4743 = vmatpush1.xpose.msra.mxu0 0.0
    %4744 = vmatprep.subr.mxu0 0.0
    %4745 = vmatpush1.xpose.msra.mxu0 0.0
    %4746 = vmatprep.subr.mxu0 0.0
    %4747 = vmatpush1.xpose.msra.mxu0 0.0
    %4748 = vmatprep.subr.mxu0 0.0
    %4749 = vmatpush1.xpose.msra.mxu0 0.0
    %4750 = vmatprep.subr.mxu0 0.0
    %4751 = vmatpush1.xpose.msra.mxu0 0.0
    %4752 = vmatprep.subr.mxu0 0.0
    %4753 = vmatpush1.xpose.msra.mxu0 0.0
    %4754 = vmatprep.subr.mxu0 0.0
    %4755 = vmatpush1.xpose.msra.mxu0 0.0
    %4756 = vmatprep.subr.mxu0 0.0
    %4757 = vmatpush1.xpose.msra.mxu0 0.0
    %4758 = vmatprep.subr.mxu0 0.0
    %4759 = vmatpush1.xpose.msra.mxu0 0.0
    %4760 = vmatprep.subr.mxu0 0.0
    %4761 = vmatpush1.xpose.msra.mxu0 0.0
    %4762 = vmatprep.subr.mxu0 0.0
    %4763 = vmatpush1.xpose.msra.mxu0 0.0
    %4764 = vmatprep.subr.mxu0 0.0
    %4765 = vmatpush1.xpose.msra.mxu0 0.0
    %4766 = vmatprep.subr.mxu0 0.0
    %4767 = vmatpush1.xpose.msra.mxu0 0.0
    %4768 = vmatprep.subr.mxu0 0.0
    %4769 = vmatpush1.xpose.msra.mxu0 0.0
    %4770 = vmatprep.subr.mxu0 0.0
    %4771 = vmatpush1.xpose.msra.mxu0 0.0
    %4772 = vmatprep.subr.mxu0 0.0
    %4773 = vmatpush1.xpose.msra.mxu0 0.0
    %4774 = vmatprep.subr.mxu0 0.0
    %4775 = vmatpush1.xpose.msra.mxu0 0.0
    %4776 = vmatprep.subr.mxu0 0.0
    %4777 = vmatpush1.xpose.msra.mxu0 0.0
    %4778 = vmatprep.subr.mxu0 0.0
    %4779 = vmatpush1.xpose.msra.mxu0 0.0
    %4780 = vmatprep.subr.mxu0 0.0
    %4781 = vmatpush1.xpose.msra.mxu0 0.0
    %4782 = vmatprep.subr.mxu0 0.0
    %4783 = vmatpush1.xpose.msra.mxu0 0.0
    %4784 = vmatprep.subr.mxu0 0.0
    %4785 = vmatpush1.xpose.msra.mxu0 0.0
    %4786 = vmatprep.subr.mxu0 0.0
    %4787 = vmatpush1.xpose.msra.mxu0 0.0
    %4788 = vmatprep.subr.mxu0 0.0
    %4789 = vmatpush1.xpose.msra.mxu0 0.0
    %4790 = vmatprep.subr.mxu0 0.0
    %4791 = vmatpush1.xpose.msra.mxu0 0.0
    %4792 = vmatprep.subr.mxu0 0.0
    %4793 = vmatpush1.xpose.msra.mxu0 0.0
    %4794 = vmatprep.subr.mxu0 0.0
    %4795 = vmatpush1.xpose.msra.mxu0 0.0
    %4796 = vmatprep.subr.mxu0 0.0
    %4797 = vmatpush1.xpose.msra.mxu0 0.0
    %4798 = vmatprep.subr.mxu0 0.0
    %4799 = vmatpush1.xpose.msra.mxu0 0.0
    %4800 = vmatprep.subr.mxu0 0.0
    %4801 = vmatpush1.xpose.msra.mxu0 0.0
    %4802 = vmatprep.mubr.f32.mxu0 0.0
    %4803 = vmatmul.mubr.f32.gmra.mrb[0].mxu0 %v4730
    %v4804 = vpop.f32.mrb[0].mxu0
    %v4805 = vadd.f32 0.0, %v4804
    %v4806 = vpop.f32.mrb[0].mxu0
    %4807 = vmatprep.mubr.f32.mxu0 0.0
    %4808 = vmatmul.mubr.f32.gmra.mrb[0].mxu0 %v4732
    %v4809 = vpop.f32.mrb[0].mxu0
    %v4810 = vadd.f32 0.0, %v4809
    %v4811 = vpop.f32.mrb[0].mxu0
    %4812 = vdwg.mxu0
    %4813 = vrot.lane.b32.xlu0 %v4201, 96
    %v4814 = vpop.permute.xlu0 %4813
    %4815 = vrot.lane.b32.xlu0 %v4203, 96
    %v4816 = vpop.permute.xlu0 %4815
    %v4817 = vsel %vm284, %v4201, 0
    %v4819 = vsel %vm284, %v4203, 0
    %v4821 = vsel %vm284, %v4814, 0
    %v4823 = vsel %vm284, %v4816, 0
    %4825 = vmatprep.subr.mxu0 0.0
    %4826 = vmatpush1.xpose.msra.mxu0 %v4821
    %4827 = vmatprep.subr.mxu0 0.0
    %4828 = vmatpush1.xpose.msra.mxu0 %v4823
    %4829 = vmatprep.subr.mxu0 0.0
    %4830 = vmatpush1.xpose.msra.mxu0 0.0
    %4831 = vmatprep.subr.mxu0 0.0
    %4832 = vmatpush1.xpose.msra.mxu0 0.0
    %4833 = vmatprep.subr.mxu0 0.0
    %4834 = vmatpush1.xpose.msra.mxu0 0.0
    %4835 = vmatprep.subr.mxu0 0.0
    %4836 = vmatpush1.xpose.msra.mxu0 0.0
    %4837 = vmatprep.subr.mxu0 0.0
    %4838 = vmatpush1.xpose.msra.mxu0 0.0
    %4839 = vmatprep.subr.mxu0 0.0
    %4840 = vmatpush1.xpose.msra.mxu0 0.0
    %4841 = vmatprep.subr.mxu0 0.0
    %4842 = vmatpush1.xpose.msra.mxu0 0.0
    %4843 = vmatprep.subr.mxu0 0.0
    %4844 = vmatpush1.xpose.msra.mxu0 0.0
    %4845 = vmatprep.subr.mxu0 0.0
    %4846 = vmatpush1.xpose.msra.mxu0 0.0
    %4847 = vmatprep.subr.mxu0 0.0
    %4848 = vmatpush1.xpose.msra.mxu0 0.0
    %4849 = vmatprep.subr.mxu0 0.0
    %4850 = vmatpush1.xpose.msra.mxu0 0.0
    %4851 = vmatprep.subr.mxu0 0.0
    %4852 = vmatpush1.xpose.msra.mxu0 0.0
    %4853 = vmatprep.subr.mxu0 0.0
    %4854 = vmatpush1.xpose.msra.mxu0 0.0
    %4855 = vmatprep.subr.mxu0 0.0
    %4856 = vmatpush1.xpose.msra.mxu0 0.0
    %4857 = vmatprep.subr.mxu0 0.0
    %4858 = vmatpush1.xpose.msra.mxu0 0.0
    %4859 = vmatprep.subr.mxu0 0.0
    %4860 = vmatpush1.xpose.msra.mxu0 0.0
    %4861 = vmatprep.subr.mxu0 0.0
    %4862 = vmatpush1.xpose.msra.mxu0 0.0
    %4863 = vmatprep.subr.mxu0 0.0
    %4864 = vmatpush1.xpose.msra.mxu0 0.0
    %4865 = vmatprep.subr.mxu0 0.0
    %4866 = vmatpush1.xpose.msra.mxu0 0.0
    %4867 = vmatprep.subr.mxu0 0.0
    %4868 = vmatpush1.xpose.msra.mxu0 0.0
    %4869 = vmatprep.subr.mxu0 0.0
    %4870 = vmatpush1.xpose.msra.mxu0 0.0
    %4871 = vmatprep.subr.mxu0 0.0
    %4872 = vmatpush1.xpose.msra.mxu0 0.0
    %4873 = vmatprep.subr.mxu0 0.0
    %4874 = vmatpush1.xpose.msra.mxu0 0.0
    %4875 = vmatprep.subr.mxu0 0.0
    %4876 = vmatpush1.xpose.msra.mxu0 0.0
    %4877 = vmatprep.subr.mxu0 0.0
    %4878 = vmatpush1.xpose.msra.mxu0 0.0
    %4879 = vmatprep.subr.mxu0 0.0
    %4880 = vmatpush1.xpose.msra.mxu0 0.0
    %4881 = vmatprep.subr.mxu0 0.0
    %4882 = vmatpush1.xpose.msra.mxu0 0.0
    %4883 = vmatprep.subr.mxu0 0.0
    %4884 = vmatpush1.xpose.msra.mxu0 0.0
    %4885 = vmatprep.subr.mxu0 0.0
    %4886 = vmatpush1.xpose.msra.mxu0 0.0
    %4887 = vmatprep.subr.mxu0 0.0
    %4888 = vmatpush1.xpose.msra.mxu0 0.0
    %4889 = vmatprep.mubr.f32.mxu0 0.0
    %4890 = vmatmul.mubr.f32.gmra.mrb[0].mxu0 %v4817
    %v4891 = vpop.f32.mrb[0].mxu0
    %v4892 = vadd.f32 0.0, %v4891
    %v4893 = vpop.f32.mrb[0].mxu0
    %4894 = vmatprep.mubr.f32.mxu0 0.0
    %4895 = vmatmul.mubr.f32.gmra.mrb[0].mxu0 %v4819
    %v4896 = vpop.f32.mrb[0].mxu0
    %v4897 = vadd.f32 0.0, %v4896
    %v4898 = vpop.f32.mrb[0].mxu0
    %4899 = vdwg.mxu0
    %v4901 = vsel %vm983, %v4283, 0
    %v4904 = vsel %vm983, %v4288, 0
    %v4907 = vsel %vm983, %v4370, 0
    %v4910 = vsel %vm983, %v4375, 0
    %v4913 = vsel %vm983, %v4457, 0
    %v4916 = vsel %vm983, %v4462, 0
    %v4919 = vsel %vm983, %v4544, 0
    %v4922 = vsel %vm983, %v4549, 0
    %v4925 = vsel %vm983, %v4631, 0
    %v4928 = vsel %vm983, %v4636, 0
    %v4931 = vsel %vm983, %v4718, 0
    %v4934 = vsel %vm983, %v4723, 0
    %v4937 = vsel %vm983, %v4805, 0
    %v4940 = vsel %vm983, %v4810, 0
    %v4943 = vsel %vm983, %v4892, 0
    %v4946 = vsel %vm983, %v4897, 0
    %4948 = vmatprep.subr.mxu0 0.0
    %4949 = vmatpush1.msra.mxu0 %v58
    %4950 = vmatprep.subr.mxu0 0.0
    %4951 = vmatpush1.msra.mxu0 %v59
    %4952 = vmatprep.subr.mxu0 0.0
    %4953 = vmatpush1.msra.mxu0 0.0
    %4954 = vmatprep.subr.mxu0 0.0
    %4955 = vmatpush1.msra.mxu0 0.0
    %4956 = vmatprep.subr.mxu0 0.0
    %4957 = vmatpush1.msra.mxu0 0.0
    %4958 = vmatprep.subr.mxu0 0.0
    %4959 = vmatpush1.msra.mxu0 0.0
    %4960 = vmatprep.subr.mxu0 0.0
    %4961 = vmatpush1.msra.mxu0 0.0
    %4962 = vmatprep.subr.mxu0 0.0
    %4963 = vmatpush1.msra.mxu0 0.0
    %4964 = vmatprep.subr.mxu0 0.0
    %4965 = vmatpush1.msra.mxu0 0.0
    %4966 = vmatprep.subr.mxu0 0.0
    %4967 = vmatpush1.msra.mxu0 0.0
    %4968 = vmatprep.subr.mxu0 0.0
    %4969 = vmatpush1.msra.mxu0 0.0
    %4970 = vmatprep.subr.mxu0 0.0
    %4971 = vmatpush1.msra.mxu0 0.0
    %4972 = vmatprep.subr.mxu0 0.0
    %4973 = vmatpush1.msra.mxu0 0.0
    %4974 = vmatprep.subr.mxu0 0.0
    %4975 = vmatpush1.msra.mxu0 0.0
    %4976 = vmatprep.subr.mxu0 0.0
    %4977 = vmatpush1.msra.mxu0 0.0
    %4978 = vmatprep.subr.mxu0 0.0
    %4979 = vmatpush1.msra.mxu0 0.0
    %4980 = vmatprep.subr.mxu0 0.0
    %4981 = vmatpush1.msra.mxu0 0.0
    %4982 = vmatprep.subr.mxu0 0.0
    %4983 = vmatpush1.msra.mxu0 0.0
    %4984 = vmatprep.subr.mxu0 0.0
    %4985 = vmatpush1.msra.mxu0 0.0
    %4986 = vmatprep.subr.mxu0 0.0
    %4987 = vmatpush1.msra.mxu0 0.0
    %4988 = vmatprep.subr.mxu0 0.0
    %4989 = vmatpush1.msra.mxu0 0.0
    %4990 = vmatprep.subr.mxu0 0.0
    %4991 = vmatpush1.msra.mxu0 0.0
    %4992 = vmatprep.subr.mxu0 0.0
    %4993 = vmatpush1.msra.mxu0 0.0
    %4994 = vmatprep.subr.mxu0 0.0
    %4995 = vmatpush1.msra.mxu0 0.0
    %4996 = vmatprep.subr.mxu0 0.0
    %4997 = vmatpush1.msra.mxu0 0.0
    %4998 = vmatprep.subr.mxu0 0.0
    %4999 = vmatpush1.msra.mxu0 0.0
    %5000 = vmatprep.subr.mxu0 0.0
    %5001 = vmatpush1.msra.mxu0 0.0
    %5002 = vmatprep.subr.mxu0 0.0
    %5003 = vmatpush1.msra.mxu0 0.0
    %5004 = vmatprep.subr.mxu0 0.0
    %5005 = vmatpush1.msra.mxu0 0.0
    %5006 = vmatprep.subr.mxu0 0.0
    %5007 = vmatpush1.msra.mxu0 0.0
    %5008 = vmatprep.subr.mxu0 0.0
    %5009 = vmatpush1.msra.mxu0 0.0
    %5010 = vmatprep.subr.mxu0 0.0
    %5011 = vmatpush1.msra.mxu0 0.0
    %5012 = vmatprep.mubr.f32.mxu0 0.0
    %5013 = vmatmul.mubr.f32.gmra.mrb[0].mxu0 %v4901
    %v5014 = vpop.f32.mrb[0].mxu0
    %v5015 = vadd.f32 %v981, %v5014
    %v5016 = vpop.f32.mrb[0].mxu0
    %5017 = vmatprep.mubr.f32.mxu0 0.0
    %5018 = vmatmul.mubr.f32.gmra.mrb[0].mxu0 %v4904
    %v5019 = vpop.f32.mrb[0].mxu0
    %v5020 = vadd.f32 %v981, %v5019
    %v5021 = vpop.f32.mrb[0].mxu0
    %5022 = vmatprep.mubr.f32.mxu0 0.0
    %5023 = vmatmul.mubr.f32.gmra.mrb[0].mxu0 %v4907
    %v5024 = vpop.f32.mrb[0].mxu0
    %v5025 = vadd.f32 %v981, %v5024
    %v5026 = vpop.f32.mrb[0].mxu0
    %5027 = vmatprep.mubr.f32.mxu0 0.0
    %5028 = vmatmul.mubr.f32.gmra.mrb[0].mxu0 %v4910
    %v5029 = vpop.f32.mrb[0].mxu0
    %v5030 = vadd.f32 %v981, %v5029
    %v5031 = vpop.f32.mrb[0].mxu0
    %5032 = vmatprep.mubr.f32.mxu0 0.0
    %5033 = vmatmul.mubr.f32.gmra.mrb[0].mxu0 %v4913
    %v5034 = vpop.f32.mrb[0].mxu0
    %v5035 = vadd.f32 %v981, %v5034
    %v5036 = vpop.f32.mrb[0].mxu0
    %5037 = vmatprep.mubr.f32.mxu0 0.0
    %5038 = vmatmul.mubr.f32.gmra.mrb[0].mxu0 %v4916
    %v5039 = vpop.f32.mrb[0].mxu0
    %v5040 = vadd.f32 %v981, %v5039
    %v5041 = vpop.f32.mrb[0].mxu0
    %5042 = vmatprep.mubr.f32.mxu0 0.0
    %5043 = vmatmul.mubr.f32.gmra.mrb[0].mxu0 %v4919
    %v5044 = vpop.f32.mrb[0].mxu0
    %v5045 = vadd.f32 %v981, %v5044
    %v5046 = vpop.f32.mrb[0].mxu0
    %5047 = vmatprep.mubr.f32.mxu0 0.0
    %5048 = vmatmul.mubr.f32.gmra.mrb[0].mxu0 %v4922
    %v5049 = vpop.f32.mrb[0].mxu0
    %v5050 = vadd.f32 %v981, %v5049
    %v5051 = vpop.f32.mrb[0].mxu0
    %5052 = vmatprep.mubr.f32.mxu0 0.0
    %5053 = vmatmul.mubr.f32.gmra.mrb[0].mxu0 %v4925
    %v5054 = vpop.f32.mrb[0].mxu0
    %v5055 = vadd.f32 %v981, %v5054
    %v5056 = vpop.f32.mrb[0].mxu0
    %5057 = vmatprep.mubr.f32.mxu0 0.0
    %5058 = vmatmul.mubr.f32.gmra.mrb[0].mxu0 %v4928
    %v5059 = vpop.f32.mrb[0].mxu0
    %v5060 = vadd.f32 %v981, %v5059
    %v5061 = vpop.f32.mrb[0].mxu0
    %5062 = vmatprep.mubr.f32.mxu0 0.0
    %5063 = vmatmul.mubr.f32.gmra.mrb[0].mxu0 %v4931
    %v5064 = vpop.f32.mrb[0].mxu0
    %v5065 = vadd.f32 %v981, %v5064
    %v5066 = vpop.f32.mrb[0].mxu0
    %5067 = vmatprep.mubr.f32.mxu0 0.0
    %5068 = vmatmul.mubr.f32.gmra.mrb[0].mxu0 %v4934
    %v5069 = vpop.f32.mrb[0].mxu0
    %v5070 = vadd.f32 %v981, %v5069
    %v5071 = vpop.f32.mrb[0].mxu0
    %5072 = vmatprep.mubr.f32.mxu0 0.0
    %5073 = vmatmul.mubr.f32.gmra.mrb[0].mxu0 %v4937
    %v5074 = vpop.f32.mrb[0].mxu0
    %v5075 = vadd.f32 %v981, %v5074
    %v5076 = vpop.f32.mrb[0].mxu0
    %5077 = vmatprep.mubr.f32.mxu0 0.0
    %5078 = vmatmul.mubr.f32.gmra.mrb[0].mxu0 %v4940
    %v5079 = vpop.f32.mrb[0].mxu0
    %v5080 = vadd.f32 %v981, %v5079
    %v5081 = vpop.f32.mrb[0].mxu0
    %5082 = vmatprep.mubr.f32.mxu0 0.0
    %5083 = vmatmul.mubr.f32.gmra.mrb[0].mxu0 %v4943
    %v5084 = vpop.f32.mrb[0].mxu0
    %v5085 = vadd.f32 %v981, %v5084
    %v5086 = vpop.f32.mrb[0].mxu0
    %5087 = vmatprep.mubr.f32.mxu0 0.0
    %5088 = vmatmul.mubr.f32.gmra.mrb[0].mxu0 %v4946
    %v5089 = vpop.f32.mrb[0].mxu0
    %v5090 = vadd.f32 %v981, %v5089
    %v5091 = vpop.f32.mrb[0].mxu0
    %5092 = vdwg.mxu0
    %v5093 = vsel %vm284, %v5015, 0.0
    %5094 = vadd.xlane.f32.xlu0 %v5093
    %v5095 = vpop.xlane.xlu0 %5094
    %v5096 = vsel %vm284, %v5020, 0.0
    %5097 = vadd.xlane.f32.xlu0 %v5096
    %v5098 = vpop.xlane.xlu0 %5097
    %v5099 = vsel %vm284, %v5025, 0.0
    %5100 = vadd.xlane.f32.xlu0 %v5099
    %v5101 = vpop.xlane.xlu0 %5100
    %v5102 = vsel %vm284, %v5030, 0.0
    %5103 = vadd.xlane.f32.xlu0 %v5102
    %v5104 = vpop.xlane.xlu0 %5103
    %v5105 = vsel %vm284, %v5035, 0.0
    %5106 = vadd.xlane.f32.xlu0 %v5105
    %v5107 = vpop.xlane.xlu0 %5106
    %v5108 = vsel %vm284, %v5040, 0.0
    %5109 = vadd.xlane.f32.xlu0 %v5108
    %v5110 = vpop.xlane.xlu0 %5109
    %v5111 = vsel %vm284, %v5045, 0.0
    %5112 = vadd.xlane.f32.xlu0 %v5111
    %v5113 = vpop.xlane.xlu0 %5112
    %v5114 = vsel %vm284, %v5050, 0.0
    %5115 = vadd.xlane.f32.xlu0 %v5114
    %v5116 = vpop.xlane.xlu0 %5115
    %v5117 = vsel %vm284, %v5055, 0.0
    %5118 = vadd.xlane.f32.xlu0 %v5117
    %v5119 = vpop.xlane.xlu0 %5118
    %v5120 = vsel %vm284, %v5060, 0.0
    %5121 = vadd.xlane.f32.xlu0 %v5120
    %v5122 = vpop.xlane.xlu0 %5121
    %v5123 = vsel %vm284, %v5065, 0.0
    %5124 = vadd.xlane.f32.xlu0 %v5123
    %v5125 = vpop.xlane.xlu0 %5124
    %v5126 = vsel %vm284, %v5070, 0.0
    %5127 = vadd.xlane.f32.xlu0 %v5126
    %v5128 = vpop.xlane.xlu0 %5127
    %v5129 = vsel %vm284, %v5075, 0.0
    %5130 = vadd.xlane.f32.xlu0 %v5129
    %v5131 = vpop.xlane.xlu0 %5130
    %v5132 = vsel %vm284, %v5080, 0.0
    %5133 = vadd.xlane.f32.xlu0 %v5132
    %v5134 = vpop.xlane.xlu0 %5133
    %v5135 = vsel %vm284, %v5085, 0.0
    %5136 = vadd.xlane.f32.xlu0 %v5135
    %v5137 = vpop.xlane.xlu0 %5136
    %v5138 = vsel %vm284, %v5090, 0.0
    %5139 = vadd.xlane.f32.xlu0 %v5138
    %v5140 = vpop.xlane.xlu0 %5139
    %v5141 = vmul.f32 %v5095, %v1225
    %v5142 = vmul.f32 %v5098, %v1225
    %v5143 = vmul.f32 %v5101, %v1225
    %v5144 = vmul.f32 %v5104, %v1225
    %v5145 = vmul.f32 %v5107, %v1225
    %v5146 = vmul.f32 %v5110, %v1225
    %v5147 = vmul.f32 %v5113, %v1225
    %v5148 = vmul.f32 %v5116, %v1225
    %v5149 = vmul.f32 %v5119, %v1225
    %v5150 = vmul.f32 %v5122, %v1225
    %v5151 = vmul.f32 %v5125, %v1225
    %v5152 = vmul.f32 %v5128, %v1225
    %v5153 = vmul.f32 %v5131, %v1225
    %v5154 = vmul.f32 %v5134, %v1225
    %v5155 = vmul.f32 %v5137, %v1225
    %v5156 = vmul.f32 %v5140, %v1225
    %v5157 = vsub.f32 %v5015, %v5141
    %v5158 = vsub.f32 %v5020, %v5142
    %v5159 = vsub.f32 %v5025, %v5143
    %v5160 = vsub.f32 %v5030, %v5144
    %v5161 = vsub.f32 %v5035, %v5145
    %v5162 = vsub.f32 %v5040, %v5146
    %v5163 = vsub.f32 %v5045, %v5147
    %v5164 = vsub.f32 %v5050, %v5148
    %v5165 = vsub.f32 %v5055, %v5149
    %v5166 = vsub.f32 %v5060, %v5150
    %v5167 = vsub.f32 %v5065, %v5151
    %v5168 = vsub.f32 %v5070, %v5152
    %v5169 = vsub.f32 %v5075, %v5153
    %v5170 = vsub.f32 %v5080, %v5154
    %v5171 = vsub.f32 %v5085, %v5155
    %v5172 = vsub.f32 %v5090, %v5156
    %v5173 = vmul.f32 %v5157, %v5157
    %v5174 = vmul.f32 %v5158, %v5158
    %v5175 = vmul.f32 %v5159, %v5159
    %v5176 = vmul.f32 %v5160, %v5160
    %v5177 = vmul.f32 %v5161, %v5161
    %v5178 = vmul.f32 %v5162, %v5162
    %v5179 = vmul.f32 %v5163, %v5163
    %v5180 = vmul.f32 %v5164, %v5164
    %v5181 = vmul.f32 %v5165, %v5165
    %v5182 = vmul.f32 %v5166, %v5166
    %v5183 = vmul.f32 %v5167, %v5167
    %v5184 = vmul.f32 %v5168, %v5168
    %v5185 = vmul.f32 %v5169, %v5169
    %v5186 = vmul.f32 %v5170, %v5170
    %v5187 = vmul.f32 %v5171, %v5171
    %v5188 = vmul.f32 %v5172, %v5172
    %v5189 = vsel %vm284, %v5173, 0.0
    %5190 = vadd.xlane.f32.xlu0 %v5189
    %v5191 = vpop.xlane.xlu0 %5190
    %v5192 = vsel %vm284, %v5174, 0.0
    %5193 = vadd.xlane.f32.xlu0 %v5192
    %v5194 = vpop.xlane.xlu0 %5193
    %v5195 = vsel %vm284, %v5175, 0.0
    %5196 = vadd.xlane.f32.xlu0 %v5195
    %v5197 = vpop.xlane.xlu0 %5196
    %v5198 = vsel %vm284, %v5176, 0.0
    %5199 = vadd.xlane.f32.xlu0 %v5198
    %v5200 = vpop.xlane.xlu0 %5199
    %v5201 = vsel %vm284, %v5177, 0.0
    %5202 = vadd.xlane.f32.xlu0 %v5201
    %v5203 = vpop.xlane.xlu0 %5202
    %v5204 = vsel %vm284, %v5178, 0.0
    %5205 = vadd.xlane.f32.xlu0 %v5204
    %v5206 = vpop.xlane.xlu0 %5205
    %v5207 = vsel %vm284, %v5179, 0.0
    %5208 = vadd.xlane.f32.xlu0 %v5207
    %v5209 = vpop.xlane.xlu0 %5208
    %v5210 = vsel %vm284, %v5180, 0.0
    %5211 = vadd.xlane.f32.xlu0 %v5210
    %v5212 = vpop.xlane.xlu0 %5211
    %v5213 = vsel %vm284, %v5181, 0.0
    %5214 = vadd.xlane.f32.xlu0 %v5213
    %v5215 = vpop.xlane.xlu0 %5214
    %v5216 = vsel %vm284, %v5182, 0.0
    %5217 = vadd.xlane.f32.xlu0 %v5216
    %v5218 = vpop.xlane.xlu0 %5217
    %v5219 = vsel %vm284, %v5183, 0.0
    %5220 = vadd.xlane.f32.xlu0 %v5219
    %v5221 = vpop.xlane.xlu0 %5220
    %v5222 = vsel %vm284, %v5184, 0.0
    %5223 = vadd.xlane.f32.xlu0 %v5222
    %v5224 = vpop.xlane.xlu0 %5223
    %v5225 = vsel %vm284, %v5185, 0.0
    %5226 = vadd.xlane.f32.xlu0 %v5225
    %v5227 = vpop.xlane.xlu0 %5226
    %v5228 = vsel %vm284, %v5186, 0.0
    %5229 = vadd.xlane.f32.xlu0 %v5228
    %v5230 = vpop.xlane.xlu0 %5229
    %v5231 = vsel %vm284, %v5187, 0.0
    %5232 = vadd.xlane.f32.xlu0 %v5231
    %v5233 = vpop.xlane.xlu0 %5232
    %v5234 = vsel %vm284, %v5188, 0.0
    %5235 = vadd.xlane.f32.xlu0 %v5234
    %v5236 = vpop.xlane.xlu0 %5235
    %v5237 = vmul.f32 %v5191, %v1225
    %v5238 = vmul.f32 %v5194, %v1225
    %v5239 = vmul.f32 %v5197, %v1225
    %v5240 = vmul.f32 %v5200, %v1225
    %v5241 = vmul.f32 %v5203, %v1225
    %v5242 = vmul.f32 %v5206, %v1225
    %v5243 = vmul.f32 %v5209, %v1225
    %v5244 = vmul.f32 %v5212, %v1225
    %v5245 = vmul.f32 %v5215, %v1225
    %v5246 = vmul.f32 %v5218, %v1225
    %v5247 = vmul.f32 %v5221, %v1225
    %v5248 = vmul.f32 %v5224, %v1225
    %v5249 = vmul.f32 %v5227, %v1225
    %v5250 = vmul.f32 %v5230, %v1225
    %v5251 = vmul.f32 %v5233, %v1225
    %v5252 = vmul.f32 %v5236, %v1225
    %v5253 = vadd.f32 %v5237, 1e-05
    %v5254 = vadd.f32 %v5238, 1e-05
    %v5255 = vadd.f32 %v5239, 1e-05
    %v5256 = vadd.f32 %v5240, 1e-05
    %v5257 = vadd.f32 %v5241, 1e-05
    %v5258 = vadd.f32 %v5242, 1e-05
    %v5259 = vadd.f32 %v5243, 1e-05
    %v5260 = vadd.f32 %v5244, 1e-05
    %v5261 = vadd.f32 %v5245, 1e-05
    %v5262 = vadd.f32 %v5246, 1e-05
    %v5263 = vadd.f32 %v5247, 1e-05
    %v5264 = vadd.f32 %v5248, 1e-05
    %v5265 = vadd.f32 %v5249, 1e-05
    %v5266 = vadd.f32 %v5250, 1e-05
    %v5267 = vadd.f32 %v5251, 1e-05
    %v5268 = vadd.f32 %v5252, 1e-05
    %v5269 = vrsqrt.pop %v5253
    %v5270 = vrsqrt.pop %v5254
    %v5271 = vrsqrt.pop %v5255
    %v5272 = vrsqrt.pop %v5256
    %v5273 = vrsqrt.pop %v5257
    %v5274 = vrsqrt.pop %v5258
    %v5275 = vrsqrt.pop %v5259
    %v5276 = vrsqrt.pop %v5260
    %v5277 = vrsqrt.pop %v5261
    %v5278 = vrsqrt.pop %v5262
    %v5279 = vrsqrt.pop %v5263
    %v5280 = vrsqrt.pop %v5264
    %v5281 = vrsqrt.pop %v5265
    %v5282 = vrsqrt.pop %v5266
    %v5283 = vrsqrt.pop %v5267
    %v5284 = vrsqrt.pop %v5268
    %v5285 = vmul.f32 %v5157, %v5269
    %v5286 = vmul.f32 %v5158, %v5270
    %v5287 = vmul.f32 %v5159, %v5271
    %v5288 = vmul.f32 %v5160, %v5272
    %v5289 = vmul.f32 %v5161, %v5273
    %v5290 = vmul.f32 %v5162, %v5274
    %v5291 = vmul.f32 %v5163, %v5275
    %v5292 = vmul.f32 %v5164, %v5276
    %v5293 = vmul.f32 %v5165, %v5277
    %v5294 = vmul.f32 %v5166, %v5278
    %v5295 = vmul.f32 %v5167, %v5279
    %v5296 = vmul.f32 %v5168, %v5280
    %v5297 = vmul.f32 %v5169, %v5281
    %v5298 = vmul.f32 %v5170, %v5282
    %v5299 = vmul.f32 %v5171, %v5283
    %v5300 = vmul.f32 %v5172, %v5284
    %v5301 = vmul.f32 %v5285, %v1390
    %v5302 = vmul.f32 %v5286, %v1390
    %v5303 = vmul.f32 %v5287, %v1390
    %v5304 = vmul.f32 %v5288, %v1390
    %v5305 = vmul.f32 %v5289, %v1390
    %v5306 = vmul.f32 %v5290, %v1390
    %v5307 = vmul.f32 %v5291, %v1390
    %v5308 = vmul.f32 %v5292, %v1390
    %v5309 = vmul.f32 %v5293, %v1390
    %v5310 = vmul.f32 %v5294, %v1390
    %v5311 = vmul.f32 %v5295, %v1390
    %v5312 = vmul.f32 %v5296, %v1390
    %v5313 = vmul.f32 %v5297, %v1390
    %v5314 = vmul.f32 %v5298, %v1390
    %v5315 = vmul.f32 %v5299, %v1390
    %v5316 = vmul.f32 %v5300, %v1390
    %v5317 = vadd.f32 %v5301, %v1412
    %v5318 = vadd.f32 %v5302, %v1412
    %v5319 = vadd.f32 %v5303, %v1412
    %v5320 = vadd.f32 %v5304, %v1412
    %v5321 = vadd.f32 %v5305, %v1412
    %v5322 = vadd.f32 %v5306, %v1412
    %v5323 = vadd.f32 %v5307, %v1412
    %v5324 = vadd.f32 %v5308, %v1412
    %v5325 = vadd.f32 %v5309, %v1412
    %v5326 = vadd.f32 %v5310, %v1412
    %v5327 = vadd.f32 %v5311, %v1412
    %v5328 = vadd.f32 %v5312, %v1412
    %v5329 = vadd.f32 %v5313, %v1412
    %v5330 = vadd.f32 %v5314, %v1412
    %v5331 = vadd.f32 %v5315, %v1412
    %v5332 = vadd.f32 %v5316, %v1412
    %v5333 = vsel %vm284, %v5317, -inf
    %5334 = vmax.xlane.f32.xlu0 %v5333
    %v5335 = vpop.xlane.xlu0 %5334
    %v5336 = vsel %vm284, %v5318, -inf
    %5337 = vmax.xlane.f32.xlu0 %v5336
    %v5338 = vpop.xlane.xlu0 %5337
    %v5339 = vsel %vm284, %v5319, -inf
    %5340 = vmax.xlane.f32.xlu0 %v5339
    %v5341 = vpop.xlane.xlu0 %5340
    %v5342 = vsel %vm284, %v5320, -inf
    %5343 = vmax.xlane.f32.xlu0 %v5342
    %v5344 = vpop.xlane.xlu0 %5343
    %v5345 = vsel %vm284, %v5321, -inf
    %5346 = vmax.xlane.f32.xlu0 %v5345
    %v5347 = vpop.xlane.xlu0 %5346
    %v5348 = vsel %vm284, %v5322, -inf
    %5349 = vmax.xlane.f32.xlu0 %v5348
    %v5350 = vpop.xlane.xlu0 %5349
    %v5351 = vsel %vm284, %v5323, -inf
    %5352 = vmax.xlane.f32.xlu0 %v5351
    %v5353 = vpop.xlane.xlu0 %5352
    %v5354 = vsel %vm284, %v5324, -inf
    %5355 = vmax.xlane.f32.xlu0 %v5354
    %v5356 = vpop.xlane.xlu0 %5355
    %v5357 = vsel %vm284, %v5325, -inf
    %5358 = vmax.xlane.f32.xlu0 %v5357
    %v5359 = vpop.xlane.xlu0 %5358
    %v5360 = vsel %vm284, %v5326, -inf
    %5361 = vmax.xlane.f32.xlu0 %v5360
    %v5362 = vpop.xlane.xlu0 %5361
    %v5363 = vsel %vm284, %v5327, -inf
    %5364 = vmax.xlane.f32.xlu0 %v5363
    %v5365 = vpop.xlane.xlu0 %5364
    %v5366 = vsel %vm284, %v5328, -inf
    %5367 = vmax.xlane.f32.xlu0 %v5366
    %v5368 = vpop.xlane.xlu0 %5367
    %v5369 = vsel %vm284, %v5329, -inf
    %5370 = vmax.xlane.f32.xlu0 %v5369
    %v5371 = vpop.xlane.xlu0 %5370
    %v5372 = vsel %vm284, %v5330, -inf
    %5373 = vmax.xlane.f32.xlu0 %v5372
    %v5374 = vpop.xlane.xlu0 %5373
    %v5375 = vsel %vm284, %v5331, -inf
    %5376 = vmax.xlane.f32.xlu0 %v5375
    %v5377 = vpop.xlane.xlu0 %5376
    %v5378 = vsel %vm284, %v5332, -inf
    %5379 = vmax.xlane.f32.xlu0 %v5378
    %v5380 = vpop.xlane.xlu0 %5379
    %v5381 = vsub.f32 %v5317, %v5335
    %v5382 = vsub.f32 %v5318, %v5338
    %v5383 = vsub.f32 %v5319, %v5341
    %v5384 = vsub.f32 %v5320, %v5344
    %v5385 = vsub.f32 %v5321, %v5347
    %v5386 = vsub.f32 %v5322, %v5350
    %v5387 = vsub.f32 %v5323, %v5353
    %v5388 = vsub.f32 %v5324, %v5356
    %v5389 = vsub.f32 %v5325, %v5359
    %v5390 = vsub.f32 %v5326, %v5362
    %v5391 = vsub.f32 %v5327, %v5365
    %v5392 = vsub.f32 %v5328, %v5368
    %v5393 = vsub.f32 %v5329, %v5371
    %v5394 = vsub.f32 %v5330, %v5374
    %v5395 = vsub.f32 %v5331, %v5377
    %v5396 = vsub.f32 %v5332, %v5380
    %v5397 = vmul.f32 %v5381, 1.442695
    %v5398 = vpow.pop %v5397
    %v5399 = vmul.f32 %v5382, 1.442695
    %v5400 = vpow.pop %v5399
    %v5401 = vmul.f32 %v5383, 1.442695
    %v5402 = vpow.pop %v5401
    %v5403 = vmul.f32 %v5384, 1.442695
    %v5404 = vpow.pop %v5403
    %v5405 = vmul.f32 %v5385, 1.442695
    %v5406 = vpow.pop %v5405
    %v5407 = vmul.f32 %v5386, 1.442695
    %v5408 = vpow.pop %v5407
    %v5409 = vmul.f32 %v5387, 1.442695
    %v5410 = vpow.pop %v5409
    %v5411 = vmul.f32 %v5388, 1.442695
    %v5412 = vpow.pop %v5411
    %v5413 = vmul.f32 %v5389, 1.442695
    %v5414 = vpow.pop %v5413
    %v5415 = vmul.f32 %v5390, 1.442695
    %v5416 = vpow.pop %v5415
    %v5417 = vmul.f32 %v5391, 1.442695
    %v5418 = vpow.pop %v5417
    %v5419 = vmul.f32 %v5392, 1.442695
    %v5420 = vpow.pop %v5419
    %v5421 = vmul.f32 %v5393, 1.442695
    %v5422 = vpow.pop %v5421
    %v5423 = vmul.f32 %v5394, 1.442695
    %v5424 = vpow.pop %v5423
    %v5425 = vmul.f32 %v5395, 1.442695
    %v5426 = vpow.pop %v5425
    %v5427 = vmul.f32 %v5396, 1.442695
    %v5428 = vpow.pop %v5427
    %v5429 = vsel %vm284, %v5398, 0.0
    %5430 = vadd.xlane.f32.xlu0 %v5429
    %v5431 = vpop.xlane.xlu0 %5430
    %v5432 = vsel %vm284, %v5400, 0.0
    %5433 = vadd.xlane.f32.xlu0 %v5432
    %v5434 = vpop.xlane.xlu0 %5433
    %v5435 = vsel %vm284, %v5402, 0.0
    %5436 = vadd.xlane.f32.xlu0 %v5435
    %v5437 = vpop.xlane.xlu0 %5436
    %v5438 = vsel %vm284, %v5404, 0.0
    %5439 = vadd.xlane.f32.xlu0 %v5438
    %v5440 = vpop.xlane.xlu0 %5439
    %v5441 = vsel %vm284, %v5406, 0.0
    %5442 = vadd.xlane.f32.xlu0 %v5441
    %v5443 = vpop.xlane.xlu0 %5442
    %v5444 = vsel %vm284, %v5408, 0.0
    %5445 = vadd.xlane.f32.xlu0 %v5444
    %v5446 = vpop.xlane.xlu0 %5445
    %v5447 = vsel %vm284, %v5410, 0.0
    %5448 = vadd.xlane.f32.xlu0 %v5447
    %v5449 = vpop.xlane.xlu0 %5448
    %v5450 = vsel %vm284, %v5412, 0.0
    %5451 = vadd.xlane.f32.xlu0 %v5450
    %v5452 = vpop.xlane.xlu0 %5451
    %v5453 = vsel %vm284, %v5414, 0.0
    %5454 = vadd.xlane.f32.xlu0 %v5453
    %v5455 = vpop.xlane.xlu0 %5454
    %v5456 = vsel %vm284, %v5416, 0.0
    %5457 = vadd.xlane.f32.xlu0 %v5456
    %v5458 = vpop.xlane.xlu0 %5457
    %v5459 = vsel %vm284, %v5418, 0.0
    %5460 = vadd.xlane.f32.xlu0 %v5459
    %v5461 = vpop.xlane.xlu0 %5460
    %v5462 = vsel %vm284, %v5420, 0.0
    %5463 = vadd.xlane.f32.xlu0 %v5462
    %v5464 = vpop.xlane.xlu0 %5463
    %v5465 = vsel %vm284, %v5422, 0.0
    %5466 = vadd.xlane.f32.xlu0 %v5465
    %v5467 = vpop.xlane.xlu0 %5466
    %v5468 = vsel %vm284, %v5424, 0.0
    %5469 = vadd.xlane.f32.xlu0 %v5468
    %v5470 = vpop.xlane.xlu0 %5469
    %v5471 = vsel %vm284, %v5426, 0.0
    %5472 = vadd.xlane.f32.xlu0 %v5471
    %v5473 = vpop.xlane.xlu0 %5472
    %v5474 = vsel %vm284, %v5428, 0.0
    %5475 = vadd.xlane.f32.xlu0 %v5474
    %v5476 = vpop.xlane.xlu0 %5475
    %v5477 = vrcp.pop %v5431
    %v5478 = vrcp.pop %v5434
    %v5479 = vrcp.pop %v5437
    %v5480 = vrcp.pop %v5440
    %v5481 = vrcp.pop %v5443
    %v5482 = vrcp.pop %v5446
    %v5483 = vrcp.pop %v5449
    %v5484 = vrcp.pop %v5452
    %v5485 = vrcp.pop %v5455
    %v5486 = vrcp.pop %v5458
    %v5487 = vrcp.pop %v5461
    %v5488 = vrcp.pop %v5464
    %v5489 = vrcp.pop %v5467
    %v5490 = vrcp.pop %v5470
    %v5491 = vrcp.pop %v5473
    %v5492 = vrcp.pop %v5476
    %v5493 = vmul.f32 %v5398, %v5477
    %v5494 = vmul.f32 %v5400, %v5478
    %v5495 = vmul.f32 %v5402, %v5479
    %v5496 = vmul.f32 %v5404, %v5480
    %v5497 = vmul.f32 %v5406, %v5481
    %v5498 = vmul.f32 %v5408, %v5482
    %v5499 = vmul.f32 %v5410, %v5483
    %v5500 = vmul.f32 %v5412, %v5484
    %v5501 = vmul.f32 %v5414, %v5485
    %v5502 = vmul.f32 %v5416, %v5486
    %v5503 = vmul.f32 %v5418, %v5487
    %v5504 = vmul.f32 %v5420, %v5488
    %v5505 = vmul.f32 %v5422, %v5489
    %v5506 = vmul.f32 %v5424, %v5490
    %v5507 = vmul.f32 %v5426, %v5491
    %v5508 = vmul.f32 %v5428, %v5492
    %5509 = vxpose.xlu0.b32.start [1/16] %v5493, 128
    %5510 = vxpose.xlu0.b32.cont [2/16] %v5494, 128
    %5511 = vxpose.xlu0.b32.cont [3/16] 0.0, 128
    %5512 = vxpose.xlu0.b32.cont [4/16] 0.0, 128
    %5513 = vxpose.xlu0.b32.cont [5/16] 0.0, 128
    %5514 = vxpose.xlu0.b32.cont [6/16] 0.0, 128
    %5515 = vxpose.xlu0.b32.cont [7/16] 0.0, 128
    %5516 = vxpose.xlu0.b32.cont [8/16] 0.0, 128
    %5517 = vxpose.xlu0.b32.cont [9/16] 0.0, 128
    %5518 = vxpose.xlu0.b32.cont [10/16] 0.0, 128
    %5519 = vxpose.xlu0.b32.cont [11/16] 0.0, 128
    %5520 = vxpose.xlu0.b32.cont [12/16] 0.0, 128
    %5521 = vxpose.xlu0.b32.cont [13/16] 0.0, 128
    %5522 = vxpose.xlu0.b32.cont [14/16] 0.0, 128
    %5523 = vxpose.xlu0.b32.cont [15/16] 0.0, 128
    %5524 = vxpose.xlu0.b32.end [16/16] 0.0, 128
    %v5525 = vpop.trf.xlu0
    %v5526 = vpop.trf.xlu0
    %v5527 = vpop.trf.xlu0
    %v5528 = vpop.trf.xlu0
    %v5529 = vpop.trf.xlu0
    %v5530 = vpop.trf.xlu0
    %v5531 = vpop.trf.xlu0
    %v5532 = vpop.trf.xlu0
    %v5533 = vpop.trf.xlu0
    %v5534 = vpop.trf.xlu0
    %v5535 = vpop.trf.xlu0
    %v5536 = vpop.trf.xlu0
    %v5537 = vpop.trf.xlu0
    %v5538 = vpop.trf.xlu0
    %v5539 = vpop.trf.xlu0
    %v5540 = vpop.trf.xlu0
    %5541 = vrot.lane.b32.xlu0 %v4158, 64
    %v5542 = vpop.permute.xlu0 %5541
    %5543 = vrot.lane.b32.xlu0 %v4163, 64
    %v5544 = vpop.permute.xlu0 %5543
    %v5548 = vsel %vm983, %v5525, 0
    %5550 = vmatprep.subr.mxu0 0.0
    %5551 = vmatpush1.msra.mxu0 %v5542
    %5552 = vmatprep.subr.mxu0 0.0
    %5553 = vmatpush1.msra.mxu0 %v5544
    %5554 = vmatprep.subr.mxu0 0.0
    %5555 = vmatpush1.msra.mxu0 0.0
    %5556 = vmatprep.subr.mxu0 0.0
    %5557 = vmatpush1.msra.mxu0 0.0
    %5558 = vmatprep.subr.mxu0 0.0
    %5559 = vmatpush1.msra.mxu0 0.0
    %5560 = vmatprep.subr.mxu0 0.0
    %5561 = vmatpush1.msra.mxu0 0.0
    %5562 = vmatprep.subr.mxu0 0.0
    %5563 = vmatpush1.msra.mxu0 0.0
    %5564 = vmatprep.subr.mxu0 0.0
    %5565 = vmatpush1.msra.mxu0 0.0
    %5566 = vmatprep.subr.mxu0 0.0
    %5567 = vmatpush1.msra.mxu0 0.0
    %5568 = vmatprep.subr.mxu0 0.0
    %5569 = vmatpush1.msra.mxu0 0.0
    %5570 = vmatprep.subr.mxu0 0.0
    %5571 = vmatpush1.msra.mxu0 0.0
    %5572 = vmatprep.subr.mxu0 0.0
    %5573 = vmatpush1.msra.mxu0 0.0
    %5574 = vmatprep.subr.mxu0 0.0
    %5575 = vmatpush1.msra.mxu0 0.0
    %5576 = vmatprep.subr.mxu0 0.0
    %5577 = vmatpush1.msra.mxu0 0.0
    %5578 = vmatprep.subr.mxu0 0.0
    %5579 = vmatpush1.msra.mxu0 0.0
    %5580 = vmatprep.subr.mxu0 0.0
    %5581 = vmatpush1.msra.mxu0 0.0
    %5582 = vmatprep.subr.mxu0 0.0
    %5583 = vmatpush1.msra.mxu0 0.0
    %5584 = vmatprep.subr.mxu0 0.0
    %5585 = vmatpush1.msra.mxu0 0.0
    %5586 = vmatprep.subr.mxu0 0.0
    %5587 = vmatpush1.msra.mxu0 0.0
    %5588 = vmatprep.subr.mxu0 0.0
    %5589 = vmatpush1.msra.mxu0 0.0
    %5590 = vmatprep.subr.mxu0 0.0
    %5591 = vmatpush1.msra.mxu0 0.0
    %5592 = vmatprep.subr.mxu0 0.0
    %5593 = vmatpush1.msra.mxu0 0.0
    %5594 = vmatprep.subr.mxu0 0.0
    %5595 = vmatpush1.msra.mxu0 0.0
    %5596 = vmatprep.subr.mxu0 0.0
    %5597 = vmatpush1.msra.mxu0 0.0
    %5598 = vmatprep.subr.mxu0 0.0
    %5599 = vmatpush1.msra.mxu0 0.0
    %5600 = vmatprep.subr.mxu0 0.0
    %5601 = vmatpush1.msra.mxu0 0.0
    %5602 = vmatprep.subr.mxu0 0.0
    %5603 = vmatpush1.msra.mxu0 0.0
    %5604 = vmatprep.subr.mxu0 0.0
    %5605 = vmatpush1.msra.mxu0 0.0
    %5606 = vmatprep.subr.mxu0 0.0
    %5607 = vmatpush1.msra.mxu0 0.0
    %5608 = vmatprep.subr.mxu0 0.0
    %5609 = vmatpush1.msra.mxu0 0.0
    %5610 = vmatprep.subr.mxu0 0.0
    %5611 = vmatpush1.msra.mxu0 0.0
    %5612 = vmatprep.subr.mxu0 0.0
    %5613 = vmatpush1.msra.mxu0 0.0
    %5614 = vmatprep.mubr.f32.mxu0 0.0
    %5615 = vmatmul.mubr.f32.gmra.mrb[0].mxu0 %v5548
    %v5616 = vpop.f32.mrb[0].mxu0
    %v5617 = vadd.f32 0.0, %v5616
    %v5618 = vpop.f32.mrb[0].mxu0
    %5619 = vdwg.mxu0
    %5620 = vxpose.xlu0.b32.start [1/16] %v5495, 128
    %5621 = vxpose.xlu0.b32.cont [2/16] %v5496, 128
    %5622 = vxpose.xlu0.b32.cont [3/16] 0.0, 128
    %5623 = vxpose.xlu0.b32.cont [4/16] 0.0, 128
    %5624 = vxpose.xlu0.b32.cont [5/16] 0.0, 128
    %5625 = vxpose.xlu0.b32.cont [6/16] 0.0, 128
    %5626 = vxpose.xlu0.b32.cont [7/16] 0.0, 128
    %5627 = vxpose.xlu0.b32.cont [8/16] 0.0, 128
    %5628 = vxpose.xlu0.b32.cont [9/16] 0.0, 128
    %5629 = vxpose.xlu0.b32.cont [10/16] 0.0, 128
    %5630 = vxpose.xlu0.b32.cont [11/16] 0.0, 128
    %5631 = vxpose.xlu0.b32.cont [12/16] 0.0, 128
    %5632 = vxpose.xlu0.b32.cont [13/16] 0.0, 128
    %5633 = vxpose.xlu0.b32.cont [14/16] 0.0, 128
    %5634 = vxpose.xlu0.b32.cont [15/16] 0.0, 128
    %5635 = vxpose.xlu0.b32.end [16/16] 0.0, 128
    %v5636 = vpop.trf.xlu0
    %v5637 = vpop.trf.xlu0
    %v5638 = vpop.trf.xlu0
    %v5639 = vpop.trf.xlu0
    %v5640 = vpop.trf.xlu0
    %v5641 = vpop.trf.xlu0
    %v5642 = vpop.trf.xlu0
    %v5643 = vpop.trf.xlu0
    %v5644 = vpop.trf.xlu0
    %v5645 = vpop.trf.xlu0
    %v5646 = vpop.trf.xlu0
    %v5647 = vpop.trf.xlu0
    %v5648 = vpop.trf.xlu0
    %v5649 = vpop.trf.xlu0
    %v5650 = vpop.trf.xlu0
    %v5651 = vpop.trf.xlu0
    %5652 = vrot.lane.b32.xlu0 %v4168, 64
    %v5653 = vpop.permute.xlu0 %5652
    %5654 = vrot.lane.b32.xlu0 %v4173, 64
    %v5655 = vpop.permute.xlu0 %5654
    %v5659 = vsel %vm983, %v5636, 0
    %5661 = vmatprep.subr.mxu0 0.0
    %5662 = vmatpush1.msra.mxu0 %v5653
    %5663 = vmatprep.subr.mxu0 0.0
    %5664 = vmatpush1.msra.mxu0 %v5655
    %5665 = vmatprep.subr.mxu0 0.0
    %5666 = vmatpush1.msra.mxu0 0.0
    %5667 = vmatprep.subr.mxu0 0.0
    %5668 = vmatpush1.msra.mxu0 0.0
    %5669 = vmatprep.subr.mxu0 0.0
    %5670 = vmatpush1.msra.mxu0 0.0
    %5671 = vmatprep.subr.mxu0 0.0
    %5672 = vmatpush1.msra.mxu0 0.0
    %5673 = vmatprep.subr.mxu0 0.0
    %5674 = vmatpush1.msra.mxu0 0.0
    %5675 = vmatprep.subr.mxu0 0.0
    %5676 = vmatpush1.msra.mxu0 0.0
    %5677 = vmatprep.subr.mxu0 0.0
    %5678 = vmatpush1.msra.mxu0 0.0
    %5679 = vmatprep.subr.mxu0 0.0
    %5680 = vmatpush1.msra.mxu0 0.0
    %5681 = vmatprep.subr.mxu0 0.0
    %5682 = vmatpush1.msra.mxu0 0.0
    %5683 = vmatprep.subr.mxu0 0.0
    %5684 = vmatpush1.msra.mxu0 0.0
    %5685 = vmatprep.subr.mxu0 0.0
    %5686 = vmatpush1.msra.mxu0 0.0
    %5687 = vmatprep.subr.mxu0 0.0
    %5688 = vmatpush1.msra.mxu0 0.0
    %5689 = vmatprep.subr.mxu0 0.0
    %5690 = vmatpush1.msra.mxu0 0.0
    %5691 = vmatprep.subr.mxu0 0.0
    %5692 = vmatpush1.msra.mxu0 0.0
    %5693 = vmatprep.subr.mxu0 0.0
    %5694 = vmatpush1.msra.mxu0 0.0
    %5695 = vmatprep.subr.mxu0 0.0
    %5696 = vmatpush1.msra.mxu0 0.0
    %5697 = vmatprep.subr.mxu0 0.0
    %5698 = vmatpush1.msra.mxu0 0.0
    %5699 = vmatprep.subr.mxu0 0.0
    %5700 = vmatpush1.msra.mxu0 0.0
    %5701 = vmatprep.subr.mxu0 0.0
    %5702 = vmatpush1.msra.mxu0 0.0
    %5703 = vmatprep.subr.mxu0 0.0
    %5704 = vmatpush1.msra.mxu0 0.0
    %5705 = vmatprep.subr.mxu0 0.0
    %5706 = vmatpush1.msra.mxu0 0.0
    %5707 = vmatprep.subr.mxu0 0.0
    %5708 = vmatpush1.msra.mxu0 0.0
    %5709 = vmatprep.subr.mxu0 0.0
    %5710 = vmatpush1.msra.mxu0 0.0
    %5711 = vmatprep.subr.mxu0 0.0
    %5712 = vmatpush1.msra.mxu0 0.0
    %5713 = vmatprep.subr.mxu0 0.0
    %5714 = vmatpush1.msra.mxu0 0.0
    %5715 = vmatprep.subr.mxu0 0.0
    %5716 = vmatpush1.msra.mxu0 0.0
    %5717 = vmatprep.subr.mxu0 0.0
    %5718 = vmatpush1.msra.mxu0 0.0
    %5719 = vmatprep.subr.mxu0 0.0
    %5720 = vmatpush1.msra.mxu0 0.0
    %5721 = vmatprep.subr.mxu0 0.0
    %5722 = vmatpush1.msra.mxu0 0.0
    %5723 = vmatprep.subr.mxu0 0.0
    %5724 = vmatpush1.msra.mxu0 0.0
    %5725 = vmatprep.mubr.f32.mxu0 0.0
    %5726 = vmatmul.mubr.f32.gmra.mrb[0].mxu0 %v5659
    %v5727 = vpop.f32.mrb[0].mxu0
    %v5728 = vadd.f32 0.0, %v5727
    %v5729 = vpop.f32.mrb[0].mxu0
    %5730 = vdwg.mxu0
    %5731 = vxpose.xlu0.b32.start [1/16] %v5497, 128
    %5732 = vxpose.xlu0.b32.cont [2/16] %v5498, 128
    %5733 = vxpose.xlu0.b32.cont [3/16] 0.0, 128
    %5734 = vxpose.xlu0.b32.cont [4/16] 0.0, 128
    %5735 = vxpose.xlu0.b32.cont [5/16] 0.0, 128
    %5736 = vxpose.xlu0.b32.cont [6/16] 0.0, 128
    %5737 = vxpose.xlu0.b32.cont [7/16] 0.0, 128
    %5738 = vxpose.xlu0.b32.cont [8/16] 0.0, 128
    %5739 = vxpose.xlu0.b32.cont [9/16] 0.0, 128
    %5740 = vxpose.xlu0.b32.cont [10/16] 0.0, 128
    %5741 = vxpose.xlu0.b32.cont [11/16] 0.0, 128
    %5742 = vxpose.xlu0.b32.cont [12/16] 0.0, 128
    %5743 = vxpose.xlu0.b32.cont [13/16] 0.0, 128
    %5744 = vxpose.xlu0.b32.cont [14/16] 0.0, 128
    %5745 = vxpose.xlu0.b32.cont [15/16] 0.0, 128
    %5746 = vxpose.xlu0.b32.end [16/16] 0.0, 128
    %v5747 = vpop.trf.xlu0
    %v5748 = vpop.trf.xlu0
    %v5749 = vpop.trf.xlu0
    %v5750 = vpop.trf.xlu0
    %v5751 = vpop.trf.xlu0
    %v5752 = vpop.trf.xlu0
    %v5753 = vpop.trf.xlu0
    %v5754 = vpop.trf.xlu0
    %v5755 = vpop.trf.xlu0
    %v5756 = vpop.trf.xlu0
    %v5757 = vpop.trf.xlu0
    %v5758 = vpop.trf.xlu0
    %v5759 = vpop.trf.xlu0
    %v5760 = vpop.trf.xlu0
    %v5761 = vpop.trf.xlu0
    %v5762 = vpop.trf.xlu0
    %5763 = vrot.lane.b32.xlu0 %v4181, 64
    %v5764 = vpop.permute.xlu0 %5763
    %5765 = vrot.lane.b32.xlu0 %v4183, 64
    %v5766 = vpop.permute.xlu0 %5765
    %v5770 = vsel %vm983, %v5747, 0
    %5772 = vmatprep.subr.mxu0 0.0
    %5773 = vmatpush1.msra.mxu0 %v5764
    %5774 = vmatprep.subr.mxu0 0.0
    %5775 = vmatpush1.msra.mxu0 %v5766
    %5776 = vmatprep.subr.mxu0 0.0
    %5777 = vmatpush1.msra.mxu0 0.0
    %5778 = vmatprep.subr.mxu0 0.0
    %5779 = vmatpush1.msra.mxu0 0.0
    %5780 = vmatprep.subr.mxu0 0.0
    %5781 = vmatpush1.msra.mxu0 0.0
    %5782 = vmatprep.subr.mxu0 0.0
    %5783 = vmatpush1.msra.mxu0 0.0
    %5784 = vmatprep.subr.mxu0 0.0
    %5785 = vmatpush1.msra.mxu0 0.0
    %5786 = vmatprep.subr.mxu0 0.0
    %5787 = vmatpush1.msra.mxu0 0.0
    %5788 = vmatprep.subr.mxu0 0.0
    %5789 = vmatpush1.msra.mxu0 0.0
    %5790 = vmatprep.subr.mxu0 0.0
    %5791 = vmatpush1.msra.mxu0 0.0
    %5792 = vmatprep.subr.mxu0 0.0
    %5793 = vmatpush1.msra.mxu0 0.0
    %5794 = vmatprep.subr.mxu0 0.0
    %5795 = vmatpush1.msra.mxu0 0.0
    %5796 = vmatprep.subr.mxu0 0.0
    %5797 = vmatpush1.msra.mxu0 0.0
    %5798 = vmatprep.subr.mxu0 0.0
    %5799 = vmatpush1.msra.mxu0 0.0
    %5800 = vmatprep.subr.mxu0 0.0
    %5801 = vmatpush1.msra.mxu0 0.0
    %5802 = vmatprep.subr.mxu0 0.0
    %5803 = vmatpush1.msra.mxu0 0.0
    %5804 = vmatprep.subr.mxu0 0.0
    %5805 = vmatpush1.msra.mxu0 0.0
    %5806 = vmatprep.subr.mxu0 0.0
    %5807 = vmatpush1.msra.mxu0 0.0
    %5808 = vmatprep.subr.mxu0 0.0
    %5809 = vmatpush1.msra.mxu0 0.0
    %5810 = vmatprep.subr.mxu0 0.0
    %5811 = vmatpush1.msra.mxu0 0.0
    %5812 = vmatprep.subr.mxu0 0.0
    %5813 = vmatpush1.msra.mxu0 0.0
    %5814 = vmatprep.subr.mxu0 0.0
    %5815 = vmatpush1.msra.mxu0 0.0
    %5816 = vmatprep.subr.mxu0 0.0
    %5817 = vmatpush1.msra.mxu0 0.0
    %5818 = vmatprep.subr.mxu0 0.0
    %5819 = vmatpush1.msra.mxu0 0.0
    %5820 = vmatprep.subr.mxu0 0.0
    %5821 = vmatpush1.msra.mxu0 0.0
    %5822 = vmatprep.subr.mxu0 0.0
    %5823 = vmatpush1.msra.mxu0 0.0
    %5824 = vmatprep.subr.mxu0 0.0
    %5825 = vmatpush1.msra.mxu0 0.0
    %5826 = vmatprep.subr.mxu0 0.0
    %5827 = vmatpush1.msra.mxu0 0.0
    %5828 = vmatprep.subr.mxu0 0.0
    %5829 = vmatpush1.msra.mxu0 0.0
    %5830 = vmatprep.subr.mxu0 0.0
    %5831 = vmatpush1.msra.mxu0 0.0
    %5832 = vmatprep.subr.mxu0 0.0
    %5833 = vmatpush1.msra.mxu0 0.0
    %5834 = vmatprep.subr.mxu0 0.0
    %5835 = vmatpush1.msra.mxu0 0.0
    %5836 = vmatprep.mubr.f32.mxu0 0.0
    %5837 = vmatmul.mubr.f32.gmra.mrb[0].mxu0 %v5770
    %v5838 = vpop.f32.mrb[0].mxu0
    %v5839 = vadd.f32 0.0, %v5838
    %v5840 = vpop.f32.mrb[0].mxu0
    %5841 = vdwg.mxu0
    %5842 = vxpose.xlu0.b32.start [1/16] %v5499, 128
    %5843 = vxpose.xlu0.b32.cont [2/16] %v5500, 128
    %5844 = vxpose.xlu0.b32.cont [3/16] 0.0, 128
    %5845 = vxpose.xlu0.b32.cont [4/16] 0.0, 128
    %5846 = vxpose.xlu0.b32.cont [5/16] 0.0, 128
    %5847 = vxpose.xlu0.b32.cont [6/16] 0.0, 128
    %5848 = vxpose.xlu0.b32.cont [7/16] 0.0, 128
    %5849 = vxpose.xlu0.b32.cont [8/16] 0.0, 128
    %5850 = vxpose.xlu0.b32.cont [9/16] 0.0, 128
    %5851 = vxpose.xlu0.b32.cont [10/16] 0.0, 128
    %5852 = vxpose.xlu0.b32.cont [11/16] 0.0, 128
    %5853 = vxpose.xlu0.b32.cont [12/16] 0.0, 128
    %5854 = vxpose.xlu0.b32.cont [13/16] 0.0, 128
    %5855 = vxpose.xlu0.b32.cont [14/16] 0.0, 128
    %5856 = vxpose.xlu0.b32.cont [15/16] 0.0, 128
    %5857 = vxpose.xlu0.b32.end [16/16] 0.0, 128
    %v5858 = vpop.trf.xlu0
    %v5859 = vpop.trf.xlu0
    %v5860 = vpop.trf.xlu0
    %v5861 = vpop.trf.xlu0
    %v5862 = vpop.trf.xlu0
    %v5863 = vpop.trf.xlu0
    %v5864 = vpop.trf.xlu0
    %v5865 = vpop.trf.xlu0
    %v5866 = vpop.trf.xlu0
    %v5867 = vpop.trf.xlu0
    %v5868 = vpop.trf.xlu0
    %v5869 = vpop.trf.xlu0
    %v5870 = vpop.trf.xlu0
    %v5871 = vpop.trf.xlu0
    %v5872 = vpop.trf.xlu0
    %v5873 = vpop.trf.xlu0
    %5874 = vrot.lane.b32.xlu0 %v4185, 64
    %v5875 = vpop.permute.xlu0 %5874
    %5876 = vrot.lane.b32.xlu0 %v4187, 64
    %v5877 = vpop.permute.xlu0 %5876
    %v5881 = vsel %vm983, %v5858, 0
    %5883 = vmatprep.subr.mxu0 0.0
    %5884 = vmatpush1.msra.mxu0 %v5875
    %5885 = vmatprep.subr.mxu0 0.0
    %5886 = vmatpush1.msra.mxu0 %v5877
    %5887 = vmatprep.subr.mxu0 0.0
    %5888 = vmatpush1.msra.mxu0 0.0
    %5889 = vmatprep.subr.mxu0 0.0
    %5890 = vmatpush1.msra.mxu0 0.0
    %5891 = vmatprep.subr.mxu0 0.0
    %5892 = vmatpush1.msra.mxu0 0.0
    %5893 = vmatprep.subr.mxu0 0.0
    %5894 = vmatpush1.msra.mxu0 0.0
    %5895 = vmatprep.subr.mxu0 0.0
    %5896 = vmatpush1.msra.mxu0 0.0
    %5897 = vmatprep.subr.mxu0 0.0
    %5898 = vmatpush1.msra.mxu0 0.0
    %5899 = vmatprep.subr.mxu0 0.0
    %5900 = vmatpush1.msra.mxu0 0.0
    %5901 = vmatprep.subr.mxu0 0.0
    %5902 = vmatpush1.msra.mxu0 0.0
    %5903 = vmatprep.subr.mxu0 0.0
    %5904 = vmatpush1.msra.mxu0 0.0
    %5905 = vmatprep.subr.mxu0 0.0
    %5906 = vmatpush1.msra.mxu0 0.0
    %5907 = vmatprep.subr.mxu0 0.0
    %5908 = vmatpush1.msra.mxu0 0.0
    %5909 = vmatprep.subr.mxu0 0.0
    %5910 = vmatpush1.msra.mxu0 0.0
    %5911 = vmatprep.subr.mxu0 0.0
    %5912 = vmatpush1.msra.mxu0 0.0
    %5913 = vmatprep.subr.mxu0 0.0
    %5914 = vmatpush1.msra.mxu0 0.0
    %5915 = vmatprep.subr.mxu0 0.0
    %5916 = vmatpush1.msra.mxu0 0.0
    %5917 = vmatprep.subr.mxu0 0.0
    %5918 = vmatpush1.msra.mxu0 0.0
    %5919 = vmatprep.subr.mxu0 0.0
    %5920 = vmatpush1.msra.mxu0 0.0
    %5921 = vmatprep.subr.mxu0 0.0
    %5922 = vmatpush1.msra.mxu0 0.0
    %5923 = vmatprep.subr.mxu0 0.0
    %5924 = vmatpush1.msra.mxu0 0.0
    %5925 = vmatprep.subr.mxu0 0.0
    %5926 = vmatpush1.msra.mxu0 0.0
    %5927 = vmatprep.subr.mxu0 0.0
    %5928 = vmatpush1.msra.mxu0 0.0
    %5929 = vmatprep.subr.mxu0 0.0
    %5930 = vmatpush1.msra.mxu0 0.0
    %5931 = vmatprep.subr.mxu0 0.0
    %5932 = vmatpush1.msra.mxu0 0.0
    %5933 = vmatprep.subr.mxu0 0.0
    %5934 = vmatpush1.msra.mxu0 0.0
    %5935 = vmatprep.subr.mxu0 0.0
    %5936 = vmatpush1.msra.mxu0 0.0
    %5937 = vmatprep.subr.mxu0 0.0
    %5938 = vmatpush1.msra.mxu0 0.0
    %5939 = vmatprep.subr.mxu0 0.0
    %5940 = vmatpush1.msra.mxu0 0.0
    %5941 = vmatprep.subr.mxu0 0.0
    %5942 = vmatpush1.msra.mxu0 0.0
    %5943 = vmatprep.subr.mxu0 0.0
    %5944 = vmatpush1.msra.mxu0 0.0
    %5945 = vmatprep.subr.mxu0 0.0
    %5946 = vmatpush1.msra.mxu0 0.0
    %5947 = vmatprep.mubr.f32.mxu0 0.0
    %5948 = vmatmul.mubr.f32.gmra.mrb[0].mxu0 %v5881
    %v5949 = vpop.f32.mrb[0].mxu0
    %v5950 = vadd.f32 0.0, %v5949
    %v5951 = vpop.f32.mrb[0].mxu0
    %5952 = vdwg.mxu0
    %5953 = vxpose.xlu0.b32.start [1/16] %v5501, 128
    %5954 = vxpose.xlu0.b32.cont [2/16] %v5502, 128
    %5955 = vxpose.xlu0.b32.cont [3/16] 0.0, 128
    %5956 = vxpose.xlu0.b32.cont [4/16] 0.0, 128
    %5957 = vxpose.xlu0.b32.cont [5/16] 0.0, 128
    %5958 = vxpose.xlu0.b32.cont [6/16] 0.0, 128
    %5959 = vxpose.xlu0.b32.cont [7/16] 0.0, 128
    %5960 = vxpose.xlu0.b32.cont [8/16] 0.0, 128
    %5961 = vxpose.xlu0.b32.cont [9/16] 0.0, 128
    %5962 = vxpose.xlu0.b32.cont [10/16] 0.0, 128
    %5963 = vxpose.xlu0.b32.cont [11/16] 0.0, 128
    %5964 = vxpose.xlu0.b32.cont [12/16] 0.0, 128
    %5965 = vxpose.xlu0.b32.cont [13/16] 0.0, 128
    %5966 = vxpose.xlu0.b32.cont [14/16] 0.0, 128
    %5967 = vxpose.xlu0.b32.cont [15/16] 0.0, 128
    %5968 = vxpose.xlu0.b32.end [16/16] 0.0, 128
    %v5969 = vpop.trf.xlu0
    %v5970 = vpop.trf.xlu0
    %v5971 = vpop.trf.xlu0
    %v5972 = vpop.trf.xlu0
    %v5973 = vpop.trf.xlu0
    %v5974 = vpop.trf.xlu0
    %v5975 = vpop.trf.xlu0
    %v5976 = vpop.trf.xlu0
    %v5977 = vpop.trf.xlu0
    %v5978 = vpop.trf.xlu0
    %v5979 = vpop.trf.xlu0
    %v5980 = vpop.trf.xlu0
    %v5981 = vpop.trf.xlu0
    %v5982 = vpop.trf.xlu0
    %v5983 = vpop.trf.xlu0
    %v5984 = vpop.trf.xlu0
    %5985 = vrot.lane.b32.xlu0 %v4189, 64
    %v5986 = vpop.permute.xlu0 %5985
    %5987 = vrot.lane.b32.xlu0 %v4191, 64
    %v5988 = vpop.permute.xlu0 %5987
    %v5992 = vsel %vm983, %v5969, 0
    %5994 = vmatprep.subr.mxu0 0.0
    %5995 = vmatpush1.msra.mxu0 %v5986
    %5996 = vmatprep.subr.mxu0 0.0
    %5997 = vmatpush1.msra.mxu0 %v5988
    %5998 = vmatprep.subr.mxu0 0.0
    %5999 = vmatpush1.msra.mxu0 0.0
    %6000 = vmatprep.subr.mxu0 0.0
    %6001 = vmatpush1.msra.mxu0 0.0
    %6002 = vmatprep.subr.mxu0 0.0
    %6003 = vmatpush1.msra.mxu0 0.0
    %6004 = vmatprep.subr.mxu0 0.0
    %6005 = vmatpush1.msra.mxu0 0.0
    %6006 = vmatprep.subr.mxu0 0.0
    %6007 = vmatpush1.msra.mxu0 0.0
    %6008 = vmatprep.subr.mxu0 0.0
    %6009 = vmatpush1.msra.mxu0 0.0
    %6010 = vmatprep.subr.mxu0 0.0
    %6011 = vmatpush1.msra.mxu0 0.0
    %6012 = vmatprep.subr.mxu0 0.0
    %6013 = vmatpush1.msra.mxu0 0.0
    %6014 = vmatprep.subr.mxu0 0.0
    %6015 = vmatpush1.msra.mxu0 0.0
    %6016 = vmatprep.subr.mxu0 0.0
    %6017 = vmatpush1.msra.mxu0 0.0
    %6018 = vmatprep.subr.mxu0 0.0
    %6019 = vmatpush1.msra.mxu0 0.0
    %6020 = vmatprep.subr.mxu0 0.0
    %6021 = vmatpush1.msra.mxu0 0.0
    %6022 = vmatprep.subr.mxu0 0.0
    %6023 = vmatpush1.msra.mxu0 0.0
    %6024 = vmatprep.subr.mxu0 0.0
    %6025 = vmatpush1.msra.mxu0 0.0
    %6026 = vmatprep.subr.mxu0 0.0
    %6027 = vmatpush1.msra.mxu0 0.0
    %6028 = vmatprep.subr.mxu0 0.0
    %6029 = vmatpush1.msra.mxu0 0.0
    %6030 = vmatprep.subr.mxu0 0.0
    %6031 = vmatpush1.msra.mxu0 0.0
    %6032 = vmatprep.subr.mxu0 0.0
    %6033 = vmatpush1.msra.mxu0 0.0
    %6034 = vmatprep.subr.mxu0 0.0
    %6035 = vmatpush1.msra.mxu0 0.0
    %6036 = vmatprep.subr.mxu0 0.0
    %6037 = vmatpush1.msra.mxu0 0.0
    %6038 = vmatprep.subr.mxu0 0.0
    %6039 = vmatpush1.msra.mxu0 0.0
    %6040 = vmatprep.subr.mxu0 0.0
    %6041 = vmatpush1.msra.mxu0 0.0
    %6042 = vmatprep.subr.mxu0 0.0
    %6043 = vmatpush1.msra.mxu0 0.0
    %6044 = vmatprep.subr.mxu0 0.0
    %6045 = vmatpush1.msra.mxu0 0.0
    %6046 = vmatprep.subr.mxu0 0.0
    %6047 = vmatpush1.msra.mxu0 0.0
    %6048 = vmatprep.subr.mxu0 0.0
    %6049 = vmatpush1.msra.mxu0 0.0
    %6050 = vmatprep.subr.mxu0 0.0
    %6051 = vmatpush1.msra.mxu0 0.0
    %6052 = vmatprep.subr.mxu0 0.0
    %6053 = vmatpush1.msra.mxu0 0.0
    %6054 = vmatprep.subr.mxu0 0.0
    %6055 = vmatpush1.msra.mxu0 0.0
    %6056 = vmatprep.subr.mxu0 0.0
    %6057 = vmatpush1.msra.mxu0 0.0
    %6058 = vmatprep.mubr.f32.mxu0 0.0
    %6059 = vmatmul.mubr.f32.gmra.mrb[0].mxu0 %v5992
    %v6060 = vpop.f32.mrb[0].mxu0
    %v6061 = vadd.f32 0.0, %v6060
    %v6062 = vpop.f32.mrb[0].mxu0
    %6063 = vdwg.mxu0
    %6064 = vxpose.xlu0.b32.start [1/16] %v5503, 128
    %6065 = vxpose.xlu0.b32.cont [2/16] %v5504, 128
    %6066 = vxpose.xlu0.b32.cont [3/16] 0.0, 128
    %6067 = vxpose.xlu0.b32.cont [4/16] 0.0, 128
    %6068 = vxpose.xlu0.b32.cont [5/16] 0.0, 128
    %6069 = vxpose.xlu0.b32.cont [6/16] 0.0, 128
    %6070 = vxpose.xlu0.b32.cont [7/16] 0.0, 128
    %6071 = vxpose.xlu0.b32.cont [8/16] 0.0, 128
    %6072 = vxpose.xlu0.b32.cont [9/16] 0.0, 128
    %6073 = vxpose.xlu0.b32.cont [10/16] 0.0, 128
    %6074 = vxpose.xlu0.b32.cont [11/16] 0.0, 128
    %6075 = vxpose.xlu0.b32.cont [12/16] 0.0, 128
    %6076 = vxpose.xlu0.b32.cont [13/16] 0.0, 128
    %6077 = vxpose.xlu0.b32.cont [14/16] 0.0, 128
    %6078 = vxpose.xlu0.b32.cont [15/16] 0.0, 128
    %6079 = vxpose.xlu0.b32.end [16/16] 0.0, 128
    %v6080 = vpop.trf.xlu0
    %v6081 = vpop.trf.xlu0
    %v6082 = vpop.trf.xlu0
    %v6083 = vpop.trf.xlu0
    %v6084 = vpop.trf.xlu0
    %v6085 = vpop.trf.xlu0
    %v6086 = vpop.trf.xlu0
    %v6087 = vpop.trf.xlu0
    %v6088 = vpop.trf.xlu0
    %v6089 = vpop.trf.xlu0
    %v6090 = vpop.trf.xlu0
    %v6091 = vpop.trf.xlu0
    %v6092 = vpop.trf.xlu0
    %v6093 = vpop.trf.xlu0
    %v6094 = vpop.trf.xlu0
    %v6095 = vpop.trf.xlu0
    %6096 = vrot.lane.b32.xlu0 %v4193, 64
    %v6097 = vpop.permute.xlu0 %6096
    %6098 = vrot.lane.b32.xlu0 %v4195, 64
    %v6099 = vpop.permute.xlu0 %6098
    %v6103 = vsel %vm983, %v6080, 0
    %6105 = vmatprep.subr.mxu0 0.0
    %6106 = vmatpush1.msra.mxu0 %v6097
    %6107 = vmatprep.subr.mxu0 0.0
    %6108 = vmatpush1.msra.mxu0 %v6099
    %6109 = vmatprep.subr.mxu0 0.0
    %6110 = vmatpush1.msra.mxu0 0.0
    %6111 = vmatprep.subr.mxu0 0.0
    %6112 = vmatpush1.msra.mxu0 0.0
    %6113 = vmatprep.subr.mxu0 0.0
    %6114 = vmatpush1.msra.mxu0 0.0
    %6115 = vmatprep.subr.mxu0 0.0
    %6116 = vmatpush1.msra.mxu0 0.0
    %6117 = vmatprep.subr.mxu0 0.0
    %6118 = vmatpush1.msra.mxu0 0.0
    %6119 = vmatprep.subr.mxu0 0.0
    %6120 = vmatpush1.msra.mxu0 0.0
    %6121 = vmatprep.subr.mxu0 0.0
    %6122 = vmatpush1.msra.mxu0 0.0
    %6123 = vmatprep.subr.mxu0 0.0
    %6124 = vmatpush1.msra.mxu0 0.0
    %6125 = vmatprep.subr.mxu0 0.0
    %6126 = vmatpush1.msra.mxu0 0.0
    %6127 = vmatprep.subr.mxu0 0.0
    %6128 = vmatpush1.msra.mxu0 0.0
    %6129 = vmatprep.subr.mxu0 0.0
    %6130 = vmatpush1.msra.mxu0 0.0
    %6131 = vmatprep.subr.mxu0 0.0
    %6132 = vmatpush1.msra.mxu0 0.0
    %6133 = vmatprep.subr.mxu0 0.0
    %6134 = vmatpush1.msra.mxu0 0.0
    %6135 = vmatprep.subr.mxu0 0.0
    %6136 = vmatpush1.msra.mxu0 0.0
    %6137 = vmatprep.subr.mxu0 0.0
    %6138 = vmatpush1.msra.mxu0 0.0
    %6139 = vmatprep.subr.mxu0 0.0
    %6140 = vmatpush1.msra.mxu0 0.0
    %6141 = vmatprep.subr.mxu0 0.0
    %6142 = vmatpush1.msra.mxu0 0.0
    %6143 = vmatprep.subr.mxu0 0.0
    %6144 = vmatpush1.msra.mxu0 0.0
    %6145 = vmatprep.subr.mxu0 0.0
    %6146 = vmatpush1.msra.mxu0 0.0
    %6147 = vmatprep.subr.mxu0 0.0
    %6148 = vmatpush1.msra.mxu0 0.0
    %6149 = vmatprep.subr.mxu0 0.0
    %6150 = vmatpush1.msra.mxu0 0.0
    %6151 = vmatprep.subr.mxu0 0.0
    %6152 = vmatpush1.msra.mxu0 0.0
    %6153 = vmatprep.subr.mxu0 0.0
    %6154 = vmatpush1.msra.mxu0 0.0
    %6155 = vmatprep.subr.mxu0 0.0
    %6156 = vmatpush1.msra.mxu0 0.0
    %6157 = vmatprep.subr.mxu0 0.0
    %6158 = vmatpush1.msra.mxu0 0.0
    %6159 = vmatprep.subr.mxu0 0.0
    %6160 = vmatpush1.msra.mxu0 0.0
    %6161 = vmatprep.subr.mxu0 0.0
    %6162 = vmatpush1.msra.mxu0 0.0
    %6163 = vmatprep.subr.mxu0 0.0
    %6164 = vmatpush1.msra.mxu0 0.0
    %6165 = vmatprep.subr.mxu0 0.0
    %6166 = vmatpush1.msra.mxu0 0.0
    %6167 = vmatprep.subr.mxu0 0.0
    %6168 = vmatpush1.msra.mxu0 0.0
    %6169 = vmatprep.mubr.f32.mxu0 0.0
    %6170 = vmatmul.mubr.f32.gmra.mrb[0].mxu0 %v6103
    %v6171 = vpop.f32.mrb[0].mxu0
    %v6172 = vadd.f32 0.0, %v6171
    %v6173 = vpop.f32.mrb[0].mxu0
    %6174 = vdwg.mxu0
    %6175 = vxpose.xlu0.b32.start [1/16] %v5505, 128
    %6176 = vxpose.xlu0.b32.cont [2/16] %v5506, 128
    %6177 = vxpose.xlu0.b32.cont [3/16] 0.0, 128
    %6178 = vxpose.xlu0.b32.cont [4/16] 0.0, 128
    %6179 = vxpose.xlu0.b32.cont [5/16] 0.0, 128
    %6180 = vxpose.xlu0.b32.cont [6/16] 0.0, 128
    %6181 = vxpose.xlu0.b32.cont [7/16] 0.0, 128
    %6182 = vxpose.xlu0.b32.cont [8/16] 0.0, 128
    %6183 = vxpose.xlu0.b32.cont [9/16] 0.0, 128
    %6184 = vxpose.xlu0.b32.cont [10/16] 0.0, 128
    %6185 = vxpose.xlu0.b32.cont [11/16] 0.0, 128
    %6186 = vxpose.xlu0.b32.cont [12/16] 0.0, 128
    %6187 = vxpose.xlu0.b32.cont [13/16] 0.0, 128
    %6188 = vxpose.xlu0.b32.cont [14/16] 0.0, 128
    %6189 = vxpose.xlu0.b32.cont [15/16] 0.0, 128
    %6190 = vxpose.xlu0.b32.end [16/16] 0.0, 128
    %v6191 = vpop.trf.xlu0
    %v6192 = vpop.trf.xlu0
    %v6193 = vpop.trf.xlu0
    %v6194 = vpop.trf.xlu0
    %v6195 = vpop.trf.xlu0
    %v6196 = vpop.trf.xlu0
    %v6197 = vpop.trf.xlu0
    %v6198 = vpop.trf.xlu0
    %v6199 = vpop.trf.xlu0
    %v6200 = vpop.trf.xlu0
    %v6201 = vpop.trf.xlu0
    %v6202 = vpop.trf.xlu0
    %v6203 = vpop.trf.xlu0
    %v6204 = vpop.trf.xlu0
    %v6205 = vpop.trf.xlu0
    %v6206 = vpop.trf.xlu0
    %6207 = vrot.lane.b32.xlu0 %v4197, 64
    %v6208 = vpop.permute.xlu0 %6207
    %6209 = vrot.lane.b32.xlu0 %v4199, 64
    %v6210 = vpop.permute.xlu0 %6209
    %v6214 = vsel %vm983, %v6191, 0
    %6216 = vmatprep.subr.mxu0 0.0
    %6217 = vmatpush1.msra.mxu0 %v6208
    %6218 = vmatprep.subr.mxu0 0.0
    %6219 = vmatpush1.msra.mxu0 %v6210
    %6220 = vmatprep.subr.mxu0 0.0
    %6221 = vmatpush1.msra.mxu0 0.0
    %6222 = vmatprep.subr.mxu0 0.0
    %6223 = vmatpush1.msra.mxu0 0.0
    %6224 = vmatprep.subr.mxu0 0.0
    %6225 = vmatpush1.msra.mxu0 0.0
    %6226 = vmatprep.subr.mxu0 0.0
    %6227 = vmatpush1.msra.mxu0 0.0
    %6228 = vmatprep.subr.mxu0 0.0
    %6229 = vmatpush1.msra.mxu0 0.0
    %6230 = vmatprep.subr.mxu0 0.0
    %6231 = vmatpush1.msra.mxu0 0.0
    %6232 = vmatprep.subr.mxu0 0.0
    %6233 = vmatpush1.msra.mxu0 0.0
    %6234 = vmatprep.subr.mxu0 0.0
    %6235 = vmatpush1.msra.mxu0 0.0
    %6236 = vmatprep.subr.mxu0 0.0
    %6237 = vmatpush1.msra.mxu0 0.0
    %6238 = vmatprep.subr.mxu0 0.0
    %6239 = vmatpush1.msra.mxu0 0.0
    %6240 = vmatprep.subr.mxu0 0.0
    %6241 = vmatpush1.msra.mxu0 0.0
    %6242 = vmatprep.subr.mxu0 0.0
    %6243 = vmatpush1.msra.mxu0 0.0
    %6244 = vmatprep.subr.mxu0 0.0
    %6245 = vmatpush1.msra.mxu0 0.0
    %6246 = vmatprep.subr.mxu0 0.0
    %6247 = vmatpush1.msra.mxu0 0.0
    %6248 = vmatprep.subr.mxu0 0.0
    %6249 = vmatpush1.msra.mxu0 0.0
    %6250 = vmatprep.subr.mxu0 0.0
    %6251 = vmatpush1.msra.mxu0 0.0
    %6252 = vmatprep.subr.mxu0 0.0
    %6253 = vmatpush1.msra.mxu0 0.0
    %6254 = vmatprep.subr.mxu0 0.0
    %6255 = vmatpush1.msra.mxu0 0.0
    %6256 = vmatprep.subr.mxu0 0.0
    %6257 = vmatpush1.msra.mxu0 0.0
    %6258 = vmatprep.subr.mxu0 0.0
    %6259 = vmatpush1.msra.mxu0 0.0
    %6260 = vmatprep.subr.mxu0 0.0
    %6261 = vmatpush1.msra.mxu0 0.0
    %6262 = vmatprep.subr.mxu0 0.0
    %6263 = vmatpush1.msra.mxu0 0.0
    %6264 = vmatprep.subr.mxu0 0.0
    %6265 = vmatpush1.msra.mxu0 0.0
    %6266 = vmatprep.subr.mxu0 0.0
    %6267 = vmatpush1.msra.mxu0 0.0
    %6268 = vmatprep.subr.mxu0 0.0
    %6269 = vmatpush1.msra.mxu0 0.0
    %6270 = vmatprep.subr.mxu0 0.0
    %6271 = vmatpush1.msra.mxu0 0.0
    %6272 = vmatprep.subr.mxu0 0.0
    %6273 = vmatpush1.msra.mxu0 0.0
    %6274 = vmatprep.subr.mxu0 0.0
    %6275 = vmatpush1.msra.mxu0 0.0
    %6276 = vmatprep.subr.mxu0 0.0
    %6277 = vmatpush1.msra.mxu0 0.0
    %6278 = vmatprep.subr.mxu0 0.0
    %6279 = vmatpush1.msra.mxu0 0.0
    %6280 = vmatprep.mubr.f32.mxu0 0.0
    %6281 = vmatmul.mubr.f32.gmra.mrb[0].mxu0 %v6214
    %v6282 = vpop.f32.mrb[0].mxu0
    %v6283 = vadd.f32 0.0, %v6282
    %v6284 = vpop.f32.mrb[0].mxu0
    %6285 = vdwg.mxu0
    %6286 = vxpose.xlu0.b32.start [1/16] %v5507, 128
    %6287 = vxpose.xlu0.b32.cont [2/16] %v5508, 128
    %6288 = vxpose.xlu0.b32.cont [3/16] 0.0, 128
    %6289 = vxpose.xlu0.b32.cont [4/16] 0.0, 128
    %6290 = vxpose.xlu0.b32.cont [5/16] 0.0, 128
    %6291 = vxpose.xlu0.b32.cont [6/16] 0.0, 128
    %6292 = vxpose.xlu0.b32.cont [7/16] 0.0, 128
    %6293 = vxpose.xlu0.b32.cont [8/16] 0.0, 128
    %6294 = vxpose.xlu0.b32.cont [9/16] 0.0, 128
    %6295 = vxpose.xlu0.b32.cont [10/16] 0.0, 128
    %6296 = vxpose.xlu0.b32.cont [11/16] 0.0, 128
    %6297 = vxpose.xlu0.b32.cont [12/16] 0.0, 128
    %6298 = vxpose.xlu0.b32.cont [13/16] 0.0, 128
    %6299 = vxpose.xlu0.b32.cont [14/16] 0.0, 128
    %6300 = vxpose.xlu0.b32.cont [15/16] 0.0, 128
    %6301 = vxpose.xlu0.b32.end [16/16] 0.0, 128
    %v6302 = vpop.trf.xlu0
    %v6303 = vpop.trf.xlu0
    %v6304 = vpop.trf.xlu0
    %v6305 = vpop.trf.xlu0
    %v6306 = vpop.trf.xlu0
    %v6307 = vpop.trf.xlu0
    %v6308 = vpop.trf.xlu0
    %v6309 = vpop.trf.xlu0
    %v6310 = vpop.trf.xlu0
    %v6311 = vpop.trf.xlu0
    %v6312 = vpop.trf.xlu0
    %v6313 = vpop.trf.xlu0
    %v6314 = vpop.trf.xlu0
    %v6315 = vpop.trf.xlu0
    %v6316 = vpop.trf.xlu0
    %v6317 = vpop.trf.xlu0
    %6318 = vrot.lane.b32.xlu0 %v4201, 64
    %v6319 = vpop.permute.xlu0 %6318
    %6320 = vrot.lane.b32.xlu0 %v4203, 64
    %v6321 = vpop.permute.xlu0 %6320
    %v6325 = vsel %vm983, %v6302, 0
    %6327 = vmatprep.subr.mxu0 0.0
    %6328 = vmatpush1.msra.mxu0 %v6319
    %6329 = vmatprep.subr.mxu0 0.0
    %6330 = vmatpush1.msra.mxu0 %v6321
    %6331 = vmatprep.subr.mxu0 0.0
    %6332 = vmatpush1.msra.mxu0 0.0
    %6333 = vmatprep.subr.mxu0 0.0
    %6334 = vmatpush1.msra.mxu0 0.0
    %6335 = vmatprep.subr.mxu0 0.0
    %6336 = vmatpush1.msra.mxu0 0.0
    %6337 = vmatprep.subr.mxu0 0.0
    %6338 = vmatpush1.msra.mxu0 0.0
    %6339 = vmatprep.subr.mxu0 0.0
    %6340 = vmatpush1.msra.mxu0 0.0
    %6341 = vmatprep.subr.mxu0 0.0
    %6342 = vmatpush1.msra.mxu0 0.0
    %6343 = vmatprep.subr.mxu0 0.0
    %6344 = vmatpush1.msra.mxu0 0.0
    %6345 = vmatprep.subr.mxu0 0.0
    %6346 = vmatpush1.msra.mxu0 0.0
    %6347 = vmatprep.subr.mxu0 0.0
    %6348 = vmatpush1.msra.mxu0 0.0
    %6349 = vmatprep.subr.mxu0 0.0
    %6350 = vmatpush1.msra.mxu0 0.0
    %6351 = vmatprep.subr.mxu0 0.0
    %6352 = vmatpush1.msra.mxu0 0.0
    %6353 = vmatprep.subr.mxu0 0.0
    %6354 = vmatpush1.msra.mxu0 0.0
    %6355 = vmatprep.subr.mxu0 0.0
    %6356 = vmatpush1.msra.mxu0 0.0
    %6357 = vmatprep.subr.mxu0 0.0
    %6358 = vmatpush1.msra.mxu0 0.0
    %6359 = vmatprep.subr.mxu0 0.0
    %6360 = vmatpush1.msra.mxu0 0.0
    %6361 = vmatprep.subr.mxu0 0.0
    %6362 = vmatpush1.msra.mxu0 0.0
    %6363 = vmatprep.subr.mxu0 0.0
    %6364 = vmatpush1.msra.mxu0 0.0
    %6365 = vmatprep.subr.mxu0 0.0
    %6366 = vmatpush1.msra.mxu0 0.0
    %6367 = vmatprep.subr.mxu0 0.0
    %6368 = vmatpush1.msra.mxu0 0.0
    %6369 = vmatprep.subr.mxu0 0.0
    %6370 = vmatpush1.msra.mxu0 0.0
    %6371 = vmatprep.subr.mxu0 0.0
    %6372 = vmatpush1.msra.mxu0 0.0
    %6373 = vmatprep.subr.mxu0 0.0
    %6374 = vmatpush1.msra.mxu0 0.0
    %6375 = vmatprep.subr.mxu0 0.0
    %6376 = vmatpush1.msra.mxu0 0.0
    %6377 = vmatprep.subr.mxu0 0.0
    %6378 = vmatpush1.msra.mxu0 0.0
    %6379 = vmatprep.subr.mxu0 0.0
    %6380 = vmatpush1.msra.mxu0 0.0
    %6381 = vmatprep.subr.mxu0 0.0
    %6382 = vmatpush1.msra.mxu0 0.0
    %6383 = vmatprep.subr.mxu0 0.0
    %6384 = vmatpush1.msra.mxu0 0.0
    %6385 = vmatprep.subr.mxu0 0.0
    %6386 = vmatpush1.msra.mxu0 0.0
    %6387 = vmatprep.subr.mxu0 0.0
    %6388 = vmatpush1.msra.mxu0 0.0
    %6389 = vmatprep.subr.mxu0 0.0
    %6390 = vmatpush1.msra.mxu0 0.0
    %6391 = vmatprep.mubr.f32.mxu0 0.0
    %6392 = vmatmul.mubr.f32.gmra.mrb[0].mxu0 %v6325
    %v6393 = vpop.f32.mrb[0].mxu0
    %v6394 = vadd.f32 0.0, %v6393
    %v6395 = vpop.f32.mrb[0].mxu0
    %6396 = vdwg.mxu0
    %v6397 = vcombine.low %v5617, %v5839
    %v6398 = vcombine.high %v5617, %v5839
    %v6400 = vunpack.c.l.s4 1983009808
    %v6401 = vunpack.c.0.s8 %v6400
    %v6402 = vlaneseq
    %v6403 = vshrl.u32 %v6402, 7
    %v6404 = vsub.s32 %v6401, %v6403
    %v6405 = vrot.slane %v6397, %v6404
    %v6407 = vunpack.c.l.s4 1983009808
    %v6408 = vunpack.c.0.s8 %v6407
    %v6409 = vlaneseq
    %v6410 = vshrl.u32 %v6409, 7
    %v6411 = vsub.s32 %v6408, %v6410
    %v6412 = vrot.slane %v6398, %v6411
    %v6413 = vcombine.low %v5728, %v5950
    %v6414 = vcombine.high %v5728, %v5950
    %v6416 = vunpack.c.l.s4 1983009808
    %v6417 = vunpack.c.0.s8 %v6416
    %v6418 = vlaneseq
    %v6419 = vshrl.u32 %v6418, 7
    %v6420 = vsub.s32 %v6417, %v6419
    %v6421 = vrot.slane %v6413, %v6420
    %v6423 = vunpack.c.l.s4 1983009808
    %v6424 = vunpack.c.0.s8 %v6423
    %v6425 = vlaneseq
    %v6426 = vshrl.u32 %v6425, 7
    %v6427 = vsub.s32 %v6424, %v6426
    %v6428 = vrot.slane %v6414, %v6427
    %v6429 = vcombine.low %v6061, %v6283
    %v6430 = vcombine.high %v6061, %v6283
    %v6432 = vunpack.c.l.s4 1983009808
    %v6433 = vunpack.c.0.s8 %v6432
    %v6434 = vlaneseq
    %v6435 = vshrl.u32 %v6434, 7
    %v6436 = vsub.s32 %v6433, %v6435
    %v6437 = vrot.slane %v6429, %v6436
    %v6439 = vunpack.c.l.s4 1983009808
    %v6440 = vunpack.c.0.s8 %v6439
    %v6441 = vlaneseq
    %v6442 = vshrl.u32 %v6441, 7
    %v6443 = vsub.s32 %v6440, %v6442
    %v6444 = vrot.slane %v6430, %v6443
    %v6445 = vcombine.low %v6172, %v6394
    %v6446 = vcombine.high %v6172, %v6394
    %v6448 = vunpack.c.l.s4 1983009808
    %v6449 = vunpack.c.0.s8 %v6448
    %v6450 = vlaneseq
    %v6451 = vshrl.u32 %v6450, 7
    %v6452 = vsub.s32 %v6449, %v6451
    %v6453 = vrot.slane %v6445, %v6452
    %v6455 = vunpack.c.l.s4 1983009808
    %v6456 = vunpack.c.0.s8 %v6455
    %v6457 = vlaneseq
    %v6458 = vshrl.u32 %v6457, 7
    %v6459 = vsub.s32 %v6456, %v6458
    %v6460 = vrot.slane %v6446, %v6459
    %v6461 = vcombine.low %v6405, %v6421
    %v6462 = vcombine.high %v6405, %v6421
    %v6464 = vunpack.c.l.s4 1934713408
    %v6465 = vunpack.c.0.s8 %v6464
    %v6466 = vlaneseq
    %v6467 = vshrl.u32 %v6466, 7
    %v6468 = vsub.s32 %v6465, %v6467
    %v6469 = vrot.slane %v6461, %v6468
    %v6471 = vunpack.c.l.s4 1934713408
    %v6472 = vunpack.c.0.s8 %v6471
    %v6473 = vlaneseq
    %v6474 = vshrl.u32 %v6473, 7
    %v6475 = vsub.s32 %v6472, %v6474
    %v6476 = vrot.slane %v6462, %v6475
    %v6477 = vcombine.low %v6412, %v6428
    %v6478 = vcombine.high %v6412, %v6428
    %v6480 = vunpack.c.l.s4 1934713408
    %v6481 = vunpack.c.0.s8 %v6480
    %v6482 = vlaneseq
    %v6483 = vshrl.u32 %v6482, 7
    %v6484 = vsub.s32 %v6481, %v6483
    %v6485 = vrot.slane %v6477, %v6484
    %v6487 = vunpack.c.l.s4 1934713408
    %v6488 = vunpack.c.0.s8 %v6487
    %v6489 = vlaneseq
    %v6490 = vshrl.u32 %v6489, 7
    %v6491 = vsub.s32 %v6488, %v6490
    %v6492 = vrot.slane %v6478, %v6491
    %v6493 = vcombine.low %v6437, %v6453
    %v6494 = vcombine.high %v6437, %v6453
    %v6496 = vunpack.c.l.s4 1934713408
    %v6497 = vunpack.c.0.s8 %v6496
    %v6498 = vlaneseq
    %v6499 = vshrl.u32 %v6498, 7
    %v6500 = vsub.s32 %v6497, %v6499
    %v6501 = vrot.slane %v6493, %v6500
    %v6503 = vunpack.c.l.s4 1934713408
    %v6504 = vunpack.c.0.s8 %v6503
    %v6505 = vlaneseq
    %v6506 = vshrl.u32 %v6505, 7
    %v6507 = vsub.s32 %v6504, %v6506
    %v6508 = vrot.slane %v6494, %v6507
    %v6509 = vcombine.low %v6444, %v6460
    %v6510 = vcombine.high %v6444, %v6460
    %v6512 = vunpack.c.l.s4 1934713408
    %v6513 = vunpack.c.0.s8 %v6512
    %v6514 = vlaneseq
    %v6515 = vshrl.u32 %v6514, 7
    %v6516 = vsub.s32 %v6513, %v6515
    %v6517 = vrot.slane %v6509, %v6516
    %v6519 = vunpack.c.l.s4 1934713408
    %v6520 = vunpack.c.0.s8 %v6519
    %v6521 = vlaneseq
    %v6522 = vshrl.u32 %v6521, 7
    %v6523 = vsub.s32 %v6520, %v6522
    %v6524 = vrot.slane %v6510, %v6523
    %v6525 = vcombine.low %v6469, %v6501
    %v6526 = vcombine.high %v6469, %v6501
    %v6527 = vcombine.low %v6476, %v6508
    %v6528 = vcombine.high %v6476, %v6508
    %v6529 = vcombine.low %v6485, %v6517
    %v6530 = vcombine.high %v6485, %v6517
    %v6531 = vcombine.low %v6492, %v6524
    %v6532 = vcombine.high %v6492, %v6524
    %v6533 = vcombine.low %v6525, %v6527
    %v6534 = vcombine.high %v6525, %v6527
    %v6536 = vunpack.c.l.s4 1983009808
    %v6537 = vunpack.c.0.s8 %v6536
    %v6538 = vlaneseq
    %v6539 = vshrl.u32 %v6538, 7
    %v6540 = vsub.s32 %v6537, %v6539
    %v6541 = vrot.slane %v6533, %v6540
    %v6543 = vunpack.c.l.s4 1983009808
    %v6544 = vunpack.c.0.s8 %v6543
    %v6545 = vlaneseq
    %v6546 = vshrl.u32 %v6545, 7
    %v6547 = vsub.s32 %v6544, %v6546
    %v6548 = vrot.slane %v6534, %v6547
    %v6549 = vcombine.low %v6526, %v6528
    %v6550 = vcombine.high %v6526, %v6528
    %v6552 = vunpack.c.l.s4 1983009808
    %v6553 = vunpack.c.0.s8 %v6552
    %v6554 = vlaneseq
    %v6555 = vshrl.u32 %v6554, 7
    %v6556 = vsub.s32 %v6553, %v6555
    %v6557 = vrot.slane %v6549, %v6556
    %v6559 = vunpack.c.l.s4 1983009808
    %v6560 = vunpack.c.0.s8 %v6559
    %v6561 = vlaneseq
    %v6562 = vshrl.u32 %v6561, 7
    %v6563 = vsub.s32 %v6560, %v6562
    %v6564 = vrot.slane %v6550, %v6563
    %v6565 = vcombine.low %v6529, %v6531
    %v6566 = vcombine.high %v6529, %v6531
    %v6568 = vunpack.c.l.s4 1983009808
    %v6569 = vunpack.c.0.s8 %v6568
    %v6570 = vlaneseq
    %v6571 = vshrl.u32 %v6570, 7
    %v6572 = vsub.s32 %v6569, %v6571
    %v6573 = vrot.slane %v6565, %v6572
    %v6575 = vunpack.c.l.s4 1983009808
    %v6576 = vunpack.c.0.s8 %v6575
    %v6577 = vlaneseq
    %v6578 = vshrl.u32 %v6577, 7
    %v6579 = vsub.s32 %v6576, %v6578
    %v6580 = vrot.slane %v6566, %v6579
    %v6581 = vcombine.low %v6530, %v6532
    %v6582 = vcombine.high %v6530, %v6532
    %v6584 = vunpack.c.l.s4 1983009808
    %v6585 = vunpack.c.0.s8 %v6584
    %v6586 = vlaneseq
    %v6587 = vshrl.u32 %v6586, 7
    %v6588 = vsub.s32 %v6585, %v6587
    %v6589 = vrot.slane %v6581, %v6588
    %v6591 = vunpack.c.l.s4 1983009808
    %v6592 = vunpack.c.0.s8 %v6591
    %v6593 = vlaneseq
    %v6594 = vshrl.u32 %v6593, 7
    %v6595 = vsub.s32 %v6592, %v6594
    %v6596 = vrot.slane %v6582, %v6595
    %v6597 = vcombine.low %v6541, %v6557
    %v6598 = vcombine.high %v6541, %v6557
    %v6600 = vunpack.c.l.s4 1934713408
    %v6601 = vunpack.c.0.s8 %v6600
    %v6602 = vlaneseq
    %v6603 = vshrl.u32 %v6602, 7
    %v6604 = vsub.s32 %v6601, %v6603
    %v6605 = vrot.slane %v6597, %v6604
    %v6607 = vunpack.c.l.s4 1934713408
    %v6608 = vunpack.c.0.s8 %v6607
    %v6609 = vlaneseq
    %v6610 = vshrl.u32 %v6609, 7
    %v6611 = vsub.s32 %v6608, %v6610
    %v6612 = vrot.slane %v6598, %v6611
    %v6613 = vcombine.low %v6548, %v6564
    %v6614 = vcombine.high %v6548, %v6564
    %v6616 = vunpack.c.l.s4 1934713408
    %v6617 = vunpack.c.0.s8 %v6616
    %v6618 = vlaneseq
    %v6619 = vshrl.u32 %v6618, 7
    %v6620 = vsub.s32 %v6617, %v6619
    %v6621 = vrot.slane %v6613, %v6620
    %v6623 = vunpack.c.l.s4 1934713408
    %v6624 = vunpack.c.0.s8 %v6623
    %v6625 = vlaneseq
    %v6626 = vshrl.u32 %v6625, 7
    %v6627 = vsub.s32 %v6624, %v6626
    %v6628 = vrot.slane %v6614, %v6627
    %v6629 = vcombine.low %v6573, %v6589
    %v6630 = vcombine.high %v6573, %v6589
    %v6632 = vunpack.c.l.s4 1934713408
    %v6633 = vunpack.c.0.s8 %v6632
    %v6634 = vlaneseq
    %v6635 = vshrl.u32 %v6634, 7
    %v6636 = vsub.s32 %v6633, %v6635
    %v6637 = vrot.slane %v6629, %v6636
    %v6639 = vunpack.c.l.s4 1934713408
    %v6640 = vunpack.c.0.s8 %v6639
    %v6641 = vlaneseq
    %v6642 = vshrl.u32 %v6641, 7
    %v6643 = vsub.s32 %v6640, %v6642
    %v6644 = vrot.slane %v6630, %v6643
    %v6645 = vcombine.low %v6580, %v6596
    %v6646 = vcombine.high %v6580, %v6596
    %v6648 = vunpack.c.l.s4 1934713408
    %v6649 = vunpack.c.0.s8 %v6648
    %v6650 = vlaneseq
    %v6651 = vshrl.u32 %v6650, 7
    %v6652 = vsub.s32 %v6649, %v6651
    %v6653 = vrot.slane %v6645, %v6652
    %v6655 = vunpack.c.l.s4 1934713408
    %v6656 = vunpack.c.0.s8 %v6655
    %v6657 = vlaneseq
    %v6658 = vshrl.u32 %v6657, 7
    %v6659 = vsub.s32 %v6656, %v6658
    %v6660 = vrot.slane %v6646, %v6659
    %v6661 = vcombine.low %v6605, %v6637
    %v6662 = vcombine.high %v6605, %v6637
    %v6663 = vcombine.low %v6612, %v6644
    %v6664 = vcombine.high %v6612, %v6644
    %v6665 = vcombine.low %v6621, %v6653
    %v6666 = vcombine.high %v6621, %v6653
    %v6667 = vcombine.low %v6628, %v6660
    %v6668 = vcombine.high %v6628, %v6660
    %6670 = vrot.lane.b32.xlu0 %v6662, 8
    %v6671 = vpop.permute.xlu0 %6670
    %6674 = vrot.lane.b32.xlu0 %v6663, 16
    %v6675 = vpop.permute.xlu0 %6674
    %6678 = vrot.lane.b32.xlu0 %v6664, 24
    %v6679 = vpop.permute.xlu0 %6678
    %6682 = vrot.lane.b32.xlu0 %v6665, 32
    %v6683 = vpop.permute.xlu0 %6682
    %6686 = vrot.lane.b32.xlu0 %v6666, 40
    %v6687 = vpop.permute.xlu0 %6686
    %6690 = vrot.lane.b32.xlu0 %v6667, 48
    %v6691 = vpop.permute.xlu0 %6690
    %6694 = vrot.lane.b32.xlu0 %v6668, 56
    %v6695 = vpop.permute.xlu0 %6694
    %v6697 = vsel %vm284, %v6661, %v6671
    %v6698 = vsel %vm983, %v6697, %v6675
    %v6699 = vsel %vm2796, %v6698, %v6679
    %v6700 = vsel %vm85, %v6699, %v6683
    %v6701 = vsel %vm2799, %v6700, %v6687
    %v6702 = vsel %vm2801, %v6701, %v6691
    %v6703 = vsel %vm2803, %v6702, %v6695
    %6704 = vmatprep.subr.mxu0 0.0
    %6705 = vmatpush1.msra.mxu0 %v6703
    %6706 = vmatprep.subr.mxu0 0.0
    %6707 = vmatpush1.msra.mxu0 0.0
    %6708 = vmatprep.subr.mxu0 0.0
    %6709 = vmatpush1.msra.mxu0 0.0
    %6710 = vmatprep.subr.mxu0 0.0
    %6711 = vmatpush1.msra.mxu0 0.0
    %6712 = vmatprep.subr.mxu0 0.0
    %6713 = vmatpush1.msra.mxu0 0.0
    %6714 = vmatprep.subr.mxu0 0.0
    %6715 = vmatpush1.msra.mxu0 0.0
    %6716 = vmatprep.subr.mxu0 0.0
    %6717 = vmatpush1.msra.mxu0 0.0
    %6718 = vmatprep.subr.mxu0 0.0
    %6719 = vmatpush1.msra.mxu0 0.0
    %6720 = vmatprep.subr.mxu0 0.0
    %6721 = vmatpush1.msra.mxu0 0.0
    %6722 = vmatprep.subr.mxu0 0.0
    %6723 = vmatpush1.msra.mxu0 0.0
    %6724 = vmatprep.subr.mxu0 0.0
    %6725 = vmatpush1.msra.mxu0 0.0
    %6726 = vmatprep.subr.mxu0 0.0
    %6727 = vmatpush1.msra.mxu0 0.0
    %6728 = vmatprep.subr.mxu0 0.0
    %6729 = vmatpush1.msra.mxu0 0.0
    %6730 = vmatprep.subr.mxu0 0.0
    %6731 = vmatpush1.msra.mxu0 0.0
    %6732 = vmatprep.subr.mxu0 0.0
    %6733 = vmatpush1.msra.mxu0 0.0
    %6734 = vmatprep.subr.mxu0 0.0
    %6735 = vmatpush1.msra.mxu0 0.0
    %6736 = vmatprep.subr.mxu0 0.0
    %6737 = vmatpush1.msra.mxu0 0.0
    %6738 = vmatprep.subr.mxu0 0.0
    %6739 = vmatpush1.msra.mxu0 0.0
    %6740 = vmatprep.subr.mxu0 0.0
    %6741 = vmatpush1.msra.mxu0 0.0
    %6742 = vmatprep.subr.mxu0 0.0
    %6743 = vmatpush1.msra.mxu0 0.0
    %6744 = vmatprep.subr.mxu0 0.0
    %6745 = vmatpush1.msra.mxu0 0.0
    %6746 = vmatprep.subr.mxu0 0.0
    %6747 = vmatpush1.msra.mxu0 0.0
    %6748 = vmatprep.subr.mxu0 0.0
    %6749 = vmatpush1.msra.mxu0 0.0
    %6750 = vmatprep.subr.mxu0 0.0
    %6751 = vmatpush1.msra.mxu0 0.0
    %6752 = vmatprep.subr.mxu0 0.0
    %6753 = vmatpush1.msra.mxu0 0.0
    %6754 = vmatprep.subr.mxu0 0.0
    %6755 = vmatpush1.msra.mxu0 0.0
    %6756 = vmatprep.subr.mxu0 0.0
    %6757 = vmatpush1.msra.mxu0 0.0
    %6758 = vmatprep.subr.mxu0 0.0
    %6759 = vmatpush1.msra.mxu0 0.0
    %6760 = vmatprep.subr.mxu0 0.0
    %6761 = vmatpush1.msra.mxu0 0.0
    %6762 = vmatprep.subr.mxu0 0.0
    %6763 = vmatpush1.msra.mxu0 0.0
    %6764 = vmatprep.subr.mxu0 0.0
    %6765 = vmatpush1.msra.mxu0 0.0
    %6766 = vmatprep.subr.mxu0 0.0
    %6767 = vmatpush1.msra.mxu0 0.0
    %6768 = vmatprep.mubr.f32.mxu0 0.0
    %6769 = vmatmul.mubr.f32.gmra.mrb[0].mxu0 %v2929
    %v6770 = vpop.f32.mrb[0].mxu0
    %v6771 = vadd.f32 %v2895, %v6770
    %v6772 = vpop.f32.mrb[0].mxu0
    %6773 = vmatprep.mubr.f32.mxu0 0.0
    %6774 = vmatmul.mubr.f32.gmra.mrb[0].mxu0 %v2932
    %v6775 = vpop.f32.mrb[0].mxu0
    %v6776 = vadd.f32 %v2895, %v6775
    %v6777 = vpop.f32.mrb[0].mxu0
    %6778 = vdwg.mxu0
    %6781 = vrot.lane.b32.xlu0 %v6771, 120
    %v6782 = vpop.permute.xlu0 %6781
    %6783 = vrot.lane.b32.xlu0 %v6776, 120
    %v6784 = vpop.permute.xlu0 %6783
    %6787 = vrot.lane.b32.xlu0 %v6771, 112
    %v6788 = vpop.permute.xlu0 %6787
    %6789 = vrot.lane.b32.xlu0 %v6776, 112
    %v6790 = vpop.permute.xlu0 %6789
    %6793 = vrot.lane.b32.xlu0 %v6771, 104
    %v6794 = vpop.permute.xlu0 %6793
    %6795 = vrot.lane.b32.xlu0 %v6776, 104
    %v6796 = vpop.permute.xlu0 %6795
    %6799 = vrot.lane.b32.xlu0 %v6771, 96
    %v6800 = vpop.permute.xlu0 %6799
    %6801 = vrot.lane.b32.xlu0 %v6776, 96
    %v6802 = vpop.permute.xlu0 %6801
    %6805 = vrot.lane.b32.xlu0 %v6771, 88
    %v6806 = vpop.permute.xlu0 %6805
    %6807 = vrot.lane.b32.xlu0 %v6776, 88
    %v6808 = vpop.permute.xlu0 %6807
    %6811 = vrot.lane.b32.xlu0 %v6771, 80
    %v6812 = vpop.permute.xlu0 %6811
    %6813 = vrot.lane.b32.xlu0 %v6776, 80
    %v6814 = vpop.permute.xlu0 %6813
    %6817 = vrot.lane.b32.xlu0 %v6771, 72
    %v6818 = vpop.permute.xlu0 %6817
    %6819 = vrot.lane.b32.xlu0 %v6776, 72
    %v6820 = vpop.permute.xlu0 %6819
    %v6823 = vcombine.low %v6771, %v6788
    %v6824 = vcombine.high %v6771, %v6788
    %v6826 = vunpack.c.l.s4 1983009808
    %v6827 = vunpack.c.0.s8 %v6826
    %v6828 = vlaneseq
    %v6829 = vshrl.u32 %v6828, 7
    %v6830 = vsub.s32 %v6827, %v6829
    %v6831 = vrot.slane %v6823, %v6830
    %v6833 = vunpack.c.l.s4 1983009808
    %v6834 = vunpack.c.0.s8 %v6833
    %v6835 = vlaneseq
    %v6836 = vshrl.u32 %v6835, 7
    %v6837 = vsub.s32 %v6834, %v6836
    %v6838 = vrot.slane %v6824, %v6837
    %v6839 = vcombine.low %v6782, %v6794
    %v6840 = vcombine.high %v6782, %v6794
    %v6842 = vunpack.c.l.s4 1983009808
    %v6843 = vunpack.c.0.s8 %v6842
    %v6844 = vlaneseq
    %v6845 = vshrl.u32 %v6844, 7
    %v6846 = vsub.s32 %v6843, %v6845
    %v6847 = vrot.slane %v6839, %v6846
    %v6849 = vunpack.c.l.s4 1983009808
    %v6850 = vunpack.c.0.s8 %v6849
    %v6851 = vlaneseq
    %v6852 = vshrl.u32 %v6851, 7
    %v6853 = vsub.s32 %v6850, %v6852
    %v6854 = vrot.slane %v6840, %v6853
    %v6855 = vcombine.low %v6800, %v6812
    %v6856 = vcombine.high %v6800, %v6812
    %v6858 = vunpack.c.l.s4 1983009808
    %v6859 = vunpack.c.0.s8 %v6858
    %v6860 = vlaneseq
    %v6861 = vshrl.u32 %v6860, 7
    %v6862 = vsub.s32 %v6859, %v6861
    %v6863 = vrot.slane %v6855, %v6862
    %v6865 = vunpack.c.l.s4 1983009808
    %v6866 = vunpack.c.0.s8 %v6865
    %v6867 = vlaneseq
    %v6868 = vshrl.u32 %v6867, 7
    %v6869 = vsub.s32 %v6866, %v6868
    %v6870 = vrot.slane %v6856, %v6869
    %v6871 = vcombine.low %v6806, %v6818
    %v6872 = vcombine.high %v6806, %v6818
    %v6874 = vunpack.c.l.s4 1983009808
    %v6875 = vunpack.c.0.s8 %v6874
    %v6876 = vlaneseq
    %v6877 = vshrl.u32 %v6876, 7
    %v6878 = vsub.s32 %v6875, %v6877
    %v6879 = vrot.slane %v6871, %v6878
    %v6881 = vunpack.c.l.s4 1983009808
    %v6882 = vunpack.c.0.s8 %v6881
    %v6883 = vlaneseq
    %v6884 = vshrl.u32 %v6883, 7
    %v6885 = vsub.s32 %v6882, %v6884
    %v6886 = vrot.slane %v6872, %v6885
    %v6887 = vcombine.low %v6831, %v6847
    %v6888 = vcombine.high %v6831, %v6847
    %v6890 = vunpack.c.l.s4 1934713408
    %v6891 = vunpack.c.0.s8 %v6890
    %v6892 = vlaneseq
    %v6893 = vshrl.u32 %v6892, 7
    %v6894 = vsub.s32 %v6891, %v6893
    %v6895 = vrot.slane %v6887, %v6894
    %v6897 = vunpack.c.l.s4 1934713408
    %v6898 = vunpack.c.0.s8 %v6897
    %v6899 = vlaneseq
    %v6900 = vshrl.u32 %v6899, 7
    %v6901 = vsub.s32 %v6898, %v6900
    %v6902 = vrot.slane %v6888, %v6901
    %v6903 = vcombine.low %v6838, %v6854
    %v6904 = vcombine.high %v6838, %v6854
    %v6906 = vunpack.c.l.s4 1934713408
    %v6907 = vunpack.c.0.s8 %v6906
    %v6908 = vlaneseq
    %v6909 = vshrl.u32 %v6908, 7
    %v6910 = vsub.s32 %v6907, %v6909
    %v6911 = vrot.slane %v6903, %v6910
    %v6913 = vunpack.c.l.s4 1934713408
    %v6914 = vunpack.c.0.s8 %v6913
    %v6915 = vlaneseq
    %v6916 = vshrl.u32 %v6915, 7
    %v6917 = vsub.s32 %v6914, %v6916
    %v6918 = vrot.slane %v6904, %v6917
    %v6919 = vcombine.low %v6863, %v6879
    %v6920 = vcombine.high %v6863, %v6879
    %v6922 = vunpack.c.l.s4 1934713408
    %v6923 = vunpack.c.0.s8 %v6922
    %v6924 = vlaneseq
    %v6925 = vshrl.u32 %v6924, 7
    %v6926 = vsub.s32 %v6923, %v6925
    %v6927 = vrot.slane %v6919, %v6926
    %v6929 = vunpack.c.l.s4 1934713408
    %v6930 = vunpack.c.0.s8 %v6929
    %v6931 = vlaneseq
    %v6932 = vshrl.u32 %v6931, 7
    %v6933 = vsub.s32 %v6930, %v6932
    %v6934 = vrot.slane %v6920, %v6933
    %v6935 = vcombine.low %v6870, %v6886
    %v6936 = vcombine.high %v6870, %v6886
    %v6938 = vunpack.c.l.s4 1934713408
    %v6939 = vunpack.c.0.s8 %v6938
    %v6940 = vlaneseq
    %v6941 = vshrl.u32 %v6940, 7
    %v6942 = vsub.s32 %v6939, %v6941
    %v6943 = vrot.slane %v6935, %v6942
    %v6945 = vunpack.c.l.s4 1934713408
    %v6946 = vunpack.c.0.s8 %v6945
    %v6947 = vlaneseq
    %v6948 = vshrl.u32 %v6947, 7
    %v6949 = vsub.s32 %v6946, %v6948
    %v6950 = vrot.slane %v6936, %v6949
    %v6951 = vcombine.low %v6895, %v6927
    %v6952 = vcombine.high %v6895, %v6927
    %v6953 = vcombine.low %v6902, %v6934
    %v6954 = vcombine.high %v6902, %v6934
    %v6955 = vcombine.low %v6911, %v6943
    %v6956 = vcombine.high %v6911, %v6943
    %v6957 = vcombine.low %v6918, %v6950
    %v6958 = vcombine.high %v6918, %v6950
    %v6959 = vcombine.low %v6776, %v6790
    %v6960 = vcombine.high %v6776, %v6790
    %v6962 = vunpack.c.l.s4 1983009808
    %v6963 = vunpack.c.0.s8 %v6962
    %v6964 = vlaneseq
    %v6965 = vshrl.u32 %v6964, 7
    %v6966 = vsub.s32 %v6963, %v6965
    %v6967 = vrot.slane %v6959, %v6966
    %v6969 = vunpack.c.l.s4 1983009808
    %v6970 = vunpack.c.0.s8 %v6969
    %v6971 = vlaneseq
    %v6972 = vshrl.u32 %v6971, 7
    %v6973 = vsub.s32 %v6970, %v6972
    %v6974 = vrot.slane %v6960, %v6973
    %v6975 = vcombine.low %v6784, %v6796
    %v6976 = vcombine.high %v6784, %v6796
    %v6978 = vunpack.c.l.s4 1983009808
    %v6979 = vunpack.c.0.s8 %v6978
    %v6980 = vlaneseq
    %v6981 = vshrl.u32 %v6980, 7
    %v6982 = vsub.s32 %v6979, %v6981
    %v6983 = vrot.slane %v6975, %v6982
    %v6985 = vunpack.c.l.s4 1983009808
    %v6986 = vunpack.c.0.s8 %v6985
    %v6987 = vlaneseq
    %v6988 = vshrl.u32 %v6987, 7
    %v6989 = vsub.s32 %v6986, %v6988
    %v6990 = vrot.slane %v6976, %v6989
    %v6991 = vcombine.low %v6802, %v6814
    %v6992 = vcombine.high %v6802, %v6814
    %v6994 = vunpack.c.l.s4 1983009808
    %v6995 = vunpack.c.0.s8 %v6994
    %v6996 = vlaneseq
    %v6997 = vshrl.u32 %v6996, 7
    %v6998 = vsub.s32 %v6995, %v6997
    %v6999 = vrot.slane %v6991, %v6998
    %v7001 = vunpack.c.l.s4 1983009808
    %v7002 = vunpack.c.0.s8 %v7001
    %v7003 = vlaneseq
    %v7004 = vshrl.u32 %v7003, 7
    %v7005 = vsub.s32 %v7002, %v7004
    %v7006 = vrot.slane %v6992, %v7005
    %v7007 = vcombine.low %v6808, %v6820
    %v7008 = vcombine.high %v6808, %v6820
    %v7010 = vunpack.c.l.s4 1983009808
    %v7011 = vunpack.c.0.s8 %v7010
    %v7012 = vlaneseq
    %v7013 = vshrl.u32 %v7012, 7
    %v7014 = vsub.s32 %v7011, %v7013
    %v7015 = vrot.slane %v7007, %v7014
    %v7017 = vunpack.c.l.s4 1983009808
    %v7018 = vunpack.c.0.s8 %v7017
    %v7019 = vlaneseq
    %v7020 = vshrl.u32 %v7019, 7
    %v7021 = vsub.s32 %v7018, %v7020
    %v7022 = vrot.slane %v7008, %v7021
    %v7023 = vcombine.low %v6967, %v6983
    %v7024 = vcombine.high %v6967, %v6983
    %v7026 = vunpack.c.l.s4 1934713408
    %v7027 = vunpack.c.0.s8 %v7026
    %v7028 = vlaneseq
    %v7029 = vshrl.u32 %v7028, 7
    %v7030 = vsub.s32 %v7027, %v7029
    %v7031 = vrot.slane %v7023, %v7030
    %v7033 = vunpack.c.l.s4 1934713408
    %v7034 = vunpack.c.0.s8 %v7033
    %v7035 = vlaneseq
    %v7036 = vshrl.u32 %v7035, 7
    %v7037 = vsub.s32 %v7034, %v7036
    %v7038 = vrot.slane %v7024, %v7037
    %v7039 = vcombine.low %v6974, %v6990
    %v7040 = vcombine.high %v6974, %v6990
    %v7042 = vunpack.c.l.s4 1934713408
    %v7043 = vunpack.c.0.s8 %v7042
    %v7044 = vlaneseq
    %v7045 = vshrl.u32 %v7044, 7
    %v7046 = vsub.s32 %v7043, %v7045
    %v7047 = vrot.slane %v7039, %v7046
    %v7049 = vunpack.c.l.s4 1934713408
    %v7050 = vunpack.c.0.s8 %v7049
    %v7051 = vlaneseq
    %v7052 = vshrl.u32 %v7051, 7
    %v7053 = vsub.s32 %v7050, %v7052
    %v7054 = vrot.slane %v7040, %v7053
    %v7055 = vcombine.low %v6999, %v7015
    %v7056 = vcombine.high %v6999, %v7015
    %v7058 = vunpack.c.l.s4 1934713408
    %v7059 = vunpack.c.0.s8 %v7058
    %v7060 = vlaneseq
    %v7061 = vshrl.u32 %v7060, 7
    %v7062 = vsub.s32 %v7059, %v7061
    %v7063 = vrot.slane %v7055, %v7062
    %v7065 = vunpack.c.l.s4 1934713408
    %v7066 = vunpack.c.0.s8 %v7065
    %v7067 = vlaneseq
    %v7068 = vshrl.u32 %v7067, 7
    %v7069 = vsub.s32 %v7066, %v7068
    %v7070 = vrot.slane %v7056, %v7069
    %v7071 = vcombine.low %v7006, %v7022
    %v7072 = vcombine.high %v7006, %v7022
    %v7074 = vunpack.c.l.s4 1934713408
    %v7075 = vunpack.c.0.s8 %v7074
    %v7076 = vlaneseq
    %v7077 = vshrl.u32 %v7076, 7
    %v7078 = vsub.s32 %v7075, %v7077
    %v7079 = vrot.slane %v7071, %v7078
    %v7081 = vunpack.c.l.s4 1934713408
    %v7082 = vunpack.c.0.s8 %v7081
    %v7083 = vlaneseq
    %v7084 = vshrl.u32 %v7083, 7
    %v7085 = vsub.s32 %v7082, %v7084
    %v7086 = vrot.slane %v7072, %v7085
    %v7087 = vcombine.low %v7031, %v7063
    %v7088 = vcombine.high %v7031, %v7063
    %v7089 = vcombine.low %v7038, %v7070
    %v7090 = vcombine.high %v7038, %v7070
    %v7091 = vcombine.low %v7047, %v7079
    %v7092 = vcombine.high %v7047, %v7079
    %v7093 = vcombine.low %v7054, %v7086
    %v7094 = vcombine.high %v7054, %v7086
    %v7095 = vcombine.low %v6951, %v6953
    %v7096 = vcombine.high %v6951, %v6953
    %v7098 = vunpack.c.l.s4 1983009808
    %v7099 = vunpack.c.0.s8 %v7098
    %v7100 = vlaneseq
    %v7101 = vshrl.u32 %v7100, 7
    %v7102 = vsub.s32 %v7099, %v7101
    %v7103 = vrot.slane %v7095, %v7102
    %v7105 = vunpack.c.l.s4 1983009808
    %v7106 = vunpack.c.0.s8 %v7105
    %v7107 = vlaneseq
    %v7108 = vshrl.u32 %v7107, 7
    %v7109 = vsub.s32 %v7106, %v7108
    %v7110 = vrot.slane %v7096, %v7109
    %v7111 = vcombine.low %v6952, %v6954
    %v7112 = vcombine.high %v6952, %v6954
    %v7114 = vunpack.c.l.s4 1983009808
    %v7115 = vunpack.c.0.s8 %v7114
    %v7116 = vlaneseq
    %v7117 = vshrl.u32 %v7116, 7
    %v7118 = vsub.s32 %v7115, %v7117
    %v7119 = vrot.slane %v7111, %v7118
    %v7121 = vunpack.c.l.s4 1983009808
    %v7122 = vunpack.c.0.s8 %v7121
    %v7123 = vlaneseq
    %v7124 = vshrl.u32 %v7123, 7
    %v7125 = vsub.s32 %v7122, %v7124
    %v7126 = vrot.slane %v7112, %v7125
    %v7127 = vcombine.low %v6955, %v6957
    %v7128 = vcombine.high %v6955, %v6957
    %v7130 = vunpack.c.l.s4 1983009808
    %v7131 = vunpack.c.0.s8 %v7130
    %v7132 = vlaneseq
    %v7133 = vshrl.u32 %v7132, 7
    %v7134 = vsub.s32 %v7131, %v7133
    %v7135 = vrot.slane %v7127, %v7134
    %v7137 = vunpack.c.l.s4 1983009808
    %v7138 = vunpack.c.0.s8 %v7137
    %v7139 = vlaneseq
    %v7140 = vshrl.u32 %v7139, 7
    %v7141 = vsub.s32 %v7138, %v7140
    %v7142 = vrot.slane %v7128, %v7141
    %v7143 = vcombine.low %v6956, %v6958
    %v7144 = vcombine.high %v6956, %v6958
    %v7146 = vunpack.c.l.s4 1983009808
    %v7147 = vunpack.c.0.s8 %v7146
    %v7148 = vlaneseq
    %v7149 = vshrl.u32 %v7148, 7
    %v7150 = vsub.s32 %v7147, %v7149
    %v7151 = vrot.slane %v7143, %v7150
    %v7153 = vunpack.c.l.s4 1983009808
    %v7154 = vunpack.c.0.s8 %v7153
    %v7155 = vlaneseq
    %v7156 = vshrl.u32 %v7155, 7
    %v7157 = vsub.s32 %v7154, %v7156
    %v7158 = vrot.slane %v7144, %v7157
    %v7159 = vcombine.low %v7103, %v7119
    %v7160 = vcombine.high %v7103, %v7119
    %v7162 = vunpack.c.l.s4 1934713408
    %v7163 = vunpack.c.0.s8 %v7162
    %v7164 = vlaneseq
    %v7165 = vshrl.u32 %v7164, 7
    %v7166 = vsub.s32 %v7163, %v7165
    %v7167 = vrot.slane %v7159, %v7166
    %v7169 = vunpack.c.l.s4 1934713408
    %v7170 = vunpack.c.0.s8 %v7169
    %v7171 = vlaneseq
    %v7172 = vshrl.u32 %v7171, 7
    %v7173 = vsub.s32 %v7170, %v7172
    %v7174 = vrot.slane %v7160, %v7173
    %v7175 = vcombine.low %v7110, %v7126
    %v7176 = vcombine.high %v7110, %v7126
    %v7178 = vunpack.c.l.s4 1934713408
    %v7179 = vunpack.c.0.s8 %v7178
    %v7180 = vlaneseq
    %v7181 = vshrl.u32 %v7180, 7
    %v7182 = vsub.s32 %v7179, %v7181
    %v7183 = vrot.slane %v7175, %v7182
    %v7185 = vunpack.c.l.s4 1934713408
    %v7186 = vunpack.c.0.s8 %v7185
    %v7187 = vlaneseq
    %v7188 = vshrl.u32 %v7187, 7
    %v7189 = vsub.s32 %v7186, %v7188
    %v7190 = vrot.slane %v7176, %v7189
    %v7191 = vcombine.low %v7135, %v7151
    %v7192 = vcombine.high %v7135, %v7151
    %v7194 = vunpack.c.l.s4 1934713408
    %v7195 = vunpack.c.0.s8 %v7194
    %v7196 = vlaneseq
    %v7197 = vshrl.u32 %v7196, 7
    %v7198 = vsub.s32 %v7195, %v7197
    %v7199 = vrot.slane %v7191, %v7198
    %v7201 = vunpack.c.l.s4 1934713408
    %v7202 = vunpack.c.0.s8 %v7201
    %v7203 = vlaneseq
    %v7204 = vshrl.u32 %v7203, 7
    %v7205 = vsub.s32 %v7202, %v7204
    %v7206 = vrot.slane %v7192, %v7205
    %v7207 = vcombine.low %v7142, %v7158
    %v7208 = vcombine.high %v7142, %v7158
    %v7210 = vunpack.c.l.s4 1934713408
    %v7211 = vunpack.c.0.s8 %v7210
    %v7212 = vlaneseq
    %v7213 = vshrl.u32 %v7212, 7
    %v7214 = vsub.s32 %v7211, %v7213
    %v7215 = vrot.slane %v7207, %v7214
    %v7217 = vunpack.c.l.s4 1934713408
    %v7218 = vunpack.c.0.s8 %v7217
    %v7219 = vlaneseq
    %v7220 = vshrl.u32 %v7219, 7
    %v7221 = vsub.s32 %v7218, %v7220
    %v7222 = vrot.slane %v7208, %v7221
    %v7223 = vcombine.low %v7167, %v7199
    %v7224 = vcombine.high %v7167, %v7199
    %v7225 = vcombine.low %v7174, %v7206
    %v7226 = vcombine.high %v7174, %v7206
    %v7227 = vcombine.low %v7183, %v7215
    %v7228 = vcombine.high %v7183, %v7215
    %v7229 = vcombine.low %v7190, %v7222
    %v7230 = vcombine.high %v7190, %v7222
    %v7231 = vcombine.low %v7087, %v7089
    %v7232 = vcombine.high %v7087, %v7089
    %v7234 = vunpack.c.l.s4 1983009808
    %v7235 = vunpack.c.0.s8 %v7234
    %v7236 = vlaneseq
    %v7237 = vshrl.u32 %v7236, 7
    %v7238 = vsub.s32 %v7235, %v7237
    %v7239 = vrot.slane %v7231, %v7238
    %v7241 = vunpack.c.l.s4 1983009808
    %v7242 = vunpack.c.0.s8 %v7241
    %v7243 = vlaneseq
    %v7244 = vshrl.u32 %v7243, 7
    %v7245 = vsub.s32 %v7242, %v7244
    %v7246 = vrot.slane %v7232, %v7245
    %v7247 = vcombine.low %v7088, %v7090
    %v7248 = vcombine.high %v7088, %v7090
    %v7250 = vunpack.c.l.s4 1983009808
    %v7251 = vunpack.c.0.s8 %v7250
    %v7252 = vlaneseq
    %v7253 = vshrl.u32 %v7252, 7
    %v7254 = vsub.s32 %v7251, %v7253
    %v7255 = vrot.slane %v7247, %v7254
    %v7257 = vunpack.c.l.s4 1983009808
    %v7258 = vunpack.c.0.s8 %v7257
    %v7259 = vlaneseq
    %v7260 = vshrl.u32 %v7259, 7
    %v7261 = vsub.s32 %v7258, %v7260
    %v7262 = vrot.slane %v7248, %v7261
    %v7263 = vcombine.low %v7091, %v7093
    %v7264 = vcombine.high %v7091, %v7093
    %v7266 = vunpack.c.l.s4 1983009808
    %v7267 = vunpack.c.0.s8 %v7266
    %v7268 = vlaneseq
    %v7269 = vshrl.u32 %v7268, 7
    %v7270 = vsub.s32 %v7267, %v7269
    %v7271 = vrot.slane %v7263, %v7270
    %v7273 = vunpack.c.l.s4 1983009808
    %v7274 = vunpack.c.0.s8 %v7273
    %v7275 = vlaneseq
    %v7276 = vshrl.u32 %v7275, 7
    %v7277 = vsub.s32 %v7274, %v7276
    %v7278 = vrot.slane %v7264, %v7277
    %v7279 = vcombine.low %v7092, %v7094
    %v7280 = vcombine.high %v7092, %v7094
    %v7282 = vunpack.c.l.s4 1983009808
    %v7283 = vunpack.c.0.s8 %v7282
    %v7284 = vlaneseq
    %v7285 = vshrl.u32 %v7284, 7
    %v7286 = vsub.s32 %v7283, %v7285
    %v7287 = vrot.slane %v7279, %v7286
    %v7289 = vunpack.c.l.s4 1983009808
    %v7290 = vunpack.c.0.s8 %v7289
    %v7291 = vlaneseq
    %v7292 = vshrl.u32 %v7291, 7
    %v7293 = vsub.s32 %v7290, %v7292
    %v7294 = vrot.slane %v7280, %v7293
    %v7295 = vcombine.low %v7239, %v7255
    %v7296 = vcombine.high %v7239, %v7255
    %v7298 = vunpack.c.l.s4 1934713408
    %v7299 = vunpack.c.0.s8 %v7298
    %v7300 = vlaneseq
    %v7301 = vshrl.u32 %v7300, 7
    %v7302 = vsub.s32 %v7299, %v7301
    %v7303 = vrot.slane %v7295, %v7302
    %v7305 = vunpack.c.l.s4 1934713408
    %v7306 = vunpack.c.0.s8 %v7305
    %v7307 = vlaneseq
    %v7308 = vshrl.u32 %v7307, 7
    %v7309 = vsub.s32 %v7306, %v7308
    %v7310 = vrot.slane %v7296, %v7309
    %v7311 = vcombine.low %v7246, %v7262
    %v7312 = vcombine.high %v7246, %v7262
    %v7314 = vunpack.c.l.s4 1934713408
    %v7315 = vunpack.c.0.s8 %v7314
    %v7316 = vlaneseq
    %v7317 = vshrl.u32 %v7316, 7
    %v7318 = vsub.s32 %v7315, %v7317
    %v7319 = vrot.slane %v7311, %v7318
    %v7321 = vunpack.c.l.s4 1934713408
    %v7322 = vunpack.c.0.s8 %v7321
    %v7323 = vlaneseq
    %v7324 = vshrl.u32 %v7323, 7
    %v7325 = vsub.s32 %v7322, %v7324
    %v7326 = vrot.slane %v7312, %v7325
    %v7327 = vcombine.low %v7271, %v7287
    %v7328 = vcombine.high %v7271, %v7287
    %v7330 = vunpack.c.l.s4 1934713408
    %v7331 = vunpack.c.0.s8 %v7330
    %v7332 = vlaneseq
    %v7333 = vshrl.u32 %v7332, 7
    %v7334 = vsub.s32 %v7331, %v7333
    %v7335 = vrot.slane %v7327, %v7334
    %v7337 = vunpack.c.l.s4 1934713408
    %v7338 = vunpack.c.0.s8 %v7337
    %v7339 = vlaneseq
    %v7340 = vshrl.u32 %v7339, 7
    %v7341 = vsub.s32 %v7338, %v7340
    %v7342 = vrot.slane %v7328, %v7341
    %v7343 = vcombine.low %v7278, %v7294
    %v7344 = vcombine.high %v7278, %v7294
    %v7346 = vunpack.c.l.s4 1934713408
    %v7347 = vunpack.c.0.s8 %v7346
    %v7348 = vlaneseq
    %v7349 = vshrl.u32 %v7348, 7
    %v7350 = vsub.s32 %v7347, %v7349
    %v7351 = vrot.slane %v7343, %v7350
    %v7353 = vunpack.c.l.s4 1934713408
    %v7354 = vunpack.c.0.s8 %v7353
    %v7355 = vlaneseq
    %v7356 = vshrl.u32 %v7355, 7
    %v7357 = vsub.s32 %v7354, %v7356
    %v7358 = vrot.slane %v7344, %v7357
    %v7359 = vcombine.low %v7303, %v7335
    %v7360 = vcombine.high %v7303, %v7335
    %v7361 = vcombine.low %v7310, %v7342
    %v7362 = vcombine.high %v7310, %v7342
    %v7363 = vcombine.low %v7319, %v7351
    %v7364 = vcombine.high %v7319, %v7351
    %v7365 = vcombine.low %v7326, %v7358
    %v7366 = vcombine.high %v7326, %v7358
    %v7367 = vadd.f32 %v7223, %v3603
    %v7368 = vadd.f32 %v7359, %v3607
    %v7369 = vadd.f32 %v7224, %v3603
    %v7370 = vadd.f32 %v7360, %v3607
    %v7371 = vadd.f32 %v7225, %v3603
    %v7372 = vadd.f32 %v7361, %v3607
    %v7373 = vadd.f32 %v7226, %v3603
    %v7374 = vadd.f32 %v7362, %v3607
    %v7375 = vadd.f32 %v7227, %v3603
    %v7376 = vadd.f32 %v7363, %v3607
    %v7377 = vadd.f32 %v7228, %v3603
    %v7378 = vadd.f32 %v7364, %v3607
    %v7379 = vadd.f32 %v7229, %v3603
    %v7380 = vadd.f32 %v7365, %v3607
    %v7381 = vadd.f32 %v7230, %v3603
    %v7382 = vadd.f32 %v7366, %v3607
    %7387 = vrot.lane.b32.xlu0 %v7371, 8
    %v7388 = vpop.permute.xlu0 %7387
    %7389 = vrot.lane.b32.xlu0 %v7372, 8
    %v7390 = vpop.permute.xlu0 %7389
    %7391 = vrot.lane.b32.xlu0 %v7373, 8
    %v7392 = vpop.permute.xlu0 %7391
    %7393 = vrot.lane.b32.xlu0 %v7374, 8
    %v7394 = vpop.permute.xlu0 %7393
    %7403 = vrot.lane.b32.xlu0 %v7375, 16
    %v7404 = vpop.permute.xlu0 %7403
    %7405 = vrot.lane.b32.xlu0 %v7376, 16
    %v7406 = vpop.permute.xlu0 %7405
    %7407 = vrot.lane.b32.xlu0 %v7377, 16
    %v7408 = vpop.permute.xlu0 %7407
    %7409 = vrot.lane.b32.xlu0 %v7378, 16
    %v7410 = vpop.permute.xlu0 %7409
    %7419 = vrot.lane.b32.xlu0 %v7379, 24
    %v7420 = vpop.permute.xlu0 %7419
    %7421 = vrot.lane.b32.xlu0 %v7380, 24
    %v7422 = vpop.permute.xlu0 %7421
    %7423 = vrot.lane.b32.xlu0 %v7381, 24
    %v7424 = vpop.permute.xlu0 %7423
    %7425 = vrot.lane.b32.xlu0 %v7382, 24
    %v7426 = vpop.permute.xlu0 %7425
    %v7431 = vsel %vm284, %v7367, %v7388
    %v7432 = vsel %vm284, %v7368, %v7390
    %v7433 = vsel %vm284, %v7369, %v7392
    %v7434 = vsel %vm284, %v7370, %v7394
    %v7435 = vsel %vm983, %v7431, %v7404
    %v7436 = vsel %vm983, %v7432, %v7406
    %v7437 = vsel %vm983, %v7433, %v7408
    %v7438 = vsel %vm983, %v7434, %v7410
    %v7439 = vsel %vm2796, %v7435, %v7420
    %v7440 = vsel %vm2796, %v7436, %v7422
    %v7441 = vsel %vm2796, %v7437, %v7424
    %v7442 = vsel %vm2796, %v7438, %v7426
    %v7443 = vadd.f32 %v3684, %v7439
    %v7444 = vadd.f32 %v3685, %v7440
    %v7445 = vadd.f32 %v3686, %v7441
    %v7446 = vadd.f32 %v3687, %v7442
    %v7447 = vld [vmem:[%s3 + $0x1] sm:$0x1]
    %v7448 = vld [vmem:[%s4 + $0x1] sm:$0x1]
    %v7449 = vsel %vm85, %v7443, 0.0
    %7450 = vadd.xlane.f32.xlu0 %v7449
    %v7451 = vpop.xlane.xlu0 %7450
    %v7452 = vsel %vm85, %v7444, 0.0
    %7453 = vadd.xlane.f32.xlu0 %v7452
    %v7454 = vpop.xlane.xlu0 %7453
    %v7455 = vsel %vm85, %v7445, 0.0
    %7456 = vadd.xlane.f32.xlu0 %v7455
    %v7457 = vpop.xlane.xlu0 %7456
    %v7458 = vsel %vm85, %v7446, 0.0
    %7459 = vadd.xlane.f32.xlu0 %v7458
    %v7460 = vpop.xlane.xlu0 %7459
    %v7461 = vmul.f32 %v7451, %v98
    %v7462 = vmul.f32 %v7454, %v98
    %v7463 = vmul.f32 %v7457, %v98
    %v7464 = vmul.f32 %v7460, %v98
    %v7465 = vsub.f32 %v7443, %v7461
    %v7466 = vsub.f32 %v7444, %v7462
    %v7467 = vsub.f32 %v7445, %v7463
    %v7468 = vsub.f32 %v7446, %v7464
    %v7469 = vmul.f32 %v7465, %v7465
    %v7470 = vmul.f32 %v7466, %v7466
    %v7471 = vmul.f32 %v7467, %v7467
    %v7472 = vmul.f32 %v7468, %v7468
    %v7473 = vsel %vm85, %v7469, 0.0
    %7474 = vadd.xlane.f32.xlu0 %v7473
    %v7475 = vpop.xlane.xlu0 %7474
    %v7476 = vsel %vm85, %v7470, 0.0
    %7477 = vadd.xlane.f32.xlu0 %v7476
    %v7478 = vpop.xlane.xlu0 %7477
    %v7479 = vsel %vm85, %v7471, 0.0
    %7480 = vadd.xlane.f32.xlu0 %v7479
    %v7481 = vpop.xlane.xlu0 %7480
    %v7482 = vsel %vm85, %v7472, 0.0
    %7483 = vadd.xlane.f32.xlu0 %v7482
    %v7484 = vpop.xlane.xlu0 %7483
    %v7485 = vmul.f32 %v7475, %v98
    %v7486 = vmul.f32 %v7478, %v98
    %v7487 = vmul.f32 %v7481, %v98
    %v7488 = vmul.f32 %v7484, %v98
    %v7489 = vadd.f32 %v7485, 1e-05
    %v7490 = vadd.f32 %v7486, 1e-05
    %v7491 = vadd.f32 %v7487, 1e-05
    %v7492 = vadd.f32 %v7488, 1e-05
    %v7493 = vrsqrt.pop %v7489
    %v7494 = vrsqrt.pop %v7490
    %v7495 = vrsqrt.pop %v7491
    %v7496 = vrsqrt.pop %v7492
    %v7497 = vmul.f32 %v7465, %v7493
    %v7498 = vmul.f32 %v7466, %v7494
    %v7499 = vmul.f32 %v7467, %v7495
    %v7500 = vmul.f32 %v7468, %v7496
    %v7501 = vlaneseq
    %v7502 = vshrl.u32 %v7501, 7
    %v7503 = vsub.s32 0, %v7502
    %v7504 = vrot.slane %v7447, %v7503
    %v7505 = vmul.f32 %v7497, %v7504
    %v7506 = vmul.f32 %v7498, %v7504
    %v7507 = vmul.f32 %v7499, %v7504
    %v7508 = vmul.f32 %v7500, %v7504
    %v7509 = vlaneseq
    %v7510 = vshrl.u32 %v7509, 7
    %v7511 = vsub.s32 0, %v7510
    %v7512 = vrot.slane %v7448, %v7511
    %v7513 = vadd.f32 %v7505, %v7512
    %v7514 = vadd.f32 %v7506, %v7512
    %v7515 = vadd.f32 %v7507, %v7512
    %v7516 = vadd.f32 %v7508, %v7512
    %v7518 = vsel %vm85, %v7513, 0
    %v7521 = vsel %vm85, %v7514, 0
    %v7524 = vsel %vm85, %v7515, 0
    %v7527 = vsel %vm85, %v7516, 0
    %7529 = vmatprep.subr.mxu0 0.0
    %7530 = vmatpush1.msra.mxu0 %v61
    %7531 = vmatprep.subr.mxu0 0.0
    %7532 = vmatpush1.msra.mxu0 %v62
    %7533 = vmatprep.subr.mxu0 0.0
    %7534 = vmatpush1.msra.mxu0 %v63
    %7535 = vmatprep.subr.mxu0 0.0
    %7536 = vmatpush1.msra.mxu0 %v64
    %7537 = vmatprep.subr.mxu0 0.0
    %7538 = vmatpush1.msra.mxu0 0.0
    %7539 = vmatprep.subr.mxu0 0.0
    %7540 = vmatpush1.msra.mxu0 0.0
    %7541 = vmatprep.subr.mxu0 0.0
    %7542 = vmatpush1.msra.mxu0 0.0
    %7543 = vmatprep.subr.mxu0 0.0
    %7544 = vmatpush1.msra.mxu0 0.0
    %7545 = vmatprep.subr.mxu0 0.0
    %7546 = vmatpush1.msra.mxu0 0.0
    %7547 = vmatprep.subr.mxu0 0.0
    %7548 = vmatpush1.msra.mxu0 0.0
    %7549 = vmatprep.subr.mxu0 0.0
    %7550 = vmatpush1.msra.mxu0 0.0
    %7551 = vmatprep.subr.mxu0 0.0
    %7552 = vmatpush1.msra.mxu0 0.0
    %7553 = vmatprep.subr.mxu0 0.0
    %7554 = vmatpush1.msra.mxu0 0.0
    %7555 = vmatprep.subr.mxu0 0.0
    %7556 = vmatpush1.msra.mxu0 0.0
    %7557 = vmatprep.subr.mxu0 0.0
    %7558 = vmatpush1.msra.mxu0 0.0
    %7559 = vmatprep.subr.mxu0 0.0
    %7560 = vmatpush1.msra.mxu0 0.0
    %7561 = vmatprep.subr.mxu0 0.0
    %7562 = vmatpush1.msra.mxu0 0.0
    %7563 = vmatprep.subr.mxu0 0.0
    %7564 = vmatpush1.msra.mxu0 0.0
    %7565 = vmatprep.subr.mxu0 0.0
    %7566 = vmatpush1.msra.mxu0 0.0
    %7567 = vmatprep.subr.mxu0 0.0
    %7568 = vmatpush1.msra.mxu0 0.0
    %7569 = vmatprep.subr.mxu0 0.0
    %7570 = vmatpush1.msra.mxu0 0.0
    %7571 = vmatprep.subr.mxu0 0.0
    %7572 = vmatpush1.msra.mxu0 0.0
    %7573 = vmatprep.subr.mxu0 0.0
    %7574 = vmatpush1.msra.mxu0 0.0
    %7575 = vmatprep.subr.mxu0 0.0
    %7576 = vmatpush1.msra.mxu0 0.0
    %7577 = vmatprep.subr.mxu0 0.0
    %7578 = vmatpush1.msra.mxu0 0.0
    %7579 = vmatprep.subr.mxu0 0.0
    %7580 = vmatpush1.msra.mxu0 0.0
    %7581 = vmatprep.subr.mxu0 0.0
    %7582 = vmatpush1.msra.mxu0 0.0
    %7583 = vmatprep.subr.mxu0 0.0
    %7584 = vmatpush1.msra.mxu0 0.0
    %7585 = vmatprep.subr.mxu0 0.0
    %7586 = vmatpush1.msra.mxu0 0.0
    %7587 = vmatprep.subr.mxu0 0.0
    %7588 = vmatpush1.msra.mxu0 0.0
    %7589 = vmatprep.subr.mxu0 0.0
    %7590 = vmatpush1.msra.mxu0 0.0
    %7591 = vmatprep.subr.mxu0 0.0
    %7592 = vmatpush1.msra.mxu0 0.0
    %7593 = vmatprep.mubr.f32.mxu0 0.0
    %7594 = vmatmul.mubr.f32.gmra.mrb[0].mxu0 %v7518
    %v7595 = vpop.f32.mrb[0].mxu0
    %v7596 = vadd.f32 %v3762, %v7595
    %v7597 = vpop.f32.mrb[0].mxu0
    %7598 = vmatprep.mubr.f32.mxu0 0.0
    %7599 = vmatmul.mubr.f32.gmra.mrb[0].mxu0 %v7521
    %v7600 = vpop.f32.mrb[0].mxu0
    %v7601 = vadd.f32 %v3762, %v7600
    %v7602 = vpop.f32.mrb[0].mxu0
    %7603 = vmatprep.mubr.f32.mxu0 0.0
    %7604 = vmatmul.mubr.f32.gmra.mrb[0].mxu0 %v7524
    %v7605 = vpop.f32.mrb[0].mxu0
    %v7606 = vadd.f32 %v3762, %v7605
    %v7607 = vpop.f32.mrb[0].mxu0
    %7608 = vmatprep.mubr.f32.mxu0 0.0
    %7609 = vmatmul.mubr.f32.gmra.mrb[0].mxu0 %v7527
    %v7610 = vpop.f32.mrb[0].mxu0
    %v7611 = vadd.f32 %v3762, %v7610
    %v7612 = vpop.f32.mrb[0].mxu0
    %7613 = vdwg.mxu0
    %v7614 = vmul.f32 %v7596, 0.5
    %v7615 = vmul.f32 %v7601, 0.5
    %v7616 = vmul.f32 %v7606, 0.5
    %v7617 = vmul.f32 %v7611, 0.5
    %v7618 = vmul.f32 %v7596, 0.044715
    %v7619 = vmul.f32 %v7601, 0.044715
    %v7620 = vmul.f32 %v7606, 0.044715
    %v7621 = vmul.f32 %v7611, 0.044715
    %v7622 = vmul.f32 %v7618, %v7596
    %v7623 = vmul.f32 %v7619, %v7601
    %v7624 = vmul.f32 %v7620, %v7606
    %v7625 = vmul.f32 %v7621, %v7611
    %v7626 = vmul.f32 %v7622, %v7596
    %v7627 = vmul.f32 %v7623, %v7601
    %v7628 = vmul.f32 %v7624, %v7606
    %v7629 = vmul.f32 %v7625, %v7611
    %v7630 = vadd.f32 %v7596, %v7626
    %v7631 = vadd.f32 %v7601, %v7627
    %v7632 = vadd.f32 %v7606, %v7628
    %v7633 = vadd.f32 %v7611, %v7629
    %v7634 = vmul.f32 %v7630, 0.7978846
    %v7635 = vmul.f32 %v7631, 0.7978846
    %v7636 = vmul.f32 %v7632, 0.7978846
    %v7637 = vmul.f32 %v7633, 0.7978846
    %v7638 = vtanh.pop %v7634
    %v7639 = vtanh.pop %v7635
    %v7640 = vtanh.pop %v7636
    %v7641 = vtanh.pop %v7637
    %v7642 = vadd.f32 %v7638, 1.0
    %v7643 = vadd.f32 %v7639, 1.0
    %v7644 = vadd.f32 %v7640, 1.0
    %v7645 = vadd.f32 %v7641, 1.0
    %v7646 = vmul.f32 %v7614, %v7642
    %v7647 = vmul.f32 %v7615, %v7643
    %v7648 = vmul.f32 %v7616, %v7644
    %v7649 = vmul.f32 %v7617, %v7645
    %v7651 = vsel %vm3897, %v7646, 0
    %v7654 = vsel %vm3897, %v7647, 0
    %v7657 = vsel %vm3897, %v7648, 0
    %v7660 = vsel %vm3897, %v7649, 0
    %7662 = vmatprep.subr.mxu0 0.0
    %7663 = vmatpush1.msra.mxu0 %v65
    %7664 = vmatprep.subr.mxu0 0.0
    %7665 = vmatpush1.msra.mxu0 %v66
    %7666 = vmatprep.subr.mxu0 0.0
    %7667 = vmatpush1.msra.mxu0 %v67
    %7668 = vmatprep.subr.mxu0 0.0
    %7669 = vmatpush1.msra.mxu0 %v68
    %7670 = vmatprep.subr.mxu0 0.0
    %7671 = vmatpush1.msra.mxu0 %v69
    %7672 = vmatprep.subr.mxu0 0.0
    %7673 = vmatpush1.msra.mxu0 %v70
    %7674 = vmatprep.subr.mxu0 0.0
    %7675 = vmatpush1.msra.mxu0 %v71
    %7676 = vmatprep.subr.mxu0 0.0
    %7677 = vmatpush1.msra.mxu0 %v72
    %7678 = vmatprep.subr.mxu0 0.0
    %7679 = vmatpush1.msra.mxu0 0.0
    %7680 = vmatprep.subr.mxu0 0.0
    %7681 = vmatpush1.msra.mxu0 0.0
    %7682 = vmatprep.subr.mxu0 0.0
    %7683 = vmatpush1.msra.mxu0 0.0
    %7684 = vmatprep.subr.mxu0 0.0
    %7685 = vmatpush1.msra.mxu0 0.0
    %7686 = vmatprep.subr.mxu0 0.0
    %7687 = vmatpush1.msra.mxu0 0.0
    %7688 = vmatprep.subr.mxu0 0.0
    %7689 = vmatpush1.msra.mxu0 0.0
    %7690 = vmatprep.subr.mxu0 0.0
    %7691 = vmatpush1.msra.mxu0 0.0
    %7692 = vmatprep.subr.mxu0 0.0
    %7693 = vmatpush1.msra.mxu0 0.0
    %7694 = vmatprep.subr.mxu0 0.0
    %7695 = vmatpush1.msra.mxu0 0.0
    %7696 = vmatprep.subr.mxu0 0.0
    %7697 = vmatpush1.msra.mxu0 0.0
    %7698 = vmatprep.subr.mxu0 0.0
    %7699 = vmatpush1.msra.mxu0 0.0
    %7700 = vmatprep.subr.mxu0 0.0
    %7701 = vmatpush1.msra.mxu0 0.0
    %7702 = vmatprep.subr.mxu0 0.0
    %7703 = vmatpush1.msra.mxu0 0.0
    %7704 = vmatprep.subr.mxu0 0.0
    %7705 = vmatpush1.msra.mxu0 0.0
    %7706 = vmatprep.subr.mxu0 0.0
    %7707 = vmatpush1.msra.mxu0 0.0
    %7708 = vmatprep.subr.mxu0 0.0
    %7709 = vmatpush1.msra.mxu0 0.0
    %7710 = vmatprep.subr.mxu0 0.0
    %7711 = vmatpush1.msra.mxu0 0.0
    %7712 = vmatprep.subr.mxu0 0.0
    %7713 = vmatpush1.msra.mxu0 0.0
    %7714 = vmatprep.subr.mxu0 0.0
    %7715 = vmatpush1.msra.mxu0 0.0
    %7716 = vmatprep.subr.mxu0 0.0
    %7717 = vmatpush1.msra.mxu0 0.0
    %7718 = vmatprep.subr.mxu0 0.0
    %7719 = vmatpush1.msra.mxu0 0.0
    %7720 = vmatprep.subr.mxu0 0.0
    %7721 = vmatpush1.msra.mxu0 0.0
    %7722 = vmatprep.subr.mxu0 0.0
    %7723 = vmatpush1.msra.mxu0 0.0
    %7724 = vmatprep.subr.mxu0 0.0
    %7725 = vmatpush1.msra.mxu0 0.0
    %7726 = vmatprep.mubr.f32.mxu0 0.0
    %7727 = vmatmul.mubr.f32.gmra.mrb[0].mxu0 %v7651
    %v7728 = vpop.f32.mrb[0].mxu0
    %v7729 = vadd.f32 0.0, %v7728
    %v7730 = vpop.f32.mrb[0].mxu0
    %7731 = vmatprep.mubr.f32.mxu0 0.0
    %7732 = vmatmul.mubr.f32.gmra.mrb[0].mxu0 %v7654
    %v7733 = vpop.f32.mrb[0].mxu0
    %v7734 = vadd.f32 0.0, %v7733
    %v7735 = vpop.f32.mrb[0].mxu0
    %7736 = vmatprep.mubr.f32.mxu0 0.0
    %7737 = vmatmul.mubr.f32.gmra.mrb[0].mxu0 %v7657
    %v7738 = vpop.f32.mrb[0].mxu0
    %v7739 = vadd.f32 0.0, %v7738
    %v7740 = vpop.f32.mrb[0].mxu0
    %7741 = vmatprep.mubr.f32.mxu0 0.0
    %7742 = vmatmul.mubr.f32.gmra.mrb[0].mxu0 %v7660
    %v7743 = vpop.f32.mrb[0].mxu0
    %v7744 = vadd.f32 0.0, %v7743
    %v7745 = vpop.f32.mrb[0].mxu0
    %7746 = vdwg.mxu0
    %v7747 = vadd.f32 %v4005, %v7729
    %v7748 = vadd.f32 %v4006, %v7734
    %v7749 = vadd.f32 %v4007, %v7739
    %v7750 = vadd.f32 %v4008, %v7744
    %v7751 = vadd.f32 %v7747, %v4003
    %v7752 = vadd.f32 %v7748, %v4003
    %v7753 = vadd.f32 %v7749, %v4003
    %v7754 = vadd.f32 %v7750, %v4003
    %v7755 = vadd.f32 %v7443, %v7751
    %v7756 = vadd.f32 %v7444, %v7752
    %v7757 = vadd.f32 %v7445, %v7753
    %v7758 = vadd.f32 %v7446, %v7754
    %v7759 = vmul.f32 %v7755, 0.5
    %v7760 = vmul.f32 %v7756, 0.5
    %v7761 = vmul.f32 %v7757, 0.5
    %v7762 = vmul.f32 %v7758, 0.5
    %7763 = vst.msk [vmem:[#allocation2] sm:$0xff] %vm85, %v7759
    %7764 = vst.msk [vmem:[#allocation2 + $0x8] sm:$0xff] %vm85, %v7760
    %7765 = vst.msk [vmem:[#allocation2 + $0x10] sm:$0xff] %vm85, %v7761
    %7766 = vst.msk [vmem:[#allocation2 + $0x18] sm:$0xff] %vm85, %v7762
    // Predicated region
    $region66: #{tpu_custom_call.1} parent=1 // pred_check
      _
    $region67: #{tpu_custom_call.1} parent=1 // pred_check_branch
      %7768 = sbr.rel (0) target = $region69
    $region68: #{tpu_custom_call.1} parent=1 // pred_region
      %s7770 = ssub.s32 512, 512
      %7771 = vsyncadd [#allocation3], %s7770
      %s7772 = sshll.u32 [#allocation2], 4
      %s7773 = int_to_ptr.vmem [resolvable:$true] %s7772
      %7778 = dma.vmem_to_hbm [thread:$0]  %s7773, 512, %s16, [#allocation3], 128, 128, 8
    $region69: #{tpu_custom_call.1} parent=1 // pred_fallthru
      _
    // Predicated region
    $region70: #{tpu_custom_call.1} parent=1 // pred_check
      _
    $region71: #{tpu_custom_call.1} parent=1 // pred_check_branch
      %7780 = sbr.rel (0) target = $region73
    $region72: #{tpu_custom_call.1} parent=1 // pred_region
      %7781 = dma.done [#allocation3], 512
    $region73: #{tpu_custom_call.1} parent=1 // pred_fallthru
      _
    %7782 = vsyncpa [#allocation3], 1

</llo_original>
